<compile_context>
chip_gen: v5e
topology: v5e:2x2
jax: 0.10.0
libtpu: 0.0.40
codegen_flags: <defaults>
</compile_context>

<pallas_src>
import functools

import numpy as np
import jax
import jax.numpy as jnp
from jax.experimental import pallas as pl
from jax.experimental.pallas import tpu as pltpu


# --------------------------------------------------------------------------------------
# helpers
# --------------------------------------------------------------------------------------

def _round_up(x, m):
    return ((x + m - 1) // m) * m


def _pad_and_tile(s, max_tile=512):
    """Pick a lane-dense tile (multiple of 128, <= max_tile) and the padded extent."""
    t = min(max_tile, _round_up(s, 128))
    return _round_up(s, t), t


def _vmem_limit(stream_bytes, resident_bytes):
    """Generation-aware scoped-VMEM request.

    Double-buffer only the grid-varying (streamed) blocks, count constant-index blocks
    once, add slack for Mosaic internal scratch, and cap at ~70% of the local
    generation's physical VMEM (v7x: 64 MiB -> ~45 MiB cap; v5e/v6e: 128 MiB -> ~90 MiB).
    """
    need = 2 * stream_bytes + resident_bytes + (4 << 20)
    try:
        cap = int(getattr(pltpu.get_tpu_info(), "vmem_capacity_bytes", 128 << 20))
    except Exception:
        cap = 128 << 20
    hi = int(cap * 0.70)
    return int(min(max(need, min(16 << 20, hi)), hi))


# --------------------------------------------------------------------------------------
# Kernel 1: 1x1 conv + folded BatchNorm (eval) + ReLU, channels-first, spatially tiled
# --------------------------------------------------------------------------------------

def _conv_bn_relu_kernel(x_ref, w_ref, b_ref, o_ref):
    # x_ref: (1, Cin, tS) bf16   w_ref: (Cout, Cin) bf16 (BN scale folded)
    # b_ref: (Cout, 1) f32       o_ref: (1, Cout, tS) bf16
    y = jnp.dot(w_ref[...], x_ref[0], preferred_element_type=jnp.float32)
    o_ref[0] = jnp.maximum(y + b_ref[...], 0.0).astype(o_ref.dtype)


def conv1x1_bn_relu(x_cf, w, bias, *, max_tile=512):
    """x_cf: (B, Cin, S) bf16; w: (Cout, Cin) bf16; bias: (Cout, 1) f32 -> (B, Cout, S) bf16."""
    B, Cin, S = x_cf.shape
    Cout = w.shape[0]
    S_pad, tS = _pad_and_tile(S, max_tile)
    if S_pad != S:  # pad host-side so spatial tiling always engages (lane-dense tiles)
        x_cf = jnp.pad(x_cf, ((0, 0), (0, 0), (0, S_pad - S)))

    stream = (Cin + Cout) * tS * 2                  # streamed activation / output tiles (bf16)
    resident = Cout * Cin * 2 + Cout * 4            # weight + bias fetched once
    out = pl.pallas_call(
        _conv_bn_relu_kernel,
        out_shape=jax.ShapeDtypeStruct((B, Cout, S_pad), jnp.bfloat16),
        grid=(B, S_pad // tS),
        in_specs=[
            pl.BlockSpec((1, Cin, tS), lambda b, s: (b, 0, s)),   # streamed, pipelined
            pl.BlockSpec((Cout, Cin), lambda b, s: (0, 0)),       # resident weight
            pl.BlockSpec((Cout, 1), lambda b, s: (0, 0)),         # resident bias
        ],
        out_specs=pl.BlockSpec((1, Cout, tS), lambda b, s: (b, 0, s)),
        compiler_params=pltpu.CompilerParams(
            dimension_semantics=("parallel", "parallel"),
            vmem_limit_bytes=_vmem_limit(stream, resident)),
    )(x_cf, w, bias)
    return out[:, :, :S]


# --------------------------------------------------------------------------------------
# Kernel 2a/2b: two-pass streaming head (GAP/ChannelSoftmax folding, then folded predict)
# --------------------------------------------------------------------------------------

def _one_minus_sigmoid(v):
    # 1 - sigmoid(v) == 0.5 * (1 - tanh(v/2)); tanh -> EUP slot, no exp overflow.
    return 0.5 * (1.0 - jnp.tanh(0.5 * v))


def _branches(o5, o4, o3):
    # The four ChannelSoftmax inputs.  All are exactly zero on zero-padded columns.
    sa4 = o4 * o5
    ra4 = _one_minus_sigmoid(o5) * o4
    sa3 = sa4 * o3                      # = o5 * o4 * o3
    ra3 = _one_minus_sigmoid(o4) * o3
    return sa4, ra4, sa3, ra3


def _head_stats_kernel(o5_ref, o4_ref, o3_ref,
                       wsa1_ref, wsa2_ref, wra1_ref, wra2_ref, wpt_ref,
                       wf_ref, gsa4, gra4, gsa3, gra3, *, inv_n):
    t = pl.program_id(1)

    @pl.when(t == 0)
    def _():
        gsa4[...] = jnp.zeros_like(gsa4)
        gra4[...] = jnp.zeros_like(gra4)
        gsa3[...] = jnp.zeros_like(gsa3)
        gra3[...] = jnp.zeros_like(gra3)
        wf_ref[...] = jnp.zeros_like(wf_ref)

    o5 = o5_ref[0].astype(jnp.float32)                      # (64, tN)
    o4 = o4_ref[0].astype(jnp.float32)
    o3 = o3_ref[0].astype(jnp.float32)
    sa4, ra4, sa3, ra3 = _branches(o5, o4, o3)

    # Pass 1: stream tiles, accumulate the four GAPs as per-channel columns (64, 1).
    gsa4[...] += jnp.sum(sa4, axis=1, keepdims=True)
    gra4[...] += jnp.sum(ra4, axis=1, keepdims=True)
    gsa3[...] += jnp.sum(sa3, axis=1, keepdims=True)
    gra3[...] += jnp.sum(ra3, axis=1, keepdims=True)

    @pl.when(t == pl.num_programs(1) - 1)
    def _():
        wsa1 = wsa1_ref[...]   # (8, 64)  torch Linear(64,8) layout -> column matmul
        wsa2 = wsa2_ref[...]   # (64, 8)
        wra1 = wra1_ref[...]
        wra2 = wra2_ref[...]

        def softmax_scales(g_sa, g_ra):
            # GAP -> tiny FCs -> 2-way softmax over the {sa, ra} pair, all column form.
            h_sa = jnp.maximum(jnp.dot(wsa1, g_sa * inv_n,
                                       preferred_element_type=jnp.float32), 0.0)
            h_ra = jnp.maximum(jnp.dot(wra1, g_ra * inv_n,
                                       preferred_element_type=jnp.float32), 0.0)
            sa_y = jnp.dot(wsa2, h_sa, preferred_element_type=jnp.float32)   # (64, 1)
            ra_y = jnp.dot(wra2, h_ra, preferred_element_type=jnp.float32)   # (64, 1)
            m = jnp.maximum(sa_y, ra_y)
            e_sa = jnp.exp(sa_y - m)
            e_ra = jnp.exp(ra_y - m)
            inv = pl.reciprocal(e_sa + e_ra, approx=True)                    # EUP slot
            return e_sa * inv, e_ra * inv

        a_sa4, a_ra4 = softmax_scales(gsa4[...], gra4[...])
        a_sa3, a_ra3 = softmax_scales(gsa3[...], gra3[...])

        # Fold the per-channel softmax scales into the predict weight columns:
        # pred = wp0.o5 + (wp1*a_sa4).sa4 + (wp1*a_ra4).ra4 + (wp2*a_sa3).sa3 + (wp2*a_ra3).ra3
        wpt = wpt_ref[...]                                   # (64, 3) predict columns
        wf_ref[0, :, 0:1] = wpt[:, 0:1]
        wf_ref[0, :, 1:2] = wpt[:, 1:2] * a_sa4
        wf_ref[0, :, 2:3] = wpt[:, 1:2] * a_ra4
        wf_ref[0, :, 3:4] = wpt[:, 2:3] * a_sa3
        wf_ref[0, :, 4:5] = wpt[:, 2:3] * a_ra3


def _head_predict_kernel(o5_ref, o4_ref, o3_ref, wf_ref, bp_ref, pred_ref):
    o5 = o5_ref[0].astype(jnp.float32)                      # (64, tN)
    o4 = o4_ref[0].astype(jnp.float32)
    o3 = o3_ref[0].astype(jnp.float32)
    sa4, ra4, sa3, ra3 = _branches(o5, o4, o3)
    wf = wf_ref[0]                                          # (64, 5) folded columns
    # att4/att3 never built: folded per-channel combine, then one sublane reduction.
    z = (wf[:, 0:1] * o5 + wf[:, 1:2] * sa4 + wf[:, 2:3] * ra4
         + wf[:, 3:4] * sa3 + wf[:, 4:5] * ra3)             # (64, tN)
    pred_ref[0] = jnp.sum(z, axis=0, keepdims=True) + bp_ref[...]   # lane-dense (1, tN) store


def sranet_head(o5u, o4u, o3c, wsa1, wsa2, wra1, wra2, wpt, bp, *, max_tile=1024):
    """o5u/o4u/o3c: (B, 64, N) channels-first (o5/o4 already upsampled) -> (B, 1, N) f32."""
    B, C, N = o3c.shape
    N_pad, tN = _pad_and_tile(N, max_tile)
    if N_pad != N:  # zero-pad so every GAP/predict tile is lane-dense; GAP uses true N
        padcfg = ((0, 0), (0, 0), (0, N_pad - N))
        o5u = jnp.pad(o5u, padcfg)
        o4u = jnp.pad(o4u, padcfg)
        o3c = jnp.pad(o3c, padcfg)
    n_tiles = N_pad // tN
    inv_n = 1.0 / float(N)

    act_spec = pl.BlockSpec((1, C, tN), lambda b, t: (b, 0, t))
    const = lambda shape: pl.BlockSpec(shape, lambda b, t: (0, 0))

    # --- pass 1: GAP accumulation + ChannelSoftmax folded into per-batch predict columns
    stream = 3 * C * tN * 2 + C * 5 * 4
    resident = 2 * (8 * C + C * 8) * 4 + C * 3 * 4 + 4 * C * 4
    wf = pl.pallas_call(
        functools.partial(_head_stats_kernel, inv_n=inv_n),
        out_shape=jax.ShapeDtypeStruct((B, C, 5), jnp.float32),
        grid=(B, n_tiles),
        in_specs=[act_spec, act_spec, act_spec,
                  const((8, C)), const((C, 8)), const((8, C)), const((C, 8)),
                  const((C, 3))],
        out_specs=pl.BlockSpec((1, C, 5), lambda b, t: (b, 0, 0)),
        scratch_shapes=[pltpu.VMEM((C, 1), jnp.float32)] * 4,
        compiler_params=pltpu.CompilerParams(
            dimension_semantics=("parallel", "arbitrary"),
            vmem_limit_bytes=_vmem_limit(stream, resident)),
    )(o5u, o4u, o3c, wsa1, wsa2, wra1, wra2, wpt)

    # --- pass 2: streamed folded predict; both grid axes parallel (v7x megacore friendly)
    stream = 3 * C * tN * 2 + C * 5 * 4 + tN * 4
    pred = pl.pallas_call(
        _head_predict_kernel,
        out_shape=jax.ShapeDtypeStruct((B, 1, N_pad), jnp.float32),
        grid=(B, n_tiles),
        in_specs=[act_spec, act_spec, act_spec,
                  pl.BlockSpec((1, C, 5), lambda b, t: (b, 0, 0)),
                  const((1, 1))],
        out_specs=pl.BlockSpec((1, 1, tN), lambda b, t: (b, 0, t)),
        compiler_params=pltpu.CompilerParams(
            dimension_semantics=("parallel", "parallel"),
            vmem_limit_bytes=_vmem_limit(stream, 4)),
    )(o5u, o4u, o3c, wf, bp)
    return pred[:, :, :N]


# --------------------------------------------------------------------------------------
# plain-JAX glue: separable bilinear upsample, params, stand-in backbone, full forward
# --------------------------------------------------------------------------------------

@functools.lru_cache(maxsize=None)
def _interp_matrix_np(n_out, n_in):
    """Row-stochastic 1-D bilinear interpolation matrix, align_corners=True (cached)."""
    m = np.zeros((n_out, n_in), np.float32)
    if n_in == 1:
        m[:, 0] = 1.0
        return m
    for i in range(n_out):
        src = 0.0 if n_out == 1 else i * (n_in - 1) / (n_out - 1)
        lo = min(int(np.floor(src)), n_in - 2)
        frac = src - lo
        m[i, lo] += 1.0 - frac
        m[i, lo + 1] += frac
    return m


def upsample_bilinear_cf(x_bchw, h_out, w_out):
    """Separable align_corners=True bilinear resize (B, C, H, W) -> (B, C, h_out, w_out).

    Done as two tiny XLA einsums on the low-res map with cached 1-D matrices — replaces
    the dense O(S_in*N) flattened-Kronecker matmuls of v2 entirely.
    """
    _, _, h_in, w_in = x_bchw.shape
    rh = jnp.asarray(_interp_matrix_np(h_out, h_in))        # (h_out, h_in) f32
    rw = jnp.asarray(_interp_matrix_np(w_out, w_in))        # (w_out, w_in) f32
    y = jnp.einsum("bchw,vw->bchv", x_bchw.astype(jnp.float32), rw)
    y = jnp.einsum("bchv,uh->bcuv", y, rh)
    return y


def _kaiming(key, shape, fan_in):
    return jax.random.normal(key, shape, jnp.float32) * np.sqrt(2.0 / fan_in)


def init_params(key):
    ks = jax.random.split(key, 8)
    p = {}
    eps = 1e-5
    # linear5/4/3: Conv2d(Cin, 64, 1) + BatchNorm2d(64) + ReLU.  BN evaluated in inference
    # mode with weight_init stats (gamma=1, beta=0, mean=0, var=1) and folded into the
    # conv weight/bias on the host (fine for this stand-in; fold real running stats for
    # trained checkpoints).
    for name, cin, k in (("l5", 2048, ks[0]), ("l4", 1024, ks[1]), ("l3", 512, ks[2])):
        w = _kaiming(k, (64, cin), cin)                      # torch conv layout (Cout, Cin)
        b_conv = jnp.zeros((64,), jnp.float32)
        gamma = jnp.ones((64,), jnp.float32)
        beta = jnp.zeros((64,), jnp.float32)
        mean = jnp.zeros((64,), jnp.float32)
        var = jnp.ones((64,), jnp.float32)
        s = gamma / jnp.sqrt(var + eps)
        p[name + "_w"] = (w * s[:, None]).astype(jnp.bfloat16)
        p[name + "_bias"] = (((b_conv - mean) * s) + beta).reshape(64, 1)
    # ChannelSoftmax: Linear(64,8,bias=False)->ReLU->Linear(8,64,bias=False), sa/ra branches
    # (torch weight layouts, used as column matmuls in the stats kernel).
    p["wsa1"] = _kaiming(ks[3], (8, 64), 64)
    p["wsa2"] = _kaiming(ks[4], (64, 8), 8)
    p["wra1"] = _kaiming(ks[5], (8, 64), 64)
    p["wra2"] = _kaiming(ks[6], (64, 8), 8)
    # predict: Conv2d(192, 1, 1) with bias; (64, 3) columns map to [out5 | att4 | att3].
    p["wpt"] = _kaiming(ks[7], (1, 192), 192).reshape(3, 64).T
    p["bp"] = jnp.zeros((1, 1), jnp.float32)
    return p


# TODO(synk): Res2Net50 backbone definition is not provided in the reference module;
# using a deterministic strided-avg-pool + fixed random 1x1 projection stand-in
# (plain-JAX glue) to produce out3/out4/out5 at strides 8/16/32 with 512/1024/2048 channels.
def standin_backbone(x_nchw, key):
    B, C, H, W = x_nchw.shape
    feats = []
    for i, (stride, cout) in enumerate([(8, 512), (16, 1024), (32, 2048)]):
        xp = x_nchw.reshape(B, C, H // stride, stride, W // stride, stride).mean(axis=(3, 5))
        proj = jax.random.normal(jax.random.fold_in(key, i), (C, cout), jnp.float32) * 0.1
        feats.append(jnp.einsum("bchw,cd->bdhw", xp, proj))   # NCHW
    return feats  # out3, out4, out5


def sranet_forward(x, params, backbone_key):
    out3, out4, out5 = standin_backbone(x, backbone_key)
    B = x.shape[0]
    H3, W3 = out3.shape[2:]
    H4, W4 = out4.shape[2:]
    H5, W5 = out5.shape[2:]
    N = H3 * W3

    def linear_block(feat, name):
        Bc, Cin, Hc, Wc = feat.shape
        x_cf = feat.reshape(Bc, Cin, Hc * Wc).astype(jnp.bfloat16)   # free NCHW -> (B, C, HW)
        return conv1x1_bn_relu(x_cf, params[name + "_w"], params[name + "_bias"])

    o5c = linear_block(out5, "l5").reshape(B, 64, H5, W5)    # (B, 64, H5, W5) bf16
    o4c = linear_block(out4, "l4").reshape(B, 64, H4, W4)
    o3c = linear_block(out3, "l3")                           # (B, 64, N) bf16

    # Separable bilinear upsample of the tiny o5/o4 maps to out3 resolution, then flatten.
    o5u = upsample_bilinear_cf(o5c, H3, W3).reshape(B, 64, N).astype(jnp.bfloat16)
    o4u = upsample_bilinear_cf(o4c, H3, W3).reshape(B, 64, N).astype(jnp.bfloat16)

    pred = sranet_head(o5u, o4u, o3c,
                       params["wsa1"], params["wsa2"],
                       params["wra1"], params["wra2"],
                       params["wpt"], params["bp"])          # (B, 1, N) f32
    return pred.reshape(B, 1, H3, W3)                        # NCHW, out3 resolution


if __name__ == "__main__":
    key = jax.random.PRNGKey(0)
    kx, kp, kb = jax.random.split(key, 3)
    x = jax.random.normal(kx, (2, 3, 64, 64), jnp.float32)   # B even: keeps both v7x TCs busy
    params = init_params(kp)

    fwd = jax.jit(sranet_forward)
    pred = jax.block_until_ready(fwd(x, params, kb))

    assert pred.shape == (2, 1, 8, 8), pred.shape
    assert bool(jnp.all(jnp.isfinite(pred)))
    print("KERNEL_OK")
</pallas_src>

<mosaic_0001>
module attributes {stable_mosaic.version = 11 : i64} {
  func.func @_conv_bn_relu_kernel(%arg0: i32, %arg1: i32, %arg2: memref<1x2048x128xbf16, #tpu.memory_space<vmem>>, %arg3: memref<64x2048xbf16, #tpu.memory_space<vmem>>, %arg4: memref<64x1xf32, #tpu.memory_space<vmem>>, %arg5: memref<1x64x128xbf16, #tpu.memory_space<vmem>>) attributes {dimension_semantics = [#tpu.dimension_semantics<parallel>, #tpu.dimension_semantics<parallel>], iteration_bounds = array<i64: 2, 1>, scalar_prefetch = 0 : i64, scratch_operands = 0 : i64, tpu.core_type = #tpu.core_type<tc>, window_params = [{transform_indices = @transform_0, window_bounds = array<i64: 1, 2048, 128>}, {pipeline_mode = #tpu.pipeline_mode<synchronous>, transform_indices = @transform_1, window_bounds = array<i64: 64, 2048>}, {pipeline_mode = #tpu.pipeline_mode<synchronous>, transform_indices = @transform_2, window_bounds = array<i64: 64, 1>}, {transform_indices = @transform_3, window_bounds = array<i64: 1, 64, 128>}]} {
    %c0 = arith.constant 0 : index
    %c0_0 = arith.constant 0 : index
    %0 = vector.load %arg3[%c0, %c0_0] : memref<64x2048xbf16, #tpu.memory_space<vmem>>, vector<64x2048xbf16>
    %c0_1 = arith.constant 0 : index
    %c0_2 = arith.constant 0 : index
    %c0_3 = arith.constant 0 : index
    %1 = vector.load %arg2[%c0_1, %c0_2, %c0_3] : memref<1x2048x128xbf16, #tpu.memory_space<vmem>>, vector<1x2048x128xbf16>
    %2 = vector.shape_cast %1 : vector<1x2048x128xbf16> to vector<2048x128xbf16>
    %cst = arith.constant dense<0.000000e+00> : vector<64x128xf32>
    %3 = tpu.matmul %0, %2, %cst {dimension_numbers = #tpu.dot_dimension_numbers<[1], [0], [0], [1], [0, 0, 1, 1], [], []>} : vector<64x2048xbf16>, vector<2048x128xbf16>, vector<64x128xf32> -> vector<64x128xf32>
    %c0_4 = arith.constant 0 : index
    %c0_5 = arith.constant 0 : index
    %4 = vector.load %arg4[%c0_4, %c0_5] : memref<64x1xf32, #tpu.memory_space<vmem>>, vector<64x1xf32>
    %5 = vector.broadcast %4 : vector<64x1xf32> to vector<64x128xf32>
    %6 = arith.addf %3, %5 : vector<64x128xf32>
    %cst_6 = arith.constant 0.000000e+00 : f32
    %7 = vector.broadcast %cst_6 : f32 to vector<64x128xf32>
    %8 = arith.maximumf %6, %7 : vector<64x128xf32>
    %9 = arith.truncf %8 : vector<64x128xf32> to vector<64x128xbf16>
    %c0_7 = arith.constant 0 : index
    %c0_8 = arith.constant 0 : index
    %c0_9 = arith.constant 0 : index
    %10 = vector.load %arg5[%c0_7, %c0_8, %c0_9] : memref<1x64x128xbf16, #tpu.memory_space<vmem>>, vector<1x64x128xbf16>
    %11 = vector.shape_cast %10 : vector<1x64x128xbf16> to vector<64x128xbf16>
    %12 = vector.shape_cast %9 : vector<64x128xbf16> to vector<1x64x128xbf16>
    tpu.vector_store %arg5[%c0_7, %c0_8, %c0_9], %12 {strides = array<i32>} : memref<1x64x128xbf16, #tpu.memory_space<vmem>>, vector<1x64x128xbf16>,
    return
  }
  func.func @transform_0(%arg0: i32, %arg1: i32) -> (i32, i32, i32) {
    %c0_i32 = arith.constant 0 : i32
    %c0_i32_0 = arith.constant 0 : i32
    return %arg0, %c0_i32, %arg1 : i32, i32, i32
  }
  func.func @transform_1(%arg0: i32, %arg1: i32) -> (i32, i32) {
    %c0_i32 = arith.constant 0 : i32
    %c0_i32_0 = arith.constant 0 : i32
    %c0_i32_1 = arith.constant 0 : i32
    return %c0_i32, %c0_i32_0 : i32, i32
  }
  func.func @transform_2(%arg0: i32, %arg1: i32) -> (i32, i32) {
    %c0_i32 = arith.constant 0 : i32
    %c0_i32_0 = arith.constant 0 : i32
    %c0_i32_1 = arith.constant 0 : i32
    return %c0_i32, %c0_i32_0 : i32, i32
  }
  func.func @transform_3(%arg0: i32, %arg1: i32) -> (i32, i32, i32) {
    %c0_i32 = arith.constant 0 : i32
    %c0_i32_0 = arith.constant 0 : i32
    return %arg0, %c0_i32, %arg1 : i32, i32, i32
  }
}

module attributes {stable_mosaic.version = 11 : i64} {
  func.func @_conv_bn_relu_kernel(%arg0: i32, %arg1: i32, %arg2: memref<1x1024x128xbf16, #tpu.memory_space<vmem>>, %arg3: memref<64x1024xbf16, #tpu.memory_space<vmem>>, %arg4: memref<64x1xf32, #tpu.memory_space<vmem>>, %arg5: memref<1x64x128xbf16, #tpu.memory_space<vmem>>) attributes {dimension_semantics = [#tpu.dimension_semantics<parallel>, #tpu.dimension_semantics<parallel>], iteration_bounds = array<i64: 2, 1>, scalar_prefetch = 0 : i64, scratch_operands = 0 : i64, tpu.core_type = #tpu.core_type<tc>, window_params = [{transform_indices = @transform_0, window_bounds = array<i64: 1, 1024, 128>}, {pipeline_mode = #tpu.pipeline_mode<synchronous>, transform_indices = @transform_1, window_bounds = array<i64: 64, 1024>}, {pipeline_mode = #tpu.pipeline_mode<synchronous>, transform_indices = @transform_2, window_bounds = array<i64: 64, 1>}, {transform_indices = @transform_3, window_bounds = array<i64: 1, 64, 128>}]} {
    %c0 = arith.constant 0 : index
    %c0_0 = arith.constant 0 : index
    %0 = vector.load %arg3[%c0, %c0_0] : memref<64x1024xbf16, #tpu.memory_space<vmem>>, vector<64x1024xbf16>
    %c0_1 = arith.constant 0 : index
    %c0_2 = arith.constant 0 : index
    %c0_3 = arith.constant 0 : index
    %1 = vector.load %arg2[%c0_1, %c0_2, %c0_3] : memref<1x1024x128xbf16, #tpu.memory_space<vmem>>, vector<1x1024x128xbf16>
    %2 = vector.shape_cast %1 : vector<1x1024x128xbf16> to vector<1024x128xbf16>
    %cst = arith.constant dense<0.000000e+00> : vector<64x128xf32>
    %3 = tpu.matmul %0, %2, %cst {dimension_numbers = #tpu.dot_dimension_numbers<[1], [0], [0], [1], [0, 0, 1, 1], [], []>} : vector<64x1024xbf16>, vector<1024x128xbf16>, vector<64x128xf32> -> vector<64x128xf32>
    %c0_4 = arith.constant 0 : index
    %c0_5 = arith.constant 0 : index
    %4 = vector.load %arg4[%c0_4, %c0_5] : memref<64x1xf32, #tpu.memory_space<vmem>>, vector<64x1xf32>
    %5 = vector.broadcast %4 : vector<64x1xf32> to vector<64x128xf32>
    %6 = arith.addf %3, %5 : vector<64x128xf32>
    %cst_6 = arith.constant 0.000000e+00 : f32
    %7 = vector.broadcast %cst_6 : f32 to vector<64x128xf32>
    %8 = arith.maximumf %6, %7 : vector<64x128xf32>
    %9 = arith.truncf %8 : vector<64x128xf32> to vector<64x128xbf16>
    %c0_7 = arith.constant 0 : index
    %c0_8 = arith.constant 0 : index
    %c0_9 = arith.constant 0 : index
    %10 = vector.load %arg5[%c0_7, %c0_8, %c0_9] : memref<1x64x128xbf16, #tpu.memory_space<vmem>>, vector<1x64x128xbf16>
    %11 = vector.shape_cast %10 : vector<1x64x128xbf16> to vector<64x128xbf16>
    %12 = vector.shape_cast %9 : vector<64x128xbf16> to vector<1x64x128xbf16>
    tpu.vector_store %arg5[%c0_7, %c0_8, %c0_9], %12 {strides = array<i32>} : memref<1x64x128xbf16, #tpu.memory_space<vmem>>, vector<1x64x128xbf16>,
    return
  }
  func.func @transform_0(%arg0: i32, %arg1: i32) -> (i32, i32, i32) {
    %c0_i32 = arith.constant 0 : i32
    %c0_i32_0 = arith.constant 0 : i32
    return %arg0, %c0_i32, %arg1 : i32, i32, i32
  }
  func.func @transform_1(%arg0: i32, %arg1: i32) -> (i32, i32) {
    %c0_i32 = arith.constant 0 : i32
    %c0_i32_0 = arith.constant 0 : i32
    %c0_i32_1 = arith.constant 0 : i32
    return %c0_i32, %c0_i32_0 : i32, i32
  }
  func.func @transform_2(%arg0: i32, %arg1: i32) -> (i32, i32) {
    %c0_i32 = arith.constant 0 : i32
    %c0_i32_0 = arith.constant 0 : i32
    %c0_i32_1 = arith.constant 0 : i32
    return %c0_i32, %c0_i32_0 : i32, i32
  }
  func.func @transform_3(%arg0: i32, %arg1: i32) -> (i32, i32, i32) {
    %c0_i32 = arith.constant 0 : i32
    %c0_i32_0 = arith.constant 0 : i32
    return %arg0, %c0_i32, %arg1 : i32, i32, i32
  }
}

module attributes {stable_mosaic.version = 11 : i64} {
  func.func @_conv_bn_relu_kernel(%arg0: i32, %arg1: i32, %arg2: memref<1x512x128xbf16, #tpu.memory_space<vmem>>, %arg3: memref<64x512xbf16, #tpu.memory_space<vmem>>, %arg4: memref<64x1xf32, #tpu.memory_space<vmem>>, %arg5: memref<1x64x128xbf16, #tpu.memory_space<vmem>>) attributes {dimension_semantics = [#tpu.dimension_semantics<parallel>, #tpu.dimension_semantics<parallel>], iteration_bounds = array<i64: 2, 1>, scalar_prefetch = 0 : i64, scratch_operands = 0 : i64, tpu.core_type = #tpu.core_type<tc>, window_params = [{transform_indices = @transform_0, window_bounds = array<i64: 1, 512, 128>}, {pipeline_mode = #tpu.pipeline_mode<synchronous>, transform_indices = @transform_1, window_bounds = array<i64: 64, 512>}, {pipeline_mode = #tpu.pipeline_mode<synchronous>, transform_indices = @transform_2, window_bounds = array<i64: 64, 1>}, {transform_indices = @transform_3, window_bounds = array<i64: 1, 64, 128>}]} {
    %c0 = arith.constant 0 : index
    %c0_0 = arith.constant 0 : index
    %0 = vector.load %arg3[%c0, %c0_0] : memref<64x512xbf16, #tpu.memory_space<vmem>>, vector<64x512xbf16>
    %c0_1 = arith.constant 0 : index
    %c0_2 = arith.constant 0 : index
    %c0_3 = arith.constant 0 : index
    %1 = vector.load %arg2[%c0_1, %c0_2, %c0_3] : memref<1x512x128xbf16, #tpu.memory_space<vmem>>, vector<1x512x128xbf16>
    %2 = vector.shape_cast %1 : vector<1x512x128xbf16> to vector<512x128xbf16>
    %cst = arith.constant dense<0.000000e+00> : vector<64x128xf32>
    %3 = tpu.matmul %0, %2, %cst {dimension_numbers = #tpu.dot_dimension_numbers<[1], [0], [0], [1], [0, 0, 1, 1], [], []>} : vector<64x512xbf16>, vector<512x128xbf16>, vector<64x128xf32> -> vector<64x128xf32>
    %c0_4 = arith.constant 0 : index
    %c0_5 = arith.constant 0 : index
    %4 = vector.load %arg4[%c0_4, %c0_5] : memref<64x1xf32, #tpu.memory_space<vmem>>, vector<64x1xf32>
    %5 = vector.broadcast %4 : vector<64x1xf32> to vector<64x128xf32>
    %6 = arith.addf %3, %5 : vector<64x128xf32>
    %cst_6 = arith.constant 0.000000e+00 : f32
    %7 = vector.broadcast %cst_6 : f32 to vector<64x128xf32>
    %8 = arith.maximumf %6, %7 : vector<64x128xf32>
    %9 = arith.truncf %8 : vector<64x128xf32> to vector<64x128xbf16>
    %c0_7 = arith.constant 0 : index
    %c0_8 = arith.constant 0 : index
    %c0_9 = arith.constant 0 : index
    %10 = vector.load %arg5[%c0_7, %c0_8, %c0_9] : memref<1x64x128xbf16, #tpu.memory_space<vmem>>, vector<1x64x128xbf16>
    %11 = vector.shape_cast %10 : vector<1x64x128xbf16> to vector<64x128xbf16>
    %12 = vector.shape_cast %9 : vector<64x128xbf16> to vector<1x64x128xbf16>
    tpu.vector_store %arg5[%c0_7, %c0_8, %c0_9], %12 {strides = array<i32>} : memref<1x64x128xbf16, #tpu.memory_space<vmem>>, vector<1x64x128xbf16>,
    return
  }
  func.func @transform_0(%arg0: i32, %arg1: i32) -> (i32, i32, i32) {
    %c0_i32 = arith.constant 0 : i32
    %c0_i32_0 = arith.constant 0 : i32
    return %arg0, %c0_i32, %arg1 : i32, i32, i32
  }
  func.func @transform_1(%arg0: i32, %arg1: i32) -> (i32, i32) {
    %c0_i32 = arith.constant 0 : i32
    %c0_i32_0 = arith.constant 0 : i32
    %c0_i32_1 = arith.constant 0 : i32
    return %c0_i32, %c0_i32_0 : i32, i32
  }
  func.func @transform_2(%arg0: i32, %arg1: i32) -> (i32, i32) {
    %c0_i32 = arith.constant 0 : i32
    %c0_i32_0 = arith.constant 0 : i32
    %c0_i32_1 = arith.constant 0 : i32
    return %c0_i32, %c0_i32_0 : i32, i32
  }
  func.func @transform_3(%arg0: i32, %arg1: i32) -> (i32, i32, i32) {
    %c0_i32 = arith.constant 0 : i32
    %c0_i32_0 = arith.constant 0 : i32
    return %arg0, %c0_i32, %arg1 : i32, i32, i32
  }
}

module attributes {stable_mosaic.version = 11 : i64} {
  func.func @_head_stats_kernel(%arg0: i32, %arg1: i32, %arg2: memref<1x64x128xbf16, #tpu.memory_space<vmem>>, %arg3: memref<1x64x128xbf16, #tpu.memory_space<vmem>>, %arg4: memref<1x64x128xbf16, #tpu.memory_space<vmem>>, %arg5: memref<8x64xf32, #tpu.memory_space<vmem>>, %arg6: memref<64x8xf32, #tpu.memory_space<vmem>>, %arg7: memref<8x64xf32, #tpu.memory_space<vmem>>, %arg8: memref<64x8xf32, #tpu.memory_space<vmem>>, %arg9: memref<64x3xf32, #tpu.memory_space<vmem>>, %arg10: memref<1x64x5xf32, #tpu.memory_space<vmem>>, %arg11: memref<64x1xf32, #tpu.memory_space<vmem>>, %arg12: memref<64x1xf32, #tpu.memory_space<vmem>>, %arg13: memref<64x1xf32, #tpu.memory_space<vmem>>, %arg14: memref<64x1xf32, #tpu.memory_space<vmem>>) attributes {dimension_semantics = [#tpu.dimension_semantics<parallel>, #tpu.dimension_semantics<arbitrary>], iteration_bounds = array<i64: 2, 1>, scalar_prefetch = 0 : i64, scratch_operands = 4 : i64, tpu.core_type = #tpu.core_type<tc>, window_params = [{transform_indices = @transform_0, window_bounds = array<i64: 1, 64, 128>}, {transform_indices = @transform_1, window_bounds = array<i64: 1, 64, 128>}, {transform_indices = @transform_2, window_bounds = array<i64: 1, 64, 128>}, {pipeline_mode = #tpu.pipeline_mode<synchronous>, transform_indices = @transform_3, window_bounds = array<i64: 8, 64>}, {pipeline_mode = #tpu.pipeline_mode<synchronous>, transform_indices = @transform_4, window_bounds = array<i64: 64, 8>}, {pipeline_mode = #tpu.pipeline_mode<synchronous>, transform_indices = @transform_5, window_bounds = array<i64: 8, 64>}, {pipeline_mode = #tpu.pipeline_mode<synchronous>, transform_indices = @transform_6, window_bounds = array<i64: 64, 8>}, {pipeline_mode = #tpu.pipeline_mode<synchronous>, transform_indices = @transform_7, window_bounds = array<i64: 64, 3>}, {transform_indices = @transform_8, window_bounds = array<i64: 1, 64, 5>}]} {
    %c0_i32 = arith.constant 0 : i32
    %0 = arith.cmpi eq, %arg1, %c0_i32 : i32
    %1 = arith.extui %0 : i1 to i32
    %c0_i32_0 = arith.constant 0 : i32
    %2 = arith.cmpi ne, %1, %c0_i32_0 : i32
    scf.if %2 {
      %cst_36 = arith.constant 0.000000e+00 : f32
      %53 = vector.broadcast %cst_36 : f32 to vector<64x1xf32>
      %c0_37 = arith.constant 0 : index
      %c0_38 = arith.constant 0 : index
      %54 = vector.load %arg11[%c0_37, %c0_38] : memref<64x1xf32, #tpu.memory_space<vmem>>, vector<64x1xf32>
      tpu.vector_store %arg11[%c0_37, %c0_38], %53 {strides = array<i32>} : memref<64x1xf32, #tpu.memory_space<vmem>>, vector<64x1xf32>,
      %cst_39 = arith.constant 0.000000e+00 : f32
      %55 = vector.broadcast %cst_39 : f32 to vector<64x1xf32>
      %c0_40 = arith.constant 0 : index
      %c0_41 = arith.constant 0 : index
      %56 = vector.load %arg12[%c0_40, %c0_41] : memref<64x1xf32, #tpu.memory_space<vmem>>, vector<64x1xf32>
      tpu.vector_store %arg12[%c0_40, %c0_41], %55 {strides = array<i32>} : memref<64x1xf32, #tpu.memory_space<vmem>>, vector<64x1xf32>,
      %cst_42 = arith.constant 0.000000e+00 : f32
      %57 = vector.broadcast %cst_42 : f32 to vector<64x1xf32>
      %c0_43 = arith.constant 0 : index
      %c0_44 = arith.constant 0 : index
      %58 = vector.load %arg13[%c0_43, %c0_44] : memref<64x1xf32, #tpu.memory_space<vmem>>, vector<64x1xf32>
      tpu.vector_store %arg13[%c0_43, %c0_44], %57 {strides = array<i32>} : memref<64x1xf32, #tpu.memory_space<vmem>>, vector<64x1xf32>,
      %cst_45 = arith.constant 0.000000e+00 : f32
      %59 = vector.broadcast %cst_45 : f32 to vector<64x1xf32>
      %c0_46 = arith.constant 0 : index
      %c0_47 = arith.constant 0 : index
      %60 = vector.load %arg14[%c0_46, %c0_47] : memref<64x1xf32, #tpu.memory_space<vmem>>, vector<64x1xf32>
      tpu.vector_store %arg14[%c0_46, %c0_47], %59 {strides = array<i32>} : memref<64x1xf32, #tpu.memory_space<vmem>>, vector<64x1xf32>,
      %cst_48 = arith.constant 0.000000e+00 : f32
      %61 = vector.broadcast %cst_48 : f32 to vector<1x64x5xf32>
      %c0_49 = arith.constant 0 : index
      %c0_50 = arith.constant 0 : index
      %c0_51 = arith.constant 0 : index
      %62 = vector.load %arg10[%c0_49, %c0_50, %c0_51] : memref<1x64x5xf32, #tpu.memory_space<vmem>>, vector<1x64x5xf32>
      tpu.vector_store %arg10[%c0_49, %c0_50, %c0_51], %61 {strides = array<i32>} : memref<1x64x5xf32, #tpu.memory_space<vmem>>, vector<1x64x5xf32>,
    } else {
    }
    %c0 = arith.constant 0 : index
    %c0_1 = arith.constant 0 : index
    %c0_2 = arith.constant 0 : index
    %3 = vector.load %arg2[%c0, %c0_1, %c0_2] : memref<1x64x128xbf16, #tpu.memory_space<vmem>>, vector<1x64x128xbf16>
    %4 = vector.shape_cast %3 : vector<1x64x128xbf16> to vector<64x128xbf16>
    %5 = arith.extf %4 : vector<64x128xbf16> to vector<64x128xf32>
    %c0_3 = arith.constant 0 : index
    %c0_4 = arith.constant 0 : index
    %c0_5 = arith.constant 0 : index
    %6 = vector.load %arg3[%c0_3, %c0_4, %c0_5] : memref<1x64x128xbf16, #tpu.memory_space<vmem>>, vector<1x64x128xbf16>
    %7 = vector.shape_cast %6 : vector<1x64x128xbf16> to vector<64x128xbf16>
    %8 = arith.extf %7 : vector<64x128xbf16> to vector<64x128xf32>
    %c0_6 = arith.constant 0 : index
    %c0_7 = arith.constant 0 : index
    %c0_8 = arith.constant 0 : index
    %9 = vector.load %arg4[%c0_6, %c0_7, %c0_8] : memref<1x64x128xbf16, #tpu.memory_space<vmem>>, vector<1x64x128xbf16>
    %10 = vector.shape_cast %9 : vector<1x64x128xbf16> to vector<64x128xbf16>
    %11 = arith.extf %10 : vector<64x128xbf16> to vector<64x128xf32>
    %12 = arith.mulf %8, %5 : vector<64x128xf32>
    %cst = arith.constant 5.000000e-01 : f32
    %13 = vector.broadcast %cst : f32 to vector<64x128xf32>
    %14 = arith.mulf %13, %5 : vector<64x128xf32>
    %15 = math.tanh %14 : vector<64x128xf32>
    %cst_9 = arith.constant 1.000000e+00 : f32
    %16 = vector.broadcast %cst_9 : f32 to vector<64x128xf32>
    %17 = arith.subf %16, %15 : vector<64x128xf32>
    %cst_10 = arith.constant 5.000000e-01 : f32
    %18 = vector.broadcast %cst_10 : f32 to vector<64x128xf32>
    %19 = arith.mulf %18, %17 : vector<64x128xf32>
    %20 = arith.mulf %19, %8 : vector<64x128xf32>
    %21 = arith.mulf %12, %11 : vector<64x128xf32>
    %cst_11 = arith.constant 5.000000e-01 : f32
    %22 = vector.broadcast %cst_11 : f32 to vector<64x128xf32>
    %23 = arith.mulf %22, %8 : vector<64x128xf32>
    %24 = math.tanh %23 : vector<64x128xf32>
    %cst_12 = arith.constant 1.000000e+00 : f32
    %25 = vector.broadcast %cst_12 : f32 to vector<64x128xf32>
    %26 = arith.subf %25, %24 : vector<64x128xf32>
    %cst_13 = arith.constant 5.000000e-01 : f32
    %27 = vector.broadcast %cst_13 : f32 to vector<64x128xf32>
    %28 = arith.mulf %27, %26 : vector<64x128xf32>
    %29 = arith.mulf %28, %11 : vector<64x128xf32>
    %c0_14 = arith.constant 0 : index
    %c0_15 = arith.constant 0 : index
    %30 = vector.load %arg11[%c0_14, %c0_15] : memref<64x1xf32, #tpu.memory_space<vmem>>, vector<64x1xf32>
    %cst_16 = arith.constant dense<0.000000e+00> : vector<64xf32>
    %31 = vector.multi_reduction <add>, %12, %cst_16 [1] : vector<64x128xf32> to vector<64xf32>
    %32 = vector.shape_cast %31 : vector<64xf32> to vector<64x1xf32>
    %33 = arith.addf %30, %32 : vector<64x1xf32>
    %c0_17 = arith.constant 0 : index
    %c0_18 = arith.constant 0 : index
    %34 = vector.load %arg11[%c0_17, %c0_18] : memref<64x1xf32, #tpu.memory_space<vmem>>, vector<64x1xf32>
    tpu.vector_store %arg11[%c0_17, %c0_18], %33 {strides = array<i32>} : memref<64x1xf32, #tpu.memory_space<vmem>>, vector<64x1xf32>,
    %c0_19 = arith.constant 0 : index
    %c0_20 = arith.constant 0 : index
    %35 = vector.load %arg12[%c0_19, %c0_20] : memref<64x1xf32, #tpu.memory_space<vmem>>, vector<64x1xf32>
    %cst_21 = arith.constant dense<0.000000e+00> : vector<64xf32>
    %36 = vector.multi_reduction <add>, %20, %cst_21 [1] : vector<64x128xf32> to vector<64xf32>
    %37 = vector.shape_cast %36 : vector<64xf32> to vector<64x1xf32>
    %38 = arith.addf %35, %37 : vector<64x1xf32>
    %c0_22 = arith.constant 0 : index
    %c0_23 = arith.constant 0 : index
    %39 = vector.load %arg12[%c0_22, %c0_23] : memref<64x1xf32, #tpu.memory_space<vmem>>, vector<64x1xf32>
    tpu.vector_store %arg12[%c0_22, %c0_23], %38 {strides = array<i32>} : memref<64x1xf32, #tpu.memory_space<vmem>>, vector<64x1xf32>,
    %c0_24 = arith.constant 0 : index
    %c0_25 = arith.constant 0 : index
    %40 = vector.load %arg13[%c0_24, %c0_25] : memref<64x1xf32, #tpu.memory_space<vmem>>, vector<64x1xf32>
    %cst_26 = arith.constant dense<0.000000e+00> : vector<64xf32>
    %41 = vector.multi_reduction <add>, %21, %cst_26 [1] : vector<64x128xf32> to vector<64xf32>
    %42 = vector.shape_cast %41 : vector<64xf32> to vector<64x1xf32>
    %43 = arith.addf %40, %42 : vector<64x1xf32>
    %c0_27 = arith.constant 0 : index
    %c0_28 = arith.constant 0 : index
    %44 = vector.load %arg13[%c0_27, %c0_28] : memref<64x1xf32, #tpu.memory_space<vmem>>, vector<64x1xf32>
    tpu.vector_store %arg13[%c0_27, %c0_28], %43 {strides = array<i32>} : memref<64x1xf32, #tpu.memory_space<vmem>>, vector<64x1xf32>,
    %c0_29 = arith.constant 0 : index
    %c0_30 = arith.constant 0 : index
    %45 = vector.load %arg14[%c0_29, %c0_30] : memref<64x1xf32, #tpu.memory_space<vmem>>, vector<64x1xf32>
    %cst_31 = arith.constant dense<0.000000e+00> : vector<64xf32>
    %46 = vector.multi_reduction <add>, %29, %cst_31 [1] : vector<64x128xf32> to vector<64xf32>
    %47 = vector.shape_cast %46 : vector<64xf32> to vector<64x1xf32>
    %48 = arith.addf %45, %47 : vector<64x1xf32>
    %c0_32 = arith.constant 0 : index
    %c0_33 = arith.constant 0 : index
    %49 = vector.load %arg14[%c0_32, %c0_33] : memref<64x1xf32, #tpu.memory_space<vmem>>, vector<64x1xf32>
    tpu.vector_store %arg14[%c0_32, %c0_33], %48 {strides = array<i32>} : memref<64x1xf32, #tpu.memory_space<vmem>>, vector<64x1xf32>,
    %c0_i32_34 = arith.constant 0 : i32
    %50 = arith.cmpi eq, %arg1, %c0_i32_34 : i32
    %51 = arith.extui %50 : i1 to i32
    %c0_i32_35 = arith.constant 0 : i32
    %52 = arith.cmpi ne, %51, %c0_i32_35 : i32
    scf.if %52 {
      %c0_36 = arith.constant 0 : index
      %c0_37 = arith.constant 0 : index
      %53 = vector.load %arg5[%c0_36, %c0_37] : memref<8x64xf32, #tpu.memory_space<vmem>>, vector<8x64xf32>
      %c0_38 = arith.constant 0 : index
      %c0_39 = arith.constant 0 : index
      %54 = vector.load %arg6[%c0_38, %c0_39] : memref<64x8xf32, #tpu.memory_space<vmem>>, vector<64x8xf32>
      %c0_40 = arith.constant 0 : index
      %c0_41 = arith.constant 0 : index
      %55 = vector.load %arg7[%c0_40, %c0_41] : memref<8x64xf32, #tpu.memory_space<vmem>>, vector<8x64xf32>
      %c0_42 = arith.constant 0 : index
      %c0_43 = arith.constant 0 : index
      %56 = vector.load %arg8[%c0_42, %c0_43] : memref<64x8xf32, #tpu.memory_space<vmem>>, vector<64x8xf32>
      %c0_44 = arith.constant 0 : index
      %c0_45 = arith.constant 0 : index
      %57 = vector.load %arg11[%c0_44, %c0_45] : memref<64x1xf32, #tpu.memory_space<vmem>>, vector<64x1xf32>
      %c0_46 = arith.constant 0 : index
      %c0_47 = arith.constant 0 : index
      %58 = vector.load %arg12[%c0_46, %c0_47] : memref<64x1xf32, #tpu.memory_space<vmem>>, vector<64x1xf32>
      %cst_48 = arith.constant 1.562500e-02 : f32
      %59 = vector.broadcast %cst_48 : f32 to vector<64x1xf32>
      %60 = arith.mulf %57, %59 : vector<64x1xf32>
      %cst_49 = arith.constant dense<0.000000e+00> : vector<8x1xf32>
      %61 = tpu.matmul %53, %60, %cst_49 {dimension_numbers = #tpu.dot_dimension_numbers<[1], [0], [0], [1], [0, 0, 1, 1], [], []>} : vector<8x64xf32>, vector<64x1xf32>, vector<8x1xf32> -> vector<8x1xf32>
      %cst_50 = arith.constant 0.000000e+00 : f32
      %62 = vector.broadcast %cst_50 : f32 to vector<8x1xf32>
      %63 = arith.maximumf %61, %62 : vector<8x1xf32>
      %cst_51 = arith.constant 1.562500e-02 : f32
      %64 = vector.broadcast %cst_51 : f32 to vector<64x1xf32>
      %65 = arith.mulf %58, %64 : vector<64x1xf32>
      %cst_52 = arith.constant dense<0.000000e+00> : vector<8x1xf32>
      %66 = tpu.matmul %55, %65, %cst_52 {dimension_numbers = #tpu.dot_dimension_numbers<[1], [0], [0], [1], [0, 0, 1, 1], [], []>} : vector<8x64xf32>, vector<64x1xf32>, vector<8x1xf32> -> vector<8x1xf32>
      %cst_53 = arith.constant 0.000000e+00 : f32
      %67 = vector.broadcast %cst_53 : f32 to vector<8x1xf32>
      %68 = arith.maximumf %66, %67 : vector<8x1xf32>
      %cst_54 = arith.constant dense<0.000000e+00> : vector<64x1xf32>
      %69 = tpu.matmul %54, %63, %cst_54 {dimension_numbers = #tpu.dot_dimension_numbers<[1], [0], [0], [1], [0, 0, 1, 1], [], []>} : vector<64x8xf32>, vector<8x1xf32>, vector<64x1xf32> -> vector<64x1xf32>
      %cst_55 = arith.constant dense<0.000000e+00> : vector<64x1xf32>
      %70 = tpu.matmul %56, %68, %cst_55 {dimension_numbers = #tpu.dot_dimension_numbers<[1], [0], [0], [1], [0, 0, 1, 1], [], []>} : vector<64x8xf32>, vector<8x1xf32>, vector<64x1xf32> -> vector<64x1xf32>
      %71 = arith.maximumf %69, %70 : vector<64x1xf32>
      %72 = arith.subf %69, %71 : vector<64x1xf32>
      %73 = math.exp %72 : vector<64x1xf32>
      %74 = arith.subf %70, %71 : vector<64x1xf32>
      %75 = math.exp %74 : vector<64x1xf32>
      %76 = arith.addf %73, %75 : vector<64x1xf32>
      %77 = tpu.reciprocal %76 {approx = true} : vector<64x1xf32> -> vector<64x1xf32>
      %78 = arith.mulf %73, %77 : vector<64x1xf32>
      %79 = arith.mulf %75, %77 : vector<64x1xf32>
      %c0_56 = arith.constant 0 : index
      %c0_57 = arith.constant 0 : index
      %80 = vector.load %arg13[%c0_56, %c0_57] : memref<64x1xf32, #tpu.memory_space<vmem>>, vector<64x1xf32>
      %c0_58 = arith.constant 0 : index
      %c0_59 = arith.constant 0 : index
      %81 = vector.load %arg14[%c0_58, %c0_59] : memref<64x1xf32, #tpu.memory_space<vmem>>, vector<64x1xf32>
      %cst_60 = arith.constant 1.562500e-02 : f32
      %82 = vector.broadcast %cst_60 : f32 to vector<64x1xf32>
      %83 = arith.mulf %80, %82 : vector<64x1xf32>
      %cst_61 = arith.constant dense<0.000000e+00> : vector<8x1xf32>
      %84 = tpu.matmul %53, %83, %cst_61 {dimension_numbers = #tpu.dot_dimension_numbers<[1], [0], [0], [1], [0, 0, 1, 1], [], []>} : vector<8x64xf32>, vector<64x1xf32>, vector<8x1xf32> -> vector<8x1xf32>
      %cst_62 = arith.constant 0.000000e+00 : f32
      %85 = vector.broadcast %cst_62 : f32 to vector<8x1xf32>
      %86 = arith.maximumf %84, %85 : vector<8x1xf32>
      %cst_63 = arith.constant 1.562500e-02 : f32
      %87 = vector.broadcast %cst_63 : f32 to vector<64x1xf32>
      %88 = arith.mulf %81, %87 : vector<64x1xf32>
      %cst_64 = arith.constant dense<0.000000e+00> : vector<8x1xf32>
      %89 = tpu.matmul %55, %88, %cst_64 {dimension_numbers = #tpu.dot_dimension_numbers<[1], [0], [0], [1], [0, 0, 1, 1], [], []>} : vector<8x64xf32>, vector<64x1xf32>, vector<8x1xf32> -> vector<8x1xf32>
      %cst_65 = arith.constant 0.000000e+00 : f32
      %90 = vector.broadcast %cst_65 : f32 to vector<8x1xf32>
      %91 = arith.maximumf %89, %90 : vector<8x1xf32>
      %cst_66 = arith.constant dense<0.000000e+00> : vector<64x1xf32>
      %92 = tpu.matmul %54, %86, %cst_66 {dimension_numbers = #tpu.dot_dimension_numbers<[1], [0], [0], [1], [0, 0, 1, 1], [], []>} : vector<64x8xf32>, vector<8x1xf32>, vector<64x1xf32> -> vector<64x1xf32>
      %cst_67 = arith.constant dense<0.000000e+00> : vector<64x1xf32>
      %93 = tpu.matmul %56, %91, %cst_67 {dimension_numbers = #tpu.dot_dimension_numbers<[1], [0], [0], [1], [0, 0, 1, 1], [], []>} : vector<64x8xf32>, vector<8x1xf32>, vector<64x1xf32> -> vector<64x1xf32>
      %94 = arith.maximumf %92, %93 : vector<64x1xf32>
      %95 = arith.subf %92, %94 : vector<64x1xf32>
      %96 = math.exp %95 : vector<64x1xf32>
      %97 = arith.subf %93, %94 : vector<64x1xf32>
      %98 = math.exp %97 : vector<64x1xf32>
      %99 = arith.addf %96, %98 : vector<64x1xf32>
      %100 = tpu.reciprocal %99 {approx = true} : vector<64x1xf32> -> vector<64x1xf32>
      %101 = arith.mulf %96, %100 : vector<64x1xf32>
      %102 = arith.mulf %98, %100 : vector<64x1xf32>
      %c0_68 = arith.constant 0 : index
      %c0_69 = arith.constant 0 : index
      %103 = vector.load %arg9[%c0_68, %c0_69] : memref<64x3xf32, #tpu.memory_space<vmem>>, vector<64x3xf32>
      %104 = vector.extract_strided_slice %103 {offsets = [0, 0], sizes = [64, 1], strides = [1, 1]} : vector<64x3xf32> to vector<64x1xf32>
      %c0_70 = arith.constant 0 : index
      %c0_71 = arith.constant 0 : index
      %c0_72 = arith.constant 0 : index
      %105 = vector.load %arg10[%c0_70, %c0_71, %c0_72] : memref<1x64x5xf32, #tpu.memory_space<vmem>>, vector<1x64x1xf32>
      %106 = vector.shape_cast %105 : vector<1x64x1xf32> to vector<64x1xf32>
      %107 = vector.shape_cast %104 : vector<64x1xf32> to vector<1x64x1xf32>
      tpu.vector_store %arg10[%c0_70, %c0_71, %c0_72], %107 {strides = array<i32>} : memref<1x64x5xf32, #tpu.memory_space<vmem>>, vector<1x64x1xf32>,
      %108 = vector.extract_strided_slice %103 {offsets = [0, 1], sizes = [64, 1], strides = [1, 1]} : vector<64x3xf32> to vector<64x1xf32>
      %109 = arith.mulf %108, %78 : vector<64x1xf32>
      %c0_73 = arith.constant 0 : index
      %c0_74 = arith.constant 0 : index
      %c1 = arith.constant 1 : index
      %110 = vector.load %arg10[%c0_73, %c0_74, %c1] : memref<1x64x5xf32, #tpu.memory_space<vmem>>, vector<1x64x1xf32>
      %111 = vector.shape_cast %110 : vector<1x64x1xf32> to vector<64x1xf32>
      %112 = vector.shape_cast %109 : vector<64x1xf32> to vector<1x64x1xf32>
      tpu.vector_store %arg10[%c0_73, %c0_74, %c1], %112 {strides = array<i32>} : memref<1x64x5xf32, #tpu.memory_space<vmem>>, vector<1x64x1xf32>,
      %113 = vector.extract_strided_slice %103 {offsets = [0, 1], sizes = [64, 1], strides = [1, 1]} : vector<64x3xf32> to vector<64x1xf32>
      %114 = arith.mulf %113, %79 : vector<64x1xf32>
      %c0_75 = arith.constant 0 : index
      %c0_76 = arith.constant 0 : index
      %c2 = arith.constant 2 : index
      %115 = vector.load %arg10[%c0_75, %c0_76, %c2] : memref<1x64x5xf32, #tpu.memory_space<vmem>>, vector<1x64x1xf32>
      %116 = vector.shape_cast %115 : vector<1x64x1xf32> to vector<64x1xf32>
      %117 = vector.shape_cast %114 : vector<64x1xf32> to vector<1x64x1xf32>
      tpu.vector_store %arg10[%c0_75, %c0_76, %c2], %117 {strides = array<i32>} : memref<1x64x5xf32, #tpu.memory_space<vmem>>, vector<1x64x1xf32>,
      %118 = vector.extract_strided_slice %103 {offsets = [0, 2], sizes = [64, 1], strides = [1, 1]} : vector<64x3xf32> to vector<64x1xf32>
      %119 = arith.mulf %118, %101 : vector<64x1xf32>
      %c0_77 = arith.constant 0 : index
      %c0_78 = arith.constant 0 : index
      %c3 = arith.constant 3 : index
      %120 = vector.load %arg10[%c0_77, %c0_78, %c3] : memref<1x64x5xf32, #tpu.memory_space<vmem>>, vector<1x64x1xf32>
      %121 = vector.shape_cast %120 : vector<1x64x1xf32> to vector<64x1xf32>
      %122 = vector.shape_cast %119 : vector<64x1xf32> to vector<1x64x1xf32>
      tpu.vector_store %arg10[%c0_77, %c0_78, %c3], %122 {strides = array<i32>} : memref<1x64x5xf32, #tpu.memory_space<vmem>>, vector<1x64x1xf32>,
      %123 = vector.extract_strided_slice %103 {offsets = [0, 2], sizes = [64, 1], strides = [1, 1]} : vector<64x3xf32> to vector<64x1xf32>
      %124 = arith.mulf %123, %102 : vector<64x1xf32>
      %c0_79 = arith.constant 0 : index
      %c0_80 = arith.constant 0 : index
      %c4 = arith.constant 4 : index
      %125 = vector.load %arg10[%c0_79, %c0_80, %c4] : memref<1x64x5xf32, #tpu.memory_space<vmem>>, vector<1x64x1xf32>
      %126 = vector.shape_cast %125 : vector<1x64x1xf32> to vector<64x1xf32>
      %127 = vector.shape_cast %124 : vector<64x1xf32> to vector<1x64x1xf32>
      tpu.vector_store %arg10[%c0_79, %c0_80, %c4], %127 {strides = array<i32>} : memref<1x64x5xf32, #tpu.memory_space<vmem>>, vector<1x64x1xf32>,
    } else {
    }
    return
  }
  func.func @transform_0(%arg0: i32, %arg1: i32) -> (i32, i32, i32) {
    %c0_i32 = arith.constant 0 : i32
    %c0_i32_0 = arith.constant 0 : i32
    return %arg0, %c0_i32, %arg1 : i32, i32, i32
  }
  func.func @transform_1(%arg0: i32, %arg1: i32) -> (i32, i32, i32) {
    %c0_i32 = arith.constant 0 : i32
    %c0_i32_0 = arith.constant 0 : i32
    return %arg0, %c0_i32, %arg1 : i32, i32, i32
  }
  func.func @transform_2(%arg0: i32, %arg1: i32) -> (i32, i32, i32) {
    %c0_i32 = arith.constant 0 : i32
    %c0_i32_0 = arith.constant 0 : i32
    return %arg0, %c0_i32, %arg1 : i32, i32, i32
  }
  func.func @transform_3(%arg0: i32, %arg1: i32) -> (i32, i32) {
    %c0_i32 = arith.constant 0 : i32
    %c0_i32_0 = arith.constant 0 : i32
    %c0_i32_1 = arith.constant 0 : i32
    return %c0_i32, %c0_i32_0 : i32, i32
  }
  func.func @transform_4(%arg0: i32, %arg1: i32) -> (i32, i32) {
    %c0_i32 = arith.constant 0 : i32
    %c0_i32_0 = arith.constant 0 : i32
    %c0_i32_1 = arith.constant 0 : i32
    return %c0_i32, %c0_i32_0 : i32, i32
  }
  func.func @transform_5(%arg0: i32, %arg1: i32) -> (i32, i32) {
    %c0_i32 = arith.constant 0 : i32
    %c0_i32_0 = arith.constant 0 : i32
    %c0_i32_1 = arith.constant 0 : i32
    return %c0_i32, %c0_i32_0 : i32, i32
  }
  func.func @transform_6(%arg0: i32, %arg1: i32) -> (i32, i32) {
    %c0_i32 = arith.constant 0 : i32
    %c0_i32_0 = arith.constant 0 : i32
    %c0_i32_1 = arith.constant 0 : i32
    return %c0_i32, %c0_i32_0 : i32, i32
  }
  func.func @transform_7(%arg0: i32, %arg1: i32) -> (i32, i32) {
    %c0_i32 = arith.constant 0 : i32
    %c0_i32_0 = arith.constant 0 : i32
    %c0_i32_1 = arith.constant 0 : i32
    return %c0_i32, %c0_i32_0 : i32, i32
  }
  func.func @transform_8(%arg0: i32, %arg1: i32) -> (i32, i32, i32) {
    %c0_i32 = arith.constant 0 : i32
    %c0_i32_0 = arith.constant 0 : i32
    %c0_i32_1 = arith.constant 0 : i32
    return %arg0, %c0_i32, %c0_i32_0 : i32, i32, i32
  }
}

module attributes {stable_mosaic.version = 11 : i64} {
  func.func @_head_predict_kernel(%arg0: i32, %arg1: i32, %arg2: memref<1x64x128xbf16, #tpu.memory_space<vmem>>, %arg3: memref<1x64x128xbf16, #tpu.memory_space<vmem>>, %arg4: memref<1x64x128xbf16, #tpu.memory_space<vmem>>, %arg5: memref<1x64x5xf32, #tpu.memory_space<vmem>>, %arg6: memref<1x1xf32, #tpu.memory_space<vmem>>, %arg7: memref<1x1x128xf32, #tpu.memory_space<vmem>>) attributes {dimension_semantics = [#tpu.dimension_semantics<parallel>, #tpu.dimension_semantics<parallel>], iteration_bounds = array<i64: 2, 1>, scalar_prefetch = 0 : i64, scratch_operands = 0 : i64, tpu.core_type = #tpu.core_type<tc>, window_params = [{transform_indices = @transform_0, window_bounds = array<i64: 1, 64, 128>}, {transform_indices = @transform_1, window_bounds = array<i64: 1, 64, 128>}, {transform_indices = @transform_2, window_bounds = array<i64: 1, 64, 128>}, {transform_indices = @transform_3, window_bounds = array<i64: 1, 64, 5>}, {pipeline_mode = #tpu.pipeline_mode<synchronous>, transform_indices = @transform_4, window_bounds = array<i64: 1, 1>}, {transform_indices = @transform_5, window_bounds = array<i64: 1, 1, 128>}]} {
    %c0 = arith.constant 0 : index
    %c0_0 = arith.constant 0 : index
    %c0_1 = arith.constant 0 : index
    %0 = vector.load %arg2[%c0, %c0_0, %c0_1] : memref<1x64x128xbf16, #tpu.memory_space<vmem>>, vector<1x64x128xbf16>
    %1 = vector.shape_cast %0 : vector<1x64x128xbf16> to vector<64x128xbf16>
    %2 = arith.extf %1 : vector<64x128xbf16> to vector<64x128xf32>
    %c0_2 = arith.constant 0 : index
    %c0_3 = arith.constant 0 : index
    %c0_4 = arith.constant 0 : index
    %3 = vector.load %arg3[%c0_2, %c0_3, %c0_4] : memref<1x64x128xbf16, #tpu.memory_space<vmem>>, vector<1x64x128xbf16>
    %4 = vector.shape_cast %3 : vector<1x64x128xbf16> to vector<64x128xbf16>
    %5 = arith.extf %4 : vector<64x128xbf16> to vector<64x128xf32>
    %c0_5 = arith.constant 0 : index
    %c0_6 = arith.constant 0 : index
    %c0_7 = arith.constant 0 : index
    %6 = vector.load %arg4[%c0_5, %c0_6, %c0_7] : memref<1x64x128xbf16, #tpu.memory_space<vmem>>, vector<1x64x128xbf16>
    %7 = vector.shape_cast %6 : vector<1x64x128xbf16> to vector<64x128xbf16>
    %8 = arith.extf %7 : vector<64x128xbf16> to vector<64x128xf32>
    %9 = arith.mulf %5, %2 : vector<64x128xf32>
    %cst = arith.constant 5.000000e-01 : f32
    %10 = vector.broadcast %cst : f32 to vector<64x128xf32>
    %11 = arith.mulf %10, %2 : vector<64x128xf32>
    %12 = math.tanh %11 : vector<64x128xf32>
    %cst_8 = arith.constant 1.000000e+00 : f32
    %13 = vector.broadcast %cst_8 : f32 to vector<64x128xf32>
    %14 = arith.subf %13, %12 : vector<64x128xf32>
    %cst_9 = arith.constant 5.000000e-01 : f32
    %15 = vector.broadcast %cst_9 : f32 to vector<64x128xf32>
    %16 = arith.mulf %15, %14 : vector<64x128xf32>
    %17 = arith.mulf %16, %5 : vector<64x128xf32>
    %18 = arith.mulf %9, %8 : vector<64x128xf32>
    %cst_10 = arith.constant 5.000000e-01 : f32
    %19 = vector.broadcast %cst_10 : f32 to vector<64x128xf32>
    %20 = arith.mulf %19, %5 : vector<64x128xf32>
    %21 = math.tanh %20 : vector<64x128xf32>
    %cst_11 = arith.constant 1.000000e+00 : f32
    %22 = vector.broadcast %cst_11 : f32 to vector<64x128xf32>
    %23 = arith.subf %22, %21 : vector<64x128xf32>
    %cst_12 = arith.constant 5.000000e-01 : f32
    %24 = vector.broadcast %cst_12 : f32 to vector<64x128xf32>
    %25 = arith.mulf %24, %23 : vector<64x128xf32>
    %26 = arith.mulf %25, %8 : vector<64x128xf32>
    %c0_13 = arith.constant 0 : index
    %c0_14 = arith.constant 0 : index
    %c0_15 = arith.constant 0 : index
    %27 = vector.load %arg5[%c0_13, %c0_14, %c0_15] : memref<1x64x5xf32, #tpu.memory_space<vmem>>, vector<1x64x5xf32>
    %28 = vector.shape_cast %27 : vector<1x64x5xf32> to vector<64x5xf32>
    %29 = vector.extract_strided_slice %28 {offsets = [0, 0], sizes = [64, 1], strides = [1, 1]} : vector<64x5xf32> to vector<64x1xf32>
    %30 = vector.broadcast %29 : vector<64x1xf32> to vector<64x128xf32>
    %31 = arith.mulf %30, %2 : vector<64x128xf32>
    %32 = vector.extract_strided_slice %28 {offsets = [0, 1], sizes = [64, 1], strides = [1, 1]} : vector<64x5xf32> to vector<64x1xf32>
    %33 = vector.broadcast %32 : vector<64x1xf32> to vector<64x128xf32>
    %34 = arith.mulf %33, %9 : vector<64x128xf32>
    %35 = arith.addf %31, %34 : vector<64x128xf32>
    %36 = vector.extract_strided_slice %28 {offsets = [0, 2], sizes = [64, 1], strides = [1, 1]} : vector<64x5xf32> to vector<64x1xf32>
    %37 = vector.broadcast %36 : vector<64x1xf32> to vector<64x128xf32>
    %38 = arith.mulf %37, %17 : vector<64x128xf32>
    %39 = arith.addf %35, %38 : vector<64x128xf32>
    %40 = vector.extract_strided_slice %28 {offsets = [0, 3], sizes = [64, 1], strides = [1, 1]} : vector<64x5xf32> to vector<64x1xf32>
    %41 = vector.broadcast %40 : vector<64x1xf32> to vector<64x128xf32>
    %42 = arith.mulf %41, %18 : vector<64x128xf32>
    %43 = arith.addf %39, %42 : vector<64x128xf32>
    %44 = vector.extract_strided_slice %28 {offsets = [0, 4], sizes = [64, 1], strides = [1, 1]} : vector<64x5xf32> to vector<64x1xf32>
    %45 = vector.broadcast %44 : vector<64x1xf32> to vector<64x128xf32>
    %46 = arith.mulf %45, %26 : vector<64x128xf32>
    %47 = arith.addf %43, %46 : vector<64x128xf32>
    %cst_16 = arith.constant dense<0.000000e+00> : vector<128xf32>
    %48 = vector.multi_reduction <add>, %47, %cst_16 [0] : vector<64x128xf32> to vector<128xf32>
    %49 = vector.shape_cast %48 : vector<128xf32> to vector<1x128xf32>
    %c0_17 = arith.constant 0 : index
    %c0_18 = arith.constant 0 : index
    %50 = vector.load %arg6[%c0_17, %c0_18] : memref<1x1xf32, #tpu.memory_space<vmem>>, vector<1x1xf32>
    %51 = vector.broadcast %50 : vector<1x1xf32> to vector<1x128xf32>
    %52 = arith.addf %49, %51 : vector<1x128xf32>
    %c0_19 = arith.constant 0 : index
    %c0_20 = arith.constant 0 : index
    %c0_21 = arith.constant 0 : index
    %53 = vector.load %arg7[%c0_19, %c0_20, %c0_21] : memref<1x1x128xf32, #tpu.memory_space<vmem>>, vector<1x1x128xf32>
    %54 = vector.shape_cast %53 : vector<1x1x128xf32> to vector<1x128xf32>
    %55 = vector.shape_cast %52 : vector<1x128xf32> to vector<1x1x128xf32>
    tpu.vector_store %arg7[%c0_19, %c0_20, %c0_21], %55 {strides = array<i32>} : memref<1x1x128xf32, #tpu.memory_space<vmem>>, vector<1x1x128xf32>,
    return
  }
  func.func @transform_0(%arg0: i32, %arg1: i32) -> (i32, i32, i32) {
    %c0_i32 = arith.constant 0 : i32
    %c0_i32_0 = arith.constant 0 : i32
    return %arg0, %c0_i32, %arg1 : i32, i32, i32
  }
  func.func @transform_1(%arg0: i32, %arg1: i32) -> (i32, i32, i32) {
    %c0_i32 = arith.constant 0 : i32
    %c0_i32_0 = arith.constant 0 : i32
    return %arg0, %c0_i32, %arg1 : i32, i32, i32
  }
  func.func @transform_2(%arg0: i32, %arg1: i32) -> (i32, i32, i32) {
    %c0_i32 = arith.constant 0 : i32
    %c0_i32_0 = arith.constant 0 : i32
    return %arg0, %c0_i32, %arg1 : i32, i32, i32
  }
  func.func @transform_3(%arg0: i32, %arg1: i32) -> (i32, i32, i32) {
    %c0_i32 = arith.constant 0 : i32
    %c0_i32_0 = arith.constant 0 : i32
    %c0_i32_1 = arith.constant 0 : i32
    return %arg0, %c0_i32, %c0_i32_0 : i32, i32, i32
  }
  func.func @transform_4(%arg0: i32, %arg1: i32) -> (i32, i32) {
    %c0_i32 = arith.constant 0 : i32
    %c0_i32_0 = arith.constant 0 : i32
    %c0_i32_1 = arith.constant 0 : i32
    return %c0_i32, %c0_i32_0 : i32, i32
  }
  func.func @transform_5(%arg0: i32, %arg1: i32) -> (i32, i32, i32) {
    %c0_i32 = arith.constant 0 : i32
    %c0_i32_0 = arith.constant 0 : i32
    return %arg0, %c0_i32, %arg1 : i32, i32, i32
  }
}

</mosaic_0001>

<llo_original>
// kernel: sranet_forward.5
$region0: #{sranet_forward.5}
  #allocation0 [shape = 'u32[]', space=smem, size = 0x4, offset = 0x4, fixed_abs, tag = 'smem constant byte address 0x4 - core index']
  #allocation1 [shape = 'u32[72,128]{1,0:T(1,128)}', space=vmem, size = 0x9000, scoped, tag = 'internal scratch']
  %s0 = inlined_call_operand.vmem [shape: bf16[2,2048,128], index: 0, kind: input, shape index: {}]
  %s1 = inlined_call_operand.vmem [shape: bf16[64,2048], index: 1, kind: input, shape index: {}]
  %s2 = inlined_call_operand.vmem [shape: f32[64,1], index: 2, kind: input, shape index: {}]
  %s3 = inlined_call_operand.vmem [shape: bf16[2,64,128], index: 3, kind: output, shape index: {}]
  %s4 = sld [smem:[#allocation0]]
  $region45: #{sranet_forward.5} parent=0
    _
  %s6 = ssub.s32 1, %s4
  %s7 = scalar_select 0, %s6, %s4
  loop: start=0, step=1, limit=4
  $region2: #{sranet_forward.5} parent=0 // loop_pre_header
    _
  $region3: #{sranet_forward.5} parent=0 // loop_header
    %s9 = sphi 0, %s13
    %p10 = scmp.ge.s32.totalorder %s9, 4
    %s16 = sphi 0, %s28
    %s17 = sphi 0, %s24
    %s18 = sphi 0, %s16
    %s19 = sphi 0, %s17
    %s20 = sphi 0, %s18
    %s21 = sphi 0, %s19
    %s33 = sphi 0, %s35
    %s36 = sphi 0, %s33
    %s37 = sphi 0, %s36
    %s53 = sphi 0, %s37
    %s57 = sphi 0, %s57
    %s59 = sphi 0, %s57
    %s60 = sphi 0, %s59
    %s74 = sphi 0, %s60
    %s78 = sphi 0, %s78
    %s80 = sphi 0, %s78
    %s81 = sphi 0, %s80
    %s95 = sphi 0, %s81
    %s103 = sphi 0, %s105
    %s106 = sphi 0, %s103
    %s107 = sphi 0, %s106
    %s123 = sphi 0, %s107
  $region4: #{sranet_forward.5} parent=0 // loop_header_branch
    %12 = sbr.rel (%p10) target = $region8
  $region5: #{sranet_forward.5} parent=0 // loop_body
    %s14 = ssub.s32 %s9, 1
    %s15 = ssub.s32 %s9, 2
    %s22 = sadd.s32 1, %s17
    %p23 = scmp.ge.s32.totalorder %s22, 1
    %s24 = scalar_select %p23, 0, %s22
    %s25 = sadd.s32 1, %s16
    %s26 = scalar_select %p23, %s25, %s16
    %p27 = scmp.ge.s32.totalorder %s26, 2
    %s28 = scalar_select %p27, 0, %s26
    %s29 = ssub.s32 %s16, %s28
    %s30 = ssub.s32 %s17, %s24
    %s31 = sor.u32 %s29, %s30
    %p32 = scmp.eq.s32.totalorder %s31, 0
    %s34 = sadd.s32 %s33, 1
    %s35 = scalar_select %p32, %s33, %s34
    %p38 = pneg %p32
    %p39 = scmp.eq.s32.totalorder %s9, 1
    %p40 = por %p38, %p39
    %p41 = scmp.ne.s32.totalorder %s33, %s36
    %p42 = scmp.eq.s32.totalorder %s9, 0
    %p43 = por %p41, %p42
    %p44 = scmp.ne.s32.totalorder %s33, %s36
    %p45 = scmp.eq.s32.totalorder %s14, 1
    %p46 = por %p44, %p45
    %p47 = scmp.ne.s32.totalorder %s36, %s37
    %p48 = scmp.eq.s32.totalorder %s14, 0
    %p49 = por %p47, %p48
    %p50 = scmp.ne.s32.totalorder %s36, %s37
    %p51 = scmp.eq.s32.totalorder %s15, 1
    %p52 = por %p50, %p51
    %p54 = scmp.ne.s32.totalorder %s37, %s53
    %p55 = scmp.eq.s32.totalorder %s15, 0
    %p56 = por %p54, %p55
    %s58 = sadd.s32 %s57, 1
    %p61 = scmp.eq.s32.totalorder %s9, 1
    %p62 = scmp.ne.s32.totalorder %s57, %s59
    %p63 = scmp.eq.s32.totalorder %s9, 0
    %p64 = por %p62, %p63
    %p65 = scmp.ne.s32.totalorder %s57, %s59
    %p66 = scmp.eq.s32.totalorder %s14, 1
    %p67 = por %p65, %p66
    %p68 = scmp.ne.s32.totalorder %s59, %s60
    %p69 = scmp.eq.s32.totalorder %s14, 0
    %p70 = por %p68, %p69
    %p71 = scmp.ne.s32.totalorder %s59, %s60
    %p72 = scmp.eq.s32.totalorder %s15, 1
    %p73 = por %p71, %p72
    %p75 = scmp.ne.s32.totalorder %s60, %s74
    %p76 = scmp.eq.s32.totalorder %s15, 0
    %p77 = por %p75, %p76
    %s79 = sadd.s32 %s78, 1
    %p82 = scmp.eq.s32.totalorder %s9, 1
    %p83 = scmp.ne.s32.totalorder %s78, %s80
    %p84 = scmp.eq.s32.totalorder %s9, 0
    %p85 = por %p83, %p84
    %p86 = scmp.ne.s32.totalorder %s78, %s80
    %p87 = scmp.eq.s32.totalorder %s14, 1
    %p88 = por %p86, %p87
    %p89 = scmp.ne.s32.totalorder %s80, %s81
    %p90 = scmp.eq.s32.totalorder %s14, 0
    %p91 = por %p89, %p90
    %p92 = scmp.ne.s32.totalorder %s80, %s81
    %p93 = scmp.eq.s32.totalorder %s15, 1
    %p94 = por %p92, %p93
    %p96 = scmp.ne.s32.totalorder %s81, %s95
    %p97 = scmp.eq.s32.totalorder %s15, 0
    %p98 = por %p96, %p97
    %s99 = ssub.s32 %s16, %s28
    %s100 = ssub.s32 %s17, %s24
    %s101 = sor.u32 %s99, %s100
    %p102 = scmp.eq.s32.totalorder %s101, 0
    %s104 = sadd.s32 %s103, 1
    %s105 = scalar_select %p102, %s103, %s104
    %p108 = pneg %p102
    %p109 = scmp.eq.s32.totalorder %s9, 1
    %p110 = por %p108, %p109
    %p111 = scmp.ne.s32.totalorder %s103, %s106
    %p112 = scmp.eq.s32.totalorder %s9, 0
    %p113 = por %p111, %p112
    %p114 = scmp.ne.s32.totalorder %s103, %s106
    %p115 = scmp.eq.s32.totalorder %s14, 1
    %p116 = por %p114, %p115
    %p117 = scmp.ne.s32.totalorder %s106, %s107
    %p118 = scmp.eq.s32.totalorder %s14, 0
    %p119 = por %p117, %p118
    %p120 = scmp.ne.s32.totalorder %s106, %s107
    %p121 = scmp.eq.s32.totalorder %s15, 1
    %p122 = por %p120, %p121
    %p124 = scmp.ne.s32.totalorder %s107, %s123
    %p125 = scmp.eq.s32.totalorder %s15, 0
    %p126 = por %p124, %p125
    %p127 = scmp.le.s32.totalorder 1, %s9
    %p128 = scmp.lt.s32.totalorder %s9, 3
    %p129 = pnand %p127, %p128
    %p130 = pneg %p129
    // Predicated region
    $region9: #{sranet_forward.5} parent=5 // pred_check
      _
    $region10: #{sranet_forward.5} parent=5 // pred_check_branch
      %132 = sbr.rel (%p129) target = $region12
    $region11: #{sranet_forward.5} parent=5 // pred_region
      %s133 = ssub.s32 %s9, 1
      // Predicated region
      $region13: #{sranet_forward.5} parent=11 // pred_check
        %p134 = pneg %p70
      $region14: #{sranet_forward.5} parent=11 // pred_check_branch
        %136 = sbr.rel (%p134) target = $region16
      $region15: #{sranet_forward.5} parent=11 // pred_region
        _
      $region16: #{sranet_forward.5} parent=11 // pred_fallthru
        _
      // Predicated region
      $region17: #{sranet_forward.5} parent=11 // pred_check
        %p137 = pneg %p91
      $region18: #{sranet_forward.5} parent=11 // pred_check_branch
        %139 = sbr.rel (%p137) target = $region20
      $region19: #{sranet_forward.5} parent=11 // pred_region
        _
      $region20: #{sranet_forward.5} parent=11 // pred_fallthru
        _
    $region12: #{sranet_forward.5} parent=5 // pred_fallthru
      _
    %p140 = scmp.lt.s32.totalorder %s9, 2
    // Predicated region
    $region21: #{sranet_forward.5} parent=5 // pred_check
      %p141 = pneg %p140
    $region22: #{sranet_forward.5} parent=5 // pred_check_branch
      %143 = sbr.rel (%p141) target = $region24
    $region23: #{sranet_forward.5} parent=5 // pred_region
      // Predicated region
      $region25: #{sranet_forward.5} parent=23 // pred_check
        %p144 = pneg %p43
      $region26: #{sranet_forward.5} parent=23 // pred_check_branch
        %146 = sbr.rel (%p144) target = $region28
      $region27: #{sranet_forward.5} parent=23 // pred_region
        %p147 = scmp.lt.s32.totalorder %s16, 1
        %s148 = scalar_select %p147, %s16, 1
        %p149 = scmp.lt.s32.totalorder %s17, 0
        %s150 = scalar_select %p149, %s17, 0
        %s151 = smul.addr %s148, 256
        %s152 = sadd.s32 %s150, %s151
        %s153 = smul.addr %s152, 4
        %s154 = scalar_lea.vmem %s0, %s153
      $region28: #{sranet_forward.5} parent=23 // pred_fallthru
        _
    $region24: #{sranet_forward.5} parent=5 // pred_fallthru
      _
    %p155 = scmp.le.s32.totalorder 1, %s9
    %p156 = scmp.lt.s32.totalorder %s9, 3
    %p157 = pnand %p155, %p156
    %p158 = pneg %p157
    // Predicated region
    $region29: #{sranet_forward.5} parent=5 // pred_check
      _
    $region30: #{sranet_forward.5} parent=5 // pred_check_branch
      %160 = sbr.rel (%p157) target = $region32
    $region31: #{sranet_forward.5} parent=5 // pred_region
      %s161 = ssub.s32 %s9, 1
      %p162 = scmp.lt.s32.totalorder %s18, 1
      %s163 = scalar_select %p162, %s18, 1
      %p164 = scmp.lt.s32.totalorder %s19, 0
      %s165 = scalar_select %p164, %s19, 0
      %s166 = smul.addr %s163, 256
      %s167 = sadd.s32 %s165, %s166
      %s168 = smul.addr %s167, 4
      %s169 = scalar_lea.vmem %s0, %s168
      %p170 = pneg %p49
      %p171 = pneg %p46
      %p172 = pneg %p70
      %p173 = pneg %p67
      %p174 = pneg %p91
      %p175 = pneg %p88
      %p176 = pneg %p119
      %p177 = pneg %p116
      %p178 = scmp.lt.s32.totalorder %s18, 1
      %s179 = scalar_select %p178, %s18, 1
      %p180 = scmp.lt.s32.totalorder %s19, 0
      %s181 = scalar_select %p180, %s19, 0
      %s182 = smul.addr %s179, 8
      %s183 = sadd.s32 %s181, %s182
      %s184 = smul.addr %s183, 4
      %s185 = scalar_lea.vmem %s3, %s184
      %p186 = scmp.lt.s32.totalorder %s18, 1
      %s187 = scalar_select %p186, %s18, 1
      %p188 = scmp.lt.s32.totalorder %s19, 0
      %s189 = scalar_select %p188, %s19, 0
      %s190 = smul.addr %s187, 256
      %s191 = sadd.s32 %s189, %s190
      %s192 = smul.addr %s191, 4
      %s193 = scalar_lea.vmem %s0, %s192
      %p194 = scmp.lt.s32.totalorder %s18, 1
      %s195 = scalar_select %p194, %s18, 1
      %p196 = scmp.lt.s32.totalorder %s19, 0
      %s197 = scalar_select %p196, %s19, 0
      %s198 = smul.addr %s195, 8
      %s199 = sadd.s32 %s197, %s198
      %s200 = smul.addr %s199, 4
      %s201 = scalar_lea.vmem %s3, %s200
      %v202 = vld [vmem:[%s1] sm:$0xff]
      %v203 = vld [vmem:[%s1 + $0x8] sm:$0xff]
      %v204 = vld [vmem:[%s1 + $0x10] sm:$0xff]
      %v205 = vld [vmem:[%s1 + $0x18] sm:$0xff]
      %v206 = vld [vmem:[%s1 + $0x20] sm:$0xff]
      %v207 = vld [vmem:[%s1 + $0x28] sm:$0xff]
      %v208 = vld [vmem:[%s1 + $0x30] sm:$0xff]
      %v209 = vld [vmem:[%s1 + $0x38] sm:$0xff]
      %v210 = vld [vmem:[%s1 + $0x40] sm:$0xff]
      %v211 = vld [vmem:[%s1 + $0x48] sm:$0xff]
      %v212 = vld [vmem:[%s1 + $0x50] sm:$0xff]
      %v213 = vld [vmem:[%s1 + $0x58] sm:$0xff]
      %v214 = vld [vmem:[%s1 + $0x60] sm:$0xff]
      %v215 = vld [vmem:[%s1 + $0x68] sm:$0xff]
      %v216 = vld [vmem:[%s1 + $0x70] sm:$0xff]
      %v217 = vld [vmem:[%s1 + $0x78] sm:$0xff]
      %v218 = vld [vmem:[%s1 + $0x80] sm:$0xff]
      %v219 = vld [vmem:[%s1 + $0x88] sm:$0xff]
      %v220 = vld [vmem:[%s1 + $0x90] sm:$0xff]
      %v221 = vld [vmem:[%s1 + $0x98] sm:$0xff]
      %v222 = vld [vmem:[%s1 + $0xa0] sm:$0xff]
      %v223 = vld [vmem:[%s1 + $0xa8] sm:$0xff]
      %v224 = vld [vmem:[%s1 + $0xb0] sm:$0xff]
      %v225 = vld [vmem:[%s1 + $0xb8] sm:$0xff]
      %v226 = vld [vmem:[%s1 + $0xc0] sm:$0xff]
      %v227 = vld [vmem:[%s1 + $0xc8] sm:$0xff]
      %v228 = vld [vmem:[%s1 + $0xd0] sm:$0xff]
      %v229 = vld [vmem:[%s1 + $0xd8] sm:$0xff]
      %v230 = vld [vmem:[%s1 + $0xe0] sm:$0xff]
      %v231 = vld [vmem:[%s1 + $0xe8] sm:$0xff]
      %v232 = vld [vmem:[%s1 + $0xf0] sm:$0xff]
      %v233 = vld [vmem:[%s1 + $0xf8] sm:$0xff]
      %v234 = vld [vmem:[%s1 + $0x100] sm:$0xff]
      %v235 = vld [vmem:[%s1 + $0x108] sm:$0xff]
      %v236 = vld [vmem:[%s1 + $0x110] sm:$0xff]
      %v237 = vld [vmem:[%s1 + $0x118] sm:$0xff]
      %v238 = vld [vmem:[%s1 + $0x120] sm:$0xff]
      %v239 = vld [vmem:[%s1 + $0x128] sm:$0xff]
      %v240 = vld [vmem:[%s1 + $0x130] sm:$0xff]
      %v241 = vld [vmem:[%s1 + $0x138] sm:$0xff]
      %v242 = vld [vmem:[%s1 + $0x140] sm:$0xff]
      %v243 = vld [vmem:[%s1 + $0x148] sm:$0xff]
      %v244 = vld [vmem:[%s1 + $0x150] sm:$0xff]
      %v245 = vld [vmem:[%s1 + $0x158] sm:$0xff]
      %v246 = vld [vmem:[%s1 + $0x160] sm:$0xff]
      %v247 = vld [vmem:[%s1 + $0x168] sm:$0xff]
      %v248 = vld [vmem:[%s1 + $0x170] sm:$0xff]
      %v249 = vld [vmem:[%s1 + $0x178] sm:$0xff]
      %v250 = vld [vmem:[%s1 + $0x180] sm:$0xff]
      %v251 = vld [vmem:[%s1 + $0x188] sm:$0xff]
      %v252 = vld [vmem:[%s1 + $0x190] sm:$0xff]
      %v253 = vld [vmem:[%s1 + $0x198] sm:$0xff]
      %v254 = vld [vmem:[%s1 + $0x1a0] sm:$0xff]
      %v255 = vld [vmem:[%s1 + $0x1a8] sm:$0xff]
      %v256 = vld [vmem:[%s1 + $0x1b0] sm:$0xff]
      %v257 = vld [vmem:[%s1 + $0x1b8] sm:$0xff]
      %v258 = vld [vmem:[%s1 + $0x1c0] sm:$0xff]
      %v259 = vld [vmem:[%s1 + $0x1c8] sm:$0xff]
      %v260 = vld [vmem:[%s1 + $0x1d0] sm:$0xff]
      %v261 = vld [vmem:[%s1 + $0x1d8] sm:$0xff]
      %v262 = vld [vmem:[%s1 + $0x1e0] sm:$0xff]
      %v263 = vld [vmem:[%s1 + $0x1e8] sm:$0xff]
      %v264 = vld [vmem:[%s1 + $0x1f0] sm:$0xff]
      %v265 = vld [vmem:[%s1 + $0x1f8] sm:$0xff]
      %v266 = vld [vmem:[%s193] sm:$0xf]
      %v267 = vld [vmem:[%s193 + $0x4] sm:$0xf]
      %v268 = vld [vmem:[%s193 + $0x8] sm:$0xf]
      %v269 = vld [vmem:[%s193 + $0xc] sm:$0xf]
      %v270 = vld [vmem:[%s193 + $0x10] sm:$0xf]
      %v271 = vld [vmem:[%s193 + $0x14] sm:$0xf]
      %v272 = vld [vmem:[%s193 + $0x18] sm:$0xf]
      %v273 = vld [vmem:[%s193 + $0x1c] sm:$0xf]
      %v274 = vld [vmem:[%s193 + $0x20] sm:$0xf]
      %v275 = vld [vmem:[%s193 + $0x24] sm:$0xf]
      %v276 = vld [vmem:[%s193 + $0x28] sm:$0xf]
      %v277 = vld [vmem:[%s193 + $0x2c] sm:$0xf]
      %v278 = vld [vmem:[%s193 + $0x30] sm:$0xf]
      %v279 = vld [vmem:[%s193 + $0x34] sm:$0xf]
      %v280 = vld [vmem:[%s193 + $0x38] sm:$0xf]
      %v281 = vld [vmem:[%s193 + $0x3c] sm:$0xf]
      %v282 = vld [vmem:[%s193 + $0x40] sm:$0xf]
      %v283 = vld [vmem:[%s193 + $0x44] sm:$0xf]
      %v284 = vld [vmem:[%s193 + $0x48] sm:$0xf]
      %v285 = vld [vmem:[%s193 + $0x4c] sm:$0xf]
      %v286 = vld [vmem:[%s193 + $0x50] sm:$0xf]
      %v287 = vld [vmem:[%s193 + $0x54] sm:$0xf]
      %v288 = vld [vmem:[%s193 + $0x58] sm:$0xf]
      %v289 = vld [vmem:[%s193 + $0x5c] sm:$0xf]
      %v290 = vld [vmem:[%s193 + $0x60] sm:$0xf]
      %v291 = vld [vmem:[%s193 + $0x64] sm:$0xf]
      %v292 = vld [vmem:[%s193 + $0x68] sm:$0xf]
      %v293 = vld [vmem:[%s193 + $0x6c] sm:$0xf]
      %v294 = vld [vmem:[%s193 + $0x70] sm:$0xf]
      %v295 = vld [vmem:[%s193 + $0x74] sm:$0xf]
      %v296 = vld [vmem:[%s193 + $0x78] sm:$0xf]
      %v297 = vld [vmem:[%s193 + $0x7c] sm:$0xf]
      %v298 = vld [vmem:[%s193 + $0x80] sm:$0xf]
      %v299 = vld [vmem:[%s193 + $0x84] sm:$0xf]
      %v300 = vld [vmem:[%s193 + $0x88] sm:$0xf]
      %v301 = vld [vmem:[%s193 + $0x8c] sm:$0xf]
      %v302 = vld [vmem:[%s193 + $0x90] sm:$0xf]
      %v303 = vld [vmem:[%s193 + $0x94] sm:$0xf]
      %v304 = vld [vmem:[%s193 + $0x98] sm:$0xf]
      %v305 = vld [vmem:[%s193 + $0x9c] sm:$0xf]
      %v306 = vld [vmem:[%s193 + $0xa0] sm:$0xf]
      %v307 = vld [vmem:[%s193 + $0xa4] sm:$0xf]
      %v308 = vld [vmem:[%s193 + $0xa8] sm:$0xf]
      %v309 = vld [vmem:[%s193 + $0xac] sm:$0xf]
      %v310 = vld [vmem:[%s193 + $0xb0] sm:$0xf]
      %v311 = vld [vmem:[%s193 + $0xb4] sm:$0xf]
      %v312 = vld [vmem:[%s193 + $0xb8] sm:$0xf]
      %v313 = vld [vmem:[%s193 + $0xbc] sm:$0xf]
      %v314 = vld [vmem:[%s193 + $0xc0] sm:$0xf]
      %v315 = vld [vmem:[%s193 + $0xc4] sm:$0xf]
      %v316 = vld [vmem:[%s193 + $0xc8] sm:$0xf]
      %v317 = vld [vmem:[%s193 + $0xcc] sm:$0xf]
      %v318 = vld [vmem:[%s193 + $0xd0] sm:$0xf]
      %v319 = vld [vmem:[%s193 + $0xd4] sm:$0xf]
      %v320 = vld [vmem:[%s193 + $0xd8] sm:$0xf]
      %v321 = vld [vmem:[%s193 + $0xdc] sm:$0xf]
      %v322 = vld [vmem:[%s193 + $0xe0] sm:$0xf]
      %v323 = vld [vmem:[%s193 + $0xe4] sm:$0xf]
      %v324 = vld [vmem:[%s193 + $0xe8] sm:$0xf]
      %v325 = vld [vmem:[%s193 + $0xec] sm:$0xf]
      %v326 = vld [vmem:[%s193 + $0xf0] sm:$0xf]
      %v327 = vld [vmem:[%s193 + $0xf4] sm:$0xf]
      %v328 = vld [vmem:[%s193 + $0xf8] sm:$0xf]
      %v329 = vld [vmem:[%s193 + $0xfc] sm:$0xf]
      %v330 = vld [vmem:[%s193 + $0x100] sm:$0xf]
      %v331 = vld [vmem:[%s193 + $0x104] sm:$0xf]
      %v332 = vld [vmem:[%s193 + $0x108] sm:$0xf]
      %v333 = vld [vmem:[%s193 + $0x10c] sm:$0xf]
      %v334 = vld [vmem:[%s193 + $0x110] sm:$0xf]
      %v335 = vld [vmem:[%s193 + $0x114] sm:$0xf]
      %v336 = vld [vmem:[%s193 + $0x118] sm:$0xf]
      %v337 = vld [vmem:[%s193 + $0x11c] sm:$0xf]
      %v338 = vld [vmem:[%s193 + $0x120] sm:$0xf]
      %v339 = vld [vmem:[%s193 + $0x124] sm:$0xf]
      %v340 = vld [vmem:[%s193 + $0x128] sm:$0xf]
      %v341 = vld [vmem:[%s193 + $0x12c] sm:$0xf]
      %v342 = vld [vmem:[%s193 + $0x130] sm:$0xf]
      %v343 = vld [vmem:[%s193 + $0x134] sm:$0xf]
      %v344 = vld [vmem:[%s193 + $0x138] sm:$0xf]
      %v345 = vld [vmem:[%s193 + $0x13c] sm:$0xf]
      %v346 = vld [vmem:[%s193 + $0x140] sm:$0xf]
      %v347 = vld [vmem:[%s193 + $0x144] sm:$0xf]
      %v348 = vld [vmem:[%s193 + $0x148] sm:$0xf]
      %v349 = vld [vmem:[%s193 + $0x14c] sm:$0xf]
      %v350 = vld [vmem:[%s193 + $0x150] sm:$0xf]
      %v351 = vld [vmem:[%s193 + $0x154] sm:$0xf]
      %v352 = vld [vmem:[%s193 + $0x158] sm:$0xf]
      %v353 = vld [vmem:[%s193 + $0x15c] sm:$0xf]
      %v354 = vld [vmem:[%s193 + $0x160] sm:$0xf]
      %v355 = vld [vmem:[%s193 + $0x164] sm:$0xf]
      %v356 = vld [vmem:[%s193 + $0x168] sm:$0xf]
      %v357 = vld [vmem:[%s193 + $0x16c] sm:$0xf]
      %v358 = vld [vmem:[%s193 + $0x170] sm:$0xf]
      %v359 = vld [vmem:[%s193 + $0x174] sm:$0xf]
      %v360 = vld [vmem:[%s193 + $0x178] sm:$0xf]
      %v361 = vld [vmem:[%s193 + $0x17c] sm:$0xf]
      %v362 = vld [vmem:[%s193 + $0x180] sm:$0xf]
      %v363 = vld [vmem:[%s193 + $0x184] sm:$0xf]
      %v364 = vld [vmem:[%s193 + $0x188] sm:$0xf]
      %v365 = vld [vmem:[%s193 + $0x18c] sm:$0xf]
      %v366 = vld [vmem:[%s193 + $0x190] sm:$0xf]
      %v367 = vld [vmem:[%s193 + $0x194] sm:$0xf]
      %v368 = vld [vmem:[%s193 + $0x198] sm:$0xf]
      %v369 = vld [vmem:[%s193 + $0x19c] sm:$0xf]
      %v370 = vld [vmem:[%s193 + $0x1a0] sm:$0xf]
      %v371 = vld [vmem:[%s193 + $0x1a4] sm:$0xf]
      %v372 = vld [vmem:[%s193 + $0x1a8] sm:$0xf]
      %v373 = vld [vmem:[%s193 + $0x1ac] sm:$0xf]
      %v374 = vld [vmem:[%s193 + $0x1b0] sm:$0xf]
      %v375 = vld [vmem:[%s193 + $0x1b4] sm:$0xf]
      %v376 = vld [vmem:[%s193 + $0x1b8] sm:$0xf]
      %v377 = vld [vmem:[%s193 + $0x1bc] sm:$0xf]
      %v378 = vld [vmem:[%s193 + $0x1c0] sm:$0xf]
      %v379 = vld [vmem:[%s193 + $0x1c4] sm:$0xf]
      %v380 = vld [vmem:[%s193 + $0x1c8] sm:$0xf]
      %v381 = vld [vmem:[%s193 + $0x1cc] sm:$0xf]
      %v382 = vld [vmem:[%s193 + $0x1d0] sm:$0xf]
      %v383 = vld [vmem:[%s193 + $0x1d4] sm:$0xf]
      %v384 = vld [vmem:[%s193 + $0x1d8] sm:$0xf]
      %v385 = vld [vmem:[%s193 + $0x1dc] sm:$0xf]
      %v386 = vld [vmem:[%s193 + $0x1e0] sm:$0xf]
      %v387 = vld [vmem:[%s193 + $0x1e4] sm:$0xf]
      %v388 = vld [vmem:[%s193 + $0x1e8] sm:$0xf]
      %v389 = vld [vmem:[%s193 + $0x1ec] sm:$0xf]
      %v390 = vld [vmem:[%s193 + $0x1f0] sm:$0xf]
      %v391 = vld [vmem:[%s193 + $0x1f4] sm:$0xf]
      %v392 = vld [vmem:[%s193 + $0x1f8] sm:$0xf]
      %v393 = vld [vmem:[%s193 + $0x1fc] sm:$0xf]
      %v394 = vld [vmem:[%s193 + $0x200] sm:$0xf]
      %v395 = vld [vmem:[%s193 + $0x204] sm:$0xf]
      %v396 = vld [vmem:[%s193 + $0x208] sm:$0xf]
      %v397 = vld [vmem:[%s193 + $0x20c] sm:$0xf]
      %v398 = vld [vmem:[%s193 + $0x210] sm:$0xf]
      %v399 = vld [vmem:[%s193 + $0x214] sm:$0xf]
      %v400 = vld [vmem:[%s193 + $0x218] sm:$0xf]
      %v401 = vld [vmem:[%s193 + $0x21c] sm:$0xf]
      %v402 = vld [vmem:[%s193 + $0x220] sm:$0xf]
      %v403 = vld [vmem:[%s193 + $0x224] sm:$0xf]
      %v404 = vld [vmem:[%s193 + $0x228] sm:$0xf]
      %v405 = vld [vmem:[%s193 + $0x22c] sm:$0xf]
      %v406 = vld [vmem:[%s193 + $0x230] sm:$0xf]
      %v407 = vld [vmem:[%s193 + $0x234] sm:$0xf]
      %v408 = vld [vmem:[%s193 + $0x238] sm:$0xf]
      %v409 = vld [vmem:[%s193 + $0x23c] sm:$0xf]
      %v410 = vld [vmem:[%s193 + $0x240] sm:$0xf]
      %v411 = vld [vmem:[%s193 + $0x244] sm:$0xf]
      %v412 = vld [vmem:[%s193 + $0x248] sm:$0xf]
      %v413 = vld [vmem:[%s193 + $0x24c] sm:$0xf]
      %v414 = vld [vmem:[%s193 + $0x250] sm:$0xf]
      %v415 = vld [vmem:[%s193 + $0x254] sm:$0xf]
      %v416 = vld [vmem:[%s193 + $0x258] sm:$0xf]
      %v417 = vld [vmem:[%s193 + $0x25c] sm:$0xf]
      %v418 = vld [vmem:[%s193 + $0x260] sm:$0xf]
      %v419 = vld [vmem:[%s193 + $0x264] sm:$0xf]
      %v420 = vld [vmem:[%s193 + $0x268] sm:$0xf]
      %v421 = vld [vmem:[%s193 + $0x26c] sm:$0xf]
      %v422 = vld [vmem:[%s193 + $0x270] sm:$0xf]
      %v423 = vld [vmem:[%s193 + $0x274] sm:$0xf]
      %v424 = vld [vmem:[%s193 + $0x278] sm:$0xf]
      %v425 = vld [vmem:[%s193 + $0x27c] sm:$0xf]
      %v426 = vld [vmem:[%s193 + $0x280] sm:$0xf]
      %v427 = vld [vmem:[%s193 + $0x284] sm:$0xf]
      %v428 = vld [vmem:[%s193 + $0x288] sm:$0xf]
      %v429 = vld [vmem:[%s193 + $0x28c] sm:$0xf]
      %v430 = vld [vmem:[%s193 + $0x290] sm:$0xf]
      %v431 = vld [vmem:[%s193 + $0x294] sm:$0xf]
      %v432 = vld [vmem:[%s193 + $0x298] sm:$0xf]
      %v433 = vld [vmem:[%s193 + $0x29c] sm:$0xf]
      %v434 = vld [vmem:[%s193 + $0x2a0] sm:$0xf]
      %v435 = vld [vmem:[%s193 + $0x2a4] sm:$0xf]
      %v436 = vld [vmem:[%s193 + $0x2a8] sm:$0xf]
      %v437 = vld [vmem:[%s193 + $0x2ac] sm:$0xf]
      %v438 = vld [vmem:[%s193 + $0x2b0] sm:$0xf]
      %v439 = vld [vmem:[%s193 + $0x2b4] sm:$0xf]
      %v440 = vld [vmem:[%s193 + $0x2b8] sm:$0xf]
      %v441 = vld [vmem:[%s193 + $0x2bc] sm:$0xf]
      %v442 = vld [vmem:[%s193 + $0x2c0] sm:$0xf]
      %v443 = vld [vmem:[%s193 + $0x2c4] sm:$0xf]
      %v444 = vld [vmem:[%s193 + $0x2c8] sm:$0xf]
      %v445 = vld [vmem:[%s193 + $0x2cc] sm:$0xf]
      %v446 = vld [vmem:[%s193 + $0x2d0] sm:$0xf]
      %v447 = vld [vmem:[%s193 + $0x2d4] sm:$0xf]
      %v448 = vld [vmem:[%s193 + $0x2d8] sm:$0xf]
      %v449 = vld [vmem:[%s193 + $0x2dc] sm:$0xf]
      %v450 = vld [vmem:[%s193 + $0x2e0] sm:$0xf]
      %v451 = vld [vmem:[%s193 + $0x2e4] sm:$0xf]
      %v452 = vld [vmem:[%s193 + $0x2e8] sm:$0xf]
      %v453 = vld [vmem:[%s193 + $0x2ec] sm:$0xf]
      %v454 = vld [vmem:[%s193 + $0x2f0] sm:$0xf]
      %v455 = vld [vmem:[%s193 + $0x2f4] sm:$0xf]
      %v456 = vld [vmem:[%s193 + $0x2f8] sm:$0xf]
      %v457 = vld [vmem:[%s193 + $0x2fc] sm:$0xf]
      %v458 = vld [vmem:[%s193 + $0x300] sm:$0xf]
      %v459 = vld [vmem:[%s193 + $0x304] sm:$0xf]
      %v460 = vld [vmem:[%s193 + $0x308] sm:$0xf]
      %v461 = vld [vmem:[%s193 + $0x30c] sm:$0xf]
      %v462 = vld [vmem:[%s193 + $0x310] sm:$0xf]
      %v463 = vld [vmem:[%s193 + $0x314] sm:$0xf]
      %v464 = vld [vmem:[%s193 + $0x318] sm:$0xf]
      %v465 = vld [vmem:[%s193 + $0x31c] sm:$0xf]
      %v466 = vld [vmem:[%s193 + $0x320] sm:$0xf]
      %v467 = vld [vmem:[%s193 + $0x324] sm:$0xf]
      %v468 = vld [vmem:[%s193 + $0x328] sm:$0xf]
      %v469 = vld [vmem:[%s193 + $0x32c] sm:$0xf]
      %v470 = vld [vmem:[%s193 + $0x330] sm:$0xf]
      %v471 = vld [vmem:[%s193 + $0x334] sm:$0xf]
      %v472 = vld [vmem:[%s193 + $0x338] sm:$0xf]
      %v473 = vld [vmem:[%s193 + $0x33c] sm:$0xf]
      %v474 = vld [vmem:[%s193 + $0x340] sm:$0xf]
      %v475 = vld [vmem:[%s193 + $0x344] sm:$0xf]
      %v476 = vld [vmem:[%s193 + $0x348] sm:$0xf]
      %v477 = vld [vmem:[%s193 + $0x34c] sm:$0xf]
      %v478 = vld [vmem:[%s193 + $0x350] sm:$0xf]
      %v479 = vld [vmem:[%s193 + $0x354] sm:$0xf]
      %v480 = vld [vmem:[%s193 + $0x358] sm:$0xf]
      %v481 = vld [vmem:[%s193 + $0x35c] sm:$0xf]
      %v482 = vld [vmem:[%s193 + $0x360] sm:$0xf]
      %v483 = vld [vmem:[%s193 + $0x364] sm:$0xf]
      %v484 = vld [vmem:[%s193 + $0x368] sm:$0xf]
      %v485 = vld [vmem:[%s193 + $0x36c] sm:$0xf]
      %v486 = vld [vmem:[%s193 + $0x370] sm:$0xf]
      %v487 = vld [vmem:[%s193 + $0x374] sm:$0xf]
      %v488 = vld [vmem:[%s193 + $0x378] sm:$0xf]
      %v489 = vld [vmem:[%s193 + $0x37c] sm:$0xf]
      %v490 = vld [vmem:[%s193 + $0x380] sm:$0xf]
      %v491 = vld [vmem:[%s193 + $0x384] sm:$0xf]
      %v492 = vld [vmem:[%s193 + $0x388] sm:$0xf]
      %v493 = vld [vmem:[%s193 + $0x38c] sm:$0xf]
      %v494 = vld [vmem:[%s193 + $0x390] sm:$0xf]
      %v495 = vld [vmem:[%s193 + $0x394] sm:$0xf]
      %v496 = vld [vmem:[%s193 + $0x398] sm:$0xf]
      %v497 = vld [vmem:[%s193 + $0x39c] sm:$0xf]
      %v498 = vld [vmem:[%s193 + $0x3a0] sm:$0xf]
      %v499 = vld [vmem:[%s193 + $0x3a4] sm:$0xf]
      %v500 = vld [vmem:[%s193 + $0x3a8] sm:$0xf]
      %v501 = vld [vmem:[%s193 + $0x3ac] sm:$0xf]
      %v502 = vld [vmem:[%s193 + $0x3b0] sm:$0xf]
      %v503 = vld [vmem:[%s193 + $0x3b4] sm:$0xf]
      %v504 = vld [vmem:[%s193 + $0x3b8] sm:$0xf]
      %v505 = vld [vmem:[%s193 + $0x3bc] sm:$0xf]
      %v506 = vld [vmem:[%s193 + $0x3c0] sm:$0xf]
      %v507 = vld [vmem:[%s193 + $0x3c4] sm:$0xf]
      %v508 = vld [vmem:[%s193 + $0x3c8] sm:$0xf]
      %v509 = vld [vmem:[%s193 + $0x3cc] sm:$0xf]
      %v510 = vld [vmem:[%s193 + $0x3d0] sm:$0xf]
      %v511 = vld [vmem:[%s193 + $0x3d4] sm:$0xf]
      %v512 = vld [vmem:[%s193 + $0x3d8] sm:$0xf]
      %v513 = vld [vmem:[%s193 + $0x3dc] sm:$0xf]
      %v514 = vld [vmem:[%s193 + $0x3e0] sm:$0xf]
      %v515 = vld [vmem:[%s193 + $0x3e4] sm:$0xf]
      %v516 = vld [vmem:[%s193 + $0x3e8] sm:$0xf]
      %v517 = vld [vmem:[%s193 + $0x3ec] sm:$0xf]
      %v518 = vld [vmem:[%s193 + $0x3f0] sm:$0xf]
      %v519 = vld [vmem:[%s193 + $0x3f4] sm:$0xf]
      %v520 = vld [vmem:[%s193 + $0x3f8] sm:$0xf]
      %v521 = vld [vmem:[%s193 + $0x3fc] sm:$0xf]
      %v522 = vld [vmem:[%s2] sm:$0xff]
      %v523 = vld [vmem:[%s2 + $0x8] sm:$0xff]
      %v524 = vld [vmem:[%s2 + $0x10] sm:$0xff]
      %v525 = vld [vmem:[%s2 + $0x18] sm:$0xff]
      %v526 = vld [vmem:[%s2 + $0x20] sm:$0xff]
      %v527 = vld [vmem:[%s2 + $0x28] sm:$0xff]
      %v528 = vld [vmem:[%s2 + $0x30] sm:$0xff]
      %v529 = vld [vmem:[%s2 + $0x38] sm:$0xff]
      %531 = vset.pattern.permute.xlu0 0
      %532 = vperm.xlu0 %531, %v522
      %v533 = vpop.permute.xlu0 %532
      %536 = vset.pattern.permute.xlu0 0
      %537 = vperm.xlu0 %536, %v523
      %v538 = vpop.permute.xlu0 %537
      %541 = vset.pattern.permute.xlu0 0
      %542 = vperm.xlu0 %541, %v524
      %v543 = vpop.permute.xlu0 %542
      %546 = vset.pattern.permute.xlu0 0
      %547 = vperm.xlu0 %546, %v525
      %v548 = vpop.permute.xlu0 %547
      %551 = vset.pattern.permute.xlu0 0
      %552 = vperm.xlu0 %551, %v526
      %v553 = vpop.permute.xlu0 %552
      %556 = vset.pattern.permute.xlu0 0
      %557 = vperm.xlu0 %556, %v527
      %v558 = vpop.permute.xlu0 %557
      %561 = vset.pattern.permute.xlu0 0
      %562 = vperm.xlu0 %561, %v528
      %v563 = vpop.permute.xlu0 %562
      %566 = vset.pattern.permute.xlu0 0
      %567 = vperm.xlu0 %566, %v529
      %v568 = vpop.permute.xlu0 %567
      %v634 = vunpack.c.l.b16 %v202
      %v635 = vunpack.c.h.b16 %v202
      %v636 = vunpack.c.l.b16 %v203
      %v637 = vunpack.c.h.b16 %v203
      %v638 = vunpack.c.l.b16 %v204
      %v639 = vunpack.c.h.b16 %v204
      %v640 = vunpack.c.l.b16 %v205
      %v641 = vunpack.c.h.b16 %v205
      %v642 = vunpack.c.l.b16 %v206
      %v643 = vunpack.c.h.b16 %v206
      %v644 = vunpack.c.l.b16 %v207
      %v645 = vunpack.c.h.b16 %v207
      %v646 = vunpack.c.l.b16 %v208
      %v647 = vunpack.c.h.b16 %v208
      %v648 = vunpack.c.l.b16 %v209
      %v649 = vunpack.c.h.b16 %v209
      %v650 = vunpack.c.l.b16 %v210
      %v651 = vunpack.c.h.b16 %v210
      %v652 = vunpack.c.l.b16 %v211
      %v653 = vunpack.c.h.b16 %v211
      %v654 = vunpack.c.l.b16 %v212
      %v655 = vunpack.c.h.b16 %v212
      %v656 = vunpack.c.l.b16 %v213
      %v657 = vunpack.c.h.b16 %v213
      %v658 = vunpack.c.l.b16 %v214
      %v659 = vunpack.c.h.b16 %v214
      %v660 = vunpack.c.l.b16 %v215
      %v661 = vunpack.c.h.b16 %v215
      %v662 = vunpack.c.l.b16 %v216
      %v663 = vunpack.c.h.b16 %v216
      %v664 = vunpack.c.l.b16 %v217
      %v665 = vunpack.c.h.b16 %v217
      %v666 = vunpack.c.l.b16 %v218
      %v667 = vunpack.c.h.b16 %v218
      %v668 = vunpack.c.l.b16 %v219
      %v669 = vunpack.c.h.b16 %v219
      %v670 = vunpack.c.l.b16 %v220
      %v671 = vunpack.c.h.b16 %v220
      %v672 = vunpack.c.l.b16 %v221
      %v673 = vunpack.c.h.b16 %v221
      %v674 = vunpack.c.l.b16 %v222
      %v675 = vunpack.c.h.b16 %v222
      %v676 = vunpack.c.l.b16 %v223
      %v677 = vunpack.c.h.b16 %v223
      %v678 = vunpack.c.l.b16 %v224
      %v679 = vunpack.c.h.b16 %v224
      %v680 = vunpack.c.l.b16 %v225
      %v681 = vunpack.c.h.b16 %v225
      %v682 = vunpack.c.l.b16 %v226
      %v683 = vunpack.c.h.b16 %v226
      %v684 = vunpack.c.l.b16 %v227
      %v685 = vunpack.c.h.b16 %v227
      %v686 = vunpack.c.l.b16 %v228
      %v687 = vunpack.c.h.b16 %v228
      %v688 = vunpack.c.l.b16 %v229
      %v689 = vunpack.c.h.b16 %v229
      %v690 = vunpack.c.l.b16 %v230
      %v691 = vunpack.c.h.b16 %v230
      %v692 = vunpack.c.l.b16 %v231
      %v693 = vunpack.c.h.b16 %v231
      %v694 = vunpack.c.l.b16 %v232
      %v695 = vunpack.c.h.b16 %v232
      %v696 = vunpack.c.l.b16 %v233
      %v697 = vunpack.c.h.b16 %v233
      %v698 = vunpack.c.l.b16 %v234
      %v699 = vunpack.c.h.b16 %v234
      %v700 = vunpack.c.l.b16 %v235
      %v701 = vunpack.c.h.b16 %v235
      %v702 = vunpack.c.l.b16 %v236
      %v703 = vunpack.c.h.b16 %v236
      %v704 = vunpack.c.l.b16 %v237
      %v705 = vunpack.c.h.b16 %v237
      %v706 = vunpack.c.l.b16 %v238
      %v707 = vunpack.c.h.b16 %v238
      %v708 = vunpack.c.l.b16 %v239
      %v709 = vunpack.c.h.b16 %v239
      %v710 = vunpack.c.l.b16 %v240
      %v711 = vunpack.c.h.b16 %v240
      %v712 = vunpack.c.l.b16 %v241
      %v713 = vunpack.c.h.b16 %v241
      %v714 = vunpack.c.l.b16 %v242
      %v715 = vunpack.c.h.b16 %v242
      %v716 = vunpack.c.l.b16 %v243
      %v717 = vunpack.c.h.b16 %v243
      %v718 = vunpack.c.l.b16 %v244
      %v719 = vunpack.c.h.b16 %v244
      %v720 = vunpack.c.l.b16 %v245
      %v721 = vunpack.c.h.b16 %v245
      %v722 = vunpack.c.l.b16 %v246
      %v723 = vunpack.c.h.b16 %v246
      %v724 = vunpack.c.l.b16 %v247
      %v725 = vunpack.c.h.b16 %v247
      %v726 = vunpack.c.l.b16 %v248
      %v727 = vunpack.c.h.b16 %v248
      %v728 = vunpack.c.l.b16 %v249
      %v729 = vunpack.c.h.b16 %v249
      %v730 = vunpack.c.l.b16 %v250
      %v731 = vunpack.c.h.b16 %v250
      %v732 = vunpack.c.l.b16 %v251
      %v733 = vunpack.c.h.b16 %v251
      %v734 = vunpack.c.l.b16 %v252
      %v735 = vunpack.c.h.b16 %v252
      %v736 = vunpack.c.l.b16 %v253
      %v737 = vunpack.c.h.b16 %v253
      %v738 = vunpack.c.l.b16 %v254
      %v739 = vunpack.c.h.b16 %v254
      %v740 = vunpack.c.l.b16 %v255
      %v741 = vunpack.c.h.b16 %v255
      %v742 = vunpack.c.l.b16 %v256
      %v743 = vunpack.c.h.b16 %v256
      %v744 = vunpack.c.l.b16 %v257
      %v745 = vunpack.c.h.b16 %v257
      %v746 = vunpack.c.l.b16 %v258
      %v747 = vunpack.c.h.b16 %v258
      %v748 = vunpack.c.l.b16 %v259
      %v749 = vunpack.c.h.b16 %v259
      %v750 = vunpack.c.l.b16 %v260
      %v751 = vunpack.c.h.b16 %v260
      %v752 = vunpack.c.l.b16 %v261
      %v753 = vunpack.c.h.b16 %v261
      %v754 = vunpack.c.l.b16 %v262
      %v755 = vunpack.c.h.b16 %v262
      %v756 = vunpack.c.l.b16 %v263
      %v757 = vunpack.c.h.b16 %v263
      %v758 = vunpack.c.l.b16 %v264
      %v759 = vunpack.c.h.b16 %v264
      %v760 = vunpack.c.l.b16 %v265
      %v761 = vunpack.c.h.b16 %v265
      %v762 = vpack.c.b16 %v650, %v634
      %v763 = vpack.c.b16 %v651, %v635
      %v764 = vpack.c.b16 %v652, %v636
      %v765 = vpack.c.b16 %v653, %v637
      %v766 = vpack.c.b16 %v654, %v638
      %v767 = vpack.c.b16 %v655, %v639
      %v768 = vpack.c.b16 %v656, %v640
      %v769 = vpack.c.b16 %v657, %v641
      %v770 = vpack.c.b16 %v658, %v642
      %v771 = vpack.c.b16 %v659, %v643
      %v772 = vpack.c.b16 %v660, %v644
      %v773 = vpack.c.b16 %v661, %v645
      %v774 = vpack.c.b16 %v662, %v646
      %v775 = vpack.c.b16 %v663, %v647
      %v776 = vpack.c.b16 %v664, %v648
      %v777 = vpack.c.b16 %v665, %v649
      %v778 = vpack.c.b16 %v682, %v666
      %v779 = vpack.c.b16 %v683, %v667
      %v780 = vpack.c.b16 %v684, %v668
      %v781 = vpack.c.b16 %v685, %v669
      %v782 = vpack.c.b16 %v686, %v670
      %v783 = vpack.c.b16 %v687, %v671
      %v784 = vpack.c.b16 %v688, %v672
      %v785 = vpack.c.b16 %v689, %v673
      %v786 = vpack.c.b16 %v690, %v674
      %v787 = vpack.c.b16 %v691, %v675
      %v788 = vpack.c.b16 %v692, %v676
      %v789 = vpack.c.b16 %v693, %v677
      %v790 = vpack.c.b16 %v694, %v678
      %v791 = vpack.c.b16 %v695, %v679
      %v792 = vpack.c.b16 %v696, %v680
      %v793 = vpack.c.b16 %v697, %v681
      %v794 = vpack.c.b16 %v714, %v698
      %v795 = vpack.c.b16 %v715, %v699
      %v796 = vpack.c.b16 %v716, %v700
      %v797 = vpack.c.b16 %v717, %v701
      %v798 = vpack.c.b16 %v718, %v702
      %v799 = vpack.c.b16 %v719, %v703
      %v800 = vpack.c.b16 %v720, %v704
      %v801 = vpack.c.b16 %v721, %v705
      %v802 = vpack.c.b16 %v722, %v706
      %v803 = vpack.c.b16 %v723, %v707
      %v804 = vpack.c.b16 %v724, %v708
      %v805 = vpack.c.b16 %v725, %v709
      %v806 = vpack.c.b16 %v726, %v710
      %v807 = vpack.c.b16 %v727, %v711
      %v808 = vpack.c.b16 %v728, %v712
      %v809 = vpack.c.b16 %v729, %v713
      %v810 = vpack.c.b16 %v746, %v730
      %v811 = vpack.c.b16 %v747, %v731
      %v812 = vpack.c.b16 %v748, %v732
      %v813 = vpack.c.b16 %v749, %v733
      %v814 = vpack.c.b16 %v750, %v734
      %v815 = vpack.c.b16 %v751, %v735
      %v816 = vpack.c.b16 %v752, %v736
      %v817 = vpack.c.b16 %v753, %v737
      %v818 = vpack.c.b16 %v754, %v738
      %v819 = vpack.c.b16 %v755, %v739
      %v820 = vpack.c.b16 %v756, %v740
      %v821 = vpack.c.b16 %v757, %v741
      %v822 = vpack.c.b16 %v758, %v742
      %v823 = vpack.c.b16 %v759, %v743
      %v824 = vpack.c.b16 %v760, %v744
      %v825 = vpack.c.b16 %v761, %v745
      %v1146 = vunpack.c.l.b16 %v266
      %v1147 = vunpack.c.l.b16 %v267
      %v1148 = vunpack.c.l.b16 %v268
      %v1149 = vunpack.c.l.b16 %v269
      %v1150 = vunpack.c.l.b16 %v270
      %v1151 = vunpack.c.l.b16 %v271
      %v1152 = vunpack.c.l.b16 %v272
      %v1153 = vunpack.c.l.b16 %v273
      %v1154 = vunpack.c.l.b16 %v274
      %v1155 = vunpack.c.l.b16 %v275
      %v1156 = vunpack.c.l.b16 %v276
      %v1157 = vunpack.c.l.b16 %v277
      %v1158 = vunpack.c.l.b16 %v278
      %v1159 = vunpack.c.l.b16 %v279
      %v1160 = vunpack.c.l.b16 %v280
      %v1161 = vunpack.c.l.b16 %v281
      %v1162 = vunpack.c.l.b16 %v282
      %v1163 = vunpack.c.l.b16 %v283
      %v1164 = vunpack.c.l.b16 %v284
      %v1165 = vunpack.c.l.b16 %v285
      %v1166 = vunpack.c.l.b16 %v286
      %v1167 = vunpack.c.l.b16 %v287
      %v1168 = vunpack.c.l.b16 %v288
      %v1169 = vunpack.c.l.b16 %v289
      %v1170 = vunpack.c.l.b16 %v290
      %v1171 = vunpack.c.l.b16 %v291
      %v1172 = vunpack.c.l.b16 %v292
      %v1173 = vunpack.c.l.b16 %v293
      %v1174 = vunpack.c.l.b16 %v294
      %v1175 = vunpack.c.l.b16 %v295
      %v1176 = vunpack.c.l.b16 %v296
      %v1177 = vunpack.c.l.b16 %v297
      %v1178 = vunpack.c.l.b16 %v298
      %v1179 = vunpack.c.l.b16 %v299
      %v1180 = vunpack.c.l.b16 %v300
      %v1181 = vunpack.c.l.b16 %v301
      %v1182 = vunpack.c.l.b16 %v302
      %v1183 = vunpack.c.l.b16 %v303
      %v1184 = vunpack.c.l.b16 %v304
      %v1185 = vunpack.c.l.b16 %v305
      %v1186 = vunpack.c.l.b16 %v306
      %v1187 = vunpack.c.l.b16 %v307
      %v1188 = vunpack.c.l.b16 %v308
      %v1189 = vunpack.c.l.b16 %v309
      %v1190 = vunpack.c.l.b16 %v310
      %v1191 = vunpack.c.l.b16 %v311
      %v1192 = vunpack.c.l.b16 %v312
      %v1193 = vunpack.c.l.b16 %v313
      %v1194 = vunpack.c.l.b16 %v314
      %v1195 = vunpack.c.l.b16 %v315
      %v1196 = vunpack.c.l.b16 %v316
      %v1197 = vunpack.c.l.b16 %v317
      %v1198 = vunpack.c.l.b16 %v318
      %v1199 = vunpack.c.l.b16 %v319
      %v1200 = vunpack.c.l.b16 %v320
      %v1201 = vunpack.c.l.b16 %v321
      %v1202 = vunpack.c.l.b16 %v322
      %v1203 = vunpack.c.l.b16 %v323
      %v1204 = vunpack.c.l.b16 %v324
      %v1205 = vunpack.c.l.b16 %v325
      %v1206 = vunpack.c.l.b16 %v326
      %v1207 = vunpack.c.l.b16 %v327
      %v1208 = vunpack.c.l.b16 %v328
      %v1209 = vunpack.c.l.b16 %v329
      %v1210 = vunpack.c.l.b16 %v330
      %v1211 = vunpack.c.l.b16 %v331
      %v1212 = vunpack.c.l.b16 %v332
      %v1213 = vunpack.c.l.b16 %v333
      %v1214 = vunpack.c.l.b16 %v334
      %v1215 = vunpack.c.l.b16 %v335
      %v1216 = vunpack.c.l.b16 %v336
      %v1217 = vunpack.c.l.b16 %v337
      %v1218 = vunpack.c.l.b16 %v338
      %v1219 = vunpack.c.l.b16 %v339
      %v1220 = vunpack.c.l.b16 %v340
      %v1221 = vunpack.c.l.b16 %v341
      %v1222 = vunpack.c.l.b16 %v342
      %v1223 = vunpack.c.l.b16 %v343
      %v1224 = vunpack.c.l.b16 %v344
      %v1225 = vunpack.c.l.b16 %v345
      %v1226 = vunpack.c.l.b16 %v346
      %v1227 = vunpack.c.l.b16 %v347
      %v1228 = vunpack.c.l.b16 %v348
      %v1229 = vunpack.c.l.b16 %v349
      %v1230 = vunpack.c.l.b16 %v350
      %v1231 = vunpack.c.l.b16 %v351
      %v1232 = vunpack.c.l.b16 %v352
      %v1233 = vunpack.c.l.b16 %v353
      %v1234 = vunpack.c.l.b16 %v354
      %v1235 = vunpack.c.l.b16 %v355
      %v1236 = vunpack.c.l.b16 %v356
      %v1237 = vunpack.c.l.b16 %v357
      %v1238 = vunpack.c.l.b16 %v358
      %v1239 = vunpack.c.l.b16 %v359
      %v1240 = vunpack.c.l.b16 %v360
      %v1241 = vunpack.c.l.b16 %v361
      %v1242 = vunpack.c.l.b16 %v362
      %v1243 = vunpack.c.l.b16 %v363
      %v1244 = vunpack.c.l.b16 %v364
      %v1245 = vunpack.c.l.b16 %v365
      %v1246 = vunpack.c.l.b16 %v366
      %v1247 = vunpack.c.l.b16 %v367
      %v1248 = vunpack.c.l.b16 %v368
      %v1249 = vunpack.c.l.b16 %v369
      %v1250 = vunpack.c.l.b16 %v370
      %v1251 = vunpack.c.l.b16 %v371
      %v1252 = vunpack.c.l.b16 %v372
      %v1253 = vunpack.c.l.b16 %v373
      %v1254 = vunpack.c.l.b16 %v374
      %v1255 = vunpack.c.l.b16 %v375
      %v1256 = vunpack.c.l.b16 %v376
      %v1257 = vunpack.c.l.b16 %v377
      %v1258 = vunpack.c.l.b16 %v378
      %v1259 = vunpack.c.l.b16 %v379
      %v1260 = vunpack.c.l.b16 %v380
      %v1261 = vunpack.c.l.b16 %v381
      %v1262 = vunpack.c.l.b16 %v382
      %v1263 = vunpack.c.l.b16 %v383
      %v1264 = vunpack.c.l.b16 %v384
      %v1265 = vunpack.c.l.b16 %v385
      %v1266 = vunpack.c.l.b16 %v386
      %v1267 = vunpack.c.l.b16 %v387
      %v1268 = vunpack.c.l.b16 %v388
      %v1269 = vunpack.c.l.b16 %v389
      %v1270 = vunpack.c.l.b16 %v390
      %v1271 = vunpack.c.l.b16 %v391
      %v1272 = vunpack.c.l.b16 %v392
      %v1273 = vunpack.c.l.b16 %v393
      %v1274 = vunpack.c.l.b16 %v394
      %v1275 = vunpack.c.l.b16 %v395
      %v1276 = vunpack.c.l.b16 %v396
      %v1277 = vunpack.c.l.b16 %v397
      %v1278 = vunpack.c.l.b16 %v398
      %v1279 = vunpack.c.l.b16 %v399
      %v1280 = vunpack.c.l.b16 %v400
      %v1281 = vunpack.c.l.b16 %v401
      %v1282 = vunpack.c.l.b16 %v402
      %v1283 = vunpack.c.l.b16 %v403
      %v1284 = vunpack.c.l.b16 %v404
      %v1285 = vunpack.c.l.b16 %v405
      %v1286 = vunpack.c.l.b16 %v406
      %v1287 = vunpack.c.l.b16 %v407
      %v1288 = vunpack.c.l.b16 %v408
      %v1289 = vunpack.c.l.b16 %v409
      %v1290 = vunpack.c.l.b16 %v410
      %v1291 = vunpack.c.l.b16 %v411
      %v1292 = vunpack.c.l.b16 %v412
      %v1293 = vunpack.c.l.b16 %v413
      %v1294 = vunpack.c.l.b16 %v414
      %v1295 = vunpack.c.l.b16 %v415
      %v1296 = vunpack.c.l.b16 %v416
      %v1297 = vunpack.c.l.b16 %v417
      %v1298 = vunpack.c.l.b16 %v418
      %v1299 = vunpack.c.l.b16 %v419
      %v1300 = vunpack.c.l.b16 %v420
      %v1301 = vunpack.c.l.b16 %v421
      %v1302 = vunpack.c.l.b16 %v422
      %v1303 = vunpack.c.l.b16 %v423
      %v1304 = vunpack.c.l.b16 %v424
      %v1305 = vunpack.c.l.b16 %v425
      %v1306 = vunpack.c.l.b16 %v426
      %v1307 = vunpack.c.l.b16 %v427
      %v1308 = vunpack.c.l.b16 %v428
      %v1309 = vunpack.c.l.b16 %v429
      %v1310 = vunpack.c.l.b16 %v430
      %v1311 = vunpack.c.l.b16 %v431
      %v1312 = vunpack.c.l.b16 %v432
      %v1313 = vunpack.c.l.b16 %v433
      %v1314 = vunpack.c.l.b16 %v434
      %v1315 = vunpack.c.l.b16 %v435
      %v1316 = vunpack.c.l.b16 %v436
      %v1317 = vunpack.c.l.b16 %v437
      %v1318 = vunpack.c.l.b16 %v438
      %v1319 = vunpack.c.l.b16 %v439
      %v1320 = vunpack.c.l.b16 %v440
      %v1321 = vunpack.c.l.b16 %v441
      %v1322 = vunpack.c.l.b16 %v442
      %v1323 = vunpack.c.l.b16 %v443
      %v1324 = vunpack.c.l.b16 %v444
      %v1325 = vunpack.c.l.b16 %v445
      %v1326 = vunpack.c.l.b16 %v446
      %v1327 = vunpack.c.l.b16 %v447
      %v1328 = vunpack.c.l.b16 %v448
      %v1329 = vunpack.c.l.b16 %v449
      %v1330 = vunpack.c.l.b16 %v450
      %v1331 = vunpack.c.l.b16 %v451
      %v1332 = vunpack.c.l.b16 %v452
      %v1333 = vunpack.c.l.b16 %v453
      %v1334 = vunpack.c.l.b16 %v454
      %v1335 = vunpack.c.l.b16 %v455
      %v1336 = vunpack.c.l.b16 %v456
      %v1337 = vunpack.c.l.b16 %v457
      %v1338 = vunpack.c.l.b16 %v458
      %v1339 = vunpack.c.l.b16 %v459
      %v1340 = vunpack.c.l.b16 %v460
      %v1341 = vunpack.c.l.b16 %v461
      %v1342 = vunpack.c.l.b16 %v462
      %v1343 = vunpack.c.l.b16 %v463
      %v1344 = vunpack.c.l.b16 %v464
      %v1345 = vunpack.c.l.b16 %v465
      %v1346 = vunpack.c.l.b16 %v466
      %v1347 = vunpack.c.l.b16 %v467
      %v1348 = vunpack.c.l.b16 %v468
      %v1349 = vunpack.c.l.b16 %v469
      %v1350 = vunpack.c.l.b16 %v470
      %v1351 = vunpack.c.l.b16 %v471
      %v1352 = vunpack.c.l.b16 %v472
      %v1353 = vunpack.c.l.b16 %v473
      %v1354 = vunpack.c.l.b16 %v474
      %v1355 = vunpack.c.l.b16 %v475
      %v1356 = vunpack.c.l.b16 %v476
      %v1357 = vunpack.c.l.b16 %v477
      %v1358 = vunpack.c.l.b16 %v478
      %v1359 = vunpack.c.l.b16 %v479
      %v1360 = vunpack.c.l.b16 %v480
      %v1361 = vunpack.c.l.b16 %v481
      %v1362 = vunpack.c.l.b16 %v482
      %v1363 = vunpack.c.l.b16 %v483
      %v1364 = vunpack.c.l.b16 %v484
      %v1365 = vunpack.c.l.b16 %v485
      %v1366 = vunpack.c.l.b16 %v486
      %v1367 = vunpack.c.l.b16 %v487
      %v1368 = vunpack.c.l.b16 %v488
      %v1369 = vunpack.c.l.b16 %v489
      %v1370 = vunpack.c.l.b16 %v490
      %v1371 = vunpack.c.l.b16 %v491
      %v1372 = vunpack.c.l.b16 %v492
      %v1373 = vunpack.c.l.b16 %v493
      %v1374 = vunpack.c.l.b16 %v494
      %v1375 = vunpack.c.l.b16 %v495
      %v1376 = vunpack.c.l.b16 %v496
      %v1377 = vunpack.c.l.b16 %v497
      %v1378 = vunpack.c.l.b16 %v498
      %v1379 = vunpack.c.l.b16 %v499
      %v1380 = vunpack.c.l.b16 %v500
      %v1381 = vunpack.c.l.b16 %v501
      %v1382 = vunpack.c.l.b16 %v502
      %v1383 = vunpack.c.l.b16 %v503
      %v1384 = vunpack.c.l.b16 %v504
      %v1385 = vunpack.c.l.b16 %v505
      %v1386 = vunpack.c.l.b16 %v506
      %v1387 = vunpack.c.l.b16 %v507
      %v1388 = vunpack.c.l.b16 %v508
      %v1389 = vunpack.c.l.b16 %v509
      %v1390 = vunpack.c.l.b16 %v510
      %v1391 = vunpack.c.l.b16 %v511
      %v1392 = vunpack.c.l.b16 %v512
      %v1393 = vunpack.c.l.b16 %v513
      %v1394 = vunpack.c.l.b16 %v514
      %v1395 = vunpack.c.l.b16 %v515
      %v1396 = vunpack.c.l.b16 %v516
      %v1397 = vunpack.c.l.b16 %v517
      %v1398 = vunpack.c.l.b16 %v518
      %v1399 = vunpack.c.l.b16 %v519
      %v1400 = vunpack.c.l.b16 %v520
      %v1401 = vunpack.c.l.b16 %v521
      %v1402 = vpack.c.b16 %v1147, %v1146
      %v1403 = vpack.c.b16 %v1149, %v1148
      %v1404 = vpack.c.b16 %v1151, %v1150
      %v1405 = vpack.c.b16 %v1153, %v1152
      %v1406 = vpack.c.b16 %v1155, %v1154
      %v1407 = vpack.c.b16 %v1157, %v1156
      %v1408 = vpack.c.b16 %v1159, %v1158
      %v1409 = vpack.c.b16 %v1161, %v1160
      %v1410 = vpack.c.b16 %v1163, %v1162
      %v1411 = vpack.c.b16 %v1165, %v1164
      %v1412 = vpack.c.b16 %v1167, %v1166
      %v1413 = vpack.c.b16 %v1169, %v1168
      %v1414 = vpack.c.b16 %v1171, %v1170
      %v1415 = vpack.c.b16 %v1173, %v1172
      %v1416 = vpack.c.b16 %v1175, %v1174
      %v1417 = vpack.c.b16 %v1177, %v1176
      %v1418 = vpack.c.b16 %v1179, %v1178
      %v1419 = vpack.c.b16 %v1181, %v1180
      %v1420 = vpack.c.b16 %v1183, %v1182
      %v1421 = vpack.c.b16 %v1185, %v1184
      %v1422 = vpack.c.b16 %v1187, %v1186
      %v1423 = vpack.c.b16 %v1189, %v1188
      %v1424 = vpack.c.b16 %v1191, %v1190
      %v1425 = vpack.c.b16 %v1193, %v1192
      %v1426 = vpack.c.b16 %v1195, %v1194
      %v1427 = vpack.c.b16 %v1197, %v1196
      %v1428 = vpack.c.b16 %v1199, %v1198
      %v1429 = vpack.c.b16 %v1201, %v1200
      %v1430 = vpack.c.b16 %v1203, %v1202
      %v1431 = vpack.c.b16 %v1205, %v1204
      %v1432 = vpack.c.b16 %v1207, %v1206
      %v1433 = vpack.c.b16 %v1209, %v1208
      %v1434 = vpack.c.b16 %v1211, %v1210
      %v1435 = vpack.c.b16 %v1213, %v1212
      %v1436 = vpack.c.b16 %v1215, %v1214
      %v1437 = vpack.c.b16 %v1217, %v1216
      %v1438 = vpack.c.b16 %v1219, %v1218
      %v1439 = vpack.c.b16 %v1221, %v1220
      %v1440 = vpack.c.b16 %v1223, %v1222
      %v1441 = vpack.c.b16 %v1225, %v1224
      %v1442 = vpack.c.b16 %v1227, %v1226
      %v1443 = vpack.c.b16 %v1229, %v1228
      %v1444 = vpack.c.b16 %v1231, %v1230
      %v1445 = vpack.c.b16 %v1233, %v1232
      %v1446 = vpack.c.b16 %v1235, %v1234
      %v1447 = vpack.c.b16 %v1237, %v1236
      %v1448 = vpack.c.b16 %v1239, %v1238
      %v1449 = vpack.c.b16 %v1241, %v1240
      %v1450 = vpack.c.b16 %v1243, %v1242
      %v1451 = vpack.c.b16 %v1245, %v1244
      %v1452 = vpack.c.b16 %v1247, %v1246
      %v1453 = vpack.c.b16 %v1249, %v1248
      %v1454 = vpack.c.b16 %v1251, %v1250
      %v1455 = vpack.c.b16 %v1253, %v1252
      %v1456 = vpack.c.b16 %v1255, %v1254
      %v1457 = vpack.c.b16 %v1257, %v1256
      %v1458 = vpack.c.b16 %v1259, %v1258
      %v1459 = vpack.c.b16 %v1261, %v1260
      %v1460 = vpack.c.b16 %v1263, %v1262
      %v1461 = vpack.c.b16 %v1265, %v1264
      %v1462 = vpack.c.b16 %v1267, %v1266
      %v1463 = vpack.c.b16 %v1269, %v1268
      %v1464 = vpack.c.b16 %v1271, %v1270
      %v1465 = vpack.c.b16 %v1273, %v1272
      %v1466 = vpack.c.b16 %v1275, %v1274
      %v1467 = vpack.c.b16 %v1277, %v1276
      %v1468 = vpack.c.b16 %v1279, %v1278
      %v1469 = vpack.c.b16 %v1281, %v1280
      %v1470 = vpack.c.b16 %v1283, %v1282
      %v1471 = vpack.c.b16 %v1285, %v1284
      %v1472 = vpack.c.b16 %v1287, %v1286
      %v1473 = vpack.c.b16 %v1289, %v1288
      %v1474 = vpack.c.b16 %v1291, %v1290
      %v1475 = vpack.c.b16 %v1293, %v1292
      %v1476 = vpack.c.b16 %v1295, %v1294
      %v1477 = vpack.c.b16 %v1297, %v1296
      %v1478 = vpack.c.b16 %v1299, %v1298
      %v1479 = vpack.c.b16 %v1301, %v1300
      %v1480 = vpack.c.b16 %v1303, %v1302
      %v1481 = vpack.c.b16 %v1305, %v1304
      %v1482 = vpack.c.b16 %v1307, %v1306
      %v1483 = vpack.c.b16 %v1309, %v1308
      %v1484 = vpack.c.b16 %v1311, %v1310
      %v1485 = vpack.c.b16 %v1313, %v1312
      %v1486 = vpack.c.b16 %v1315, %v1314
      %v1487 = vpack.c.b16 %v1317, %v1316
      %v1488 = vpack.c.b16 %v1319, %v1318
      %v1489 = vpack.c.b16 %v1321, %v1320
      %v1490 = vpack.c.b16 %v1323, %v1322
      %v1491 = vpack.c.b16 %v1325, %v1324
      %v1492 = vpack.c.b16 %v1327, %v1326
      %v1493 = vpack.c.b16 %v1329, %v1328
      %v1494 = vpack.c.b16 %v1331, %v1330
      %v1495 = vpack.c.b16 %v1333, %v1332
      %v1496 = vpack.c.b16 %v1335, %v1334
      %v1497 = vpack.c.b16 %v1337, %v1336
      %v1498 = vpack.c.b16 %v1339, %v1338
      %v1499 = vpack.c.b16 %v1341, %v1340
      %v1500 = vpack.c.b16 %v1343, %v1342
      %v1501 = vpack.c.b16 %v1345, %v1344
      %v1502 = vpack.c.b16 %v1347, %v1346
      %v1503 = vpack.c.b16 %v1349, %v1348
      %v1504 = vpack.c.b16 %v1351, %v1350
      %v1505 = vpack.c.b16 %v1353, %v1352
      %v1506 = vpack.c.b16 %v1355, %v1354
      %v1507 = vpack.c.b16 %v1357, %v1356
      %v1508 = vpack.c.b16 %v1359, %v1358
      %v1509 = vpack.c.b16 %v1361, %v1360
      %v1510 = vpack.c.b16 %v1363, %v1362
      %v1511 = vpack.c.b16 %v1365, %v1364
      %v1512 = vpack.c.b16 %v1367, %v1366
      %v1513 = vpack.c.b16 %v1369, %v1368
      %v1514 = vpack.c.b16 %v1371, %v1370
      %v1515 = vpack.c.b16 %v1373, %v1372
      %v1516 = vpack.c.b16 %v1375, %v1374
      %v1517 = vpack.c.b16 %v1377, %v1376
      %v1518 = vpack.c.b16 %v1379, %v1378
      %v1519 = vpack.c.b16 %v1381, %v1380
      %v1520 = vpack.c.b16 %v1383, %v1382
      %v1521 = vpack.c.b16 %v1385, %v1384
      %v1522 = vpack.c.b16 %v1387, %v1386
      %v1523 = vpack.c.b16 %v1389, %v1388
      %v1524 = vpack.c.b16 %v1391, %v1390
      %v1525 = vpack.c.b16 %v1393, %v1392
      %v1526 = vpack.c.b16 %v1395, %v1394
      %v1527 = vpack.c.b16 %v1397, %v1396
      %v1528 = vpack.c.b16 %v1399, %v1398
      %v1529 = vpack.c.b16 %v1401, %v1400
      %1658 = vmatpush.bf16.msra.mxu0 %v1409
      %1659 = vmatpush.bf16.msra.mxu0 %v1408
      %1660 = vmatpush.bf16.msra.mxu0 %v1407
      %1661 = vmatpush.bf16.msra.mxu0 %v1406
      %1662 = vmatpush.bf16.msra.mxu0 %v1405
      %1663 = vmatpush.bf16.msra.mxu0 %v1404
      %1664 = vmatpush.bf16.msra.mxu0 %v1403
      %1665 = vmatpush.bf16.msra.mxu0 %v1402
      %1666 = vmatmul.bf16.gmra.mxu0 %v762
      %v1667 = vpop.f32.mrf.mxu0
      %v1668 = vadd.f32 %v533, %v1667
      %v1669 = vpop.f32.mrf.mxu0
      %v1670 = vadd.f32 %v538, %v1669
      %1671 = vmatmul.bf16.gmra.mxu0 %v778
      %v1672 = vpop.f32.mrf.mxu0
      %v1673 = vadd.f32 %v543, %v1672
      %v1674 = vpop.f32.mrf.mxu0
      %v1675 = vadd.f32 %v548, %v1674
      %1676 = vmatmul.bf16.gmra.mxu0 %v794
      %v1677 = vpop.f32.mrf.mxu0
      %v1678 = vadd.f32 %v553, %v1677
      %v1679 = vpop.f32.mrf.mxu0
      %v1680 = vadd.f32 %v558, %v1679
      %1681 = vmatmul.bf16.gmra.mxu0 %v810
      %v1682 = vpop.f32.mrf.mxu0
      %v1683 = vadd.f32 %v563, %v1682
      %v1684 = vpop.f32.mrf.mxu0
      %v1685 = vadd.f32 %v568, %v1684
      %1686 = vdwg.mxu0
      %1687 = vmatpush.bf16.msra.mxu0 %v1417
      %1688 = vmatpush.bf16.msra.mxu0 %v1416
      %1689 = vmatpush.bf16.msra.mxu0 %v1415
      %1690 = vmatpush.bf16.msra.mxu0 %v1414
      %1691 = vmatpush.bf16.msra.mxu0 %v1413
      %1692 = vmatpush.bf16.msra.mxu0 %v1412
      %1693 = vmatpush.bf16.msra.mxu0 %v1411
      %1694 = vmatpush.bf16.msra.mxu0 %v1410
      %1695 = vmatmul.bf16.gmra.mxu0 %v763
      %v1696 = vpop.f32.mrf.mxu0
      %v1697 = vadd.f32 %v1668, %v1696
      %v1698 = vpop.f32.mrf.mxu0
      %v1699 = vadd.f32 %v1670, %v1698
      %1700 = vmatmul.bf16.gmra.mxu0 %v779
      %v1701 = vpop.f32.mrf.mxu0
      %v1702 = vadd.f32 %v1673, %v1701
      %v1703 = vpop.f32.mrf.mxu0
      %v1704 = vadd.f32 %v1675, %v1703
      %1705 = vmatmul.bf16.gmra.mxu0 %v795
      %v1706 = vpop.f32.mrf.mxu0
      %v1707 = vadd.f32 %v1678, %v1706
      %v1708 = vpop.f32.mrf.mxu0
      %v1709 = vadd.f32 %v1680, %v1708
      %1710 = vmatmul.bf16.gmra.mxu0 %v811
      %v1711 = vpop.f32.mrf.mxu0
      %v1712 = vadd.f32 %v1683, %v1711
      %v1713 = vpop.f32.mrf.mxu0
      %v1714 = vadd.f32 %v1685, %v1713
      %1715 = vdwg.mxu0
      %1716 = vmatpush.bf16.msra.mxu0 %v1425
      %1717 = vmatpush.bf16.msra.mxu0 %v1424
      %1718 = vmatpush.bf16.msra.mxu0 %v1423
      %1719 = vmatpush.bf16.msra.mxu0 %v1422
      %1720 = vmatpush.bf16.msra.mxu0 %v1421
      %1721 = vmatpush.bf16.msra.mxu0 %v1420
      %1722 = vmatpush.bf16.msra.mxu0 %v1419
      %1723 = vmatpush.bf16.msra.mxu0 %v1418
      %1724 = vmatmul.bf16.gmra.mxu0 %v764
      %v1725 = vpop.f32.mrf.mxu0
      %v1726 = vadd.f32 %v1697, %v1725
      %v1727 = vpop.f32.mrf.mxu0
      %v1728 = vadd.f32 %v1699, %v1727
      %1729 = vmatmul.bf16.gmra.mxu0 %v780
      %v1730 = vpop.f32.mrf.mxu0
      %v1731 = vadd.f32 %v1702, %v1730
      %v1732 = vpop.f32.mrf.mxu0
      %v1733 = vadd.f32 %v1704, %v1732
      %1734 = vmatmul.bf16.gmra.mxu0 %v796
      %v1735 = vpop.f32.mrf.mxu0
      %v1736 = vadd.f32 %v1707, %v1735
      %v1737 = vpop.f32.mrf.mxu0
      %v1738 = vadd.f32 %v1709, %v1737
      %1739 = vmatmul.bf16.gmra.mxu0 %v812
      %v1740 = vpop.f32.mrf.mxu0
      %v1741 = vadd.f32 %v1712, %v1740
      %v1742 = vpop.f32.mrf.mxu0
      %v1743 = vadd.f32 %v1714, %v1742
      %1744 = vdwg.mxu0
      %1745 = vmatpush.bf16.msra.mxu0 %v1433
      %1746 = vmatpush.bf16.msra.mxu0 %v1432
      %1747 = vmatpush.bf16.msra.mxu0 %v1431
      %1748 = vmatpush.bf16.msra.mxu0 %v1430
      %1749 = vmatpush.bf16.msra.mxu0 %v1429
      %1750 = vmatpush.bf16.msra.mxu0 %v1428
      %1751 = vmatpush.bf16.msra.mxu0 %v1427
      %1752 = vmatpush.bf16.msra.mxu0 %v1426
      %1753 = vmatmul.bf16.gmra.mxu0 %v765
      %v1754 = vpop.f32.mrf.mxu0
      %v1755 = vadd.f32 %v1726, %v1754
      %v1756 = vpop.f32.mrf.mxu0
      %v1757 = vadd.f32 %v1728, %v1756
      %1758 = vmatmul.bf16.gmra.mxu0 %v781
      %v1759 = vpop.f32.mrf.mxu0
      %v1760 = vadd.f32 %v1731, %v1759
      %v1761 = vpop.f32.mrf.mxu0
      %v1762 = vadd.f32 %v1733, %v1761
      %1763 = vmatmul.bf16.gmra.mxu0 %v797
      %v1764 = vpop.f32.mrf.mxu0
      %v1765 = vadd.f32 %v1736, %v1764
      %v1766 = vpop.f32.mrf.mxu0
      %v1767 = vadd.f32 %v1738, %v1766
      %1768 = vmatmul.bf16.gmra.mxu0 %v813
      %v1769 = vpop.f32.mrf.mxu0
      %v1770 = vadd.f32 %v1741, %v1769
      %v1771 = vpop.f32.mrf.mxu0
      %v1772 = vadd.f32 %v1743, %v1771
      %1773 = vdwg.mxu0
      %1774 = vmatpush.bf16.msra.mxu0 %v1441
      %1775 = vmatpush.bf16.msra.mxu0 %v1440
      %1776 = vmatpush.bf16.msra.mxu0 %v1439
      %1777 = vmatpush.bf16.msra.mxu0 %v1438
      %1778 = vmatpush.bf16.msra.mxu0 %v1437
      %1779 = vmatpush.bf16.msra.mxu0 %v1436
      %1780 = vmatpush.bf16.msra.mxu0 %v1435
      %1781 = vmatpush.bf16.msra.mxu0 %v1434
      %1782 = vmatmul.bf16.gmra.mxu0 %v766
      %v1783 = vpop.f32.mrf.mxu0
      %v1784 = vadd.f32 %v1755, %v1783
      %v1785 = vpop.f32.mrf.mxu0
      %v1786 = vadd.f32 %v1757, %v1785
      %1787 = vmatmul.bf16.gmra.mxu0 %v782
      %v1788 = vpop.f32.mrf.mxu0
      %v1789 = vadd.f32 %v1760, %v1788
      %v1790 = vpop.f32.mrf.mxu0
      %v1791 = vadd.f32 %v1762, %v1790
      %1792 = vmatmul.bf16.gmra.mxu0 %v798
      %v1793 = vpop.f32.mrf.mxu0
      %v1794 = vadd.f32 %v1765, %v1793
      %v1795 = vpop.f32.mrf.mxu0
      %v1796 = vadd.f32 %v1767, %v1795
      %1797 = vmatmul.bf16.gmra.mxu0 %v814
      %v1798 = vpop.f32.mrf.mxu0
      %v1799 = vadd.f32 %v1770, %v1798
      %v1800 = vpop.f32.mrf.mxu0
      %v1801 = vadd.f32 %v1772, %v1800
      %1802 = vdwg.mxu0
      %1803 = vmatpush.bf16.msra.mxu0 %v1449
      %1804 = vmatpush.bf16.msra.mxu0 %v1448
      %1805 = vmatpush.bf16.msra.mxu0 %v1447
      %1806 = vmatpush.bf16.msra.mxu0 %v1446
      %1807 = vmatpush.bf16.msra.mxu0 %v1445
      %1808 = vmatpush.bf16.msra.mxu0 %v1444
      %1809 = vmatpush.bf16.msra.mxu0 %v1443
      %1810 = vmatpush.bf16.msra.mxu0 %v1442
      %1811 = vmatmul.bf16.gmra.mxu0 %v767
      %v1812 = vpop.f32.mrf.mxu0
      %v1813 = vadd.f32 %v1784, %v1812
      %v1814 = vpop.f32.mrf.mxu0
      %v1815 = vadd.f32 %v1786, %v1814
      %1816 = vmatmul.bf16.gmra.mxu0 %v783
      %v1817 = vpop.f32.mrf.mxu0
      %v1818 = vadd.f32 %v1789, %v1817
      %v1819 = vpop.f32.mrf.mxu0
      %v1820 = vadd.f32 %v1791, %v1819
      %1821 = vmatmul.bf16.gmra.mxu0 %v799
      %v1822 = vpop.f32.mrf.mxu0
      %v1823 = vadd.f32 %v1794, %v1822
      %v1824 = vpop.f32.mrf.mxu0
      %v1825 = vadd.f32 %v1796, %v1824
      %1826 = vmatmul.bf16.gmra.mxu0 %v815
      %v1827 = vpop.f32.mrf.mxu0
      %v1828 = vadd.f32 %v1799, %v1827
      %v1829 = vpop.f32.mrf.mxu0
      %v1830 = vadd.f32 %v1801, %v1829
      %1831 = vdwg.mxu0
      %1832 = vmatpush.bf16.msra.mxu0 %v1457
      %1833 = vmatpush.bf16.msra.mxu0 %v1456
      %1834 = vmatpush.bf16.msra.mxu0 %v1455
      %1835 = vmatpush.bf16.msra.mxu0 %v1454
      %1836 = vmatpush.bf16.msra.mxu0 %v1453
      %1837 = vmatpush.bf16.msra.mxu0 %v1452
      %1838 = vmatpush.bf16.msra.mxu0 %v1451
      %1839 = vmatpush.bf16.msra.mxu0 %v1450
      %1840 = vmatmul.bf16.gmra.mxu0 %v768
      %v1841 = vpop.f32.mrf.mxu0
      %v1842 = vadd.f32 %v1813, %v1841
      %v1843 = vpop.f32.mrf.mxu0
      %v1844 = vadd.f32 %v1815, %v1843
      %1845 = vmatmul.bf16.gmra.mxu0 %v784
      %v1846 = vpop.f32.mrf.mxu0
      %v1847 = vadd.f32 %v1818, %v1846
      %v1848 = vpop.f32.mrf.mxu0
      %v1849 = vadd.f32 %v1820, %v1848
      %1850 = vmatmul.bf16.gmra.mxu0 %v800
      %v1851 = vpop.f32.mrf.mxu0
      %v1852 = vadd.f32 %v1823, %v1851
      %v1853 = vpop.f32.mrf.mxu0
      %v1854 = vadd.f32 %v1825, %v1853
      %1855 = vmatmul.bf16.gmra.mxu0 %v816
      %v1856 = vpop.f32.mrf.mxu0
      %v1857 = vadd.f32 %v1828, %v1856
      %v1858 = vpop.f32.mrf.mxu0
      %v1859 = vadd.f32 %v1830, %v1858
      %1860 = vdwg.mxu0
      %1861 = vmatpush.bf16.msra.mxu0 %v1465
      %1862 = vmatpush.bf16.msra.mxu0 %v1464
      %1863 = vmatpush.bf16.msra.mxu0 %v1463
      %1864 = vmatpush.bf16.msra.mxu0 %v1462
      %1865 = vmatpush.bf16.msra.mxu0 %v1461
      %1866 = vmatpush.bf16.msra.mxu0 %v1460
      %1867 = vmatpush.bf16.msra.mxu0 %v1459
      %1868 = vmatpush.bf16.msra.mxu0 %v1458
      %1869 = vmatmul.bf16.gmra.mxu0 %v769
      %v1870 = vpop.f32.mrf.mxu0
      %v1871 = vadd.f32 %v1842, %v1870
      %v1872 = vpop.f32.mrf.mxu0
      %v1873 = vadd.f32 %v1844, %v1872
      %1874 = vmatmul.bf16.gmra.mxu0 %v785
      %v1875 = vpop.f32.mrf.mxu0
      %v1876 = vadd.f32 %v1847, %v1875
      %v1877 = vpop.f32.mrf.mxu0
      %v1878 = vadd.f32 %v1849, %v1877
      %1879 = vmatmul.bf16.gmra.mxu0 %v801
      %v1880 = vpop.f32.mrf.mxu0
      %v1881 = vadd.f32 %v1852, %v1880
      %v1882 = vpop.f32.mrf.mxu0
      %v1883 = vadd.f32 %v1854, %v1882
      %1884 = vmatmul.bf16.gmra.mxu0 %v817
      %v1885 = vpop.f32.mrf.mxu0
      %v1886 = vadd.f32 %v1857, %v1885
      %v1887 = vpop.f32.mrf.mxu0
      %v1888 = vadd.f32 %v1859, %v1887
      %1889 = vdwg.mxu0
      %1890 = vmatpush.bf16.msra.mxu0 %v1473
      %1891 = vmatpush.bf16.msra.mxu0 %v1472
      %1892 = vmatpush.bf16.msra.mxu0 %v1471
      %1893 = vmatpush.bf16.msra.mxu0 %v1470
      %1894 = vmatpush.bf16.msra.mxu0 %v1469
      %1895 = vmatpush.bf16.msra.mxu0 %v1468
      %1896 = vmatpush.bf16.msra.mxu0 %v1467
      %1897 = vmatpush.bf16.msra.mxu0 %v1466
      %1898 = vmatmul.bf16.gmra.mxu0 %v770
      %v1899 = vpop.f32.mrf.mxu0
      %v1900 = vadd.f32 %v1871, %v1899
      %v1901 = vpop.f32.mrf.mxu0
      %v1902 = vadd.f32 %v1873, %v1901
      %1903 = vmatmul.bf16.gmra.mxu0 %v786
      %v1904 = vpop.f32.mrf.mxu0
      %v1905 = vadd.f32 %v1876, %v1904
      %v1906 = vpop.f32.mrf.mxu0
      %v1907 = vadd.f32 %v1878, %v1906
      %1908 = vmatmul.bf16.gmra.mxu0 %v802
      %v1909 = vpop.f32.mrf.mxu0
      %v1910 = vadd.f32 %v1881, %v1909
      %v1911 = vpop.f32.mrf.mxu0
      %v1912 = vadd.f32 %v1883, %v1911
      %1913 = vmatmul.bf16.gmra.mxu0 %v818
      %v1914 = vpop.f32.mrf.mxu0
      %v1915 = vadd.f32 %v1886, %v1914
      %v1916 = vpop.f32.mrf.mxu0
      %v1917 = vadd.f32 %v1888, %v1916
      %1918 = vdwg.mxu0
      %1919 = vmatpush.bf16.msra.mxu0 %v1481
      %1920 = vmatpush.bf16.msra.mxu0 %v1480
      %1921 = vmatpush.bf16.msra.mxu0 %v1479
      %1922 = vmatpush.bf16.msra.mxu0 %v1478
      %1923 = vmatpush.bf16.msra.mxu0 %v1477
      %1924 = vmatpush.bf16.msra.mxu0 %v1476
      %1925 = vmatpush.bf16.msra.mxu0 %v1475
      %1926 = vmatpush.bf16.msra.mxu0 %v1474
      %1927 = vmatmul.bf16.gmra.mxu0 %v771
      %v1928 = vpop.f32.mrf.mxu0
      %v1929 = vadd.f32 %v1900, %v1928
      %v1930 = vpop.f32.mrf.mxu0
      %v1931 = vadd.f32 %v1902, %v1930
      %1932 = vmatmul.bf16.gmra.mxu0 %v787
      %v1933 = vpop.f32.mrf.mxu0
      %v1934 = vadd.f32 %v1905, %v1933
      %v1935 = vpop.f32.mrf.mxu0
      %v1936 = vadd.f32 %v1907, %v1935
      %1937 = vmatmul.bf16.gmra.mxu0 %v803
      %v1938 = vpop.f32.mrf.mxu0
      %v1939 = vadd.f32 %v1910, %v1938
      %v1940 = vpop.f32.mrf.mxu0
      %v1941 = vadd.f32 %v1912, %v1940
      %1942 = vmatmul.bf16.gmra.mxu0 %v819
      %v1943 = vpop.f32.mrf.mxu0
      %v1944 = vadd.f32 %v1915, %v1943
      %v1945 = vpop.f32.mrf.mxu0
      %v1946 = vadd.f32 %v1917, %v1945
      %1947 = vdwg.mxu0
      %1948 = vmatpush.bf16.msra.mxu0 %v1489
      %1949 = vmatpush.bf16.msra.mxu0 %v1488
      %1950 = vmatpush.bf16.msra.mxu0 %v1487
      %1951 = vmatpush.bf16.msra.mxu0 %v1486
      %1952 = vmatpush.bf16.msra.mxu0 %v1485
      %1953 = vmatpush.bf16.msra.mxu0 %v1484
      %1954 = vmatpush.bf16.msra.mxu0 %v1483
      %1955 = vmatpush.bf16.msra.mxu0 %v1482
      %1956 = vmatmul.bf16.gmra.mxu0 %v772
      %v1957 = vpop.f32.mrf.mxu0
      %v1958 = vadd.f32 %v1929, %v1957
      %v1959 = vpop.f32.mrf.mxu0
      %v1960 = vadd.f32 %v1931, %v1959
      %1961 = vmatmul.bf16.gmra.mxu0 %v788
      %v1962 = vpop.f32.mrf.mxu0
      %v1963 = vadd.f32 %v1934, %v1962
      %v1964 = vpop.f32.mrf.mxu0
      %v1965 = vadd.f32 %v1936, %v1964
      %1966 = vmatmul.bf16.gmra.mxu0 %v804
      %v1967 = vpop.f32.mrf.mxu0
      %v1968 = vadd.f32 %v1939, %v1967
      %v1969 = vpop.f32.mrf.mxu0
      %v1970 = vadd.f32 %v1941, %v1969
      %1971 = vmatmul.bf16.gmra.mxu0 %v820
      %v1972 = vpop.f32.mrf.mxu0
      %v1973 = vadd.f32 %v1944, %v1972
      %v1974 = vpop.f32.mrf.mxu0
      %v1975 = vadd.f32 %v1946, %v1974
      %1976 = vdwg.mxu0
      %1977 = vmatpush.bf16.msra.mxu0 %v1497
      %1978 = vmatpush.bf16.msra.mxu0 %v1496
      %1979 = vmatpush.bf16.msra.mxu0 %v1495
      %1980 = vmatpush.bf16.msra.mxu0 %v1494
      %1981 = vmatpush.bf16.msra.mxu0 %v1493
      %1982 = vmatpush.bf16.msra.mxu0 %v1492
      %1983 = vmatpush.bf16.msra.mxu0 %v1491
      %1984 = vmatpush.bf16.msra.mxu0 %v1490
      %1985 = vmatmul.bf16.gmra.mxu0 %v773
      %v1986 = vpop.f32.mrf.mxu0
      %v1987 = vadd.f32 %v1958, %v1986
      %v1988 = vpop.f32.mrf.mxu0
      %v1989 = vadd.f32 %v1960, %v1988
      %1990 = vmatmul.bf16.gmra.mxu0 %v789
      %v1991 = vpop.f32.mrf.mxu0
      %v1992 = vadd.f32 %v1963, %v1991
      %v1993 = vpop.f32.mrf.mxu0
      %v1994 = vadd.f32 %v1965, %v1993
      %1995 = vmatmul.bf16.gmra.mxu0 %v805
      %v1996 = vpop.f32.mrf.mxu0
      %v1997 = vadd.f32 %v1968, %v1996
      %v1998 = vpop.f32.mrf.mxu0
      %v1999 = vadd.f32 %v1970, %v1998
      %2000 = vmatmul.bf16.gmra.mxu0 %v821
      %v2001 = vpop.f32.mrf.mxu0
      %v2002 = vadd.f32 %v1973, %v2001
      %v2003 = vpop.f32.mrf.mxu0
      %v2004 = vadd.f32 %v1975, %v2003
      %2005 = vdwg.mxu0
      %2006 = vmatpush.bf16.msra.mxu0 %v1505
      %2007 = vmatpush.bf16.msra.mxu0 %v1504
      %2008 = vmatpush.bf16.msra.mxu0 %v1503
      %2009 = vmatpush.bf16.msra.mxu0 %v1502
      %2010 = vmatpush.bf16.msra.mxu0 %v1501
      %2011 = vmatpush.bf16.msra.mxu0 %v1500
      %2012 = vmatpush.bf16.msra.mxu0 %v1499
      %2013 = vmatpush.bf16.msra.mxu0 %v1498
      %2014 = vmatmul.bf16.gmra.mxu0 %v774
      %v2015 = vpop.f32.mrf.mxu0
      %v2016 = vadd.f32 %v1987, %v2015
      %v2017 = vpop.f32.mrf.mxu0
      %v2018 = vadd.f32 %v1989, %v2017
      %2019 = vmatmul.bf16.gmra.mxu0 %v790
      %v2020 = vpop.f32.mrf.mxu0
      %v2021 = vadd.f32 %v1992, %v2020
      %v2022 = vpop.f32.mrf.mxu0
      %v2023 = vadd.f32 %v1994, %v2022
      %2024 = vmatmul.bf16.gmra.mxu0 %v806
      %v2025 = vpop.f32.mrf.mxu0
      %v2026 = vadd.f32 %v1997, %v2025
      %v2027 = vpop.f32.mrf.mxu0
      %v2028 = vadd.f32 %v1999, %v2027
      %2029 = vmatmul.bf16.gmra.mxu0 %v822
      %v2030 = vpop.f32.mrf.mxu0
      %v2031 = vadd.f32 %v2002, %v2030
      %v2032 = vpop.f32.mrf.mxu0
      %v2033 = vadd.f32 %v2004, %v2032
      %2034 = vdwg.mxu0
      %2035 = vmatpush.bf16.msra.mxu0 %v1513
      %2036 = vmatpush.bf16.msra.mxu0 %v1512
      %2037 = vmatpush.bf16.msra.mxu0 %v1511
      %2038 = vmatpush.bf16.msra.mxu0 %v1510
      %2039 = vmatpush.bf16.msra.mxu0 %v1509
      %2040 = vmatpush.bf16.msra.mxu0 %v1508
      %2041 = vmatpush.bf16.msra.mxu0 %v1507
      %2042 = vmatpush.bf16.msra.mxu0 %v1506
      %2043 = vmatmul.bf16.gmra.mxu0 %v775
      %v2044 = vpop.f32.mrf.mxu0
      %v2045 = vadd.f32 %v2016, %v2044
      %v2046 = vpop.f32.mrf.mxu0
      %v2047 = vadd.f32 %v2018, %v2046
      %2048 = vmatmul.bf16.gmra.mxu0 %v791
      %v2049 = vpop.f32.mrf.mxu0
      %v2050 = vadd.f32 %v2021, %v2049
      %v2051 = vpop.f32.mrf.mxu0
      %v2052 = vadd.f32 %v2023, %v2051
      %2053 = vmatmul.bf16.gmra.mxu0 %v807
      %v2054 = vpop.f32.mrf.mxu0
      %v2055 = vadd.f32 %v2026, %v2054
      %v2056 = vpop.f32.mrf.mxu0
      %v2057 = vadd.f32 %v2028, %v2056
      %2058 = vmatmul.bf16.gmra.mxu0 %v823
      %v2059 = vpop.f32.mrf.mxu0
      %v2060 = vadd.f32 %v2031, %v2059
      %v2061 = vpop.f32.mrf.mxu0
      %v2062 = vadd.f32 %v2033, %v2061
      %2063 = vdwg.mxu0
      %2064 = vmatpush.bf16.msra.mxu0 %v1521
      %2065 = vmatpush.bf16.msra.mxu0 %v1520
      %2066 = vmatpush.bf16.msra.mxu0 %v1519
      %2067 = vmatpush.bf16.msra.mxu0 %v1518
      %2068 = vmatpush.bf16.msra.mxu0 %v1517
      %2069 = vmatpush.bf16.msra.mxu0 %v1516
      %2070 = vmatpush.bf16.msra.mxu0 %v1515
      %2071 = vmatpush.bf16.msra.mxu0 %v1514
      %2072 = vmatmul.bf16.gmra.mxu0 %v776
      %v2073 = vpop.f32.mrf.mxu0
      %v2074 = vadd.f32 %v2045, %v2073
      %v2075 = vpop.f32.mrf.mxu0
      %v2076 = vadd.f32 %v2047, %v2075
      %2077 = vmatmul.bf16.gmra.mxu0 %v792
      %v2078 = vpop.f32.mrf.mxu0
      %v2079 = vadd.f32 %v2050, %v2078
      %v2080 = vpop.f32.mrf.mxu0
      %v2081 = vadd.f32 %v2052, %v2080
      %2082 = vmatmul.bf16.gmra.mxu0 %v808
      %v2083 = vpop.f32.mrf.mxu0
      %v2084 = vadd.f32 %v2055, %v2083
      %v2085 = vpop.f32.mrf.mxu0
      %v2086 = vadd.f32 %v2057, %v2085
      %2087 = vmatmul.bf16.gmra.mxu0 %v824
      %v2088 = vpop.f32.mrf.mxu0
      %v2089 = vadd.f32 %v2060, %v2088
      %v2090 = vpop.f32.mrf.mxu0
      %v2091 = vadd.f32 %v2062, %v2090
      %2092 = vdwg.mxu0
      %2093 = vmatpush.bf16.msra.mxu0 %v1529
      %2094 = vmatpush.bf16.msra.mxu0 %v1528
      %2095 = vmatpush.bf16.msra.mxu0 %v1527
      %2096 = vmatpush.bf16.msra.mxu0 %v1526
      %2097 = vmatpush.bf16.msra.mxu0 %v1525
      %2098 = vmatpush.bf16.msra.mxu0 %v1524
      %2099 = vmatpush.bf16.msra.mxu0 %v1523
      %2100 = vmatpush.bf16.msra.mxu0 %v1522
      %2101 = vmatmul.bf16.gmra.mxu0 %v777
      %v2102 = vpop.f32.mrf.mxu0
      %v2103 = vadd.f32 %v2074, %v2102
      %v2104 = vpop.f32.mrf.mxu0
      %v2105 = vadd.f32 %v2076, %v2104
      %2106 = vmatmul.bf16.gmra.mxu0 %v793
      %v2107 = vpop.f32.mrf.mxu0
      %v2108 = vadd.f32 %v2079, %v2107
      %v2109 = vpop.f32.mrf.mxu0
      %v2110 = vadd.f32 %v2081, %v2109
      %2111 = vmatmul.bf16.gmra.mxu0 %v809
      %v2112 = vpop.f32.mrf.mxu0
      %v2113 = vadd.f32 %v2084, %v2112
      %v2114 = vpop.f32.mrf.mxu0
      %v2115 = vadd.f32 %v2086, %v2114
      %2116 = vmatmul.bf16.gmra.mxu0 %v825
      %v2117 = vpop.f32.mrf.mxu0
      %v2118 = vadd.f32 %v2089, %v2117
      %v2119 = vpop.f32.mrf.mxu0
      %v2120 = vadd.f32 %v2091, %v2119
      %2121 = vdwg.mxu0
      %v2122 = vmax.f32 %v2103, 0.0
      %v2123 = vmax.f32 %v2105, 0.0
      %v2124 = vmax.f32 %v2108, 0.0
      %v2125 = vmax.f32 %v2110, 0.0
      %v2126 = vmax.f32 %v2113, 0.0
      %v2127 = vmax.f32 %v2115, 0.0
      %v2128 = vmax.f32 %v2118, 0.0
      %v2129 = vmax.f32 %v2120, 0.0
      %v2130 = vpack.c.bf16 %v2122, %v2122
      %v2131 = vpack.c.bf16 %v2123, %v2123
      %v2132 = vpack.c.bf16 %v2124, %v2124
      %v2133 = vpack.c.bf16 %v2125, %v2125
      %v2134 = vpack.c.bf16 %v2126, %v2126
      %v2135 = vpack.c.bf16 %v2127, %v2127
      %v2136 = vpack.c.bf16 %v2128, %v2128
      %v2137 = vpack.c.bf16 %v2129, %v2129
      %2138 = vst [vmem:[%s201] sm:$0xf] %v2130
      %2139 = vst [vmem:[%s201 + $0x4] sm:$0xf] %v2131
      %2140 = vst [vmem:[%s201 + $0x8] sm:$0xf] %v2132
      %2141 = vst [vmem:[%s201 + $0xc] sm:$0xf] %v2133
      %2142 = vst [vmem:[%s201 + $0x10] sm:$0xf] %v2134
      %2143 = vst [vmem:[%s201 + $0x14] sm:$0xf] %v2135
      %2144 = vst [vmem:[%s201 + $0x18] sm:$0xf] %v2136
      %2145 = vst [vmem:[%s201 + $0x1c] sm:$0xf] %v2137
      %p2146 = scmp.lt.s32.totalorder %s18, 1
      %s2147 = scalar_select %p2146, %s18, 1
      %p2148 = scmp.lt.s32.totalorder %s19, 0
      %s2149 = scalar_select %p2148, %s19, 0
      %s2150 = smul.addr %s2147, 8
      %s2151 = sadd.s32 %s2149, %s2150
      %s2152 = smul.addr %s2151, 4
      %s2153 = scalar_lea.vmem %s3, %s2152
      // Predicated region
      $region33: #{sranet_forward.5} parent=31 // pred_check
        %p2154 = pneg %p116
      $region34: #{sranet_forward.5} parent=31 // pred_check_branch
        %2156 = sbr.rel (%p2154) target = $region36
      $region35: #{sranet_forward.5} parent=31 // pred_region
        _
      $region36: #{sranet_forward.5} parent=31 // pred_fallthru
        _
    $region32: #{sranet_forward.5} parent=5 // pred_fallthru
      _
    %p2157 = scmp.le.s32.totalorder 2, %s9
    // Predicated region
    $region37: #{sranet_forward.5} parent=5 // pred_check
      %p2158 = pneg %p2157
    $region38: #{sranet_forward.5} parent=5 // pred_check_branch
      %2160 = sbr.rel (%p2158) target = $region40
    $region39: #{sranet_forward.5} parent=5 // pred_region
      %s2161 = ssub.s32 %s9, 2
      // Predicated region
      $region41: #{sranet_forward.5} parent=39 // pred_check
        %p2162 = pneg %p122
      $region42: #{sranet_forward.5} parent=39 // pred_check_branch
        %2164 = sbr.rel (%p2162) target = $region44
      $region43: #{sranet_forward.5} parent=39 // pred_region
        %p2165 = scmp.lt.s32.totalorder %s20, 1
        %s2166 = scalar_select %p2165, %s20, 1
        %p2167 = scmp.lt.s32.totalorder %s21, 0
        %s2168 = scalar_select %p2167, %s21, 0
        %s2169 = smul.addr %s2166, 8
        %s2170 = sadd.s32 %s2168, %s2169
        %s2171 = smul.addr %s2170, 4
        %s2172 = scalar_lea.vmem %s3, %s2171
      $region44: #{sranet_forward.5} parent=39 // pred_fallthru
        _
    $region40: #{sranet_forward.5} parent=5 // pred_fallthru
      _
  $region6: #{sranet_forward.5} parent=0 // loop_footer
    %s13 = sadd.s32 1, %s9
  $region7: #{sranet_forward.5} parent=0 // loop_footer_branch
    %8 = sbr.rel target = $region3
  $region8: #{sranet_forward.5} parent=0 // loop_exit
    _

// kernel: sranet_forward.6
$region0: #{sranet_forward.6}
  #allocation0 [shape = 'u32[]', space=smem, size = 0x4, offset = 0x4, fixed_abs, tag = 'smem constant byte address 0x4 - core index']
  #allocation1 [shape = 'u32[72,128]{1,0:T(1,128)}', space=vmem, size = 0x9000, scoped, tag = 'internal scratch']
  %s0 = inlined_call_operand.vmem [shape: bf16[2,1024,128], index: 0, kind: input, shape index: {}]
  %s1 = inlined_call_operand.vmem [shape: bf16[64,1024], index: 1, kind: input, shape index: {}]
  %s2 = inlined_call_operand.vmem [shape: f32[64,1], index: 2, kind: input, shape index: {}]
  %s3 = inlined_call_operand.vmem [shape: bf16[2,64,128], index: 3, kind: output, shape index: {}]
  %s4 = sld [smem:[#allocation0]]
  $region45: #{sranet_forward.6} parent=0
    _
  %s6 = ssub.s32 1, %s4
  %s7 = scalar_select 0, %s6, %s4
  loop: start=0, step=1, limit=4
  $region2: #{sranet_forward.6} parent=0 // loop_pre_header
    _
  $region3: #{sranet_forward.6} parent=0 // loop_header
    %s9 = sphi 0, %s13
    %p10 = scmp.ge.s32.totalorder %s9, 4
    %s16 = sphi 0, %s28
    %s17 = sphi 0, %s24
    %s18 = sphi 0, %s16
    %s19 = sphi 0, %s17
    %s20 = sphi 0, %s18
    %s21 = sphi 0, %s19
    %s33 = sphi 0, %s35
    %s36 = sphi 0, %s33
    %s37 = sphi 0, %s36
    %s53 = sphi 0, %s37
    %s57 = sphi 0, %s57
    %s59 = sphi 0, %s57
    %s60 = sphi 0, %s59
    %s74 = sphi 0, %s60
    %s78 = sphi 0, %s78
    %s80 = sphi 0, %s78
    %s81 = sphi 0, %s80
    %s95 = sphi 0, %s81
    %s103 = sphi 0, %s105
    %s106 = sphi 0, %s103
    %s107 = sphi 0, %s106
    %s123 = sphi 0, %s107
  $region4: #{sranet_forward.6} parent=0 // loop_header_branch
    %12 = sbr.rel (%p10) target = $region8
  $region5: #{sranet_forward.6} parent=0 // loop_body
    %s14 = ssub.s32 %s9, 1
    %s15 = ssub.s32 %s9, 2
    %s22 = sadd.s32 1, %s17
    %p23 = scmp.ge.s32.totalorder %s22, 1
    %s24 = scalar_select %p23, 0, %s22
    %s25 = sadd.s32 1, %s16
    %s26 = scalar_select %p23, %s25, %s16
    %p27 = scmp.ge.s32.totalorder %s26, 2
    %s28 = scalar_select %p27, 0, %s26
    %s29 = ssub.s32 %s16, %s28
    %s30 = ssub.s32 %s17, %s24
    %s31 = sor.u32 %s29, %s30
    %p32 = scmp.eq.s32.totalorder %s31, 0
    %s34 = sadd.s32 %s33, 1
    %s35 = scalar_select %p32, %s33, %s34
    %p38 = pneg %p32
    %p39 = scmp.eq.s32.totalorder %s9, 1
    %p40 = por %p38, %p39
    %p41 = scmp.ne.s32.totalorder %s33, %s36
    %p42 = scmp.eq.s32.totalorder %s9, 0
    %p43 = por %p41, %p42
    %p44 = scmp.ne.s32.totalorder %s33, %s36
    %p45 = scmp.eq.s32.totalorder %s14, 1
    %p46 = por %p44, %p45
    %p47 = scmp.ne.s32.totalorder %s36, %s37
    %p48 = scmp.eq.s32.totalorder %s14, 0
    %p49 = por %p47, %p48
    %p50 = scmp.ne.s32.totalorder %s36, %s37
    %p51 = scmp.eq.s32.totalorder %s15, 1
    %p52 = por %p50, %p51
    %p54 = scmp.ne.s32.totalorder %s37, %s53
    %p55 = scmp.eq.s32.totalorder %s15, 0
    %p56 = por %p54, %p55
    %s58 = sadd.s32 %s57, 1
    %p61 = scmp.eq.s32.totalorder %s9, 1
    %p62 = scmp.ne.s32.totalorder %s57, %s59
    %p63 = scmp.eq.s32.totalorder %s9, 0
    %p64 = por %p62, %p63
    %p65 = scmp.ne.s32.totalorder %s57, %s59
    %p66 = scmp.eq.s32.totalorder %s14, 1
    %p67 = por %p65, %p66
    %p68 = scmp.ne.s32.totalorder %s59, %s60
    %p69 = scmp.eq.s32.totalorder %s14, 0
    %p70 = por %p68, %p69
    %p71 = scmp.ne.s32.totalorder %s59, %s60
    %p72 = scmp.eq.s32.totalorder %s15, 1
    %p73 = por %p71, %p72
    %p75 = scmp.ne.s32.totalorder %s60, %s74
    %p76 = scmp.eq.s32.totalorder %s15, 0
    %p77 = por %p75, %p76
    %s79 = sadd.s32 %s78, 1
    %p82 = scmp.eq.s32.totalorder %s9, 1
    %p83 = scmp.ne.s32.totalorder %s78, %s80
    %p84 = scmp.eq.s32.totalorder %s9, 0
    %p85 = por %p83, %p84
    %p86 = scmp.ne.s32.totalorder %s78, %s80
    %p87 = scmp.eq.s32.totalorder %s14, 1
    %p88 = por %p86, %p87
    %p89 = scmp.ne.s32.totalorder %s80, %s81
    %p90 = scmp.eq.s32.totalorder %s14, 0
    %p91 = por %p89, %p90
    %p92 = scmp.ne.s32.totalorder %s80, %s81
    %p93 = scmp.eq.s32.totalorder %s15, 1
    %p94 = por %p92, %p93
    %p96 = scmp.ne.s32.totalorder %s81, %s95
    %p97 = scmp.eq.s32.totalorder %s15, 0
    %p98 = por %p96, %p97
    %s99 = ssub.s32 %s16, %s28
    %s100 = ssub.s32 %s17, %s24
    %s101 = sor.u32 %s99, %s100
    %p102 = scmp.eq.s32.totalorder %s101, 0
    %s104 = sadd.s32 %s103, 1
    %s105 = scalar_select %p102, %s103, %s104
    %p108 = pneg %p102
    %p109 = scmp.eq.s32.totalorder %s9, 1
    %p110 = por %p108, %p109
    %p111 = scmp.ne.s32.totalorder %s103, %s106
    %p112 = scmp.eq.s32.totalorder %s9, 0
    %p113 = por %p111, %p112
    %p114 = scmp.ne.s32.totalorder %s103, %s106
    %p115 = scmp.eq.s32.totalorder %s14, 1
    %p116 = por %p114, %p115
    %p117 = scmp.ne.s32.totalorder %s106, %s107
    %p118 = scmp.eq.s32.totalorder %s14, 0
    %p119 = por %p117, %p118
    %p120 = scmp.ne.s32.totalorder %s106, %s107
    %p121 = scmp.eq.s32.totalorder %s15, 1
    %p122 = por %p120, %p121
    %p124 = scmp.ne.s32.totalorder %s107, %s123
    %p125 = scmp.eq.s32.totalorder %s15, 0
    %p126 = por %p124, %p125
    %p127 = scmp.le.s32.totalorder 1, %s9
    %p128 = scmp.lt.s32.totalorder %s9, 3
    %p129 = pnand %p127, %p128
    %p130 = pneg %p129
    // Predicated region
    $region9: #{sranet_forward.6} parent=5 // pred_check
      _
    $region10: #{sranet_forward.6} parent=5 // pred_check_branch
      %132 = sbr.rel (%p129) target = $region12
    $region11: #{sranet_forward.6} parent=5 // pred_region
      %s133 = ssub.s32 %s9, 1
      // Predicated region
      $region13: #{sranet_forward.6} parent=11 // pred_check
        %p134 = pneg %p70
      $region14: #{sranet_forward.6} parent=11 // pred_check_branch
        %136 = sbr.rel (%p134) target = $region16
      $region15: #{sranet_forward.6} parent=11 // pred_region
        _
      $region16: #{sranet_forward.6} parent=11 // pred_fallthru
        _
      // Predicated region
      $region17: #{sranet_forward.6} parent=11 // pred_check
        %p137 = pneg %p91
      $region18: #{sranet_forward.6} parent=11 // pred_check_branch
        %139 = sbr.rel (%p137) target = $region20
      $region19: #{sranet_forward.6} parent=11 // pred_region
        _
      $region20: #{sranet_forward.6} parent=11 // pred_fallthru
        _
    $region12: #{sranet_forward.6} parent=5 // pred_fallthru
      _
    %p140 = scmp.lt.s32.totalorder %s9, 2
    // Predicated region
    $region21: #{sranet_forward.6} parent=5 // pred_check
      %p141 = pneg %p140
    $region22: #{sranet_forward.6} parent=5 // pred_check_branch
      %143 = sbr.rel (%p141) target = $region24
    $region23: #{sranet_forward.6} parent=5 // pred_region
      // Predicated region
      $region25: #{sranet_forward.6} parent=23 // pred_check
        %p144 = pneg %p43
      $region26: #{sranet_forward.6} parent=23 // pred_check_branch
        %146 = sbr.rel (%p144) target = $region28
      $region27: #{sranet_forward.6} parent=23 // pred_region
        %p147 = scmp.lt.s32.totalorder %s16, 1
        %s148 = scalar_select %p147, %s16, 1
        %p149 = scmp.lt.s32.totalorder %s17, 0
        %s150 = scalar_select %p149, %s17, 0
        %s151 = smul.addr %s148, 128
        %s152 = sadd.s32 %s150, %s151
        %s153 = smul.addr %s152, 4
        %s154 = scalar_lea.vmem %s0, %s153
      $region28: #{sranet_forward.6} parent=23 // pred_fallthru
        _
    $region24: #{sranet_forward.6} parent=5 // pred_fallthru
      _
    %p155 = scmp.le.s32.totalorder 1, %s9
    %p156 = scmp.lt.s32.totalorder %s9, 3
    %p157 = pnand %p155, %p156
    %p158 = pneg %p157
    // Predicated region
    $region29: #{sranet_forward.6} parent=5 // pred_check
      _
    $region30: #{sranet_forward.6} parent=5 // pred_check_branch
      %160 = sbr.rel (%p157) target = $region32
    $region31: #{sranet_forward.6} parent=5 // pred_region
      %s161 = ssub.s32 %s9, 1
      %p162 = scmp.lt.s32.totalorder %s18, 1
      %s163 = scalar_select %p162, %s18, 1
      %p164 = scmp.lt.s32.totalorder %s19, 0
      %s165 = scalar_select %p164, %s19, 0
      %s166 = smul.addr %s163, 128
      %s167 = sadd.s32 %s165, %s166
      %s168 = smul.addr %s167, 4
      %s169 = scalar_lea.vmem %s0, %s168
      %p170 = pneg %p49
      %p171 = pneg %p46
      %p172 = pneg %p70
      %p173 = pneg %p67
      %p174 = pneg %p91
      %p175 = pneg %p88
      %p176 = pneg %p119
      %p177 = pneg %p116
      %p178 = scmp.lt.s32.totalorder %s18, 1
      %s179 = scalar_select %p178, %s18, 1
      %p180 = scmp.lt.s32.totalorder %s19, 0
      %s181 = scalar_select %p180, %s19, 0
      %s182 = smul.addr %s179, 8
      %s183 = sadd.s32 %s181, %s182
      %s184 = smul.addr %s183, 4
      %s185 = scalar_lea.vmem %s3, %s184
      %p186 = scmp.lt.s32.totalorder %s18, 1
      %s187 = scalar_select %p186, %s18, 1
      %p188 = scmp.lt.s32.totalorder %s19, 0
      %s189 = scalar_select %p188, %s19, 0
      %s190 = smul.addr %s187, 128
      %s191 = sadd.s32 %s189, %s190
      %s192 = smul.addr %s191, 4
      %s193 = scalar_lea.vmem %s0, %s192
      %p194 = scmp.lt.s32.totalorder %s18, 1
      %s195 = scalar_select %p194, %s18, 1
      %p196 = scmp.lt.s32.totalorder %s19, 0
      %s197 = scalar_select %p196, %s19, 0
      %s198 = smul.addr %s195, 8
      %s199 = sadd.s32 %s197, %s198
      %s200 = smul.addr %s199, 4
      %s201 = scalar_lea.vmem %s3, %s200
      %v202 = vld [vmem:[%s1] sm:$0xff]
      %v203 = vld [vmem:[%s1 + $0x8] sm:$0xff]
      %v204 = vld [vmem:[%s1 + $0x10] sm:$0xff]
      %v205 = vld [vmem:[%s1 + $0x18] sm:$0xff]
      %v206 = vld [vmem:[%s1 + $0x20] sm:$0xff]
      %v207 = vld [vmem:[%s1 + $0x28] sm:$0xff]
      %v208 = vld [vmem:[%s1 + $0x30] sm:$0xff]
      %v209 = vld [vmem:[%s1 + $0x38] sm:$0xff]
      %v210 = vld [vmem:[%s1 + $0x40] sm:$0xff]
      %v211 = vld [vmem:[%s1 + $0x48] sm:$0xff]
      %v212 = vld [vmem:[%s1 + $0x50] sm:$0xff]
      %v213 = vld [vmem:[%s1 + $0x58] sm:$0xff]
      %v214 = vld [vmem:[%s1 + $0x60] sm:$0xff]
      %v215 = vld [vmem:[%s1 + $0x68] sm:$0xff]
      %v216 = vld [vmem:[%s1 + $0x70] sm:$0xff]
      %v217 = vld [vmem:[%s1 + $0x78] sm:$0xff]
      %v218 = vld [vmem:[%s1 + $0x80] sm:$0xff]
      %v219 = vld [vmem:[%s1 + $0x88] sm:$0xff]
      %v220 = vld [vmem:[%s1 + $0x90] sm:$0xff]
      %v221 = vld [vmem:[%s1 + $0x98] sm:$0xff]
      %v222 = vld [vmem:[%s1 + $0xa0] sm:$0xff]
      %v223 = vld [vmem:[%s1 + $0xa8] sm:$0xff]
      %v224 = vld [vmem:[%s1 + $0xb0] sm:$0xff]
      %v225 = vld [vmem:[%s1 + $0xb8] sm:$0xff]
      %v226 = vld [vmem:[%s1 + $0xc0] sm:$0xff]
      %v227 = vld [vmem:[%s1 + $0xc8] sm:$0xff]
      %v228 = vld [vmem:[%s1 + $0xd0] sm:$0xff]
      %v229 = vld [vmem:[%s1 + $0xd8] sm:$0xff]
      %v230 = vld [vmem:[%s1 + $0xe0] sm:$0xff]
      %v231 = vld [vmem:[%s1 + $0xe8] sm:$0xff]
      %v232 = vld [vmem:[%s1 + $0xf0] sm:$0xff]
      %v233 = vld [vmem:[%s1 + $0xf8] sm:$0xff]
      %v234 = vld [vmem:[%s193] sm:$0xf]
      %v235 = vld [vmem:[%s193 + $0x4] sm:$0xf]
      %v236 = vld [vmem:[%s193 + $0x8] sm:$0xf]
      %v237 = vld [vmem:[%s193 + $0xc] sm:$0xf]
      %v238 = vld [vmem:[%s193 + $0x10] sm:$0xf]
      %v239 = vld [vmem:[%s193 + $0x14] sm:$0xf]
      %v240 = vld [vmem:[%s193 + $0x18] sm:$0xf]
      %v241 = vld [vmem:[%s193 + $0x1c] sm:$0xf]
      %v242 = vld [vmem:[%s193 + $0x20] sm:$0xf]
      %v243 = vld [vmem:[%s193 + $0x24] sm:$0xf]
      %v244 = vld [vmem:[%s193 + $0x28] sm:$0xf]
      %v245 = vld [vmem:[%s193 + $0x2c] sm:$0xf]
      %v246 = vld [vmem:[%s193 + $0x30] sm:$0xf]
      %v247 = vld [vmem:[%s193 + $0x34] sm:$0xf]
      %v248 = vld [vmem:[%s193 + $0x38] sm:$0xf]
      %v249 = vld [vmem:[%s193 + $0x3c] sm:$0xf]
      %v250 = vld [vmem:[%s193 + $0x40] sm:$0xf]
      %v251 = vld [vmem:[%s193 + $0x44] sm:$0xf]
      %v252 = vld [vmem:[%s193 + $0x48] sm:$0xf]
      %v253 = vld [vmem:[%s193 + $0x4c] sm:$0xf]
      %v254 = vld [vmem:[%s193 + $0x50] sm:$0xf]
      %v255 = vld [vmem:[%s193 + $0x54] sm:$0xf]
      %v256 = vld [vmem:[%s193 + $0x58] sm:$0xf]
      %v257 = vld [vmem:[%s193 + $0x5c] sm:$0xf]
      %v258 = vld [vmem:[%s193 + $0x60] sm:$0xf]
      %v259 = vld [vmem:[%s193 + $0x64] sm:$0xf]
      %v260 = vld [vmem:[%s193 + $0x68] sm:$0xf]
      %v261 = vld [vmem:[%s193 + $0x6c] sm:$0xf]
      %v262 = vld [vmem:[%s193 + $0x70] sm:$0xf]
      %v263 = vld [vmem:[%s193 + $0x74] sm:$0xf]
      %v264 = vld [vmem:[%s193 + $0x78] sm:$0xf]
      %v265 = vld [vmem:[%s193 + $0x7c] sm:$0xf]
      %v266 = vld [vmem:[%s193 + $0x80] sm:$0xf]
      %v267 = vld [vmem:[%s193 + $0x84] sm:$0xf]
      %v268 = vld [vmem:[%s193 + $0x88] sm:$0xf]
      %v269 = vld [vmem:[%s193 + $0x8c] sm:$0xf]
      %v270 = vld [vmem:[%s193 + $0x90] sm:$0xf]
      %v271 = vld [vmem:[%s193 + $0x94] sm:$0xf]
      %v272 = vld [vmem:[%s193 + $0x98] sm:$0xf]
      %v273 = vld [vmem:[%s193 + $0x9c] sm:$0xf]
      %v274 = vld [vmem:[%s193 + $0xa0] sm:$0xf]
      %v275 = vld [vmem:[%s193 + $0xa4] sm:$0xf]
      %v276 = vld [vmem:[%s193 + $0xa8] sm:$0xf]
      %v277 = vld [vmem:[%s193 + $0xac] sm:$0xf]
      %v278 = vld [vmem:[%s193 + $0xb0] sm:$0xf]
      %v279 = vld [vmem:[%s193 + $0xb4] sm:$0xf]
      %v280 = vld [vmem:[%s193 + $0xb8] sm:$0xf]
      %v281 = vld [vmem:[%s193 + $0xbc] sm:$0xf]
      %v282 = vld [vmem:[%s193 + $0xc0] sm:$0xf]
      %v283 = vld [vmem:[%s193 + $0xc4] sm:$0xf]
      %v284 = vld [vmem:[%s193 + $0xc8] sm:$0xf]
      %v285 = vld [vmem:[%s193 + $0xcc] sm:$0xf]
      %v286 = vld [vmem:[%s193 + $0xd0] sm:$0xf]
      %v287 = vld [vmem:[%s193 + $0xd4] sm:$0xf]
      %v288 = vld [vmem:[%s193 + $0xd8] sm:$0xf]
      %v289 = vld [vmem:[%s193 + $0xdc] sm:$0xf]
      %v290 = vld [vmem:[%s193 + $0xe0] sm:$0xf]
      %v291 = vld [vmem:[%s193 + $0xe4] sm:$0xf]
      %v292 = vld [vmem:[%s193 + $0xe8] sm:$0xf]
      %v293 = vld [vmem:[%s193 + $0xec] sm:$0xf]
      %v294 = vld [vmem:[%s193 + $0xf0] sm:$0xf]
      %v295 = vld [vmem:[%s193 + $0xf4] sm:$0xf]
      %v296 = vld [vmem:[%s193 + $0xf8] sm:$0xf]
      %v297 = vld [vmem:[%s193 + $0xfc] sm:$0xf]
      %v298 = vld [vmem:[%s193 + $0x100] sm:$0xf]
      %v299 = vld [vmem:[%s193 + $0x104] sm:$0xf]
      %v300 = vld [vmem:[%s193 + $0x108] sm:$0xf]
      %v301 = vld [vmem:[%s193 + $0x10c] sm:$0xf]
      %v302 = vld [vmem:[%s193 + $0x110] sm:$0xf]
      %v303 = vld [vmem:[%s193 + $0x114] sm:$0xf]
      %v304 = vld [vmem:[%s193 + $0x118] sm:$0xf]
      %v305 = vld [vmem:[%s193 + $0x11c] sm:$0xf]
      %v306 = vld [vmem:[%s193 + $0x120] sm:$0xf]
      %v307 = vld [vmem:[%s193 + $0x124] sm:$0xf]
      %v308 = vld [vmem:[%s193 + $0x128] sm:$0xf]
      %v309 = vld [vmem:[%s193 + $0x12c] sm:$0xf]
      %v310 = vld [vmem:[%s193 + $0x130] sm:$0xf]
      %v311 = vld [vmem:[%s193 + $0x134] sm:$0xf]
      %v312 = vld [vmem:[%s193 + $0x138] sm:$0xf]
      %v313 = vld [vmem:[%s193 + $0x13c] sm:$0xf]
      %v314 = vld [vmem:[%s193 + $0x140] sm:$0xf]
      %v315 = vld [vmem:[%s193 + $0x144] sm:$0xf]
      %v316 = vld [vmem:[%s193 + $0x148] sm:$0xf]
      %v317 = vld [vmem:[%s193 + $0x14c] sm:$0xf]
      %v318 = vld [vmem:[%s193 + $0x150] sm:$0xf]
      %v319 = vld [vmem:[%s193 + $0x154] sm:$0xf]
      %v320 = vld [vmem:[%s193 + $0x158] sm:$0xf]
      %v321 = vld [vmem:[%s193 + $0x15c] sm:$0xf]
      %v322 = vld [vmem:[%s193 + $0x160] sm:$0xf]
      %v323 = vld [vmem:[%s193 + $0x164] sm:$0xf]
      %v324 = vld [vmem:[%s193 + $0x168] sm:$0xf]
      %v325 = vld [vmem:[%s193 + $0x16c] sm:$0xf]
      %v326 = vld [vmem:[%s193 + $0x170] sm:$0xf]
      %v327 = vld [vmem:[%s193 + $0x174] sm:$0xf]
      %v328 = vld [vmem:[%s193 + $0x178] sm:$0xf]
      %v329 = vld [vmem:[%s193 + $0x17c] sm:$0xf]
      %v330 = vld [vmem:[%s193 + $0x180] sm:$0xf]
      %v331 = vld [vmem:[%s193 + $0x184] sm:$0xf]
      %v332 = vld [vmem:[%s193 + $0x188] sm:$0xf]
      %v333 = vld [vmem:[%s193 + $0x18c] sm:$0xf]
      %v334 = vld [vmem:[%s193 + $0x190] sm:$0xf]
      %v335 = vld [vmem:[%s193 + $0x194] sm:$0xf]
      %v336 = vld [vmem:[%s193 + $0x198] sm:$0xf]
      %v337 = vld [vmem:[%s193 + $0x19c] sm:$0xf]
      %v338 = vld [vmem:[%s193 + $0x1a0] sm:$0xf]
      %v339 = vld [vmem:[%s193 + $0x1a4] sm:$0xf]
      %v340 = vld [vmem:[%s193 + $0x1a8] sm:$0xf]
      %v341 = vld [vmem:[%s193 + $0x1ac] sm:$0xf]
      %v342 = vld [vmem:[%s193 + $0x1b0] sm:$0xf]
      %v343 = vld [vmem:[%s193 + $0x1b4] sm:$0xf]
      %v344 = vld [vmem:[%s193 + $0x1b8] sm:$0xf]
      %v345 = vld [vmem:[%s193 + $0x1bc] sm:$0xf]
      %v346 = vld [vmem:[%s193 + $0x1c0] sm:$0xf]
      %v347 = vld [vmem:[%s193 + $0x1c4] sm:$0xf]
      %v348 = vld [vmem:[%s193 + $0x1c8] sm:$0xf]
      %v349 = vld [vmem:[%s193 + $0x1cc] sm:$0xf]
      %v350 = vld [vmem:[%s193 + $0x1d0] sm:$0xf]
      %v351 = vld [vmem:[%s193 + $0x1d4] sm:$0xf]
      %v352 = vld [vmem:[%s193 + $0x1d8] sm:$0xf]
      %v353 = vld [vmem:[%s193 + $0x1dc] sm:$0xf]
      %v354 = vld [vmem:[%s193 + $0x1e0] sm:$0xf]
      %v355 = vld [vmem:[%s193 + $0x1e4] sm:$0xf]
      %v356 = vld [vmem:[%s193 + $0x1e8] sm:$0xf]
      %v357 = vld [vmem:[%s193 + $0x1ec] sm:$0xf]
      %v358 = vld [vmem:[%s193 + $0x1f0] sm:$0xf]
      %v359 = vld [vmem:[%s193 + $0x1f4] sm:$0xf]
      %v360 = vld [vmem:[%s193 + $0x1f8] sm:$0xf]
      %v361 = vld [vmem:[%s193 + $0x1fc] sm:$0xf]
      %v362 = vld [vmem:[%s2] sm:$0xff]
      %v363 = vld [vmem:[%s2 + $0x8] sm:$0xff]
      %v364 = vld [vmem:[%s2 + $0x10] sm:$0xff]
      %v365 = vld [vmem:[%s2 + $0x18] sm:$0xff]
      %v366 = vld [vmem:[%s2 + $0x20] sm:$0xff]
      %v367 = vld [vmem:[%s2 + $0x28] sm:$0xff]
      %v368 = vld [vmem:[%s2 + $0x30] sm:$0xff]
      %v369 = vld [vmem:[%s2 + $0x38] sm:$0xff]
      %371 = vset.pattern.permute.xlu0 0
      %372 = vperm.xlu0 %371, %v362
      %v373 = vpop.permute.xlu0 %372
      %376 = vset.pattern.permute.xlu0 0
      %377 = vperm.xlu0 %376, %v363
      %v378 = vpop.permute.xlu0 %377
      %381 = vset.pattern.permute.xlu0 0
      %382 = vperm.xlu0 %381, %v364
      %v383 = vpop.permute.xlu0 %382
      %386 = vset.pattern.permute.xlu0 0
      %387 = vperm.xlu0 %386, %v365
      %v388 = vpop.permute.xlu0 %387
      %391 = vset.pattern.permute.xlu0 0
      %392 = vperm.xlu0 %391, %v366
      %v393 = vpop.permute.xlu0 %392
      %396 = vset.pattern.permute.xlu0 0
      %397 = vperm.xlu0 %396, %v367
      %v398 = vpop.permute.xlu0 %397
      %401 = vset.pattern.permute.xlu0 0
      %402 = vperm.xlu0 %401, %v368
      %v403 = vpop.permute.xlu0 %402
      %406 = vset.pattern.permute.xlu0 0
      %407 = vperm.xlu0 %406, %v369
      %v408 = vpop.permute.xlu0 %407
      %v442 = vunpack.c.l.b16 %v202
      %v443 = vunpack.c.h.b16 %v202
      %v444 = vunpack.c.l.b16 %v203
      %v445 = vunpack.c.h.b16 %v203
      %v446 = vunpack.c.l.b16 %v204
      %v447 = vunpack.c.h.b16 %v204
      %v448 = vunpack.c.l.b16 %v205
      %v449 = vunpack.c.h.b16 %v205
      %v450 = vunpack.c.l.b16 %v206
      %v451 = vunpack.c.h.b16 %v206
      %v452 = vunpack.c.l.b16 %v207
      %v453 = vunpack.c.h.b16 %v207
      %v454 = vunpack.c.l.b16 %v208
      %v455 = vunpack.c.h.b16 %v208
      %v456 = vunpack.c.l.b16 %v209
      %v457 = vunpack.c.h.b16 %v209
      %v458 = vunpack.c.l.b16 %v210
      %v459 = vunpack.c.h.b16 %v210
      %v460 = vunpack.c.l.b16 %v211
      %v461 = vunpack.c.h.b16 %v211
      %v462 = vunpack.c.l.b16 %v212
      %v463 = vunpack.c.h.b16 %v212
      %v464 = vunpack.c.l.b16 %v213
      %v465 = vunpack.c.h.b16 %v213
      %v466 = vunpack.c.l.b16 %v214
      %v467 = vunpack.c.h.b16 %v214
      %v468 = vunpack.c.l.b16 %v215
      %v469 = vunpack.c.h.b16 %v215
      %v470 = vunpack.c.l.b16 %v216
      %v471 = vunpack.c.h.b16 %v216
      %v472 = vunpack.c.l.b16 %v217
      %v473 = vunpack.c.h.b16 %v217
      %v474 = vunpack.c.l.b16 %v218
      %v475 = vunpack.c.h.b16 %v218
      %v476 = vunpack.c.l.b16 %v219
      %v477 = vunpack.c.h.b16 %v219
      %v478 = vunpack.c.l.b16 %v220
      %v479 = vunpack.c.h.b16 %v220
      %v480 = vunpack.c.l.b16 %v221
      %v481 = vunpack.c.h.b16 %v221
      %v482 = vunpack.c.l.b16 %v222
      %v483 = vunpack.c.h.b16 %v222
      %v484 = vunpack.c.l.b16 %v223
      %v485 = vunpack.c.h.b16 %v223
      %v486 = vunpack.c.l.b16 %v224
      %v487 = vunpack.c.h.b16 %v224
      %v488 = vunpack.c.l.b16 %v225
      %v489 = vunpack.c.h.b16 %v225
      %v490 = vunpack.c.l.b16 %v226
      %v491 = vunpack.c.h.b16 %v226
      %v492 = vunpack.c.l.b16 %v227
      %v493 = vunpack.c.h.b16 %v227
      %v494 = vunpack.c.l.b16 %v228
      %v495 = vunpack.c.h.b16 %v228
      %v496 = vunpack.c.l.b16 %v229
      %v497 = vunpack.c.h.b16 %v229
      %v498 = vunpack.c.l.b16 %v230
      %v499 = vunpack.c.h.b16 %v230
      %v500 = vunpack.c.l.b16 %v231
      %v501 = vunpack.c.h.b16 %v231
      %v502 = vunpack.c.l.b16 %v232
      %v503 = vunpack.c.h.b16 %v232
      %v504 = vunpack.c.l.b16 %v233
      %v505 = vunpack.c.h.b16 %v233
      %v506 = vpack.c.b16 %v450, %v442
      %v507 = vpack.c.b16 %v451, %v443
      %v508 = vpack.c.b16 %v452, %v444
      %v509 = vpack.c.b16 %v453, %v445
      %v510 = vpack.c.b16 %v454, %v446
      %v511 = vpack.c.b16 %v455, %v447
      %v512 = vpack.c.b16 %v456, %v448
      %v513 = vpack.c.b16 %v457, %v449
      %v514 = vpack.c.b16 %v466, %v458
      %v515 = vpack.c.b16 %v467, %v459
      %v516 = vpack.c.b16 %v468, %v460
      %v517 = vpack.c.b16 %v469, %v461
      %v518 = vpack.c.b16 %v470, %v462
      %v519 = vpack.c.b16 %v471, %v463
      %v520 = vpack.c.b16 %v472, %v464
      %v521 = vpack.c.b16 %v473, %v465
      %v522 = vpack.c.b16 %v482, %v474
      %v523 = vpack.c.b16 %v483, %v475
      %v524 = vpack.c.b16 %v484, %v476
      %v525 = vpack.c.b16 %v485, %v477
      %v526 = vpack.c.b16 %v486, %v478
      %v527 = vpack.c.b16 %v487, %v479
      %v528 = vpack.c.b16 %v488, %v480
      %v529 = vpack.c.b16 %v489, %v481
      %v530 = vpack.c.b16 %v498, %v490
      %v531 = vpack.c.b16 %v499, %v491
      %v532 = vpack.c.b16 %v500, %v492
      %v533 = vpack.c.b16 %v501, %v493
      %v534 = vpack.c.b16 %v502, %v494
      %v535 = vpack.c.b16 %v503, %v495
      %v536 = vpack.c.b16 %v504, %v496
      %v537 = vpack.c.b16 %v505, %v497
      %v698 = vunpack.c.l.b16 %v234
      %v699 = vunpack.c.l.b16 %v235
      %v700 = vunpack.c.l.b16 %v236
      %v701 = vunpack.c.l.b16 %v237
      %v702 = vunpack.c.l.b16 %v238
      %v703 = vunpack.c.l.b16 %v239
      %v704 = vunpack.c.l.b16 %v240
      %v705 = vunpack.c.l.b16 %v241
      %v706 = vunpack.c.l.b16 %v242
      %v707 = vunpack.c.l.b16 %v243
      %v708 = vunpack.c.l.b16 %v244
      %v709 = vunpack.c.l.b16 %v245
      %v710 = vunpack.c.l.b16 %v246
      %v711 = vunpack.c.l.b16 %v247
      %v712 = vunpack.c.l.b16 %v248
      %v713 = vunpack.c.l.b16 %v249
      %v714 = vunpack.c.l.b16 %v250
      %v715 = vunpack.c.l.b16 %v251
      %v716 = vunpack.c.l.b16 %v252
      %v717 = vunpack.c.l.b16 %v253
      %v718 = vunpack.c.l.b16 %v254
      %v719 = vunpack.c.l.b16 %v255
      %v720 = vunpack.c.l.b16 %v256
      %v721 = vunpack.c.l.b16 %v257
      %v722 = vunpack.c.l.b16 %v258
      %v723 = vunpack.c.l.b16 %v259
      %v724 = vunpack.c.l.b16 %v260
      %v725 = vunpack.c.l.b16 %v261
      %v726 = vunpack.c.l.b16 %v262
      %v727 = vunpack.c.l.b16 %v263
      %v728 = vunpack.c.l.b16 %v264
      %v729 = vunpack.c.l.b16 %v265
      %v730 = vunpack.c.l.b16 %v266
      %v731 = vunpack.c.l.b16 %v267
      %v732 = vunpack.c.l.b16 %v268
      %v733 = vunpack.c.l.b16 %v269
      %v734 = vunpack.c.l.b16 %v270
      %v735 = vunpack.c.l.b16 %v271
      %v736 = vunpack.c.l.b16 %v272
      %v737 = vunpack.c.l.b16 %v273
      %v738 = vunpack.c.l.b16 %v274
      %v739 = vunpack.c.l.b16 %v275
      %v740 = vunpack.c.l.b16 %v276
      %v741 = vunpack.c.l.b16 %v277
      %v742 = vunpack.c.l.b16 %v278
      %v743 = vunpack.c.l.b16 %v279
      %v744 = vunpack.c.l.b16 %v280
      %v745 = vunpack.c.l.b16 %v281
      %v746 = vunpack.c.l.b16 %v282
      %v747 = vunpack.c.l.b16 %v283
      %v748 = vunpack.c.l.b16 %v284
      %v749 = vunpack.c.l.b16 %v285
      %v750 = vunpack.c.l.b16 %v286
      %v751 = vunpack.c.l.b16 %v287
      %v752 = vunpack.c.l.b16 %v288
      %v753 = vunpack.c.l.b16 %v289
      %v754 = vunpack.c.l.b16 %v290
      %v755 = vunpack.c.l.b16 %v291
      %v756 = vunpack.c.l.b16 %v292
      %v757 = vunpack.c.l.b16 %v293
      %v758 = vunpack.c.l.b16 %v294
      %v759 = vunpack.c.l.b16 %v295
      %v760 = vunpack.c.l.b16 %v296
      %v761 = vunpack.c.l.b16 %v297
      %v762 = vunpack.c.l.b16 %v298
      %v763 = vunpack.c.l.b16 %v299
      %v764 = vunpack.c.l.b16 %v300
      %v765 = vunpack.c.l.b16 %v301
      %v766 = vunpack.c.l.b16 %v302
      %v767 = vunpack.c.l.b16 %v303
      %v768 = vunpack.c.l.b16 %v304
      %v769 = vunpack.c.l.b16 %v305
      %v770 = vunpack.c.l.b16 %v306
      %v771 = vunpack.c.l.b16 %v307
      %v772 = vunpack.c.l.b16 %v308
      %v773 = vunpack.c.l.b16 %v309
      %v774 = vunpack.c.l.b16 %v310
      %v775 = vunpack.c.l.b16 %v311
      %v776 = vunpack.c.l.b16 %v312
      %v777 = vunpack.c.l.b16 %v313
      %v778 = vunpack.c.l.b16 %v314
      %v779 = vunpack.c.l.b16 %v315
      %v780 = vunpack.c.l.b16 %v316
      %v781 = vunpack.c.l.b16 %v317
      %v782 = vunpack.c.l.b16 %v318
      %v783 = vunpack.c.l.b16 %v319
      %v784 = vunpack.c.l.b16 %v320
      %v785 = vunpack.c.l.b16 %v321
      %v786 = vunpack.c.l.b16 %v322
      %v787 = vunpack.c.l.b16 %v323
      %v788 = vunpack.c.l.b16 %v324
      %v789 = vunpack.c.l.b16 %v325
      %v790 = vunpack.c.l.b16 %v326
      %v791 = vunpack.c.l.b16 %v327
      %v792 = vunpack.c.l.b16 %v328
      %v793 = vunpack.c.l.b16 %v329
      %v794 = vunpack.c.l.b16 %v330
      %v795 = vunpack.c.l.b16 %v331
      %v796 = vunpack.c.l.b16 %v332
      %v797 = vunpack.c.l.b16 %v333
      %v798 = vunpack.c.l.b16 %v334
      %v799 = vunpack.c.l.b16 %v335
      %v800 = vunpack.c.l.b16 %v336
      %v801 = vunpack.c.l.b16 %v337
      %v802 = vunpack.c.l.b16 %v338
      %v803 = vunpack.c.l.b16 %v339
      %v804 = vunpack.c.l.b16 %v340
      %v805 = vunpack.c.l.b16 %v341
      %v806 = vunpack.c.l.b16 %v342
      %v807 = vunpack.c.l.b16 %v343
      %v808 = vunpack.c.l.b16 %v344
      %v809 = vunpack.c.l.b16 %v345
      %v810 = vunpack.c.l.b16 %v346
      %v811 = vunpack.c.l.b16 %v347
      %v812 = vunpack.c.l.b16 %v348
      %v813 = vunpack.c.l.b16 %v349
      %v814 = vunpack.c.l.b16 %v350
      %v815 = vunpack.c.l.b16 %v351
      %v816 = vunpack.c.l.b16 %v352
      %v817 = vunpack.c.l.b16 %v353
      %v818 = vunpack.c.l.b16 %v354
      %v819 = vunpack.c.l.b16 %v355
      %v820 = vunpack.c.l.b16 %v356
      %v821 = vunpack.c.l.b16 %v357
      %v822 = vunpack.c.l.b16 %v358
      %v823 = vunpack.c.l.b16 %v359
      %v824 = vunpack.c.l.b16 %v360
      %v825 = vunpack.c.l.b16 %v361
      %v826 = vpack.c.b16 %v699, %v698
      %v827 = vpack.c.b16 %v701, %v700
      %v828 = vpack.c.b16 %v703, %v702
      %v829 = vpack.c.b16 %v705, %v704
      %v830 = vpack.c.b16 %v707, %v706
      %v831 = vpack.c.b16 %v709, %v708
      %v832 = vpack.c.b16 %v711, %v710
      %v833 = vpack.c.b16 %v713, %v712
      %v834 = vpack.c.b16 %v715, %v714
      %v835 = vpack.c.b16 %v717, %v716
      %v836 = vpack.c.b16 %v719, %v718
      %v837 = vpack.c.b16 %v721, %v720
      %v838 = vpack.c.b16 %v723, %v722
      %v839 = vpack.c.b16 %v725, %v724
      %v840 = vpack.c.b16 %v727, %v726
      %v841 = vpack.c.b16 %v729, %v728
      %v842 = vpack.c.b16 %v731, %v730
      %v843 = vpack.c.b16 %v733, %v732
      %v844 = vpack.c.b16 %v735, %v734
      %v845 = vpack.c.b16 %v737, %v736
      %v846 = vpack.c.b16 %v739, %v738
      %v847 = vpack.c.b16 %v741, %v740
      %v848 = vpack.c.b16 %v743, %v742
      %v849 = vpack.c.b16 %v745, %v744
      %v850 = vpack.c.b16 %v747, %v746
      %v851 = vpack.c.b16 %v749, %v748
      %v852 = vpack.c.b16 %v751, %v750
      %v853 = vpack.c.b16 %v753, %v752
      %v854 = vpack.c.b16 %v755, %v754
      %v855 = vpack.c.b16 %v757, %v756
      %v856 = vpack.c.b16 %v759, %v758
      %v857 = vpack.c.b16 %v761, %v760
      %v858 = vpack.c.b16 %v763, %v762
      %v859 = vpack.c.b16 %v765, %v764
      %v860 = vpack.c.b16 %v767, %v766
      %v861 = vpack.c.b16 %v769, %v768
      %v862 = vpack.c.b16 %v771, %v770
      %v863 = vpack.c.b16 %v773, %v772
      %v864 = vpack.c.b16 %v775, %v774
      %v865 = vpack.c.b16 %v777, %v776
      %v866 = vpack.c.b16 %v779, %v778
      %v867 = vpack.c.b16 %v781, %v780
      %v868 = vpack.c.b16 %v783, %v782
      %v869 = vpack.c.b16 %v785, %v784
      %v870 = vpack.c.b16 %v787, %v786
      %v871 = vpack.c.b16 %v789, %v788
      %v872 = vpack.c.b16 %v791, %v790
      %v873 = vpack.c.b16 %v793, %v792
      %v874 = vpack.c.b16 %v795, %v794
      %v875 = vpack.c.b16 %v797, %v796
      %v876 = vpack.c.b16 %v799, %v798
      %v877 = vpack.c.b16 %v801, %v800
      %v878 = vpack.c.b16 %v803, %v802
      %v879 = vpack.c.b16 %v805, %v804
      %v880 = vpack.c.b16 %v807, %v806
      %v881 = vpack.c.b16 %v809, %v808
      %v882 = vpack.c.b16 %v811, %v810
      %v883 = vpack.c.b16 %v813, %v812
      %v884 = vpack.c.b16 %v815, %v814
      %v885 = vpack.c.b16 %v817, %v816
      %v886 = vpack.c.b16 %v819, %v818
      %v887 = vpack.c.b16 %v821, %v820
      %v888 = vpack.c.b16 %v823, %v822
      %v889 = vpack.c.b16 %v825, %v824
      %954 = vmatpush.bf16.msra.mxu0 %v833
      %955 = vmatpush.bf16.msra.mxu0 %v832
      %956 = vmatpush.bf16.msra.mxu0 %v831
      %957 = vmatpush.bf16.msra.mxu0 %v830
      %958 = vmatpush.bf16.msra.mxu0 %v829
      %959 = vmatpush.bf16.msra.mxu0 %v828
      %960 = vmatpush.bf16.msra.mxu0 %v827
      %961 = vmatpush.bf16.msra.mxu0 %v826
      %962 = vmatmul.bf16.gmra.mxu0 %v506
      %v963 = vpop.f32.mrf.mxu0
      %v964 = vadd.f32 %v373, %v963
      %v965 = vpop.f32.mrf.mxu0
      %v966 = vadd.f32 %v378, %v965
      %967 = vmatmul.bf16.gmra.mxu0 %v514
      %v968 = vpop.f32.mrf.mxu0
      %v969 = vadd.f32 %v383, %v968
      %v970 = vpop.f32.mrf.mxu0
      %v971 = vadd.f32 %v388, %v970
      %972 = vmatmul.bf16.gmra.mxu0 %v522
      %v973 = vpop.f32.mrf.mxu0
      %v974 = vadd.f32 %v393, %v973
      %v975 = vpop.f32.mrf.mxu0
      %v976 = vadd.f32 %v398, %v975
      %977 = vmatmul.bf16.gmra.mxu0 %v530
      %v978 = vpop.f32.mrf.mxu0
      %v979 = vadd.f32 %v403, %v978
      %v980 = vpop.f32.mrf.mxu0
      %v981 = vadd.f32 %v408, %v980
      %982 = vdwg.mxu0
      %983 = vmatpush.bf16.msra.mxu0 %v841
      %984 = vmatpush.bf16.msra.mxu0 %v840
      %985 = vmatpush.bf16.msra.mxu0 %v839
      %986 = vmatpush.bf16.msra.mxu0 %v838
      %987 = vmatpush.bf16.msra.mxu0 %v837
      %988 = vmatpush.bf16.msra.mxu0 %v836
      %989 = vmatpush.bf16.msra.mxu0 %v835
      %990 = vmatpush.bf16.msra.mxu0 %v834
      %991 = vmatmul.bf16.gmra.mxu0 %v507
      %v992 = vpop.f32.mrf.mxu0
      %v993 = vadd.f32 %v964, %v992
      %v994 = vpop.f32.mrf.mxu0
      %v995 = vadd.f32 %v966, %v994
      %996 = vmatmul.bf16.gmra.mxu0 %v515
      %v997 = vpop.f32.mrf.mxu0
      %v998 = vadd.f32 %v969, %v997
      %v999 = vpop.f32.mrf.mxu0
      %v1000 = vadd.f32 %v971, %v999
      %1001 = vmatmul.bf16.gmra.mxu0 %v523
      %v1002 = vpop.f32.mrf.mxu0
      %v1003 = vadd.f32 %v974, %v1002
      %v1004 = vpop.f32.mrf.mxu0
      %v1005 = vadd.f32 %v976, %v1004
      %1006 = vmatmul.bf16.gmra.mxu0 %v531
      %v1007 = vpop.f32.mrf.mxu0
      %v1008 = vadd.f32 %v979, %v1007
      %v1009 = vpop.f32.mrf.mxu0
      %v1010 = vadd.f32 %v981, %v1009
      %1011 = vdwg.mxu0
      %1012 = vmatpush.bf16.msra.mxu0 %v849
      %1013 = vmatpush.bf16.msra.mxu0 %v848
      %1014 = vmatpush.bf16.msra.mxu0 %v847
      %1015 = vmatpush.bf16.msra.mxu0 %v846
      %1016 = vmatpush.bf16.msra.mxu0 %v845
      %1017 = vmatpush.bf16.msra.mxu0 %v844
      %1018 = vmatpush.bf16.msra.mxu0 %v843
      %1019 = vmatpush.bf16.msra.mxu0 %v842
      %1020 = vmatmul.bf16.gmra.mxu0 %v508
      %v1021 = vpop.f32.mrf.mxu0
      %v1022 = vadd.f32 %v993, %v1021
      %v1023 = vpop.f32.mrf.mxu0
      %v1024 = vadd.f32 %v995, %v1023
      %1025 = vmatmul.bf16.gmra.mxu0 %v516
      %v1026 = vpop.f32.mrf.mxu0
      %v1027 = vadd.f32 %v998, %v1026
      %v1028 = vpop.f32.mrf.mxu0
      %v1029 = vadd.f32 %v1000, %v1028
      %1030 = vmatmul.bf16.gmra.mxu0 %v524
      %v1031 = vpop.f32.mrf.mxu0
      %v1032 = vadd.f32 %v1003, %v1031
      %v1033 = vpop.f32.mrf.mxu0
      %v1034 = vadd.f32 %v1005, %v1033
      %1035 = vmatmul.bf16.gmra.mxu0 %v532
      %v1036 = vpop.f32.mrf.mxu0
      %v1037 = vadd.f32 %v1008, %v1036
      %v1038 = vpop.f32.mrf.mxu0
      %v1039 = vadd.f32 %v1010, %v1038
      %1040 = vdwg.mxu0
      %1041 = vmatpush.bf16.msra.mxu0 %v857
      %1042 = vmatpush.bf16.msra.mxu0 %v856
      %1043 = vmatpush.bf16.msra.mxu0 %v855
      %1044 = vmatpush.bf16.msra.mxu0 %v854
      %1045 = vmatpush.bf16.msra.mxu0 %v853
      %1046 = vmatpush.bf16.msra.mxu0 %v852
      %1047 = vmatpush.bf16.msra.mxu0 %v851
      %1048 = vmatpush.bf16.msra.mxu0 %v850
      %1049 = vmatmul.bf16.gmra.mxu0 %v509
      %v1050 = vpop.f32.mrf.mxu0
      %v1051 = vadd.f32 %v1022, %v1050
      %v1052 = vpop.f32.mrf.mxu0
      %v1053 = vadd.f32 %v1024, %v1052
      %1054 = vmatmul.bf16.gmra.mxu0 %v517
      %v1055 = vpop.f32.mrf.mxu0
      %v1056 = vadd.f32 %v1027, %v1055
      %v1057 = vpop.f32.mrf.mxu0
      %v1058 = vadd.f32 %v1029, %v1057
      %1059 = vmatmul.bf16.gmra.mxu0 %v525
      %v1060 = vpop.f32.mrf.mxu0
      %v1061 = vadd.f32 %v1032, %v1060
      %v1062 = vpop.f32.mrf.mxu0
      %v1063 = vadd.f32 %v1034, %v1062
      %1064 = vmatmul.bf16.gmra.mxu0 %v533
      %v1065 = vpop.f32.mrf.mxu0
      %v1066 = vadd.f32 %v1037, %v1065
      %v1067 = vpop.f32.mrf.mxu0
      %v1068 = vadd.f32 %v1039, %v1067
      %1069 = vdwg.mxu0
      %1070 = vmatpush.bf16.msra.mxu0 %v865
      %1071 = vmatpush.bf16.msra.mxu0 %v864
      %1072 = vmatpush.bf16.msra.mxu0 %v863
      %1073 = vmatpush.bf16.msra.mxu0 %v862
      %1074 = vmatpush.bf16.msra.mxu0 %v861
      %1075 = vmatpush.bf16.msra.mxu0 %v860
      %1076 = vmatpush.bf16.msra.mxu0 %v859
      %1077 = vmatpush.bf16.msra.mxu0 %v858
      %1078 = vmatmul.bf16.gmra.mxu0 %v510
      %v1079 = vpop.f32.mrf.mxu0
      %v1080 = vadd.f32 %v1051, %v1079
      %v1081 = vpop.f32.mrf.mxu0
      %v1082 = vadd.f32 %v1053, %v1081
      %1083 = vmatmul.bf16.gmra.mxu0 %v518
      %v1084 = vpop.f32.mrf.mxu0
      %v1085 = vadd.f32 %v1056, %v1084
      %v1086 = vpop.f32.mrf.mxu0
      %v1087 = vadd.f32 %v1058, %v1086
      %1088 = vmatmul.bf16.gmra.mxu0 %v526
      %v1089 = vpop.f32.mrf.mxu0
      %v1090 = vadd.f32 %v1061, %v1089
      %v1091 = vpop.f32.mrf.mxu0
      %v1092 = vadd.f32 %v1063, %v1091
      %1093 = vmatmul.bf16.gmra.mxu0 %v534
      %v1094 = vpop.f32.mrf.mxu0
      %v1095 = vadd.f32 %v1066, %v1094
      %v1096 = vpop.f32.mrf.mxu0
      %v1097 = vadd.f32 %v1068, %v1096
      %1098 = vdwg.mxu0
      %1099 = vmatpush.bf16.msra.mxu0 %v873
      %1100 = vmatpush.bf16.msra.mxu0 %v872
      %1101 = vmatpush.bf16.msra.mxu0 %v871
      %1102 = vmatpush.bf16.msra.mxu0 %v870
      %1103 = vmatpush.bf16.msra.mxu0 %v869
      %1104 = vmatpush.bf16.msra.mxu0 %v868
      %1105 = vmatpush.bf16.msra.mxu0 %v867
      %1106 = vmatpush.bf16.msra.mxu0 %v866
      %1107 = vmatmul.bf16.gmra.mxu0 %v511
      %v1108 = vpop.f32.mrf.mxu0
      %v1109 = vadd.f32 %v1080, %v1108
      %v1110 = vpop.f32.mrf.mxu0
      %v1111 = vadd.f32 %v1082, %v1110
      %1112 = vmatmul.bf16.gmra.mxu0 %v519
      %v1113 = vpop.f32.mrf.mxu0
      %v1114 = vadd.f32 %v1085, %v1113
      %v1115 = vpop.f32.mrf.mxu0
      %v1116 = vadd.f32 %v1087, %v1115
      %1117 = vmatmul.bf16.gmra.mxu0 %v527
      %v1118 = vpop.f32.mrf.mxu0
      %v1119 = vadd.f32 %v1090, %v1118
      %v1120 = vpop.f32.mrf.mxu0
      %v1121 = vadd.f32 %v1092, %v1120
      %1122 = vmatmul.bf16.gmra.mxu0 %v535
      %v1123 = vpop.f32.mrf.mxu0
      %v1124 = vadd.f32 %v1095, %v1123
      %v1125 = vpop.f32.mrf.mxu0
      %v1126 = vadd.f32 %v1097, %v1125
      %1127 = vdwg.mxu0
      %1128 = vmatpush.bf16.msra.mxu0 %v881
      %1129 = vmatpush.bf16.msra.mxu0 %v880
      %1130 = vmatpush.bf16.msra.mxu0 %v879
      %1131 = vmatpush.bf16.msra.mxu0 %v878
      %1132 = vmatpush.bf16.msra.mxu0 %v877
      %1133 = vmatpush.bf16.msra.mxu0 %v876
      %1134 = vmatpush.bf16.msra.mxu0 %v875
      %1135 = vmatpush.bf16.msra.mxu0 %v874
      %1136 = vmatmul.bf16.gmra.mxu0 %v512
      %v1137 = vpop.f32.mrf.mxu0
      %v1138 = vadd.f32 %v1109, %v1137
      %v1139 = vpop.f32.mrf.mxu0
      %v1140 = vadd.f32 %v1111, %v1139
      %1141 = vmatmul.bf16.gmra.mxu0 %v520
      %v1142 = vpop.f32.mrf.mxu0
      %v1143 = vadd.f32 %v1114, %v1142
      %v1144 = vpop.f32.mrf.mxu0
      %v1145 = vadd.f32 %v1116, %v1144
      %1146 = vmatmul.bf16.gmra.mxu0 %v528
      %v1147 = vpop.f32.mrf.mxu0
      %v1148 = vadd.f32 %v1119, %v1147
      %v1149 = vpop.f32.mrf.mxu0
      %v1150 = vadd.f32 %v1121, %v1149
      %1151 = vmatmul.bf16.gmra.mxu0 %v536
      %v1152 = vpop.f32.mrf.mxu0
      %v1153 = vadd.f32 %v1124, %v1152
      %v1154 = vpop.f32.mrf.mxu0
      %v1155 = vadd.f32 %v1126, %v1154
      %1156 = vdwg.mxu0
      %1157 = vmatpush.bf16.msra.mxu0 %v889
      %1158 = vmatpush.bf16.msra.mxu0 %v888
      %1159 = vmatpush.bf16.msra.mxu0 %v887
      %1160 = vmatpush.bf16.msra.mxu0 %v886
      %1161 = vmatpush.bf16.msra.mxu0 %v885
      %1162 = vmatpush.bf16.msra.mxu0 %v884
      %1163 = vmatpush.bf16.msra.mxu0 %v883
      %1164 = vmatpush.bf16.msra.mxu0 %v882
      %1165 = vmatmul.bf16.gmra.mxu0 %v513
      %v1166 = vpop.f32.mrf.mxu0
      %v1167 = vadd.f32 %v1138, %v1166
      %v1168 = vpop.f32.mrf.mxu0
      %v1169 = vadd.f32 %v1140, %v1168
      %1170 = vmatmul.bf16.gmra.mxu0 %v521
      %v1171 = vpop.f32.mrf.mxu0
      %v1172 = vadd.f32 %v1143, %v1171
      %v1173 = vpop.f32.mrf.mxu0
      %v1174 = vadd.f32 %v1145, %v1173
      %1175 = vmatmul.bf16.gmra.mxu0 %v529
      %v1176 = vpop.f32.mrf.mxu0
      %v1177 = vadd.f32 %v1148, %v1176
      %v1178 = vpop.f32.mrf.mxu0
      %v1179 = vadd.f32 %v1150, %v1178
      %1180 = vmatmul.bf16.gmra.mxu0 %v537
      %v1181 = vpop.f32.mrf.mxu0
      %v1182 = vadd.f32 %v1153, %v1181
      %v1183 = vpop.f32.mrf.mxu0
      %v1184 = vadd.f32 %v1155, %v1183
      %1185 = vdwg.mxu0
      %v1186 = vmax.f32 %v1167, 0.0
      %v1187 = vmax.f32 %v1169, 0.0
      %v1188 = vmax.f32 %v1172, 0.0
      %v1189 = vmax.f32 %v1174, 0.0
      %v1190 = vmax.f32 %v1177, 0.0
      %v1191 = vmax.f32 %v1179, 0.0
      %v1192 = vmax.f32 %v1182, 0.0
      %v1193 = vmax.f32 %v1184, 0.0
      %v1194 = vpack.c.bf16 %v1186, %v1186
      %v1195 = vpack.c.bf16 %v1187, %v1187
      %v1196 = vpack.c.bf16 %v1188, %v1188
      %v1197 = vpack.c.bf16 %v1189, %v1189
      %v1198 = vpack.c.bf16 %v1190, %v1190
      %v1199 = vpack.c.bf16 %v1191, %v1191
      %v1200 = vpack.c.bf16 %v1192, %v1192
      %v1201 = vpack.c.bf16 %v1193, %v1193
      %1202 = vst [vmem:[%s201] sm:$0xf] %v1194
      %1203 = vst [vmem:[%s201 + $0x4] sm:$0xf] %v1195
      %1204 = vst [vmem:[%s201 + $0x8] sm:$0xf] %v1196
      %1205 = vst [vmem:[%s201 + $0xc] sm:$0xf] %v1197
      %1206 = vst [vmem:[%s201 + $0x10] sm:$0xf] %v1198
      %1207 = vst [vmem:[%s201 + $0x14] sm:$0xf] %v1199
      %1208 = vst [vmem:[%s201 + $0x18] sm:$0xf] %v1200
      %1209 = vst [vmem:[%s201 + $0x1c] sm:$0xf] %v1201
      %p1210 = scmp.lt.s32.totalorder %s18, 1
      %s1211 = scalar_select %p1210, %s18, 1
      %p1212 = scmp.lt.s32.totalorder %s19, 0
      %s1213 = scalar_select %p1212, %s19, 0
      %s1214 = smul.addr %s1211, 8
      %s1215 = sadd.s32 %s1213, %s1214
      %s1216 = smul.addr %s1215, 4
      %s1217 = scalar_lea.vmem %s3, %s1216
      // Predicated region
      $region33: #{sranet_forward.6} parent=31 // pred_check
        %p1218 = pneg %p116
      $region34: #{sranet_forward.6} parent=31 // pred_check_branch
        %1220 = sbr.rel (%p1218) target = $region36
      $region35: #{sranet_forward.6} parent=31 // pred_region
        _
      $region36: #{sranet_forward.6} parent=31 // pred_fallthru
        _
    $region32: #{sranet_forward.6} parent=5 // pred_fallthru
      _
    %p1221 = scmp.le.s32.totalorder 2, %s9
    // Predicated region
    $region37: #{sranet_forward.6} parent=5 // pred_check
      %p1222 = pneg %p1221
    $region38: #{sranet_forward.6} parent=5 // pred_check_branch
      %1224 = sbr.rel (%p1222) target = $region40
    $region39: #{sranet_forward.6} parent=5 // pred_region
      %s1225 = ssub.s32 %s9, 2
      // Predicated region
      $region41: #{sranet_forward.6} parent=39 // pred_check
        %p1226 = pneg %p122
      $region42: #{sranet_forward.6} parent=39 // pred_check_branch
        %1228 = sbr.rel (%p1226) target = $region44
      $region43: #{sranet_forward.6} parent=39 // pred_region
        %p1229 = scmp.lt.s32.totalorder %s20, 1
        %s1230 = scalar_select %p1229, %s20, 1
        %p1231 = scmp.lt.s32.totalorder %s21, 0
        %s1232 = scalar_select %p1231, %s21, 0
        %s1233 = smul.addr %s1230, 8
        %s1234 = sadd.s32 %s1232, %s1233
        %s1235 = smul.addr %s1234, 4
        %s1236 = scalar_lea.vmem %s3, %s1235
      $region44: #{sranet_forward.6} parent=39 // pred_fallthru
        _
    $region40: #{sranet_forward.6} parent=5 // pred_fallthru
      _
  $region6: #{sranet_forward.6} parent=0 // loop_footer
    %s13 = sadd.s32 1, %s9
  $region7: #{sranet_forward.6} parent=0 // loop_footer_branch
    %8 = sbr.rel target = $region3
  $region8: #{sranet_forward.6} parent=0 // loop_exit
    _

// kernel: sranet_forward.7
$region0: #{sranet_forward.7}
  #allocation0 [shape = 'u32[]', space=smem, size = 0x4, offset = 0x4, fixed_abs, tag = 'smem constant byte address 0x4 - core index']
  #allocation1 [shape = 'u32[72,128]{1,0:T(1,128)}', space=vmem, size = 0x9000, scoped, tag = 'internal scratch']
  %s0 = inlined_call_operand.vmem [shape: bf16[2,512,128], index: 0, kind: input, shape index: {}]
  %s1 = inlined_call_operand.vmem [shape: bf16[64,512], index: 1, kind: input, shape index: {}]
  %s2 = inlined_call_operand.vmem [shape: f32[64,1], index: 2, kind: input, shape index: {}]
  %s3 = inlined_call_operand.vmem [shape: bf16[2,64,128], index: 3, kind: output, shape index: {}]
  %s4 = sld [smem:[#allocation0]]
  $region45: #{sranet_forward.7} parent=0
    _
  %s6 = ssub.s32 1, %s4
  %s7 = scalar_select 0, %s6, %s4
  loop: start=0, step=1, limit=4
  $region2: #{sranet_forward.7} parent=0 // loop_pre_header
    _
  $region3: #{sranet_forward.7} parent=0 // loop_header
    %s9 = sphi 0, %s13
    %p10 = scmp.ge.s32.totalorder %s9, 4
    %s16 = sphi 0, %s28
    %s17 = sphi 0, %s24
    %s18 = sphi 0, %s16
    %s19 = sphi 0, %s17
    %s20 = sphi 0, %s18
    %s21 = sphi 0, %s19
    %s33 = sphi 0, %s35
    %s36 = sphi 0, %s33
    %s37 = sphi 0, %s36
    %s53 = sphi 0, %s37
    %s57 = sphi 0, %s57
    %s59 = sphi 0, %s57
    %s60 = sphi 0, %s59
    %s74 = sphi 0, %s60
    %s78 = sphi 0, %s78
    %s80 = sphi 0, %s78
    %s81 = sphi 0, %s80
    %s95 = sphi 0, %s81
    %s103 = sphi 0, %s105
    %s106 = sphi 0, %s103
    %s107 = sphi 0, %s106
    %s123 = sphi 0, %s107
  $region4: #{sranet_forward.7} parent=0 // loop_header_branch
    %12 = sbr.rel (%p10) target = $region8
  $region5: #{sranet_forward.7} parent=0 // loop_body
    %s14 = ssub.s32 %s9, 1
    %s15 = ssub.s32 %s9, 2
    %s22 = sadd.s32 1, %s17
    %p23 = scmp.ge.s32.totalorder %s22, 1
    %s24 = scalar_select %p23, 0, %s22
    %s25 = sadd.s32 1, %s16
    %s26 = scalar_select %p23, %s25, %s16
    %p27 = scmp.ge.s32.totalorder %s26, 2
    %s28 = scalar_select %p27, 0, %s26
    %s29 = ssub.s32 %s16, %s28
    %s30 = ssub.s32 %s17, %s24
    %s31 = sor.u32 %s29, %s30
    %p32 = scmp.eq.s32.totalorder %s31, 0
    %s34 = sadd.s32 %s33, 1
    %s35 = scalar_select %p32, %s33, %s34
    %p38 = pneg %p32
    %p39 = scmp.eq.s32.totalorder %s9, 1
    %p40 = por %p38, %p39
    %p41 = scmp.ne.s32.totalorder %s33, %s36
    %p42 = scmp.eq.s32.totalorder %s9, 0
    %p43 = por %p41, %p42
    %p44 = scmp.ne.s32.totalorder %s33, %s36
    %p45 = scmp.eq.s32.totalorder %s14, 1
    %p46 = por %p44, %p45
    %p47 = scmp.ne.s32.totalorder %s36, %s37
    %p48 = scmp.eq.s32.totalorder %s14, 0
    %p49 = por %p47, %p48
    %p50 = scmp.ne.s32.totalorder %s36, %s37
    %p51 = scmp.eq.s32.totalorder %s15, 1
    %p52 = por %p50, %p51
    %p54 = scmp.ne.s32.totalorder %s37, %s53
    %p55 = scmp.eq.s32.totalorder %s15, 0
    %p56 = por %p54, %p55
    %s58 = sadd.s32 %s57, 1
    %p61 = scmp.eq.s32.totalorder %s9, 1
    %p62 = scmp.ne.s32.totalorder %s57, %s59
    %p63 = scmp.eq.s32.totalorder %s9, 0
    %p64 = por %p62, %p63
    %p65 = scmp.ne.s32.totalorder %s57, %s59
    %p66 = scmp.eq.s32.totalorder %s14, 1
    %p67 = por %p65, %p66
    %p68 = scmp.ne.s32.totalorder %s59, %s60
    %p69 = scmp.eq.s32.totalorder %s14, 0
    %p70 = por %p68, %p69
    %p71 = scmp.ne.s32.totalorder %s59, %s60
    %p72 = scmp.eq.s32.totalorder %s15, 1
    %p73 = por %p71, %p72
    %p75 = scmp.ne.s32.totalorder %s60, %s74
    %p76 = scmp.eq.s32.totalorder %s15, 0
    %p77 = por %p75, %p76
    %s79 = sadd.s32 %s78, 1
    %p82 = scmp.eq.s32.totalorder %s9, 1
    %p83 = scmp.ne.s32.totalorder %s78, %s80
    %p84 = scmp.eq.s32.totalorder %s9, 0
    %p85 = por %p83, %p84
    %p86 = scmp.ne.s32.totalorder %s78, %s80
    %p87 = scmp.eq.s32.totalorder %s14, 1
    %p88 = por %p86, %p87
    %p89 = scmp.ne.s32.totalorder %s80, %s81
    %p90 = scmp.eq.s32.totalorder %s14, 0
    %p91 = por %p89, %p90
    %p92 = scmp.ne.s32.totalorder %s80, %s81
    %p93 = scmp.eq.s32.totalorder %s15, 1
    %p94 = por %p92, %p93
    %p96 = scmp.ne.s32.totalorder %s81, %s95
    %p97 = scmp.eq.s32.totalorder %s15, 0
    %p98 = por %p96, %p97
    %s99 = ssub.s32 %s16, %s28
    %s100 = ssub.s32 %s17, %s24
    %s101 = sor.u32 %s99, %s100
    %p102 = scmp.eq.s32.totalorder %s101, 0
    %s104 = sadd.s32 %s103, 1
    %s105 = scalar_select %p102, %s103, %s104
    %p108 = pneg %p102
    %p109 = scmp.eq.s32.totalorder %s9, 1
    %p110 = por %p108, %p109
    %p111 = scmp.ne.s32.totalorder %s103, %s106
    %p112 = scmp.eq.s32.totalorder %s9, 0
    %p113 = por %p111, %p112
    %p114 = scmp.ne.s32.totalorder %s103, %s106
    %p115 = scmp.eq.s32.totalorder %s14, 1
    %p116 = por %p114, %p115
    %p117 = scmp.ne.s32.totalorder %s106, %s107
    %p118 = scmp.eq.s32.totalorder %s14, 0
    %p119 = por %p117, %p118
    %p120 = scmp.ne.s32.totalorder %s106, %s107
    %p121 = scmp.eq.s32.totalorder %s15, 1
    %p122 = por %p120, %p121
    %p124 = scmp.ne.s32.totalorder %s107, %s123
    %p125 = scmp.eq.s32.totalorder %s15, 0
    %p126 = por %p124, %p125
    %p127 = scmp.le.s32.totalorder 1, %s9
    %p128 = scmp.lt.s32.totalorder %s9, 3
    %p129 = pnand %p127, %p128
    %p130 = pneg %p129
    // Predicated region
    $region9: #{sranet_forward.7} parent=5 // pred_check
      _
    $region10: #{sranet_forward.7} parent=5 // pred_check_branch
      %132 = sbr.rel (%p129) target = $region12
    $region11: #{sranet_forward.7} parent=5 // pred_region
      %s133 = ssub.s32 %s9, 1
      // Predicated region
      $region13: #{sranet_forward.7} parent=11 // pred_check
        %p134 = pneg %p70
      $region14: #{sranet_forward.7} parent=11 // pred_check_branch
        %136 = sbr.rel (%p134) target = $region16
      $region15: #{sranet_forward.7} parent=11 // pred_region
        _
      $region16: #{sranet_forward.7} parent=11 // pred_fallthru
        _
      // Predicated region
      $region17: #{sranet_forward.7} parent=11 // pred_check
        %p137 = pneg %p91
      $region18: #{sranet_forward.7} parent=11 // pred_check_branch
        %139 = sbr.rel (%p137) target = $region20
      $region19: #{sranet_forward.7} parent=11 // pred_region
        _
      $region20: #{sranet_forward.7} parent=11 // pred_fallthru
        _
    $region12: #{sranet_forward.7} parent=5 // pred_fallthru
      _
    %p140 = scmp.lt.s32.totalorder %s9, 2
    // Predicated region
    $region21: #{sranet_forward.7} parent=5 // pred_check
      %p141 = pneg %p140
    $region22: #{sranet_forward.7} parent=5 // pred_check_branch
      %143 = sbr.rel (%p141) target = $region24
    $region23: #{sranet_forward.7} parent=5 // pred_region
      // Predicated region
      $region25: #{sranet_forward.7} parent=23 // pred_check
        %p144 = pneg %p43
      $region26: #{sranet_forward.7} parent=23 // pred_check_branch
        %146 = sbr.rel (%p144) target = $region28
      $region27: #{sranet_forward.7} parent=23 // pred_region
        %p147 = scmp.lt.s32.totalorder %s16, 1
        %s148 = scalar_select %p147, %s16, 1
        %p149 = scmp.lt.s32.totalorder %s17, 0
        %s150 = scalar_select %p149, %s17, 0
        %s151 = smul.addr %s148, 64
        %s152 = sadd.s32 %s150, %s151
        %s153 = smul.addr %s152, 4
        %s154 = scalar_lea.vmem %s0, %s153
      $region28: #{sranet_forward.7} parent=23 // pred_fallthru
        _
    $region24: #{sranet_forward.7} parent=5 // pred_fallthru
      _
    %p155 = scmp.le.s32.totalorder 1, %s9
    %p156 = scmp.lt.s32.totalorder %s9, 3
    %p157 = pnand %p155, %p156
    %p158 = pneg %p157
    // Predicated region
    $region29: #{sranet_forward.7} parent=5 // pred_check
      _
    $region30: #{sranet_forward.7} parent=5 // pred_check_branch
      %160 = sbr.rel (%p157) target = $region32
    $region31: #{sranet_forward.7} parent=5 // pred_region
      %s161 = ssub.s32 %s9, 1
      %p162 = scmp.lt.s32.totalorder %s18, 1
      %s163 = scalar_select %p162, %s18, 1
      %p164 = scmp.lt.s32.totalorder %s19, 0
      %s165 = scalar_select %p164, %s19, 0
      %s166 = smul.addr %s163, 64
      %s167 = sadd.s32 %s165, %s166
      %s168 = smul.addr %s167, 4
      %s169 = scalar_lea.vmem %s0, %s168
      %p170 = pneg %p49
      %p171 = pneg %p46
      %p172 = pneg %p70
      %p173 = pneg %p67
      %p174 = pneg %p91
      %p175 = pneg %p88
      %p176 = pneg %p119
      %p177 = pneg %p116
      %p178 = scmp.lt.s32.totalorder %s18, 1
      %s179 = scalar_select %p178, %s18, 1
      %p180 = scmp.lt.s32.totalorder %s19, 0
      %s181 = scalar_select %p180, %s19, 0
      %s182 = smul.addr %s179, 8
      %s183 = sadd.s32 %s181, %s182
      %s184 = smul.addr %s183, 4
      %s185 = scalar_lea.vmem %s3, %s184
      %p186 = scmp.lt.s32.totalorder %s18, 1
      %s187 = scalar_select %p186, %s18, 1
      %p188 = scmp.lt.s32.totalorder %s19, 0
      %s189 = scalar_select %p188, %s19, 0
      %s190 = smul.addr %s187, 64
      %s191 = sadd.s32 %s189, %s190
      %s192 = smul.addr %s191, 4
      %s193 = scalar_lea.vmem %s0, %s192
      %p194 = scmp.lt.s32.totalorder %s18, 1
      %s195 = scalar_select %p194, %s18, 1
      %p196 = scmp.lt.s32.totalorder %s19, 0
      %s197 = scalar_select %p196, %s19, 0
      %s198 = smul.addr %s195, 8
      %s199 = sadd.s32 %s197, %s198
      %s200 = smul.addr %s199, 4
      %s201 = scalar_lea.vmem %s3, %s200
      %v202 = vld [vmem:[%s1] sm:$0xff]
      %v203 = vld [vmem:[%s1 + $0x8] sm:$0xff]
      %v204 = vld [vmem:[%s1 + $0x10] sm:$0xff]
      %v205 = vld [vmem:[%s1 + $0x18] sm:$0xff]
      %v206 = vld [vmem:[%s1 + $0x20] sm:$0xff]
      %v207 = vld [vmem:[%s1 + $0x28] sm:$0xff]
      %v208 = vld [vmem:[%s1 + $0x30] sm:$0xff]
      %v209 = vld [vmem:[%s1 + $0x38] sm:$0xff]
      %v210 = vld [vmem:[%s1 + $0x40] sm:$0xff]
      %v211 = vld [vmem:[%s1 + $0x48] sm:$0xff]
      %v212 = vld [vmem:[%s1 + $0x50] sm:$0xff]
      %v213 = vld [vmem:[%s1 + $0x58] sm:$0xff]
      %v214 = vld [vmem:[%s1 + $0x60] sm:$0xff]
      %v215 = vld [vmem:[%s1 + $0x68] sm:$0xff]
      %v216 = vld [vmem:[%s1 + $0x70] sm:$0xff]
      %v217 = vld [vmem:[%s1 + $0x78] sm:$0xff]
      %v218 = vld [vmem:[%s193] sm:$0xf]
      %v219 = vld [vmem:[%s193 + $0x4] sm:$0xf]
      %v220 = vld [vmem:[%s193 + $0x8] sm:$0xf]
      %v221 = vld [vmem:[%s193 + $0xc] sm:$0xf]
      %v222 = vld [vmem:[%s193 + $0x10] sm:$0xf]
      %v223 = vld [vmem:[%s193 + $0x14] sm:$0xf]
      %v224 = vld [vmem:[%s193 + $0x18] sm:$0xf]
      %v225 = vld [vmem:[%s193 + $0x1c] sm:$0xf]
      %v226 = vld [vmem:[%s193 + $0x20] sm:$0xf]
      %v227 = vld [vmem:[%s193 + $0x24] sm:$0xf]
      %v228 = vld [vmem:[%s193 + $0x28] sm:$0xf]
      %v229 = vld [vmem:[%s193 + $0x2c] sm:$0xf]
      %v230 = vld [vmem:[%s193 + $0x30] sm:$0xf]
      %v231 = vld [vmem:[%s193 + $0x34] sm:$0xf]
      %v232 = vld [vmem:[%s193 + $0x38] sm:$0xf]
      %v233 = vld [vmem:[%s193 + $0x3c] sm:$0xf]
      %v234 = vld [vmem:[%s193 + $0x40] sm:$0xf]
      %v235 = vld [vmem:[%s193 + $0x44] sm:$0xf]
      %v236 = vld [vmem:[%s193 + $0x48] sm:$0xf]
      %v237 = vld [vmem:[%s193 + $0x4c] sm:$0xf]
      %v238 = vld [vmem:[%s193 + $0x50] sm:$0xf]
      %v239 = vld [vmem:[%s193 + $0x54] sm:$0xf]
      %v240 = vld [vmem:[%s193 + $0x58] sm:$0xf]
      %v241 = vld [vmem:[%s193 + $0x5c] sm:$0xf]
      %v242 = vld [vmem:[%s193 + $0x60] sm:$0xf]
      %v243 = vld [vmem:[%s193 + $0x64] sm:$0xf]
      %v244 = vld [vmem:[%s193 + $0x68] sm:$0xf]
      %v245 = vld [vmem:[%s193 + $0x6c] sm:$0xf]
      %v246 = vld [vmem:[%s193 + $0x70] sm:$0xf]
      %v247 = vld [vmem:[%s193 + $0x74] sm:$0xf]
      %v248 = vld [vmem:[%s193 + $0x78] sm:$0xf]
      %v249 = vld [vmem:[%s193 + $0x7c] sm:$0xf]
      %v250 = vld [vmem:[%s193 + $0x80] sm:$0xf]
      %v251 = vld [vmem:[%s193 + $0x84] sm:$0xf]
      %v252 = vld [vmem:[%s193 + $0x88] sm:$0xf]
      %v253 = vld [vmem:[%s193 + $0x8c] sm:$0xf]
      %v254 = vld [vmem:[%s193 + $0x90] sm:$0xf]
      %v255 = vld [vmem:[%s193 + $0x94] sm:$0xf]
      %v256 = vld [vmem:[%s193 + $0x98] sm:$0xf]
      %v257 = vld [vmem:[%s193 + $0x9c] sm:$0xf]
      %v258 = vld [vmem:[%s193 + $0xa0] sm:$0xf]
      %v259 = vld [vmem:[%s193 + $0xa4] sm:$0xf]
      %v260 = vld [vmem:[%s193 + $0xa8] sm:$0xf]
      %v261 = vld [vmem:[%s193 + $0xac] sm:$0xf]
      %v262 = vld [vmem:[%s193 + $0xb0] sm:$0xf]
      %v263 = vld [vmem:[%s193 + $0xb4] sm:$0xf]
      %v264 = vld [vmem:[%s193 + $0xb8] sm:$0xf]
      %v265 = vld [vmem:[%s193 + $0xbc] sm:$0xf]
      %v266 = vld [vmem:[%s193 + $0xc0] sm:$0xf]
      %v267 = vld [vmem:[%s193 + $0xc4] sm:$0xf]
      %v268 = vld [vmem:[%s193 + $0xc8] sm:$0xf]
      %v269 = vld [vmem:[%s193 + $0xcc] sm:$0xf]
      %v270 = vld [vmem:[%s193 + $0xd0] sm:$0xf]
      %v271 = vld [vmem:[%s193 + $0xd4] sm:$0xf]
      %v272 = vld [vmem:[%s193 + $0xd8] sm:$0xf]
      %v273 = vld [vmem:[%s193 + $0xdc] sm:$0xf]
      %v274 = vld [vmem:[%s193 + $0xe0] sm:$0xf]
      %v275 = vld [vmem:[%s193 + $0xe4] sm:$0xf]
      %v276 = vld [vmem:[%s193 + $0xe8] sm:$0xf]
      %v277 = vld [vmem:[%s193 + $0xec] sm:$0xf]
      %v278 = vld [vmem:[%s193 + $0xf0] sm:$0xf]
      %v279 = vld [vmem:[%s193 + $0xf4] sm:$0xf]
      %v280 = vld [vmem:[%s193 + $0xf8] sm:$0xf]
      %v281 = vld [vmem:[%s193 + $0xfc] sm:$0xf]
      %v282 = vld [vmem:[%s2] sm:$0xff]
      %v283 = vld [vmem:[%s2 + $0x8] sm:$0xff]
      %v284 = vld [vmem:[%s2 + $0x10] sm:$0xff]
      %v285 = vld [vmem:[%s2 + $0x18] sm:$0xff]
      %v286 = vld [vmem:[%s2 + $0x20] sm:$0xff]
      %v287 = vld [vmem:[%s2 + $0x28] sm:$0xff]
      %v288 = vld [vmem:[%s2 + $0x30] sm:$0xff]
      %v289 = vld [vmem:[%s2 + $0x38] sm:$0xff]
      %291 = vset.pattern.permute.xlu0 0
      %292 = vperm.xlu0 %291, %v282
      %v293 = vpop.permute.xlu0 %292
      %296 = vset.pattern.permute.xlu0 0
      %297 = vperm.xlu0 %296, %v283
      %v298 = vpop.permute.xlu0 %297
      %301 = vset.pattern.permute.xlu0 0
      %302 = vperm.xlu0 %301, %v284
      %v303 = vpop.permute.xlu0 %302
      %306 = vset.pattern.permute.xlu0 0
      %307 = vperm.xlu0 %306, %v285
      %v308 = vpop.permute.xlu0 %307
      %311 = vset.pattern.permute.xlu0 0
      %312 = vperm.xlu0 %311, %v286
      %v313 = vpop.permute.xlu0 %312
      %316 = vset.pattern.permute.xlu0 0
      %317 = vperm.xlu0 %316, %v287
      %v318 = vpop.permute.xlu0 %317
      %321 = vset.pattern.permute.xlu0 0
      %322 = vperm.xlu0 %321, %v288
      %v323 = vpop.permute.xlu0 %322
      %326 = vset.pattern.permute.xlu0 0
      %327 = vperm.xlu0 %326, %v289
      %v328 = vpop.permute.xlu0 %327
      %v346 = vunpack.c.l.b16 %v202
      %v347 = vunpack.c.h.b16 %v202
      %v348 = vunpack.c.l.b16 %v203
      %v349 = vunpack.c.h.b16 %v203
      %v350 = vunpack.c.l.b16 %v204
      %v351 = vunpack.c.h.b16 %v204
      %v352 = vunpack.c.l.b16 %v205
      %v353 = vunpack.c.h.b16 %v205
      %v354 = vunpack.c.l.b16 %v206
      %v355 = vunpack.c.h.b16 %v206
      %v356 = vunpack.c.l.b16 %v207
      %v357 = vunpack.c.h.b16 %v207
      %v358 = vunpack.c.l.b16 %v208
      %v359 = vunpack.c.h.b16 %v208
      %v360 = vunpack.c.l.b16 %v209
      %v361 = vunpack.c.h.b16 %v209
      %v362 = vunpack.c.l.b16 %v210
      %v363 = vunpack.c.h.b16 %v210
      %v364 = vunpack.c.l.b16 %v211
      %v365 = vunpack.c.h.b16 %v211
      %v366 = vunpack.c.l.b16 %v212
      %v367 = vunpack.c.h.b16 %v212
      %v368 = vunpack.c.l.b16 %v213
      %v369 = vunpack.c.h.b16 %v213
      %v370 = vunpack.c.l.b16 %v214
      %v371 = vunpack.c.h.b16 %v214
      %v372 = vunpack.c.l.b16 %v215
      %v373 = vunpack.c.h.b16 %v215
      %v374 = vunpack.c.l.b16 %v216
      %v375 = vunpack.c.h.b16 %v216
      %v376 = vunpack.c.l.b16 %v217
      %v377 = vunpack.c.h.b16 %v217
      %v378 = vpack.c.b16 %v350, %v346
      %v379 = vpack.c.b16 %v351, %v347
      %v380 = vpack.c.b16 %v352, %v348
      %v381 = vpack.c.b16 %v353, %v349
      %v382 = vpack.c.b16 %v358, %v354
      %v383 = vpack.c.b16 %v359, %v355
      %v384 = vpack.c.b16 %v360, %v356
      %v385 = vpack.c.b16 %v361, %v357
      %v386 = vpack.c.b16 %v366, %v362
      %v387 = vpack.c.b16 %v367, %v363
      %v388 = vpack.c.b16 %v368, %v364
      %v389 = vpack.c.b16 %v369, %v365
      %v390 = vpack.c.b16 %v374, %v370
      %v391 = vpack.c.b16 %v375, %v371
      %v392 = vpack.c.b16 %v376, %v372
      %v393 = vpack.c.b16 %v377, %v373
      %v474 = vunpack.c.l.b16 %v218
      %v475 = vunpack.c.l.b16 %v219
      %v476 = vunpack.c.l.b16 %v220
      %v477 = vunpack.c.l.b16 %v221
      %v478 = vunpack.c.l.b16 %v222
      %v479 = vunpack.c.l.b16 %v223
      %v480 = vunpack.c.l.b16 %v224
      %v481 = vunpack.c.l.b16 %v225
      %v482 = vunpack.c.l.b16 %v226
      %v483 = vunpack.c.l.b16 %v227
      %v484 = vunpack.c.l.b16 %v228
      %v485 = vunpack.c.l.b16 %v229
      %v486 = vunpack.c.l.b16 %v230
      %v487 = vunpack.c.l.b16 %v231
      %v488 = vunpack.c.l.b16 %v232
      %v489 = vunpack.c.l.b16 %v233
      %v490 = vunpack.c.l.b16 %v234
      %v491 = vunpack.c.l.b16 %v235
      %v492 = vunpack.c.l.b16 %v236
      %v493 = vunpack.c.l.b16 %v237
      %v494 = vunpack.c.l.b16 %v238
      %v495 = vunpack.c.l.b16 %v239
      %v496 = vunpack.c.l.b16 %v240
      %v497 = vunpack.c.l.b16 %v241
      %v498 = vunpack.c.l.b16 %v242
      %v499 = vunpack.c.l.b16 %v243
      %v500 = vunpack.c.l.b16 %v244
      %v501 = vunpack.c.l.b16 %v245
      %v502 = vunpack.c.l.b16 %v246
      %v503 = vunpack.c.l.b16 %v247
      %v504 = vunpack.c.l.b16 %v248
      %v505 = vunpack.c.l.b16 %v249
      %v506 = vunpack.c.l.b16 %v250
      %v507 = vunpack.c.l.b16 %v251
      %v508 = vunpack.c.l.b16 %v252
      %v509 = vunpack.c.l.b16 %v253
      %v510 = vunpack.c.l.b16 %v254
      %v511 = vunpack.c.l.b16 %v255
      %v512 = vunpack.c.l.b16 %v256
      %v513 = vunpack.c.l.b16 %v257
      %v514 = vunpack.c.l.b16 %v258
      %v515 = vunpack.c.l.b16 %v259
      %v516 = vunpack.c.l.b16 %v260
      %v517 = vunpack.c.l.b16 %v261
      %v518 = vunpack.c.l.b16 %v262
      %v519 = vunpack.c.l.b16 %v263
      %v520 = vunpack.c.l.b16 %v264
      %v521 = vunpack.c.l.b16 %v265
      %v522 = vunpack.c.l.b16 %v266
      %v523 = vunpack.c.l.b16 %v267
      %v524 = vunpack.c.l.b16 %v268
      %v525 = vunpack.c.l.b16 %v269
      %v526 = vunpack.c.l.b16 %v270
      %v527 = vunpack.c.l.b16 %v271
      %v528 = vunpack.c.l.b16 %v272
      %v529 = vunpack.c.l.b16 %v273
      %v530 = vunpack.c.l.b16 %v274
      %v531 = vunpack.c.l.b16 %v275
      %v532 = vunpack.c.l.b16 %v276
      %v533 = vunpack.c.l.b16 %v277
      %v534 = vunpack.c.l.b16 %v278
      %v535 = vunpack.c.l.b16 %v279
      %v536 = vunpack.c.l.b16 %v280
      %v537 = vunpack.c.l.b16 %v281
      %v538 = vpack.c.b16 %v475, %v474
      %v539 = vpack.c.b16 %v477, %v476
      %v540 = vpack.c.b16 %v479, %v478
      %v541 = vpack.c.b16 %v481, %v480
      %v542 = vpack.c.b16 %v483, %v482
      %v543 = vpack.c.b16 %v485, %v484
      %v544 = vpack.c.b16 %v487, %v486
      %v545 = vpack.c.b16 %v489, %v488
      %v546 = vpack.c.b16 %v491, %v490
      %v547 = vpack.c.b16 %v493, %v492
      %v548 = vpack.c.b16 %v495, %v494
      %v549 = vpack.c.b16 %v497, %v496
      %v550 = vpack.c.b16 %v499, %v498
      %v551 = vpack.c.b16 %v501, %v500
      %v552 = vpack.c.b16 %v503, %v502
      %v553 = vpack.c.b16 %v505, %v504
      %v554 = vpack.c.b16 %v507, %v506
      %v555 = vpack.c.b16 %v509, %v508
      %v556 = vpack.c.b16 %v511, %v510
      %v557 = vpack.c.b16 %v513, %v512
      %v558 = vpack.c.b16 %v515, %v514
      %v559 = vpack.c.b16 %v517, %v516
      %v560 = vpack.c.b16 %v519, %v518
      %v561 = vpack.c.b16 %v521, %v520
      %v562 = vpack.c.b16 %v523, %v522
      %v563 = vpack.c.b16 %v525, %v524
      %v564 = vpack.c.b16 %v527, %v526
      %v565 = vpack.c.b16 %v529, %v528
      %v566 = vpack.c.b16 %v531, %v530
      %v567 = vpack.c.b16 %v533, %v532
      %v568 = vpack.c.b16 %v535, %v534
      %v569 = vpack.c.b16 %v537, %v536
      %602 = vmatpush.bf16.msra.mxu0 %v545
      %603 = vmatpush.bf16.msra.mxu0 %v544
      %604 = vmatpush.bf16.msra.mxu0 %v543
      %605 = vmatpush.bf16.msra.mxu0 %v542
      %606 = vmatpush.bf16.msra.mxu0 %v541
      %607 = vmatpush.bf16.msra.mxu0 %v540
      %608 = vmatpush.bf16.msra.mxu0 %v539
      %609 = vmatpush.bf16.msra.mxu0 %v538
      %610 = vmatmul.bf16.gmra.mxu0 %v378
      %v611 = vpop.f32.mrf.mxu0
      %v612 = vadd.f32 %v293, %v611
      %v613 = vpop.f32.mrf.mxu0
      %v614 = vadd.f32 %v298, %v613
      %615 = vmatmul.bf16.gmra.mxu0 %v382
      %v616 = vpop.f32.mrf.mxu0
      %v617 = vadd.f32 %v303, %v616
      %v618 = vpop.f32.mrf.mxu0
      %v619 = vadd.f32 %v308, %v618
      %620 = vmatmul.bf16.gmra.mxu0 %v386
      %v621 = vpop.f32.mrf.mxu0
      %v622 = vadd.f32 %v313, %v621
      %v623 = vpop.f32.mrf.mxu0
      %v624 = vadd.f32 %v318, %v623
      %625 = vmatmul.bf16.gmra.mxu0 %v390
      %v626 = vpop.f32.mrf.mxu0
      %v627 = vadd.f32 %v323, %v626
      %v628 = vpop.f32.mrf.mxu0
      %v629 = vadd.f32 %v328, %v628
      %630 = vdwg.mxu0
      %631 = vmatpush.bf16.msra.mxu0 %v553
      %632 = vmatpush.bf16.msra.mxu0 %v552
      %633 = vmatpush.bf16.msra.mxu0 %v551
      %634 = vmatpush.bf16.msra.mxu0 %v550
      %635 = vmatpush.bf16.msra.mxu0 %v549
      %636 = vmatpush.bf16.msra.mxu0 %v548
      %637 = vmatpush.bf16.msra.mxu0 %v547
      %638 = vmatpush.bf16.msra.mxu0 %v546
      %639 = vmatmul.bf16.gmra.mxu0 %v379
      %v640 = vpop.f32.mrf.mxu0
      %v641 = vadd.f32 %v612, %v640
      %v642 = vpop.f32.mrf.mxu0
      %v643 = vadd.f32 %v614, %v642
      %644 = vmatmul.bf16.gmra.mxu0 %v383
      %v645 = vpop.f32.mrf.mxu0
      %v646 = vadd.f32 %v617, %v645
      %v647 = vpop.f32.mrf.mxu0
      %v648 = vadd.f32 %v619, %v647
      %649 = vmatmul.bf16.gmra.mxu0 %v387
      %v650 = vpop.f32.mrf.mxu0
      %v651 = vadd.f32 %v622, %v650
      %v652 = vpop.f32.mrf.mxu0
      %v653 = vadd.f32 %v624, %v652
      %654 = vmatmul.bf16.gmra.mxu0 %v391
      %v655 = vpop.f32.mrf.mxu0
      %v656 = vadd.f32 %v627, %v655
      %v657 = vpop.f32.mrf.mxu0
      %v658 = vadd.f32 %v629, %v657
      %659 = vdwg.mxu0
      %660 = vmatpush.bf16.msra.mxu0 %v561
      %661 = vmatpush.bf16.msra.mxu0 %v560
      %662 = vmatpush.bf16.msra.mxu0 %v559
      %663 = vmatpush.bf16.msra.mxu0 %v558
      %664 = vmatpush.bf16.msra.mxu0 %v557
      %665 = vmatpush.bf16.msra.mxu0 %v556
      %666 = vmatpush.bf16.msra.mxu0 %v555
      %667 = vmatpush.bf16.msra.mxu0 %v554
      %668 = vmatmul.bf16.gmra.mxu0 %v380
      %v669 = vpop.f32.mrf.mxu0
      %v670 = vadd.f32 %v641, %v669
      %v671 = vpop.f32.mrf.mxu0
      %v672 = vadd.f32 %v643, %v671
      %673 = vmatmul.bf16.gmra.mxu0 %v384
      %v674 = vpop.f32.mrf.mxu0
      %v675 = vadd.f32 %v646, %v674
      %v676 = vpop.f32.mrf.mxu0
      %v677 = vadd.f32 %v648, %v676
      %678 = vmatmul.bf16.gmra.mxu0 %v388
      %v679 = vpop.f32.mrf.mxu0
      %v680 = vadd.f32 %v651, %v679
      %v681 = vpop.f32.mrf.mxu0
      %v682 = vadd.f32 %v653, %v681
      %683 = vmatmul.bf16.gmra.mxu0 %v392
      %v684 = vpop.f32.mrf.mxu0
      %v685 = vadd.f32 %v656, %v684
      %v686 = vpop.f32.mrf.mxu0
      %v687 = vadd.f32 %v658, %v686
      %688 = vdwg.mxu0
      %689 = vmatpush.bf16.msra.mxu0 %v569
      %690 = vmatpush.bf16.msra.mxu0 %v568
      %691 = vmatpush.bf16.msra.mxu0 %v567
      %692 = vmatpush.bf16.msra.mxu0 %v566
      %693 = vmatpush.bf16.msra.mxu0 %v565
      %694 = vmatpush.bf16.msra.mxu0 %v564
      %695 = vmatpush.bf16.msra.mxu0 %v563
      %696 = vmatpush.bf16.msra.mxu0 %v562
      %697 = vmatmul.bf16.gmra.mxu0 %v381
      %v698 = vpop.f32.mrf.mxu0
      %v699 = vadd.f32 %v670, %v698
      %v700 = vpop.f32.mrf.mxu0
      %v701 = vadd.f32 %v672, %v700
      %702 = vmatmul.bf16.gmra.mxu0 %v385
      %v703 = vpop.f32.mrf.mxu0
      %v704 = vadd.f32 %v675, %v703
      %v705 = vpop.f32.mrf.mxu0
      %v706 = vadd.f32 %v677, %v705
      %707 = vmatmul.bf16.gmra.mxu0 %v389
      %v708 = vpop.f32.mrf.mxu0
      %v709 = vadd.f32 %v680, %v708
      %v710 = vpop.f32.mrf.mxu0
      %v711 = vadd.f32 %v682, %v710
      %712 = vmatmul.bf16.gmra.mxu0 %v393
      %v713 = vpop.f32.mrf.mxu0
      %v714 = vadd.f32 %v685, %v713
      %v715 = vpop.f32.mrf.mxu0
      %v716 = vadd.f32 %v687, %v715
      %717 = vdwg.mxu0
      %v718 = vmax.f32 %v699, 0.0
      %v719 = vmax.f32 %v701, 0.0
      %v720 = vmax.f32 %v704, 0.0
      %v721 = vmax.f32 %v706, 0.0
      %v722 = vmax.f32 %v709, 0.0
      %v723 = vmax.f32 %v711, 0.0
      %v724 = vmax.f32 %v714, 0.0
      %v725 = vmax.f32 %v716, 0.0
      %v726 = vpack.c.bf16 %v718, %v718
      %v727 = vpack.c.bf16 %v719, %v719
      %v728 = vpack.c.bf16 %v720, %v720
      %v729 = vpack.c.bf16 %v721, %v721
      %v730 = vpack.c.bf16 %v722, %v722
      %v731 = vpack.c.bf16 %v723, %v723
      %v732 = vpack.c.bf16 %v724, %v724
      %v733 = vpack.c.bf16 %v725, %v725
      %734 = vst [vmem:[%s201] sm:$0xf] %v726
      %735 = vst [vmem:[%s201 + $0x4] sm:$0xf] %v727
      %736 = vst [vmem:[%s201 + $0x8] sm:$0xf] %v728
      %737 = vst [vmem:[%s201 + $0xc] sm:$0xf] %v729
      %738 = vst [vmem:[%s201 + $0x10] sm:$0xf] %v730
      %739 = vst [vmem:[%s201 + $0x14] sm:$0xf] %v731
      %740 = vst [vmem:[%s201 + $0x18] sm:$0xf] %v732
      %741 = vst [vmem:[%s201 + $0x1c] sm:$0xf] %v733
      %p742 = scmp.lt.s32.totalorder %s18, 1
      %s743 = scalar_select %p742, %s18, 1
      %p744 = scmp.lt.s32.totalorder %s19, 0
      %s745 = scalar_select %p744, %s19, 0
      %s746 = smul.addr %s743, 8
      %s747 = sadd.s32 %s745, %s746
      %s748 = smul.addr %s747, 4
      %s749 = scalar_lea.vmem %s3, %s748
      // Predicated region
      $region33: #{sranet_forward.7} parent=31 // pred_check
        %p750 = pneg %p116
      $region34: #{sranet_forward.7} parent=31 // pred_check_branch
        %752 = sbr.rel (%p750) target = $region36
      $region35: #{sranet_forward.7} parent=31 // pred_region
        _
      $region36: #{sranet_forward.7} parent=31 // pred_fallthru
        _
    $region32: #{sranet_forward.7} parent=5 // pred_fallthru
      _
    %p753 = scmp.le.s32.totalorder 2, %s9
    // Predicated region
    $region37: #{sranet_forward.7} parent=5 // pred_check
      %p754 = pneg %p753
    $region38: #{sranet_forward.7} parent=5 // pred_check_branch
      %756 = sbr.rel (%p754) target = $region40
    $region39: #{sranet_forward.7} parent=5 // pred_region
      %s757 = ssub.s32 %s9, 2
      // Predicated region
      $region41: #{sranet_forward.7} parent=39 // pred_check
        %p758 = pneg %p122
      $region42: #{sranet_forward.7} parent=39 // pred_check_branch
        %760 = sbr.rel (%p758) target = $region44
      $region43: #{sranet_forward.7} parent=39 // pred_region
        %p761 = scmp.lt.s32.totalorder %s20, 1
        %s762 = scalar_select %p761, %s20, 1
        %p763 = scmp.lt.s32.totalorder %s21, 0
        %s764 = scalar_select %p763, %s21, 0
        %s765 = smul.addr %s762, 8
        %s766 = sadd.s32 %s764, %s765
        %s767 = smul.addr %s766, 4
        %s768 = scalar_lea.vmem %s3, %s767
      $region44: #{sranet_forward.7} parent=39 // pred_fallthru
        _
    $region40: #{sranet_forward.7} parent=5 // pred_fallthru
      _
  $region6: #{sranet_forward.7} parent=0 // loop_footer
    %s13 = sadd.s32 1, %s9
  $region7: #{sranet_forward.7} parent=0 // loop_footer_branch
    %8 = sbr.rel target = $region3
  $region8: #{sranet_forward.7} parent=0 // loop_exit
    _

// kernel: sranet_forward.9
$region0: #{sranet_forward.9}
  #allocation0 [shape = 'u32[]', space=smem, size = 0x4, offset = 0x4, fixed_abs, tag = 'smem constant byte address 0x4 - core index']
  #allocation1 [shape = 'u32[72,128]{1,0:T(1,128)}', space=vmem, size = 0x9000, scoped, tag = 'internal scratch']
  #allocation2 [shape = 'f32[1,1]{1,0:T(1,128)S(1)}', space=vmem, size = 0x200, scoped, tag = 'scoped memory for sranet_forward.9']
  %s0 = inlined_call_operand.vmem [shape: bf16[2,64,128], index: 0, kind: input, shape index: {}]
  %s1 = inlined_call_operand.vmem [shape: bf16[2,64,128], index: 1, kind: input, shape index: {}]
  %s2 = inlined_call_operand.vmem [shape: bf16[2,64,128], index: 2, kind: input, shape index: {}]
  %s3 = inlined_call_operand.vmem [shape: f32[2,64,5], index: 3, kind: input, shape index: {}]
  %s4 = inlined_call_operand.<no memory space> [shape: f32[1,1], index: 4, kind: input, shape index: {}]
  %s5 = inlined_call_operand.vmem [shape: f32[2,1,128], index: 5, kind: output, shape index: {}]
  %s6 = sld [smem:[#allocation0]]
  $region53: #{sranet_forward.9} parent=0
    _
  %s8 = ssub.s32 1, %s6
  %s9 = scalar_select 0, %s8, %s6
  %v10 = vstv %s4
  %11 = vst [vmem:[#allocation2] sm:$0x1] %v10
  loop: start=0, step=1, limit=4
  $region2: #{sranet_forward.9} parent=0 // loop_pre_header
    _
  $region3: #{sranet_forward.9} parent=0 // loop_header
    %s13 = sphi 0, %s17
    %p14 = scmp.ge.s32.totalorder %s13, 4
    %s20 = sphi 0, %s32
    %s21 = sphi 0, %s28
    %s22 = sphi 0, %s20
    %s23 = sphi 0, %s21
    %s24 = sphi 0, %s22
    %s25 = sphi 0, %s23
    %s37 = sphi 0, %s39
    %s40 = sphi 0, %s37
    %s41 = sphi 0, %s40
    %s57 = sphi 0, %s41
    %s65 = sphi 0, %s67
    %s68 = sphi 0, %s65
    %s69 = sphi 0, %s68
    %s85 = sphi 0, %s69
    %s93 = sphi 0, %s95
    %s96 = sphi 0, %s93
    %s97 = sphi 0, %s96
    %s113 = sphi 0, %s97
    %s119 = sphi 0, %s121
    %s122 = sphi 0, %s119
    %s123 = sphi 0, %s122
    %s139 = sphi 0, %s123
    %s143 = sphi 0, %s143
    %s145 = sphi 0, %s143
    %s146 = sphi 0, %s145
    %s160 = sphi 0, %s146
    %s168 = sphi 0, %s170
    %s171 = sphi 0, %s168
    %s172 = sphi 0, %s171
    %s188 = sphi 0, %s172
  $region4: #{sranet_forward.9} parent=0 // loop_header_branch
    %16 = sbr.rel (%p14) target = $region8
  $region5: #{sranet_forward.9} parent=0 // loop_body
    %s18 = ssub.s32 %s13, 1
    %s19 = ssub.s32 %s13, 2
    %s26 = sadd.s32 1, %s21
    %p27 = scmp.ge.s32.totalorder %s26, 1
    %s28 = scalar_select %p27, 0, %s26
    %s29 = sadd.s32 1, %s20
    %s30 = scalar_select %p27, %s29, %s20
    %p31 = scmp.ge.s32.totalorder %s30, 2
    %s32 = scalar_select %p31, 0, %s30
    %s33 = ssub.s32 %s20, %s32
    %s34 = ssub.s32 %s21, %s28
    %s35 = sor.u32 %s33, %s34
    %p36 = scmp.eq.s32.totalorder %s35, 0
    %s38 = sadd.s32 %s37, 1
    %s39 = scalar_select %p36, %s37, %s38
    %p42 = pneg %p36
    %p43 = scmp.eq.s32.totalorder %s13, 1
    %p44 = por %p42, %p43
    %p45 = scmp.ne.s32.totalorder %s37, %s40
    %p46 = scmp.eq.s32.totalorder %s13, 0
    %p47 = por %p45, %p46
    %p48 = scmp.ne.s32.totalorder %s37, %s40
    %p49 = scmp.eq.s32.totalorder %s18, 1
    %p50 = por %p48, %p49
    %p51 = scmp.ne.s32.totalorder %s40, %s41
    %p52 = scmp.eq.s32.totalorder %s18, 0
    %p53 = por %p51, %p52
    %p54 = scmp.ne.s32.totalorder %s40, %s41
    %p55 = scmp.eq.s32.totalorder %s19, 1
    %p56 = por %p54, %p55
    %p58 = scmp.ne.s32.totalorder %s41, %s57
    %p59 = scmp.eq.s32.totalorder %s19, 0
    %p60 = por %p58, %p59
    %s61 = ssub.s32 %s20, %s32
    %s62 = ssub.s32 %s21, %s28
    %s63 = sor.u32 %s61, %s62
    %p64 = scmp.eq.s32.totalorder %s63, 0
    %s66 = sadd.s32 %s65, 1
    %s67 = scalar_select %p64, %s65, %s66
    %p70 = pneg %p64
    %p71 = scmp.eq.s32.totalorder %s13, 1
    %p72 = por %p70, %p71
    %p73 = scmp.ne.s32.totalorder %s65, %s68
    %p74 = scmp.eq.s32.totalorder %s13, 0
    %p75 = por %p73, %p74
    %p76 = scmp.ne.s32.totalorder %s65, %s68
    %p77 = scmp.eq.s32.totalorder %s18, 1
    %p78 = por %p76, %p77
    %p79 = scmp.ne.s32.totalorder %s68, %s69
    %p80 = scmp.eq.s32.totalorder %s18, 0
    %p81 = por %p79, %p80
    %p82 = scmp.ne.s32.totalorder %s68, %s69
    %p83 = scmp.eq.s32.totalorder %s19, 1
    %p84 = por %p82, %p83
    %p86 = scmp.ne.s32.totalorder %s69, %s85
    %p87 = scmp.eq.s32.totalorder %s19, 0
    %p88 = por %p86, %p87
    %s89 = ssub.s32 %s20, %s32
    %s90 = ssub.s32 %s21, %s28
    %s91 = sor.u32 %s89, %s90
    %p92 = scmp.eq.s32.totalorder %s91, 0
    %s94 = sadd.s32 %s93, 1
    %s95 = scalar_select %p92, %s93, %s94
    %p98 = pneg %p92
    %p99 = scmp.eq.s32.totalorder %s13, 1
    %p100 = por %p98, %p99
    %p101 = scmp.ne.s32.totalorder %s93, %s96
    %p102 = scmp.eq.s32.totalorder %s13, 0
    %p103 = por %p101, %p102
    %p104 = scmp.ne.s32.totalorder %s93, %s96
    %p105 = scmp.eq.s32.totalorder %s18, 1
    %p106 = por %p104, %p105
    %p107 = scmp.ne.s32.totalorder %s96, %s97
    %p108 = scmp.eq.s32.totalorder %s18, 0
    %p109 = por %p107, %p108
    %p110 = scmp.ne.s32.totalorder %s96, %s97
    %p111 = scmp.eq.s32.totalorder %s19, 1
    %p112 = por %p110, %p111
    %p114 = scmp.ne.s32.totalorder %s97, %s113
    %p115 = scmp.eq.s32.totalorder %s19, 0
    %p116 = por %p114, %p115
    %s117 = ssub.s32 %s20, %s32
    %p118 = scmp.eq.s32.totalorder %s117, 0
    %s120 = sadd.s32 %s119, 1
    %s121 = scalar_select %p118, %s119, %s120
    %p124 = pneg %p118
    %p125 = scmp.eq.s32.totalorder %s13, 1
    %p126 = por %p124, %p125
    %p127 = scmp.ne.s32.totalorder %s119, %s122
    %p128 = scmp.eq.s32.totalorder %s13, 0
    %p129 = por %p127, %p128
    %p130 = scmp.ne.s32.totalorder %s119, %s122
    %p131 = scmp.eq.s32.totalorder %s18, 1
    %p132 = por %p130, %p131
    %p133 = scmp.ne.s32.totalorder %s122, %s123
    %p134 = scmp.eq.s32.totalorder %s18, 0
    %p135 = por %p133, %p134
    %p136 = scmp.ne.s32.totalorder %s122, %s123
    %p137 = scmp.eq.s32.totalorder %s19, 1
    %p138 = por %p136, %p137
    %p140 = scmp.ne.s32.totalorder %s123, %s139
    %p141 = scmp.eq.s32.totalorder %s19, 0
    %p142 = por %p140, %p141
    %s144 = sadd.s32 %s143, 1
    %p147 = scmp.eq.s32.totalorder %s13, 1
    %p148 = scmp.ne.s32.totalorder %s143, %s145
    %p149 = scmp.eq.s32.totalorder %s13, 0
    %p150 = por %p148, %p149
    %p151 = scmp.ne.s32.totalorder %s143, %s145
    %p152 = scmp.eq.s32.totalorder %s18, 1
    %p153 = por %p151, %p152
    %p154 = scmp.ne.s32.totalorder %s145, %s146
    %p155 = scmp.eq.s32.totalorder %s18, 0
    %p156 = por %p154, %p155
    %p157 = scmp.ne.s32.totalorder %s145, %s146
    %p158 = scmp.eq.s32.totalorder %s19, 1
    %p159 = por %p157, %p158
    %p161 = scmp.ne.s32.totalorder %s146, %s160
    %p162 = scmp.eq.s32.totalorder %s19, 0
    %p163 = por %p161, %p162
    %s164 = ssub.s32 %s20, %s32
    %s165 = ssub.s32 %s21, %s28
    %s166 = sor.u32 %s164, %s165
    %p167 = scmp.eq.s32.totalorder %s166, 0
    %s169 = sadd.s32 %s168, 1
    %s170 = scalar_select %p167, %s168, %s169
    %p173 = pneg %p167
    %p174 = scmp.eq.s32.totalorder %s13, 1
    %p175 = por %p173, %p174
    %p176 = scmp.ne.s32.totalorder %s168, %s171
    %p177 = scmp.eq.s32.totalorder %s13, 0
    %p178 = por %p176, %p177
    %p179 = scmp.ne.s32.totalorder %s168, %s171
    %p180 = scmp.eq.s32.totalorder %s18, 1
    %p181 = por %p179, %p180
    %p182 = scmp.ne.s32.totalorder %s171, %s172
    %p183 = scmp.eq.s32.totalorder %s18, 0
    %p184 = por %p182, %p183
    %p185 = scmp.ne.s32.totalorder %s171, %s172
    %p186 = scmp.eq.s32.totalorder %s19, 1
    %p187 = por %p185, %p186
    %p189 = scmp.ne.s32.totalorder %s172, %s188
    %p190 = scmp.eq.s32.totalorder %s19, 0
    %p191 = por %p189, %p190
    %p192 = scmp.le.s32.totalorder 1, %s13
    %p193 = scmp.lt.s32.totalorder %s13, 3
    %p194 = pnand %p192, %p193
    %p195 = pneg %p194
    // Predicated region
    $region9: #{sranet_forward.9} parent=5 // pred_check
      _
    $region10: #{sranet_forward.9} parent=5 // pred_check_branch
      %197 = sbr.rel (%p194) target = $region12
    $region11: #{sranet_forward.9} parent=5 // pred_region
      %s198 = ssub.s32 %s13, 1
      // Predicated region
      $region13: #{sranet_forward.9} parent=11 // pred_check
        %p199 = pneg %p156
      $region14: #{sranet_forward.9} parent=11 // pred_check_branch
        %201 = sbr.rel (%p199) target = $region16
      $region15: #{sranet_forward.9} parent=11 // pred_region
        _
      $region16: #{sranet_forward.9} parent=11 // pred_fallthru
        _
    $region12: #{sranet_forward.9} parent=5 // pred_fallthru
      _
    %p202 = scmp.lt.s32.totalorder %s13, 2
    // Predicated region
    $region17: #{sranet_forward.9} parent=5 // pred_check
      %p203 = pneg %p202
    $region18: #{sranet_forward.9} parent=5 // pred_check_branch
      %205 = sbr.rel (%p203) target = $region20
    $region19: #{sranet_forward.9} parent=5 // pred_region
      // Predicated region
      $region21: #{sranet_forward.9} parent=19 // pred_check
        %p206 = pneg %p47
      $region22: #{sranet_forward.9} parent=19 // pred_check_branch
        %208 = sbr.rel (%p206) target = $region24
      $region23: #{sranet_forward.9} parent=19 // pred_region
        %p209 = scmp.lt.s32.totalorder %s20, 1
        %s210 = scalar_select %p209, %s20, 1
        %p211 = scmp.lt.s32.totalorder %s21, 0
        %s212 = scalar_select %p211, %s21, 0
        %s213 = smul.addr %s210, 8
        %s214 = sadd.s32 %s212, %s213
        %s215 = smul.addr %s214, 4
        %s216 = scalar_lea.vmem %s0, %s215
      $region24: #{sranet_forward.9} parent=19 // pred_fallthru
        _
      // Predicated region
      $region25: #{sranet_forward.9} parent=19 // pred_check
        %p217 = pneg %p75
      $region26: #{sranet_forward.9} parent=19 // pred_check_branch
        %219 = sbr.rel (%p217) target = $region28
      $region27: #{sranet_forward.9} parent=19 // pred_region
        %p220 = scmp.lt.s32.totalorder %s20, 1
        %s221 = scalar_select %p220, %s20, 1
        %p222 = scmp.lt.s32.totalorder %s21, 0
        %s223 = scalar_select %p222, %s21, 0
        %s224 = smul.addr %s221, 8
        %s225 = sadd.s32 %s223, %s224
        %s226 = smul.addr %s225, 4
        %s227 = scalar_lea.vmem %s1, %s226
      $region28: #{sranet_forward.9} parent=19 // pred_fallthru
        _
      // Predicated region
      $region29: #{sranet_forward.9} parent=19 // pred_check
        %p228 = pneg %p103
      $region30: #{sranet_forward.9} parent=19 // pred_check_branch
        %230 = sbr.rel (%p228) target = $region32
      $region31: #{sranet_forward.9} parent=19 // pred_region
        %p231 = scmp.lt.s32.totalorder %s20, 1
        %s232 = scalar_select %p231, %s20, 1
        %p233 = scmp.lt.s32.totalorder %s21, 0
        %s234 = scalar_select %p233, %s21, 0
        %s235 = smul.addr %s232, 8
        %s236 = sadd.s32 %s234, %s235
        %s237 = smul.addr %s236, 4
        %s238 = scalar_lea.vmem %s2, %s237
      $region32: #{sranet_forward.9} parent=19 // pred_fallthru
        _
      // Predicated region
      $region33: #{sranet_forward.9} parent=19 // pred_check
        %p239 = pneg %p129
      $region34: #{sranet_forward.9} parent=19 // pred_check_branch
        %241 = sbr.rel (%p239) target = $region36
      $region35: #{sranet_forward.9} parent=19 // pred_region
        %p242 = scmp.lt.s32.totalorder %s20, 1
        %s243 = scalar_select %p242, %s20, 1
        %s244 = smul.addr %s243, 8
        %s245 = smul.addr %s244, 8
        %s246 = scalar_lea.vmem %s3, %s245
      $region36: #{sranet_forward.9} parent=19 // pred_fallthru
        _
    $region20: #{sranet_forward.9} parent=5 // pred_fallthru
      _
    %p247 = scmp.le.s32.totalorder 1, %s13
    %p248 = scmp.lt.s32.totalorder %s13, 3
    %p249 = pnand %p247, %p248
    %p250 = pneg %p249
    // Predicated region
    $region37: #{sranet_forward.9} parent=5 // pred_check
      _
    $region38: #{sranet_forward.9} parent=5 // pred_check_branch
      %252 = sbr.rel (%p249) target = $region40
    $region39: #{sranet_forward.9} parent=5 // pred_region
      %s253 = ssub.s32 %s13, 1
      %p254 = scmp.lt.s32.totalorder %s22, 1
      %s255 = scalar_select %p254, %s22, 1
      %p256 = scmp.lt.s32.totalorder %s23, 0
      %s257 = scalar_select %p256, %s23, 0
      %s258 = smul.addr %s255, 8
      %s259 = sadd.s32 %s257, %s258
      %s260 = smul.addr %s259, 4
      %s261 = scalar_lea.vmem %s0, %s260
      %p262 = pneg %p53
      %p263 = pneg %p50
      %p264 = scmp.lt.s32.totalorder %s22, 1
      %s265 = scalar_select %p264, %s22, 1
      %p266 = scmp.lt.s32.totalorder %s23, 0
      %s267 = scalar_select %p266, %s23, 0
      %s268 = smul.addr %s265, 8
      %s269 = sadd.s32 %s267, %s268
      %s270 = smul.addr %s269, 4
      %s271 = scalar_lea.vmem %s1, %s270
      %p272 = pneg %p81
      %p273 = pneg %p78
      %p274 = scmp.lt.s32.totalorder %s22, 1
      %s275 = scalar_select %p274, %s22, 1
      %p276 = scmp.lt.s32.totalorder %s23, 0
      %s277 = scalar_select %p276, %s23, 0
      %s278 = smul.addr %s275, 8
      %s279 = sadd.s32 %s277, %s278
      %s280 = smul.addr %s279, 4
      %s281 = scalar_lea.vmem %s2, %s280
      %p282 = pneg %p109
      %p283 = pneg %p106
      %p284 = scmp.lt.s32.totalorder %s22, 1
      %s285 = scalar_select %p284, %s22, 1
      %s286 = smul.addr %s285, 8
      %s287 = smul.addr %s286, 8
      %s288 = scalar_lea.vmem %s3, %s287
      %p289 = pneg %p135
      %p290 = pneg %p132
      %p291 = pneg %p156
      %p292 = pneg %p153
      %p293 = pneg %p184
      %p294 = pneg %p181
      %p295 = scmp.lt.s32.totalorder %s22, 1
      %s296 = scalar_select %p295, %s22, 1
      %p297 = scmp.lt.s32.totalorder %s23, 0
      %s298 = scalar_select %p297, %s23, 0
      %s299 = sadd.s32 %s298, %s296
      %s300 = scalar_lea.vmem %s5, %s299
      %p301 = scmp.lt.s32.totalorder %s22, 1
      %s302 = scalar_select %p301, %s22, 1
      %p303 = scmp.lt.s32.totalorder %s23, 0
      %s304 = scalar_select %p303, %s23, 0
      %s305 = smul.addr %s302, 8
      %s306 = sadd.s32 %s304, %s305
      %s307 = smul.addr %s306, 4
      %s308 = scalar_lea.vmem %s0, %s307
      %p309 = scmp.lt.s32.totalorder %s22, 1
      %s310 = scalar_select %p309, %s22, 1
      %p311 = scmp.lt.s32.totalorder %s23, 0
      %s312 = scalar_select %p311, %s23, 0
      %s313 = smul.addr %s310, 8
      %s314 = sadd.s32 %s312, %s313
      %s315 = smul.addr %s314, 4
      %s316 = scalar_lea.vmem %s1, %s315
      %p317 = scmp.lt.s32.totalorder %s22, 1
      %s318 = scalar_select %p317, %s22, 1
      %p319 = scmp.lt.s32.totalorder %s23, 0
      %s320 = scalar_select %p319, %s23, 0
      %s321 = smul.addr %s318, 8
      %s322 = sadd.s32 %s320, %s321
      %s323 = smul.addr %s322, 4
      %s324 = scalar_lea.vmem %s2, %s323
      %p325 = scmp.lt.s32.totalorder %s22, 1
      %s326 = scalar_select %p325, %s22, 1
      %s327 = smul.addr %s326, 8
      %s328 = smul.addr %s327, 8
      %s329 = scalar_lea.vmem %s3, %s328
      %p330 = scmp.lt.s32.totalorder %s22, 1
      %s331 = scalar_select %p330, %s22, 1
      %p332 = scmp.lt.s32.totalorder %s23, 0
      %s333 = scalar_select %p332, %s23, 0
      %s334 = sadd.s32 %s333, %s331
      %s335 = scalar_lea.vmem %s5, %s334
      %v336 = vld [vmem:[%s308] sm:$0xf]
      %v337 = vld [vmem:[%s308 + $0x4] sm:$0xf]
      %v338 = vld [vmem:[%s308 + $0x8] sm:$0xf]
      %v339 = vld [vmem:[%s308 + $0xc] sm:$0xf]
      %v340 = vld [vmem:[%s308 + $0x10] sm:$0xf]
      %v341 = vld [vmem:[%s308 + $0x14] sm:$0xf]
      %v342 = vld [vmem:[%s308 + $0x18] sm:$0xf]
      %v343 = vld [vmem:[%s308 + $0x1c] sm:$0xf]
      %v344 = vunpack.c.l.bf16 %v336
      %v345 = vunpack.c.l.bf16 %v337
      %v346 = vunpack.c.l.bf16 %v338
      %v347 = vunpack.c.l.bf16 %v339
      %v348 = vunpack.c.l.bf16 %v340
      %v349 = vunpack.c.l.bf16 %v341
      %v350 = vunpack.c.l.bf16 %v342
      %v351 = vunpack.c.l.bf16 %v343
      %v352 = vld [vmem:[%s316] sm:$0xf]
      %v353 = vld [vmem:[%s316 + $0x4] sm:$0xf]
      %v354 = vld [vmem:[%s316 + $0x8] sm:$0xf]
      %v355 = vld [vmem:[%s316 + $0xc] sm:$0xf]
      %v356 = vld [vmem:[%s316 + $0x10] sm:$0xf]
      %v357 = vld [vmem:[%s316 + $0x14] sm:$0xf]
      %v358 = vld [vmem:[%s316 + $0x18] sm:$0xf]
      %v359 = vld [vmem:[%s316 + $0x1c] sm:$0xf]
      %v360 = vunpack.c.l.bf16 %v352
      %v361 = vunpack.c.l.bf16 %v353
      %v362 = vunpack.c.l.bf16 %v354
      %v363 = vunpack.c.l.bf16 %v355
      %v364 = vunpack.c.l.bf16 %v356
      %v365 = vunpack.c.l.bf16 %v357
      %v366 = vunpack.c.l.bf16 %v358
      %v367 = vunpack.c.l.bf16 %v359
      %v368 = vld [vmem:[%s324] sm:$0xf]
      %v369 = vld [vmem:[%s324 + $0x4] sm:$0xf]
      %v370 = vld [vmem:[%s324 + $0x8] sm:$0xf]
      %v371 = vld [vmem:[%s324 + $0xc] sm:$0xf]
      %v372 = vld [vmem:[%s324 + $0x10] sm:$0xf]
      %v373 = vld [vmem:[%s324 + $0x14] sm:$0xf]
      %v374 = vld [vmem:[%s324 + $0x18] sm:$0xf]
      %v375 = vld [vmem:[%s324 + $0x1c] sm:$0xf]
      %v376 = vunpack.c.l.bf16 %v368
      %v377 = vunpack.c.l.bf16 %v369
      %v378 = vunpack.c.l.bf16 %v370
      %v379 = vunpack.c.l.bf16 %v371
      %v380 = vunpack.c.l.bf16 %v372
      %v381 = vunpack.c.l.bf16 %v373
      %v382 = vunpack.c.l.bf16 %v374
      %v383 = vunpack.c.l.bf16 %v375
      %v384 = vmul.f32 %v360, %v344
      %v385 = vmul.f32 %v361, %v345
      %v386 = vmul.f32 %v362, %v346
      %v387 = vmul.f32 %v363, %v347
      %v388 = vmul.f32 %v364, %v348
      %v389 = vmul.f32 %v365, %v349
      %v390 = vmul.f32 %v366, %v350
      %v391 = vmul.f32 %v367, %v351
      %v392 = vmul.f32 %v344, 0.5
      %v393 = vmul.f32 %v345, 0.5
      %v394 = vmul.f32 %v346, 0.5
      %v395 = vmul.f32 %v347, 0.5
      %v396 = vmul.f32 %v348, 0.5
      %v397 = vmul.f32 %v349, 0.5
      %v398 = vmul.f32 %v350, 0.5
      %v399 = vmul.f32 %v351, 0.5
      %v400 = vtanh.pop %v392
      %v401 = vtanh.pop %v393
      %v402 = vtanh.pop %v394
      %v403 = vtanh.pop %v395
      %v404 = vtanh.pop %v396
      %v405 = vtanh.pop %v397
      %v406 = vtanh.pop %v398
      %v407 = vtanh.pop %v399
      %v408 = vsub.f32 1.0, %v400
      %v409 = vsub.f32 1.0, %v401
      %v410 = vsub.f32 1.0, %v402
      %v411 = vsub.f32 1.0, %v403
      %v412 = vsub.f32 1.0, %v404
      %v413 = vsub.f32 1.0, %v405
      %v414 = vsub.f32 1.0, %v406
      %v415 = vsub.f32 1.0, %v407
      %v416 = vmul.f32 %v408, 0.5
      %v417 = vmul.f32 %v409, 0.5
      %v418 = vmul.f32 %v410, 0.5
      %v419 = vmul.f32 %v411, 0.5
      %v420 = vmul.f32 %v412, 0.5
      %v421 = vmul.f32 %v413, 0.5
      %v422 = vmul.f32 %v414, 0.5
      %v423 = vmul.f32 %v415, 0.5
      %v424 = vmul.f32 %v416, %v360
      %v425 = vmul.f32 %v417, %v361
      %v426 = vmul.f32 %v418, %v362
      %v427 = vmul.f32 %v419, %v363
      %v428 = vmul.f32 %v420, %v364
      %v429 = vmul.f32 %v421, %v365
      %v430 = vmul.f32 %v422, %v366
      %v431 = vmul.f32 %v423, %v367
      %v432 = vmul.f32 %v384, %v376
      %v433 = vmul.f32 %v385, %v377
      %v434 = vmul.f32 %v386, %v378
      %v435 = vmul.f32 %v387, %v379
      %v436 = vmul.f32 %v388, %v380
      %v437 = vmul.f32 %v389, %v381
      %v438 = vmul.f32 %v390, %v382
      %v439 = vmul.f32 %v391, %v383
      %v440 = vmul.f32 %v360, 0.5
      %v441 = vmul.f32 %v361, 0.5
      %v442 = vmul.f32 %v362, 0.5
      %v443 = vmul.f32 %v363, 0.5
      %v444 = vmul.f32 %v364, 0.5
      %v445 = vmul.f32 %v365, 0.5
      %v446 = vmul.f32 %v366, 0.5
      %v447 = vmul.f32 %v367, 0.5
      %v448 = vtanh.pop %v440
      %v449 = vtanh.pop %v441
      %v450 = vtanh.pop %v442
      %v451 = vtanh.pop %v443
      %v452 = vtanh.pop %v444
      %v453 = vtanh.pop %v445
      %v454 = vtanh.pop %v446
      %v455 = vtanh.pop %v447
      %v456 = vsub.f32 1.0, %v448
      %v457 = vsub.f32 1.0, %v449
      %v458 = vsub.f32 1.0, %v450
      %v459 = vsub.f32 1.0, %v451
      %v460 = vsub.f32 1.0, %v452
      %v461 = vsub.f32 1.0, %v453
      %v462 = vsub.f32 1.0, %v454
      %v463 = vsub.f32 1.0, %v455
      %v464 = vmul.f32 %v456, 0.5
      %v465 = vmul.f32 %v457, 0.5
      %v466 = vmul.f32 %v458, 0.5
      %v467 = vmul.f32 %v459, 0.5
      %v468 = vmul.f32 %v460, 0.5
      %v469 = vmul.f32 %v461, 0.5
      %v470 = vmul.f32 %v462, 0.5
      %v471 = vmul.f32 %v463, 0.5
      %v472 = vmul.f32 %v464, %v376
      %v473 = vmul.f32 %v465, %v377
      %v474 = vmul.f32 %v466, %v378
      %v475 = vmul.f32 %v467, %v379
      %v476 = vmul.f32 %v468, %v380
      %v477 = vmul.f32 %v469, %v381
      %v478 = vmul.f32 %v470, %v382
      %v479 = vmul.f32 %v471, %v383
      %v480 = vld [vmem:[%s329] sm:$0xff]
      %v481 = vld [vmem:[%s329 + $0x8] sm:$0xff]
      %v482 = vld [vmem:[%s329 + $0x10] sm:$0xff]
      %v483 = vld [vmem:[%s329 + $0x18] sm:$0xff]
      %v484 = vld [vmem:[%s329 + $0x20] sm:$0xff]
      %v485 = vld [vmem:[%s329 + $0x28] sm:$0xff]
      %v486 = vld [vmem:[%s329 + $0x30] sm:$0xff]
      %v487 = vld [vmem:[%s329 + $0x38] sm:$0xff]
      %489 = vset.pattern.permute.xlu0 0
      %490 = vperm.xlu0 %489, %v480
      %v491 = vpop.permute.xlu0 %490
      %494 = vset.pattern.permute.xlu0 0
      %495 = vperm.xlu0 %494, %v481
      %v496 = vpop.permute.xlu0 %495
      %499 = vset.pattern.permute.xlu0 0
      %500 = vperm.xlu0 %499, %v482
      %v501 = vpop.permute.xlu0 %500
      %504 = vset.pattern.permute.xlu0 0
      %505 = vperm.xlu0 %504, %v483
      %v506 = vpop.permute.xlu0 %505
      %509 = vset.pattern.permute.xlu0 0
      %510 = vperm.xlu0 %509, %v484
      %v511 = vpop.permute.xlu0 %510
      %514 = vset.pattern.permute.xlu0 0
      %515 = vperm.xlu0 %514, %v485
      %v516 = vpop.permute.xlu0 %515
      %519 = vset.pattern.permute.xlu0 0
      %520 = vperm.xlu0 %519, %v486
      %v521 = vpop.permute.xlu0 %520
      %524 = vset.pattern.permute.xlu0 0
      %525 = vperm.xlu0 %524, %v487
      %v526 = vpop.permute.xlu0 %525
      %v528 = vmul.f32 %v491, %v344
      %v529 = vmul.f32 %v496, %v345
      %v530 = vmul.f32 %v501, %v346
      %v531 = vmul.f32 %v506, %v347
      %v532 = vmul.f32 %v511, %v348
      %v533 = vmul.f32 %v516, %v349
      %v534 = vmul.f32 %v521, %v350
      %v535 = vmul.f32 %v526, %v351
      %536 = vset.pattern.permute.xlu0 1
      %537 = vperm.xlu0 %536, %v480
      %v538 = vpop.permute.xlu0 %537
      %540 = vset.pattern.permute.xlu0 1
      %541 = vperm.xlu0 %540, %v481
      %v542 = vpop.permute.xlu0 %541
      %544 = vset.pattern.permute.xlu0 1
      %545 = vperm.xlu0 %544, %v482
      %v546 = vpop.permute.xlu0 %545
      %548 = vset.pattern.permute.xlu0 1
      %549 = vperm.xlu0 %548, %v483
      %v550 = vpop.permute.xlu0 %549
      %552 = vset.pattern.permute.xlu0 1
      %553 = vperm.xlu0 %552, %v484
      %v554 = vpop.permute.xlu0 %553
      %556 = vset.pattern.permute.xlu0 1
      %557 = vperm.xlu0 %556, %v485
      %v558 = vpop.permute.xlu0 %557
      %560 = vset.pattern.permute.xlu0 1
      %561 = vperm.xlu0 %560, %v486
      %v562 = vpop.permute.xlu0 %561
      %564 = vset.pattern.permute.xlu0 1
      %565 = vperm.xlu0 %564, %v487
      %v566 = vpop.permute.xlu0 %565
      %v568 = vmul.f32 %v538, %v384
      %v569 = vmul.f32 %v542, %v385
      %v570 = vmul.f32 %v546, %v386
      %v571 = vmul.f32 %v550, %v387
      %v572 = vmul.f32 %v554, %v388
      %v573 = vmul.f32 %v558, %v389
      %v574 = vmul.f32 %v562, %v390
      %v575 = vmul.f32 %v566, %v391
      %v576 = vadd.f32 %v528, %v568
      %v577 = vadd.f32 %v529, %v569
      %v578 = vadd.f32 %v530, %v570
      %v579 = vadd.f32 %v531, %v571
      %v580 = vadd.f32 %v532, %v572
      %v581 = vadd.f32 %v533, %v573
      %v582 = vadd.f32 %v534, %v574
      %v583 = vadd.f32 %v535, %v575
      %584 = vset.pattern.permute.xlu0 2
      %585 = vperm.xlu0 %584, %v480
      %v586 = vpop.permute.xlu0 %585
      %588 = vset.pattern.permute.xlu0 2
      %589 = vperm.xlu0 %588, %v481
      %v590 = vpop.permute.xlu0 %589
      %592 = vset.pattern.permute.xlu0 2
      %593 = vperm.xlu0 %592, %v482
      %v594 = vpop.permute.xlu0 %593
      %596 = vset.pattern.permute.xlu0 2
      %597 = vperm.xlu0 %596, %v483
      %v598 = vpop.permute.xlu0 %597
      %600 = vset.pattern.permute.xlu0 2
      %601 = vperm.xlu0 %600, %v484
      %v602 = vpop.permute.xlu0 %601
      %604 = vset.pattern.permute.xlu0 2
      %605 = vperm.xlu0 %604, %v485
      %v606 = vpop.permute.xlu0 %605
      %608 = vset.pattern.permute.xlu0 2
      %609 = vperm.xlu0 %608, %v486
      %v610 = vpop.permute.xlu0 %609
      %612 = vset.pattern.permute.xlu0 2
      %613 = vperm.xlu0 %612, %v487
      %v614 = vpop.permute.xlu0 %613
      %v616 = vmul.f32 %v586, %v424
      %v617 = vmul.f32 %v590, %v425
      %v618 = vmul.f32 %v594, %v426
      %v619 = vmul.f32 %v598, %v427
      %v620 = vmul.f32 %v602, %v428
      %v621 = vmul.f32 %v606, %v429
      %v622 = vmul.f32 %v610, %v430
      %v623 = vmul.f32 %v614, %v431
      %v624 = vadd.f32 %v576, %v616
      %v625 = vadd.f32 %v577, %v617
      %v626 = vadd.f32 %v578, %v618
      %v627 = vadd.f32 %v579, %v619
      %v628 = vadd.f32 %v580, %v620
      %v629 = vadd.f32 %v581, %v621
      %v630 = vadd.f32 %v582, %v622
      %v631 = vadd.f32 %v583, %v623
      %632 = vset.pattern.permute.xlu0 3
      %633 = vperm.xlu0 %632, %v480
      %v634 = vpop.permute.xlu0 %633
      %636 = vset.pattern.permute.xlu0 3
      %637 = vperm.xlu0 %636, %v481
      %v638 = vpop.permute.xlu0 %637
      %640 = vset.pattern.permute.xlu0 3
      %641 = vperm.xlu0 %640, %v482
      %v642 = vpop.permute.xlu0 %641
      %644 = vset.pattern.permute.xlu0 3
      %645 = vperm.xlu0 %644, %v483
      %v646 = vpop.permute.xlu0 %645
      %648 = vset.pattern.permute.xlu0 3
      %649 = vperm.xlu0 %648, %v484
      %v650 = vpop.permute.xlu0 %649
      %652 = vset.pattern.permute.xlu0 3
      %653 = vperm.xlu0 %652, %v485
      %v654 = vpop.permute.xlu0 %653
      %656 = vset.pattern.permute.xlu0 3
      %657 = vperm.xlu0 %656, %v486
      %v658 = vpop.permute.xlu0 %657
      %660 = vset.pattern.permute.xlu0 3
      %661 = vperm.xlu0 %660, %v487
      %v662 = vpop.permute.xlu0 %661
      %v664 = vmul.f32 %v634, %v432
      %v665 = vmul.f32 %v638, %v433
      %v666 = vmul.f32 %v642, %v434
      %v667 = vmul.f32 %v646, %v435
      %v668 = vmul.f32 %v650, %v436
      %v669 = vmul.f32 %v654, %v437
      %v670 = vmul.f32 %v658, %v438
      %v671 = vmul.f32 %v662, %v439
      %v672 = vadd.f32 %v624, %v664
      %v673 = vadd.f32 %v625, %v665
      %v674 = vadd.f32 %v626, %v666
      %v675 = vadd.f32 %v627, %v667
      %v676 = vadd.f32 %v628, %v668
      %v677 = vadd.f32 %v629, %v669
      %v678 = vadd.f32 %v630, %v670
      %v679 = vadd.f32 %v631, %v671
      %680 = vset.pattern.permute.xlu0 4
      %681 = vperm.xlu0 %680, %v480
      %v682 = vpop.permute.xlu0 %681
      %684 = vset.pattern.permute.xlu0 4
      %685 = vperm.xlu0 %684, %v481
      %v686 = vpop.permute.xlu0 %685
      %688 = vset.pattern.permute.xlu0 4
      %689 = vperm.xlu0 %688, %v482
      %v690 = vpop.permute.xlu0 %689
      %692 = vset.pattern.permute.xlu0 4
      %693 = vperm.xlu0 %692, %v483
      %v694 = vpop.permute.xlu0 %693
      %696 = vset.pattern.permute.xlu0 4
      %697 = vperm.xlu0 %696, %v484
      %v698 = vpop.permute.xlu0 %697
      %700 = vset.pattern.permute.xlu0 4
      %701 = vperm.xlu0 %700, %v485
      %v702 = vpop.permute.xlu0 %701
      %704 = vset.pattern.permute.xlu0 4
      %705 = vperm.xlu0 %704, %v486
      %v706 = vpop.permute.xlu0 %705
      %708 = vset.pattern.permute.xlu0 4
      %709 = vperm.xlu0 %708, %v487
      %v710 = vpop.permute.xlu0 %709
      %v712 = vmul.f32 %v682, %v472
      %v713 = vmul.f32 %v686, %v473
      %v714 = vmul.f32 %v690, %v474
      %v715 = vmul.f32 %v694, %v475
      %v716 = vmul.f32 %v698, %v476
      %v717 = vmul.f32 %v702, %v477
      %v718 = vmul.f32 %v706, %v478
      %v719 = vmul.f32 %v710, %v479
      %v720 = vadd.f32 %v672, %v712
      %v721 = vadd.f32 %v673, %v713
      %v722 = vadd.f32 %v674, %v714
      %v723 = vadd.f32 %v675, %v715
      %v724 = vadd.f32 %v676, %v716
      %v725 = vadd.f32 %v677, %v717
      %v726 = vadd.f32 %v678, %v718
      %v727 = vadd.f32 %v679, %v719
      %v728 = vadd.f32 %v720, %v721
      %v729 = vadd.f32 %v728, %v722
      %v730 = vadd.f32 %v729, %v723
      %v731 = vadd.f32 %v730, %v724
      %v732 = vadd.f32 %v731, %v725
      %v733 = vadd.f32 %v732, %v726
      %v734 = vadd.f32 %v733, %v727
      %v735 = vrot.slane %v734, 4
      %v736 = vadd.f32 %v734, %v735
      %v737 = vrot.slane %v736, 2
      %v738 = vadd.f32 %v736, %v737
      %v739 = vrot.slane %v738, 1
      %v740 = vadd.f32 %v738, %v739
      %v741 = vld [vmem:[#allocation2] sm:$0x1]
      %743 = vset.pattern.permute.xlu0 0
      %744 = vperm.xlu0 %743, %v741
      %v745 = vpop.permute.xlu0 %744
      %v747 = vperm.slane %v745, 0
      %v748 = vadd.f32 %v740, %v747
      %749 = vst [vmem:[%s335] sm:$0x1] %v748
      %p750 = scmp.lt.s32.totalorder %s22, 1
      %s751 = scalar_select %p750, %s22, 1
      %p752 = scmp.lt.s32.totalorder %s23, 0
      %s753 = scalar_select %p752, %s23, 0
      %s754 = sadd.s32 %s753, %s751
      %s755 = scalar_lea.vmem %s5, %s754
      // Predicated region
      $region41: #{sranet_forward.9} parent=39 // pred_check
        %p756 = pneg %p181
      $region42: #{sranet_forward.9} parent=39 // pred_check_branch
        %758 = sbr.rel (%p756) target = $region44
      $region43: #{sranet_forward.9} parent=39 // pred_region
        _
      $region44: #{sranet_forward.9} parent=39 // pred_fallthru
        _
    $region40: #{sranet_forward.9} parent=5 // pred_fallthru
      _
    %p759 = scmp.le.s32.totalorder 2, %s13
    // Predicated region
    $region45: #{sranet_forward.9} parent=5 // pred_check
      %p760 = pneg %p759
    $region46: #{sranet_forward.9} parent=5 // pred_check_branch
      %762 = sbr.rel (%p760) target = $region48
    $region47: #{sranet_forward.9} parent=5 // pred_region
      %s763 = ssub.s32 %s13, 2
      // Predicated region
      $region49: #{sranet_forward.9} parent=47 // pred_check
        %p764 = pneg %p187
      $region50: #{sranet_forward.9} parent=47 // pred_check_branch
        %766 = sbr.rel (%p764) target = $region52
      $region51: #{sranet_forward.9} parent=47 // pred_region
        %p767 = scmp.lt.s32.totalorder %s24, 1
        %s768 = scalar_select %p767, %s24, 1
        %p769 = scmp.lt.s32.totalorder %s25, 0
        %s770 = scalar_select %p769, %s25, 0
        %s771 = sadd.s32 %s770, %s768
        %s772 = scalar_lea.vmem %s5, %s771
      $region52: #{sranet_forward.9} parent=47 // pred_fallthru
        _
    $region48: #{sranet_forward.9} parent=5 // pred_fallthru
      _
  $region6: #{sranet_forward.9} parent=0 // loop_footer
    %s17 = sadd.s32 1, %s13
  $region7: #{sranet_forward.9} parent=0 // loop_footer_branch
    %12 = sbr.rel target = $region3
  $region8: #{sranet_forward.9} parent=0 // loop_exit
    _

// kernel: sranet_forward.8
$region0: #{sranet_forward.8}
  #allocation0 [shape = 'u32[]', space=smem, size = 0x4, offset = 0x4, fixed_abs, tag = 'smem constant byte address 0x4 - core index']
  #allocation1 [shape = 'u32[72,128]{1,0:T(1,128)}', space=vmem, size = 0x9000, scoped, tag = 'internal scratch']
  #allocation2 [shape = 'f32[64,1]{1,0:T(8,128)}', space=vmem, size = 0x8000, scoped, tag = 'scratch operand']
  #allocation3 [shape = 'f32[64,1]{1,0:T(8,128)}', space=vmem, size = 0x8000, scoped, tag = 'scratch operand']
  #allocation4 [shape = 'f32[64,1]{1,0:T(8,128)}', space=vmem, size = 0x8000, scoped, tag = 'scratch operand']
  #allocation5 [shape = 'f32[64,1]{1,0:T(8,128)}', space=vmem, size = 0x8000, scoped, tag = 'scratch operand']
  %s0 = inlined_call_operand.vmem [shape: bf16[2,64,128], index: 0, kind: input, shape index: {}]
  %s1 = inlined_call_operand.vmem [shape: bf16[2,64,128], index: 1, kind: input, shape index: {}]
  %s2 = inlined_call_operand.vmem [shape: bf16[2,64,128], index: 2, kind: input, shape index: {}]
  %s3 = inlined_call_operand.vmem [shape: f32[8,64], index: 3, kind: input, shape index: {}]
  %s4 = inlined_call_operand.vmem [shape: f32[64,8], index: 4, kind: input, shape index: {}]
  %s5 = inlined_call_operand.vmem [shape: f32[8,64], index: 5, kind: input, shape index: {}]
  %s6 = inlined_call_operand.vmem [shape: f32[64,8], index: 6, kind: input, shape index: {}]
  %s7 = inlined_call_operand.vmem [shape: f32[64,3], index: 7, kind: input, shape index: {}]
  %s8 = inlined_call_operand.vmem [shape: f32[2,64,5], index: 8, kind: output, shape index: {}]
  %s9 = sld [smem:[#allocation0]]
  $region73: #{sranet_forward.8} parent=0
    _
  %s11 = ssub.s32 1, %s9
  %s12 = scalar_select 0, %s11, %s9
  loop: start=0, step=1, limit=4
  $region2: #{sranet_forward.8} parent=0 // loop_pre_header
    _
  $region3: #{sranet_forward.8} parent=0 // loop_header
    %s14 = sphi 0, %s18
    %p15 = scmp.ge.s32.totalorder %s14, 4
    %s21 = sphi 0, %s33
    %s22 = sphi 0, %s29
    %s23 = sphi 0, %s21
    %s24 = sphi 0, %s22
    %s25 = sphi 0, %s23
    %s26 = sphi 0, %s24
    %s38 = sphi 0, %s40
    %s41 = sphi 0, %s38
    %s42 = sphi 0, %s41
    %s58 = sphi 0, %s42
    %s66 = sphi 0, %s68
    %s69 = sphi 0, %s66
    %s70 = sphi 0, %s69
    %s86 = sphi 0, %s70
    %s94 = sphi 0, %s96
    %s97 = sphi 0, %s94
    %s98 = sphi 0, %s97
    %s114 = sphi 0, %s98
    %s118 = sphi 0, %s118
    %s120 = sphi 0, %s118
    %s121 = sphi 0, %s120
    %s135 = sphi 0, %s121
    %s139 = sphi 0, %s139
    %s141 = sphi 0, %s139
    %s142 = sphi 0, %s141
    %s156 = sphi 0, %s142
    %s160 = sphi 0, %s160
    %s162 = sphi 0, %s160
    %s163 = sphi 0, %s162
    %s177 = sphi 0, %s163
    %s181 = sphi 0, %s181
    %s183 = sphi 0, %s181
    %s184 = sphi 0, %s183
    %s198 = sphi 0, %s184
    %s202 = sphi 0, %s202
    %s204 = sphi 0, %s202
    %s205 = sphi 0, %s204
    %s219 = sphi 0, %s205
    %s225 = sphi 0, %s227
    %s228 = sphi 0, %s225
    %s229 = sphi 0, %s228
    %s245 = sphi 0, %s229
  $region4: #{sranet_forward.8} parent=0 // loop_header_branch
    %17 = sbr.rel (%p15) target = $region8
  $region5: #{sranet_forward.8} parent=0 // loop_body
    %s19 = ssub.s32 %s14, 1
    %s20 = ssub.s32 %s14, 2
    %s27 = sadd.s32 1, %s22
    %p28 = scmp.ge.s32.totalorder %s27, 1
    %s29 = scalar_select %p28, 0, %s27
    %s30 = sadd.s32 1, %s21
    %s31 = scalar_select %p28, %s30, %s21
    %p32 = scmp.ge.s32.totalorder %s31, 2
    %s33 = scalar_select %p32, 0, %s31
    %s34 = ssub.s32 %s21, %s33
    %s35 = ssub.s32 %s22, %s29
    %s36 = sor.u32 %s34, %s35
    %p37 = scmp.eq.s32.totalorder %s36, 0
    %s39 = sadd.s32 %s38, 1
    %s40 = scalar_select %p37, %s38, %s39
    %p43 = pneg %p37
    %p44 = scmp.eq.s32.totalorder %s14, 1
    %p45 = por %p43, %p44
    %p46 = scmp.ne.s32.totalorder %s38, %s41
    %p47 = scmp.eq.s32.totalorder %s14, 0
    %p48 = por %p46, %p47
    %p49 = scmp.ne.s32.totalorder %s38, %s41
    %p50 = scmp.eq.s32.totalorder %s19, 1
    %p51 = por %p49, %p50
    %p52 = scmp.ne.s32.totalorder %s41, %s42
    %p53 = scmp.eq.s32.totalorder %s19, 0
    %p54 = por %p52, %p53
    %p55 = scmp.ne.s32.totalorder %s41, %s42
    %p56 = scmp.eq.s32.totalorder %s20, 1
    %p57 = por %p55, %p56
    %p59 = scmp.ne.s32.totalorder %s42, %s58
    %p60 = scmp.eq.s32.totalorder %s20, 0
    %p61 = por %p59, %p60
    %s62 = ssub.s32 %s21, %s33
    %s63 = ssub.s32 %s22, %s29
    %s64 = sor.u32 %s62, %s63
    %p65 = scmp.eq.s32.totalorder %s64, 0
    %s67 = sadd.s32 %s66, 1
    %s68 = scalar_select %p65, %s66, %s67
    %p71 = pneg %p65
    %p72 = scmp.eq.s32.totalorder %s14, 1
    %p73 = por %p71, %p72
    %p74 = scmp.ne.s32.totalorder %s66, %s69
    %p75 = scmp.eq.s32.totalorder %s14, 0
    %p76 = por %p74, %p75
    %p77 = scmp.ne.s32.totalorder %s66, %s69
    %p78 = scmp.eq.s32.totalorder %s19, 1
    %p79 = por %p77, %p78
    %p80 = scmp.ne.s32.totalorder %s69, %s70
    %p81 = scmp.eq.s32.totalorder %s19, 0
    %p82 = por %p80, %p81
    %p83 = scmp.ne.s32.totalorder %s69, %s70
    %p84 = scmp.eq.s32.totalorder %s20, 1
    %p85 = por %p83, %p84
    %p87 = scmp.ne.s32.totalorder %s70, %s86
    %p88 = scmp.eq.s32.totalorder %s20, 0
    %p89 = por %p87, %p88
    %s90 = ssub.s32 %s21, %s33
    %s91 = ssub.s32 %s22, %s29
    %s92 = sor.u32 %s90, %s91
    %p93 = scmp.eq.s32.totalorder %s92, 0
    %s95 = sadd.s32 %s94, 1
    %s96 = scalar_select %p93, %s94, %s95
    %p99 = pneg %p93
    %p100 = scmp.eq.s32.totalorder %s14, 1
    %p101 = por %p99, %p100
    %p102 = scmp.ne.s32.totalorder %s94, %s97
    %p103 = scmp.eq.s32.totalorder %s14, 0
    %p104 = por %p102, %p103
    %p105 = scmp.ne.s32.totalorder %s94, %s97
    %p106 = scmp.eq.s32.totalorder %s19, 1
    %p107 = por %p105, %p106
    %p108 = scmp.ne.s32.totalorder %s97, %s98
    %p109 = scmp.eq.s32.totalorder %s19, 0
    %p110 = por %p108, %p109
    %p111 = scmp.ne.s32.totalorder %s97, %s98
    %p112 = scmp.eq.s32.totalorder %s20, 1
    %p113 = por %p111, %p112
    %p115 = scmp.ne.s32.totalorder %s98, %s114
    %p116 = scmp.eq.s32.totalorder %s20, 0
    %p117 = por %p115, %p116
    %s119 = sadd.s32 %s118, 1
    %p122 = scmp.eq.s32.totalorder %s14, 1
    %p123 = scmp.ne.s32.totalorder %s118, %s120
    %p124 = scmp.eq.s32.totalorder %s14, 0
    %p125 = por %p123, %p124
    %p126 = scmp.ne.s32.totalorder %s118, %s120
    %p127 = scmp.eq.s32.totalorder %s19, 1
    %p128 = por %p126, %p127
    %p129 = scmp.ne.s32.totalorder %s120, %s121
    %p130 = scmp.eq.s32.totalorder %s19, 0
    %p131 = por %p129, %p130
    %p132 = scmp.ne.s32.totalorder %s120, %s121
    %p133 = scmp.eq.s32.totalorder %s20, 1
    %p134 = por %p132, %p133
    %p136 = scmp.ne.s32.totalorder %s121, %s135
    %p137 = scmp.eq.s32.totalorder %s20, 0
    %p138 = por %p136, %p137
    %s140 = sadd.s32 %s139, 1
    %p143 = scmp.eq.s32.totalorder %s14, 1
    %p144 = scmp.ne.s32.totalorder %s139, %s141
    %p145 = scmp.eq.s32.totalorder %s14, 0
    %p146 = por %p144, %p145
    %p147 = scmp.ne.s32.totalorder %s139, %s141
    %p148 = scmp.eq.s32.totalorder %s19, 1
    %p149 = por %p147, %p148
    %p150 = scmp.ne.s32.totalorder %s141, %s142
    %p151 = scmp.eq.s32.totalorder %s19, 0
    %p152 = por %p150, %p151
    %p153 = scmp.ne.s32.totalorder %s141, %s142
    %p154 = scmp.eq.s32.totalorder %s20, 1
    %p155 = por %p153, %p154
    %p157 = scmp.ne.s32.totalorder %s142, %s156
    %p158 = scmp.eq.s32.totalorder %s20, 0
    %p159 = por %p157, %p158
    %s161 = sadd.s32 %s160, 1
    %p164 = scmp.eq.s32.totalorder %s14, 1
    %p165 = scmp.ne.s32.totalorder %s160, %s162
    %p166 = scmp.eq.s32.totalorder %s14, 0
    %p167 = por %p165, %p166
    %p168 = scmp.ne.s32.totalorder %s160, %s162
    %p169 = scmp.eq.s32.totalorder %s19, 1
    %p170 = por %p168, %p169
    %p171 = scmp.ne.s32.totalorder %s162, %s163
    %p172 = scmp.eq.s32.totalorder %s19, 0
    %p173 = por %p171, %p172
    %p174 = scmp.ne.s32.totalorder %s162, %s163
    %p175 = scmp.eq.s32.totalorder %s20, 1
    %p176 = por %p174, %p175
    %p178 = scmp.ne.s32.totalorder %s163, %s177
    %p179 = scmp.eq.s32.totalorder %s20, 0
    %p180 = por %p178, %p179
    %s182 = sadd.s32 %s181, 1
    %p185 = scmp.eq.s32.totalorder %s14, 1
    %p186 = scmp.ne.s32.totalorder %s181, %s183
    %p187 = scmp.eq.s32.totalorder %s14, 0
    %p188 = por %p186, %p187
    %p189 = scmp.ne.s32.totalorder %s181, %s183
    %p190 = scmp.eq.s32.totalorder %s19, 1
    %p191 = por %p189, %p190
    %p192 = scmp.ne.s32.totalorder %s183, %s184
    %p193 = scmp.eq.s32.totalorder %s19, 0
    %p194 = por %p192, %p193
    %p195 = scmp.ne.s32.totalorder %s183, %s184
    %p196 = scmp.eq.s32.totalorder %s20, 1
    %p197 = por %p195, %p196
    %p199 = scmp.ne.s32.totalorder %s184, %s198
    %p200 = scmp.eq.s32.totalorder %s20, 0
    %p201 = por %p199, %p200
    %s203 = sadd.s32 %s202, 1
    %p206 = scmp.eq.s32.totalorder %s14, 1
    %p207 = scmp.ne.s32.totalorder %s202, %s204
    %p208 = scmp.eq.s32.totalorder %s14, 0
    %p209 = por %p207, %p208
    %p210 = scmp.ne.s32.totalorder %s202, %s204
    %p211 = scmp.eq.s32.totalorder %s19, 1
    %p212 = por %p210, %p211
    %p213 = scmp.ne.s32.totalorder %s204, %s205
    %p214 = scmp.eq.s32.totalorder %s19, 0
    %p215 = por %p213, %p214
    %p216 = scmp.ne.s32.totalorder %s204, %s205
    %p217 = scmp.eq.s32.totalorder %s20, 1
    %p218 = por %p216, %p217
    %p220 = scmp.ne.s32.totalorder %s205, %s219
    %p221 = scmp.eq.s32.totalorder %s20, 0
    %p222 = por %p220, %p221
    %s223 = ssub.s32 %s21, %s33
    %p224 = scmp.eq.s32.totalorder %s223, 0
    %s226 = sadd.s32 %s225, 1
    %s227 = scalar_select %p224, %s225, %s226
    %p230 = pneg %p224
    %p231 = scmp.eq.s32.totalorder %s14, 1
    %p232 = por %p230, %p231
    %p233 = scmp.ne.s32.totalorder %s225, %s228
    %p234 = scmp.eq.s32.totalorder %s14, 0
    %p235 = por %p233, %p234
    %p236 = scmp.ne.s32.totalorder %s225, %s228
    %p237 = scmp.eq.s32.totalorder %s19, 1
    %p238 = por %p236, %p237
    %p239 = scmp.ne.s32.totalorder %s228, %s229
    %p240 = scmp.eq.s32.totalorder %s19, 0
    %p241 = por %p239, %p240
    %p242 = scmp.ne.s32.totalorder %s228, %s229
    %p243 = scmp.eq.s32.totalorder %s20, 1
    %p244 = por %p242, %p243
    %p246 = scmp.ne.s32.totalorder %s229, %s245
    %p247 = scmp.eq.s32.totalorder %s20, 0
    %p248 = por %p246, %p247
    %p249 = scmp.le.s32.totalorder 1, %s14
    %p250 = scmp.lt.s32.totalorder %s14, 3
    %p251 = pnand %p249, %p250
    %p252 = pneg %p251
    // Predicated region
    $region9: #{sranet_forward.8} parent=5 // pred_check
      _
    $region10: #{sranet_forward.8} parent=5 // pred_check_branch
      %254 = sbr.rel (%p251) target = $region12
    $region11: #{sranet_forward.8} parent=5 // pred_region
      %s255 = ssub.s32 %s14, 1
      // Predicated region
      $region13: #{sranet_forward.8} parent=11 // pred_check
        %p256 = pneg %p131
      $region14: #{sranet_forward.8} parent=11 // pred_check_branch
        %258 = sbr.rel (%p256) target = $region16
      $region15: #{sranet_forward.8} parent=11 // pred_region
        _
      $region16: #{sranet_forward.8} parent=11 // pred_fallthru
        _
      // Predicated region
      $region17: #{sranet_forward.8} parent=11 // pred_check
        %p259 = pneg %p152
      $region18: #{sranet_forward.8} parent=11 // pred_check_branch
        %261 = sbr.rel (%p259) target = $region20
      $region19: #{sranet_forward.8} parent=11 // pred_region
        _
      $region20: #{sranet_forward.8} parent=11 // pred_fallthru
        _
      // Predicated region
      $region21: #{sranet_forward.8} parent=11 // pred_check
        %p262 = pneg %p173
      $region22: #{sranet_forward.8} parent=11 // pred_check_branch
        %264 = sbr.rel (%p262) target = $region24
      $region23: #{sranet_forward.8} parent=11 // pred_region
        _
      $region24: #{sranet_forward.8} parent=11 // pred_fallthru
        _
      // Predicated region
      $region25: #{sranet_forward.8} parent=11 // pred_check
        %p265 = pneg %p194
      $region26: #{sranet_forward.8} parent=11 // pred_check_branch
        %267 = sbr.rel (%p265) target = $region28
      $region27: #{sranet_forward.8} parent=11 // pred_region
        _
      $region28: #{sranet_forward.8} parent=11 // pred_fallthru
        _
      // Predicated region
      $region29: #{sranet_forward.8} parent=11 // pred_check
        %p268 = pneg %p215
      $region30: #{sranet_forward.8} parent=11 // pred_check_branch
        %270 = sbr.rel (%p268) target = $region32
      $region31: #{sranet_forward.8} parent=11 // pred_region
        _
      $region32: #{sranet_forward.8} parent=11 // pred_fallthru
        _
    $region12: #{sranet_forward.8} parent=5 // pred_fallthru
      _
    %p271 = scmp.lt.s32.totalorder %s14, 2
    // Predicated region
    $region33: #{sranet_forward.8} parent=5 // pred_check
      %p272 = pneg %p271
    $region34: #{sranet_forward.8} parent=5 // pred_check_branch
      %274 = sbr.rel (%p272) target = $region36
    $region35: #{sranet_forward.8} parent=5 // pred_region
      // Predicated region
      $region37: #{sranet_forward.8} parent=35 // pred_check
        %p275 = pneg %p48
      $region38: #{sranet_forward.8} parent=35 // pred_check_branch
        %277 = sbr.rel (%p275) target = $region40
      $region39: #{sranet_forward.8} parent=35 // pred_region
        %p278 = scmp.lt.s32.totalorder %s21, 1
        %s279 = scalar_select %p278, %s21, 1
        %p280 = scmp.lt.s32.totalorder %s22, 0
        %s281 = scalar_select %p280, %s22, 0
        %s282 = smul.addr %s279, 8
        %s283 = sadd.s32 %s281, %s282
        %s284 = smul.addr %s283, 4
        %s285 = scalar_lea.vmem %s0, %s284
      $region40: #{sranet_forward.8} parent=35 // pred_fallthru
        _
      // Predicated region
      $region41: #{sranet_forward.8} parent=35 // pred_check
        %p286 = pneg %p76
      $region42: #{sranet_forward.8} parent=35 // pred_check_branch
        %288 = sbr.rel (%p286) target = $region44
      $region43: #{sranet_forward.8} parent=35 // pred_region
        %p289 = scmp.lt.s32.totalorder %s21, 1
        %s290 = scalar_select %p289, %s21, 1
        %p291 = scmp.lt.s32.totalorder %s22, 0
        %s292 = scalar_select %p291, %s22, 0
        %s293 = smul.addr %s290, 8
        %s294 = sadd.s32 %s292, %s293
        %s295 = smul.addr %s294, 4
        %s296 = scalar_lea.vmem %s1, %s295
      $region44: #{sranet_forward.8} parent=35 // pred_fallthru
        _
      // Predicated region
      $region45: #{sranet_forward.8} parent=35 // pred_check
        %p297 = pneg %p104
      $region46: #{sranet_forward.8} parent=35 // pred_check_branch
        %299 = sbr.rel (%p297) target = $region48
      $region47: #{sranet_forward.8} parent=35 // pred_region
        %p300 = scmp.lt.s32.totalorder %s21, 1
        %s301 = scalar_select %p300, %s21, 1
        %p302 = scmp.lt.s32.totalorder %s22, 0
        %s303 = scalar_select %p302, %s22, 0
        %s304 = smul.addr %s301, 8
        %s305 = sadd.s32 %s303, %s304
        %s306 = smul.addr %s305, 4
        %s307 = scalar_lea.vmem %s2, %s306
      $region48: #{sranet_forward.8} parent=35 // pred_fallthru
        _
    $region36: #{sranet_forward.8} parent=5 // pred_fallthru
      _
    %p308 = scmp.le.s32.totalorder 1, %s14
    %p309 = scmp.lt.s32.totalorder %s14, 3
    %p310 = pnand %p308, %p309
    %p311 = pneg %p310
    // Predicated region
    $region49: #{sranet_forward.8} parent=5 // pred_check
      _
    $region50: #{sranet_forward.8} parent=5 // pred_check_branch
      %313 = sbr.rel (%p310) target = $region52
    $region51: #{sranet_forward.8} parent=5 // pred_region
      %s314 = ssub.s32 %s14, 1
      %p315 = scmp.lt.s32.totalorder %s23, 1
      %s316 = scalar_select %p315, %s23, 1
      %p317 = scmp.lt.s32.totalorder %s24, 0
      %s318 = scalar_select %p317, %s24, 0
      %s319 = smul.addr %s316, 8
      %s320 = sadd.s32 %s318, %s319
      %s321 = smul.addr %s320, 4
      %s322 = scalar_lea.vmem %s0, %s321
      %p323 = pneg %p54
      %p324 = pneg %p51
      %p325 = scmp.lt.s32.totalorder %s23, 1
      %s326 = scalar_select %p325, %s23, 1
      %p327 = scmp.lt.s32.totalorder %s24, 0
      %s328 = scalar_select %p327, %s24, 0
      %s329 = smul.addr %s326, 8
      %s330 = sadd.s32 %s328, %s329
      %s331 = smul.addr %s330, 4
      %s332 = scalar_lea.vmem %s1, %s331
      %p333 = pneg %p82
      %p334 = pneg %p79
      %p335 = scmp.lt.s32.totalorder %s23, 1
      %s336 = scalar_select %p335, %s23, 1
      %p337 = scmp.lt.s32.totalorder %s24, 0
      %s338 = scalar_select %p337, %s24, 0
      %s339 = smul.addr %s336, 8
      %s340 = sadd.s32 %s338, %s339
      %s341 = smul.addr %s340, 4
      %s342 = scalar_lea.vmem %s2, %s341
      %p343 = pneg %p110
      %p344 = pneg %p107
      %p345 = pneg %p131
      %p346 = pneg %p128
      %p347 = pneg %p152
      %p348 = pneg %p149
      %p349 = pneg %p173
      %p350 = pneg %p170
      %p351 = pneg %p194
      %p352 = pneg %p191
      %p353 = pneg %p215
      %p354 = pneg %p212
      %p355 = pneg %p241
      %p356 = pneg %p238
      %p357 = scmp.lt.s32.totalorder %s23, 1
      %s358 = scalar_select %p357, %s23, 1
      %s359 = smul.addr %s358, 8
      %s360 = smul.addr %s359, 8
      %s361 = scalar_lea.vmem %s8, %s360
      %p362 = scmp.lt.s32.totalorder %s23, 1
      %s363 = scalar_select %p362, %s23, 1
      %p364 = scmp.lt.s32.totalorder %s24, 0
      %s365 = scalar_select %p364, %s24, 0
      %s366 = smul.addr %s363, 8
      %s367 = sadd.s32 %s365, %s366
      %s368 = smul.addr %s367, 4
      %s369 = scalar_lea.vmem %s0, %s368
      %p370 = scmp.lt.s32.totalorder %s23, 1
      %s371 = scalar_select %p370, %s23, 1
      %p372 = scmp.lt.s32.totalorder %s24, 0
      %s373 = scalar_select %p372, %s24, 0
      %s374 = smul.addr %s371, 8
      %s375 = sadd.s32 %s373, %s374
      %s376 = smul.addr %s375, 4
      %s377 = scalar_lea.vmem %s1, %s376
      %p378 = scmp.lt.s32.totalorder %s23, 1
      %s379 = scalar_select %p378, %s23, 1
      %p380 = scmp.lt.s32.totalorder %s24, 0
      %s381 = scalar_select %p380, %s24, 0
      %s382 = smul.addr %s379, 8
      %s383 = sadd.s32 %s381, %s382
      %s384 = smul.addr %s383, 4
      %s385 = scalar_lea.vmem %s2, %s384
      %p386 = scmp.lt.s32.totalorder %s23, 1
      %s387 = scalar_select %p386, %s23, 1
      %s388 = smul.addr %s387, 8
      %s389 = smul.addr %s388, 8
      %s390 = scalar_lea.vmem %s8, %s389
      %p391 = scmp.eq.s32.totalorder %s24, 0
      // Predicated region
      $region53: #{sranet_forward.8} parent=51 // pred_check
        %p392 = pneg %p391
      $region54: #{sranet_forward.8} parent=51 // pred_check_branch
        %394 = sbr.rel (%p392) target = $region56
      $region55: #{sranet_forward.8} parent=51 // pred_region
        %vm395 = vcmask 7168
        %396 = vst.msk [vmem:[#allocation2] sm:$0xff] %vm395, 0.0
        %397 = vst.msk [vmem:[#allocation2 + $0x8] sm:$0xff] %vm395, 0.0
        %398 = vst.msk [vmem:[#allocation2 + $0x10] sm:$0xff] %vm395, 0.0
        %399 = vst.msk [vmem:[#allocation2 + $0x18] sm:$0xff] %vm395, 0.0
        %400 = vst.msk [vmem:[#allocation2 + $0x20] sm:$0xff] %vm395, 0.0
        %401 = vst.msk [vmem:[#allocation2 + $0x28] sm:$0xff] %vm395, 0.0
        %402 = vst.msk [vmem:[#allocation2 + $0x30] sm:$0xff] %vm395, 0.0
        %403 = vst.msk [vmem:[#allocation2 + $0x38] sm:$0xff] %vm395, 0.0
        %404 = vst.msk [vmem:[#allocation3] sm:$0xff] %vm395, 0.0
        %405 = vst.msk [vmem:[#allocation3 + $0x8] sm:$0xff] %vm395, 0.0
        %406 = vst.msk [vmem:[#allocation3 + $0x10] sm:$0xff] %vm395, 0.0
        %407 = vst.msk [vmem:[#allocation3 + $0x18] sm:$0xff] %vm395, 0.0
        %408 = vst.msk [vmem:[#allocation3 + $0x20] sm:$0xff] %vm395, 0.0
        %409 = vst.msk [vmem:[#allocation3 + $0x28] sm:$0xff] %vm395, 0.0
        %410 = vst.msk [vmem:[#allocation3 + $0x30] sm:$0xff] %vm395, 0.0
        %411 = vst.msk [vmem:[#allocation3 + $0x38] sm:$0xff] %vm395, 0.0
        %412 = vst.msk [vmem:[#allocation4] sm:$0xff] %vm395, 0.0
        %413 = vst.msk [vmem:[#allocation4 + $0x8] sm:$0xff] %vm395, 0.0
        %414 = vst.msk [vmem:[#allocation4 + $0x10] sm:$0xff] %vm395, 0.0
        %415 = vst.msk [vmem:[#allocation4 + $0x18] sm:$0xff] %vm395, 0.0
        %416 = vst.msk [vmem:[#allocation4 + $0x20] sm:$0xff] %vm395, 0.0
        %417 = vst.msk [vmem:[#allocation4 + $0x28] sm:$0xff] %vm395, 0.0
        %418 = vst.msk [vmem:[#allocation4 + $0x30] sm:$0xff] %vm395, 0.0
        %419 = vst.msk [vmem:[#allocation4 + $0x38] sm:$0xff] %vm395, 0.0
        %420 = vst.msk [vmem:[#allocation5] sm:$0xff] %vm395, 0.0
        %421 = vst.msk [vmem:[#allocation5 + $0x8] sm:$0xff] %vm395, 0.0
        %422 = vst.msk [vmem:[#allocation5 + $0x10] sm:$0xff] %vm395, 0.0
        %423 = vst.msk [vmem:[#allocation5 + $0x18] sm:$0xff] %vm395, 0.0
        %424 = vst.msk [vmem:[#allocation5 + $0x20] sm:$0xff] %vm395, 0.0
        %425 = vst.msk [vmem:[#allocation5 + $0x28] sm:$0xff] %vm395, 0.0
        %426 = vst.msk [vmem:[#allocation5 + $0x30] sm:$0xff] %vm395, 0.0
        %427 = vst.msk [vmem:[#allocation5 + $0x38] sm:$0xff] %vm395, 0.0
        %vm428 = vcmask 39936
        %429 = vst.msk [vmem:[%s390] sm:$0xff] %vm428, 0.0
        %430 = vst.msk [vmem:[%s390 + $0x8] sm:$0xff] %vm428, 0.0
        %431 = vst.msk [vmem:[%s390 + $0x10] sm:$0xff] %vm428, 0.0
        %432 = vst.msk [vmem:[%s390 + $0x18] sm:$0xff] %vm428, 0.0
        %433 = vst.msk [vmem:[%s390 + $0x20] sm:$0xff] %vm428, 0.0
        %434 = vst.msk [vmem:[%s390 + $0x28] sm:$0xff] %vm428, 0.0
        %435 = vst.msk [vmem:[%s390 + $0x30] sm:$0xff] %vm428, 0.0
        %436 = vst.msk [vmem:[%s390 + $0x38] sm:$0xff] %vm428, 0.0
      $region56: #{sranet_forward.8} parent=51 // pred_fallthru
        _
      %v437 = vld [vmem:[%s369] sm:$0xf]
      %v438 = vld [vmem:[%s369 + $0x4] sm:$0xf]
      %v439 = vld [vmem:[%s369 + $0x8] sm:$0xf]
      %v440 = vld [vmem:[%s369 + $0xc] sm:$0xf]
      %v441 = vld [vmem:[%s369 + $0x10] sm:$0xf]
      %v442 = vld [vmem:[%s369 + $0x14] sm:$0xf]
      %v443 = vld [vmem:[%s369 + $0x18] sm:$0xf]
      %v444 = vld [vmem:[%s369 + $0x1c] sm:$0xf]
      %v445 = vunpack.c.l.bf16 %v437
      %v446 = vunpack.c.l.bf16 %v438
      %v447 = vunpack.c.l.bf16 %v439
      %v448 = vunpack.c.l.bf16 %v440
      %v449 = vunpack.c.l.bf16 %v441
      %v450 = vunpack.c.l.bf16 %v442
      %v451 = vunpack.c.l.bf16 %v443
      %v452 = vunpack.c.l.bf16 %v444
      %v453 = vld [vmem:[%s377] sm:$0xf]
      %v454 = vld [vmem:[%s377 + $0x4] sm:$0xf]
      %v455 = vld [vmem:[%s377 + $0x8] sm:$0xf]
      %v456 = vld [vmem:[%s377 + $0xc] sm:$0xf]
      %v457 = vld [vmem:[%s377 + $0x10] sm:$0xf]
      %v458 = vld [vmem:[%s377 + $0x14] sm:$0xf]
      %v459 = vld [vmem:[%s377 + $0x18] sm:$0xf]
      %v460 = vld [vmem:[%s377 + $0x1c] sm:$0xf]
      %v461 = vunpack.c.l.bf16 %v453
      %v462 = vunpack.c.l.bf16 %v454
      %v463 = vunpack.c.l.bf16 %v455
      %v464 = vunpack.c.l.bf16 %v456
      %v465 = vunpack.c.l.bf16 %v457
      %v466 = vunpack.c.l.bf16 %v458
      %v467 = vunpack.c.l.bf16 %v459
      %v468 = vunpack.c.l.bf16 %v460
      %v469 = vld [vmem:[%s385] sm:$0xf]
      %v470 = vld [vmem:[%s385 + $0x4] sm:$0xf]
      %v471 = vld [vmem:[%s385 + $0x8] sm:$0xf]
      %v472 = vld [vmem:[%s385 + $0xc] sm:$0xf]
      %v473 = vld [vmem:[%s385 + $0x10] sm:$0xf]
      %v474 = vld [vmem:[%s385 + $0x14] sm:$0xf]
      %v475 = vld [vmem:[%s385 + $0x18] sm:$0xf]
      %v476 = vld [vmem:[%s385 + $0x1c] sm:$0xf]
      %v477 = vunpack.c.l.bf16 %v469
      %v478 = vunpack.c.l.bf16 %v470
      %v479 = vunpack.c.l.bf16 %v471
      %v480 = vunpack.c.l.bf16 %v472
      %v481 = vunpack.c.l.bf16 %v473
      %v482 = vunpack.c.l.bf16 %v474
      %v483 = vunpack.c.l.bf16 %v475
      %v484 = vunpack.c.l.bf16 %v476
      %v485 = vmul.f32 %v461, %v445
      %v486 = vmul.f32 %v462, %v446
      %v487 = vmul.f32 %v463, %v447
      %v488 = vmul.f32 %v464, %v448
      %v489 = vmul.f32 %v465, %v449
      %v490 = vmul.f32 %v466, %v450
      %v491 = vmul.f32 %v467, %v451
      %v492 = vmul.f32 %v468, %v452
      %v493 = vmul.f32 %v445, 0.5
      %v494 = vmul.f32 %v446, 0.5
      %v495 = vmul.f32 %v447, 0.5
      %v496 = vmul.f32 %v448, 0.5
      %v497 = vmul.f32 %v449, 0.5
      %v498 = vmul.f32 %v450, 0.5
      %v499 = vmul.f32 %v451, 0.5
      %v500 = vmul.f32 %v452, 0.5
      %v501 = vtanh.pop %v493
      %v502 = vtanh.pop %v494
      %v503 = vtanh.pop %v495
      %v504 = vtanh.pop %v496
      %v505 = vtanh.pop %v497
      %v506 = vtanh.pop %v498
      %v507 = vtanh.pop %v499
      %v508 = vtanh.pop %v500
      %v509 = vsub.f32 1.0, %v501
      %v510 = vsub.f32 1.0, %v502
      %v511 = vsub.f32 1.0, %v503
      %v512 = vsub.f32 1.0, %v504
      %v513 = vsub.f32 1.0, %v505
      %v514 = vsub.f32 1.0, %v506
      %v515 = vsub.f32 1.0, %v507
      %v516 = vsub.f32 1.0, %v508
      %v517 = vmul.f32 %v509, 0.5
      %v518 = vmul.f32 %v510, 0.5
      %v519 = vmul.f32 %v511, 0.5
      %v520 = vmul.f32 %v512, 0.5
      %v521 = vmul.f32 %v513, 0.5
      %v522 = vmul.f32 %v514, 0.5
      %v523 = vmul.f32 %v515, 0.5
      %v524 = vmul.f32 %v516, 0.5
      %v525 = vmul.f32 %v517, %v461
      %v526 = vmul.f32 %v518, %v462
      %v527 = vmul.f32 %v519, %v463
      %v528 = vmul.f32 %v520, %v464
      %v529 = vmul.f32 %v521, %v465
      %v530 = vmul.f32 %v522, %v466
      %v531 = vmul.f32 %v523, %v467
      %v532 = vmul.f32 %v524, %v468
      %v533 = vmul.f32 %v485, %v477
      %v534 = vmul.f32 %v486, %v478
      %v535 = vmul.f32 %v487, %v479
      %v536 = vmul.f32 %v488, %v480
      %v537 = vmul.f32 %v489, %v481
      %v538 = vmul.f32 %v490, %v482
      %v539 = vmul.f32 %v491, %v483
      %v540 = vmul.f32 %v492, %v484
      %v541 = vmul.f32 %v461, 0.5
      %v542 = vmul.f32 %v462, 0.5
      %v543 = vmul.f32 %v463, 0.5
      %v544 = vmul.f32 %v464, 0.5
      %v545 = vmul.f32 %v465, 0.5
      %v546 = vmul.f32 %v466, 0.5
      %v547 = vmul.f32 %v467, 0.5
      %v548 = vmul.f32 %v468, 0.5
      %v549 = vtanh.pop %v541
      %v550 = vtanh.pop %v542
      %v551 = vtanh.pop %v543
      %v552 = vtanh.pop %v544
      %v553 = vtanh.pop %v545
      %v554 = vtanh.pop %v546
      %v555 = vtanh.pop %v547
      %v556 = vtanh.pop %v548
      %v557 = vsub.f32 1.0, %v549
      %v558 = vsub.f32 1.0, %v550
      %v559 = vsub.f32 1.0, %v551
      %v560 = vsub.f32 1.0, %v552
      %v561 = vsub.f32 1.0, %v553
      %v562 = vsub.f32 1.0, %v554
      %v563 = vsub.f32 1.0, %v555
      %v564 = vsub.f32 1.0, %v556
      %v565 = vmul.f32 %v557, 0.5
      %v566 = vmul.f32 %v558, 0.5
      %v567 = vmul.f32 %v559, 0.5
      %v568 = vmul.f32 %v560, 0.5
      %v569 = vmul.f32 %v561, 0.5
      %v570 = vmul.f32 %v562, 0.5
      %v571 = vmul.f32 %v563, 0.5
      %v572 = vmul.f32 %v564, 0.5
      %v573 = vmul.f32 %v565, %v477
      %v574 = vmul.f32 %v566, %v478
      %v575 = vmul.f32 %v567, %v479
      %v576 = vmul.f32 %v568, %v480
      %v577 = vmul.f32 %v569, %v481
      %v578 = vmul.f32 %v570, %v482
      %v579 = vmul.f32 %v571, %v483
      %v580 = vmul.f32 %v572, %v484
      %v581 = vld [vmem:[#allocation2] sm:$0xff]
      %v582 = vld [vmem:[#allocation2 + $0x8] sm:$0xff]
      %v583 = vld [vmem:[#allocation2 + $0x10] sm:$0xff]
      %v584 = vld [vmem:[#allocation2 + $0x18] sm:$0xff]
      %v585 = vld [vmem:[#allocation2 + $0x20] sm:$0xff]
      %v586 = vld [vmem:[#allocation2 + $0x28] sm:$0xff]
      %v587 = vld [vmem:[#allocation2 + $0x30] sm:$0xff]
      %v588 = vld [vmem:[#allocation2 + $0x38] sm:$0xff]
      %589 = vadd.xlane.f32.xlu0 %v485
      %v590 = vpop.xlane.xlu0 %589
      %591 = vadd.xlane.f32.xlu0 %v486
      %v592 = vpop.xlane.xlu0 %591
      %593 = vadd.xlane.f32.xlu0 %v487
      %v594 = vpop.xlane.xlu0 %593
      %595 = vadd.xlane.f32.xlu0 %v488
      %v596 = vpop.xlane.xlu0 %595
      %597 = vadd.xlane.f32.xlu0 %v489
      %v598 = vpop.xlane.xlu0 %597
      %599 = vadd.xlane.f32.xlu0 %v490
      %v600 = vpop.xlane.xlu0 %599
      %601 = vadd.xlane.f32.xlu0 %v491
      %v602 = vpop.xlane.xlu0 %601
      %603 = vadd.xlane.f32.xlu0 %v492
      %v604 = vpop.xlane.xlu0 %603
      %v605 = vadd.f32 %v581, %v590
      %v606 = vadd.f32 %v582, %v592
      %v607 = vadd.f32 %v583, %v594
      %v608 = vadd.f32 %v584, %v596
      %v609 = vadd.f32 %v585, %v598
      %v610 = vadd.f32 %v586, %v600
      %v611 = vadd.f32 %v587, %v602
      %v612 = vadd.f32 %v588, %v604
      %vm613 = vcmask 7168
      %614 = vst.msk [vmem:[#allocation2] sm:$0xff] %vm613, %v605
      %615 = vst.msk [vmem:[#allocation2 + $0x8] sm:$0xff] %vm613, %v606
      %616 = vst.msk [vmem:[#allocation2 + $0x10] sm:$0xff] %vm613, %v607
      %617 = vst.msk [vmem:[#allocation2 + $0x18] sm:$0xff] %vm613, %v608
      %618 = vst.msk [vmem:[#allocation2 + $0x20] sm:$0xff] %vm613, %v609
      %619 = vst.msk [vmem:[#allocation2 + $0x28] sm:$0xff] %vm613, %v610
      %620 = vst.msk [vmem:[#allocation2 + $0x30] sm:$0xff] %vm613, %v611
      %621 = vst.msk [vmem:[#allocation2 + $0x38] sm:$0xff] %vm613, %v612
      %v622 = vld [vmem:[#allocation3] sm:$0xff]
      %v623 = vld [vmem:[#allocation3 + $0x8] sm:$0xff]
      %v624 = vld [vmem:[#allocation3 + $0x10] sm:$0xff]
      %v625 = vld [vmem:[#allocation3 + $0x18] sm:$0xff]
      %v626 = vld [vmem:[#allocation3 + $0x20] sm:$0xff]
      %v627 = vld [vmem:[#allocation3 + $0x28] sm:$0xff]
      %v628 = vld [vmem:[#allocation3 + $0x30] sm:$0xff]
      %v629 = vld [vmem:[#allocation3 + $0x38] sm:$0xff]
      %630 = vadd.xlane.f32.xlu0 %v525
      %v631 = vpop.xlane.xlu0 %630
      %632 = vadd.xlane.f32.xlu0 %v526
      %v633 = vpop.xlane.xlu0 %632
      %634 = vadd.xlane.f32.xlu0 %v527
      %v635 = vpop.xlane.xlu0 %634
      %636 = vadd.xlane.f32.xlu0 %v528
      %v637 = vpop.xlane.xlu0 %636
      %638 = vadd.xlane.f32.xlu0 %v529
      %v639 = vpop.xlane.xlu0 %638
      %640 = vadd.xlane.f32.xlu0 %v530
      %v641 = vpop.xlane.xlu0 %640
      %642 = vadd.xlane.f32.xlu0 %v531
      %v643 = vpop.xlane.xlu0 %642
      %644 = vadd.xlane.f32.xlu0 %v532
      %v645 = vpop.xlane.xlu0 %644
      %v646 = vadd.f32 %v622, %v631
      %v647 = vadd.f32 %v623, %v633
      %v648 = vadd.f32 %v624, %v635
      %v649 = vadd.f32 %v625, %v637
      %v650 = vadd.f32 %v626, %v639
      %v651 = vadd.f32 %v627, %v641
      %v652 = vadd.f32 %v628, %v643
      %v653 = vadd.f32 %v629, %v645
      %654 = vst.msk [vmem:[#allocation3] sm:$0xff] %vm613, %v646
      %655 = vst.msk [vmem:[#allocation3 + $0x8] sm:$0xff] %vm613, %v647
      %656 = vst.msk [vmem:[#allocation3 + $0x10] sm:$0xff] %vm613, %v648
      %657 = vst.msk [vmem:[#allocation3 + $0x18] sm:$0xff] %vm613, %v649
      %658 = vst.msk [vmem:[#allocation3 + $0x20] sm:$0xff] %vm613, %v650
      %659 = vst.msk [vmem:[#allocation3 + $0x28] sm:$0xff] %vm613, %v651
      %660 = vst.msk [vmem:[#allocation3 + $0x30] sm:$0xff] %vm613, %v652
      %661 = vst.msk [vmem:[#allocation3 + $0x38] sm:$0xff] %vm613, %v653
      %v662 = vld [vmem:[#allocation4] sm:$0xff]
      %v663 = vld [vmem:[#allocation4 + $0x8] sm:$0xff]
      %v664 = vld [vmem:[#allocation4 + $0x10] sm:$0xff]
      %v665 = vld [vmem:[#allocation4 + $0x18] sm:$0xff]
      %v666 = vld [vmem:[#allocation4 + $0x20] sm:$0xff]
      %v667 = vld [vmem:[#allocation4 + $0x28] sm:$0xff]
      %v668 = vld [vmem:[#allocation4 + $0x30] sm:$0xff]
      %v669 = vld [vmem:[#allocation4 + $0x38] sm:$0xff]
      %670 = vadd.xlane.f32.xlu0 %v533
      %v671 = vpop.xlane.xlu0 %670
      %672 = vadd.xlane.f32.xlu0 %v534
      %v673 = vpop.xlane.xlu0 %672
      %674 = vadd.xlane.f32.xlu0 %v535
      %v675 = vpop.xlane.xlu0 %674
      %676 = vadd.xlane.f32.xlu0 %v536
      %v677 = vpop.xlane.xlu0 %676
      %678 = vadd.xlane.f32.xlu0 %v537
      %v679 = vpop.xlane.xlu0 %678
      %680 = vadd.xlane.f32.xlu0 %v538
      %v681 = vpop.xlane.xlu0 %680
      %682 = vadd.xlane.f32.xlu0 %v539
      %v683 = vpop.xlane.xlu0 %682
      %684 = vadd.xlane.f32.xlu0 %v540
      %v685 = vpop.xlane.xlu0 %684
      %v686 = vadd.f32 %v662, %v671
      %v687 = vadd.f32 %v663, %v673
      %v688 = vadd.f32 %v664, %v675
      %v689 = vadd.f32 %v665, %v677
      %v690 = vadd.f32 %v666, %v679
      %v691 = vadd.f32 %v667, %v681
      %v692 = vadd.f32 %v668, %v683
      %v693 = vadd.f32 %v669, %v685
      %694 = vst.msk [vmem:[#allocation4] sm:$0xff] %vm613, %v686
      %695 = vst.msk [vmem:[#allocation4 + $0x8] sm:$0xff] %vm613, %v687
      %696 = vst.msk [vmem:[#allocation4 + $0x10] sm:$0xff] %vm613, %v688
      %697 = vst.msk [vmem:[#allocation4 + $0x18] sm:$0xff] %vm613, %v689
      %698 = vst.msk [vmem:[#allocation4 + $0x20] sm:$0xff] %vm613, %v690
      %699 = vst.msk [vmem:[#allocation4 + $0x28] sm:$0xff] %vm613, %v691
      %700 = vst.msk [vmem:[#allocation4 + $0x30] sm:$0xff] %vm613, %v692
      %701 = vst.msk [vmem:[#allocation4 + $0x38] sm:$0xff] %vm613, %v693
      %v702 = vld [vmem:[#allocation5] sm:$0xff]
      %v703 = vld [vmem:[#allocation5 + $0x8] sm:$0xff]
      %v704 = vld [vmem:[#allocation5 + $0x10] sm:$0xff]
      %v705 = vld [vmem:[#allocation5 + $0x18] sm:$0xff]
      %v706 = vld [vmem:[#allocation5 + $0x20] sm:$0xff]
      %v707 = vld [vmem:[#allocation5 + $0x28] sm:$0xff]
      %v708 = vld [vmem:[#allocation5 + $0x30] sm:$0xff]
      %v709 = vld [vmem:[#allocation5 + $0x38] sm:$0xff]
      %710 = vadd.xlane.f32.xlu0 %v573
      %v711 = vpop.xlane.xlu0 %710
      %712 = vadd.xlane.f32.xlu0 %v574
      %v713 = vpop.xlane.xlu0 %712
      %714 = vadd.xlane.f32.xlu0 %v575
      %v715 = vpop.xlane.xlu0 %714
      %716 = vadd.xlane.f32.xlu0 %v576
      %v717 = vpop.xlane.xlu0 %716
      %718 = vadd.xlane.f32.xlu0 %v577
      %v719 = vpop.xlane.xlu0 %718
      %720 = vadd.xlane.f32.xlu0 %v578
      %v721 = vpop.xlane.xlu0 %720
      %722 = vadd.xlane.f32.xlu0 %v579
      %v723 = vpop.xlane.xlu0 %722
      %724 = vadd.xlane.f32.xlu0 %v580
      %v725 = vpop.xlane.xlu0 %724
      %v726 = vadd.f32 %v702, %v711
      %v727 = vadd.f32 %v703, %v713
      %v728 = vadd.f32 %v704, %v715
      %v729 = vadd.f32 %v705, %v717
      %v730 = vadd.f32 %v706, %v719
      %v731 = vadd.f32 %v707, %v721
      %v732 = vadd.f32 %v708, %v723
      %v733 = vadd.f32 %v709, %v725
      %734 = vst.msk [vmem:[#allocation5] sm:$0xff] %vm613, %v726
      %735 = vst.msk [vmem:[#allocation5 + $0x8] sm:$0xff] %vm613, %v727
      %736 = vst.msk [vmem:[#allocation5 + $0x10] sm:$0xff] %vm613, %v728
      %737 = vst.msk [vmem:[#allocation5 + $0x18] sm:$0xff] %vm613, %v729
      %738 = vst.msk [vmem:[#allocation5 + $0x20] sm:$0xff] %vm613, %v730
      %739 = vst.msk [vmem:[#allocation5 + $0x28] sm:$0xff] %vm613, %v731
      %740 = vst.msk [vmem:[#allocation5 + $0x30] sm:$0xff] %vm613, %v732
      %741 = vst.msk [vmem:[#allocation5 + $0x38] sm:$0xff] %vm613, %v733
      // Predicated region
      $region57: #{sranet_forward.8} parent=51 // pred_check
        %p742 = pneg %p391
      $region58: #{sranet_forward.8} parent=51 // pred_check_branch
        %744 = sbr.rel (%p742) target = $region60
      $region59: #{sranet_forward.8} parent=51 // pred_region
        %v745 = vld [vmem:[%s3] sm:$0xff]
        %v746 = vld [vmem:[%s4] sm:$0xff]
        %v747 = vld [vmem:[%s4 + $0x8] sm:$0xff]
        %v748 = vld [vmem:[%s4 + $0x10] sm:$0xff]
        %v749 = vld [vmem:[%s4 + $0x18] sm:$0xff]
        %v750 = vld [vmem:[%s4 + $0x20] sm:$0xff]
        %v751 = vld [vmem:[%s4 + $0x28] sm:$0xff]
        %v752 = vld [vmem:[%s4 + $0x30] sm:$0xff]
        %v753 = vld [vmem:[%s4 + $0x38] sm:$0xff]
        %v754 = vld [vmem:[%s5] sm:$0xff]
        %v755 = vld [vmem:[%s6] sm:$0xff]
        %v756 = vld [vmem:[%s6 + $0x8] sm:$0xff]
        %v757 = vld [vmem:[%s6 + $0x10] sm:$0xff]
        %v758 = vld [vmem:[%s6 + $0x18] sm:$0xff]
        %v759 = vld [vmem:[%s6 + $0x20] sm:$0xff]
        %v760 = vld [vmem:[%s6 + $0x28] sm:$0xff]
        %v761 = vld [vmem:[%s6 + $0x30] sm:$0xff]
        %v762 = vld [vmem:[%s6 + $0x38] sm:$0xff]
        %v763 = vld [vmem:[#allocation2] sm:$0xff]
        %v764 = vld [vmem:[#allocation2 + $0x8] sm:$0xff]
        %v765 = vld [vmem:[#allocation2 + $0x10] sm:$0xff]
        %v766 = vld [vmem:[#allocation2 + $0x18] sm:$0xff]
        %v767 = vld [vmem:[#allocation2 + $0x20] sm:$0xff]
        %v768 = vld [vmem:[#allocation2 + $0x28] sm:$0xff]
        %v769 = vld [vmem:[#allocation2 + $0x30] sm:$0xff]
        %v770 = vld [vmem:[#allocation2 + $0x38] sm:$0xff]
        %v771 = vld [vmem:[#allocation3] sm:$0xff]
        %v772 = vld [vmem:[#allocation3 + $0x8] sm:$0xff]
        %v773 = vld [vmem:[#allocation3 + $0x10] sm:$0xff]
        %v774 = vld [vmem:[#allocation3 + $0x18] sm:$0xff]
        %v775 = vld [vmem:[#allocation3 + $0x20] sm:$0xff]
        %v776 = vld [vmem:[#allocation3 + $0x28] sm:$0xff]
        %v777 = vld [vmem:[#allocation3 + $0x30] sm:$0xff]
        %v778 = vld [vmem:[#allocation3 + $0x38] sm:$0xff]
        %v779 = vmul.f32 %v763, 0.015625
        %v780 = vmul.f32 %v764, 0.015625
        %v781 = vmul.f32 %v765, 0.015625
        %v782 = vmul.f32 %v766, 0.015625
        %v783 = vmul.f32 %v767, 0.015625
        %v784 = vmul.f32 %v768, 0.015625
        %v785 = vmul.f32 %v769, 0.015625
        %v786 = vmul.f32 %v770, 0.015625
        %vm787 = vcmask 523264
        %v789 = vsel %vm787, %v745, 0
        %791 = vmatpush.msra.mxu0 0.0
        %792 = vmatpush.msra.mxu0 0.0
        %793 = vmatpush.msra.mxu0 0.0
        %794 = vmatpush.msra.mxu0 0.0
        %795 = vmatpush.msra.mxu0 0.0
        %796 = vmatpush.msra.mxu0 0.0
        %797 = vmatpush.msra.mxu0 0.0
        %798 = vmatpush.msra.mxu0 0.0
        %799 = vmatpush.msra.mxu0 %v786
        %800 = vmatpush.msra.mxu0 %v785
        %801 = vmatpush.msra.mxu0 %v784
        %802 = vmatpush.msra.mxu0 %v783
        %803 = vmatpush.msra.mxu0 %v782
        %804 = vmatpush.msra.mxu0 %v781
        %805 = vmatpush.msra.mxu0 %v780
        %806 = vmatpush.msra.mxu0 %v779
        %807 = vmatmul.f32.gmra.mxu0 %v789
        %v808 = vpop.f32.mrf.mxu0
        %v809 = vadd.f32 0.0, %v808
        %810 = vdwg.mxu0
        %v811 = vmax.f32 %v809, 0.0
        %v812 = vmul.f32 %v771, 0.015625
        %v813 = vmul.f32 %v772, 0.015625
        %v814 = vmul.f32 %v773, 0.015625
        %v815 = vmul.f32 %v774, 0.015625
        %v816 = vmul.f32 %v775, 0.015625
        %v817 = vmul.f32 %v776, 0.015625
        %v818 = vmul.f32 %v777, 0.015625
        %v819 = vmul.f32 %v778, 0.015625
        %v821 = vsel %vm787, %v754, 0
        %823 = vmatpush.msra.mxu0 0.0
        %824 = vmatpush.msra.mxu0 0.0
        %825 = vmatpush.msra.mxu0 0.0
        %826 = vmatpush.msra.mxu0 0.0
        %827 = vmatpush.msra.mxu0 0.0
        %828 = vmatpush.msra.mxu0 0.0
        %829 = vmatpush.msra.mxu0 0.0
        %830 = vmatpush.msra.mxu0 0.0
        %831 = vmatpush.msra.mxu0 %v819
        %832 = vmatpush.msra.mxu0 %v818
        %833 = vmatpush.msra.mxu0 %v817
        %834 = vmatpush.msra.mxu0 %v816
        %835 = vmatpush.msra.mxu0 %v815
        %836 = vmatpush.msra.mxu0 %v814
        %837 = vmatpush.msra.mxu0 %v813
        %838 = vmatpush.msra.mxu0 %v812
        %839 = vmatmul.f32.gmra.mxu0 %v821
        %v840 = vpop.f32.mrf.mxu0
        %v841 = vadd.f32 0.0, %v840
        %842 = vdwg.mxu0
        %v843 = vmax.f32 %v841, 0.0
        %vm844 = vcmask 64512
        %v846 = vsel %vm844, %v746, 0
        %v849 = vsel %vm844, %v747, 0
        %v852 = vsel %vm844, %v748, 0
        %v855 = vsel %vm844, %v749, 0
        %v858 = vsel %vm844, %v750, 0
        %v861 = vsel %vm844, %v751, 0
        %v864 = vsel %vm844, %v752, 0
        %v867 = vsel %vm844, %v753, 0
        %869 = vmatpush.msra.mxu0 0.0
        %870 = vmatpush.msra.mxu0 0.0
        %871 = vmatpush.msra.mxu0 0.0
        %872 = vmatpush.msra.mxu0 0.0
        %873 = vmatpush.msra.mxu0 0.0
        %874 = vmatpush.msra.mxu0 0.0
        %875 = vmatpush.msra.mxu0 0.0
        %876 = vmatpush.msra.mxu0 0.0
        %877 = vmatpush.msra.mxu0 0.0
        %878 = vmatpush.msra.mxu0 0.0
        %879 = vmatpush.msra.mxu0 0.0
        %880 = vmatpush.msra.mxu0 0.0
        %881 = vmatpush.msra.mxu0 0.0
        %882 = vmatpush.msra.mxu0 0.0
        %883 = vmatpush.msra.mxu0 0.0
        %884 = vmatpush.msra.mxu0 %v811
        %885 = vmatmul.f32.gmra.mxu0 %v846
        %v886 = vpop.f32.mrf.mxu0
        %v887 = vadd.f32 0.0, %v886
        %888 = vmatmul.f32.gmra.mxu0 %v849
        %v889 = vpop.f32.mrf.mxu0
        %v890 = vadd.f32 0.0, %v889
        %891 = vmatmul.f32.gmra.mxu0 %v852
        %v892 = vpop.f32.mrf.mxu0
        %v893 = vadd.f32 0.0, %v892
        %894 = vmatmul.f32.gmra.mxu0 %v855
        %v895 = vpop.f32.mrf.mxu0
        %v896 = vadd.f32 0.0, %v895
        %897 = vmatmul.f32.gmra.mxu0 %v858
        %v898 = vpop.f32.mrf.mxu0
        %v899 = vadd.f32 0.0, %v898
        %900 = vmatmul.f32.gmra.mxu0 %v861
        %v901 = vpop.f32.mrf.mxu0
        %v902 = vadd.f32 0.0, %v901
        %903 = vmatmul.f32.gmra.mxu0 %v864
        %v904 = vpop.f32.mrf.mxu0
        %v905 = vadd.f32 0.0, %v904
        %906 = vmatmul.f32.gmra.mxu0 %v867
        %v907 = vpop.f32.mrf.mxu0
        %v908 = vadd.f32 0.0, %v907
        %909 = vdwg.mxu0
        %v911 = vsel %vm844, %v755, 0
        %v914 = vsel %vm844, %v756, 0
        %v917 = vsel %vm844, %v757, 0
        %v920 = vsel %vm844, %v758, 0
        %v923 = vsel %vm844, %v759, 0
        %v926 = vsel %vm844, %v760, 0
        %v929 = vsel %vm844, %v761, 0
        %v932 = vsel %vm844, %v762, 0
        %934 = vmatpush.msra.mxu0 0.0
        %935 = vmatpush.msra.mxu0 0.0
        %936 = vmatpush.msra.mxu0 0.0
        %937 = vmatpush.msra.mxu0 0.0
        %938 = vmatpush.msra.mxu0 0.0
        %939 = vmatpush.msra.mxu0 0.0
        %940 = vmatpush.msra.mxu0 0.0
        %941 = vmatpush.msra.mxu0 0.0
        %942 = vmatpush.msra.mxu0 0.0
        %943 = vmatpush.msra.mxu0 0.0
        %944 = vmatpush.msra.mxu0 0.0
        %945 = vmatpush.msra.mxu0 0.0
        %946 = vmatpush.msra.mxu0 0.0
        %947 = vmatpush.msra.mxu0 0.0
        %948 = vmatpush.msra.mxu0 0.0
        %949 = vmatpush.msra.mxu0 %v843
        %950 = vmatmul.f32.gmra.mxu0 %v911
        %v951 = vpop.f32.mrf.mxu0
        %v952 = vadd.f32 0.0, %v951
        %953 = vmatmul.f32.gmra.mxu0 %v914
        %v954 = vpop.f32.mrf.mxu0
        %v955 = vadd.f32 0.0, %v954
        %956 = vmatmul.f32.gmra.mxu0 %v917
        %v957 = vpop.f32.mrf.mxu0
        %v958 = vadd.f32 0.0, %v957
        %959 = vmatmul.f32.gmra.mxu0 %v920
        %v960 = vpop.f32.mrf.mxu0
        %v961 = vadd.f32 0.0, %v960
        %962 = vmatmul.f32.gmra.mxu0 %v923
        %v963 = vpop.f32.mrf.mxu0
        %v964 = vadd.f32 0.0, %v963
        %965 = vmatmul.f32.gmra.mxu0 %v926
        %v966 = vpop.f32.mrf.mxu0
        %v967 = vadd.f32 0.0, %v966
        %968 = vmatmul.f32.gmra.mxu0 %v929
        %v969 = vpop.f32.mrf.mxu0
        %v970 = vadd.f32 0.0, %v969
        %971 = vmatmul.f32.gmra.mxu0 %v932
        %v972 = vpop.f32.mrf.mxu0
        %v973 = vadd.f32 0.0, %v972
        %974 = vdwg.mxu0
        %v975 = vmax.f32 %v887, %v952
        %v976 = vmax.f32 %v890, %v955
        %v977 = vmax.f32 %v893, %v958
        %v978 = vmax.f32 %v896, %v961
        %v979 = vmax.f32 %v899, %v964
        %v980 = vmax.f32 %v902, %v967
        %v981 = vmax.f32 %v905, %v970
        %v982 = vmax.f32 %v908, %v973
        %v983 = vsub.f32 %v887, %v975
        %v984 = vsub.f32 %v890, %v976
        %v985 = vsub.f32 %v893, %v977
        %v986 = vsub.f32 %v896, %v978
        %v987 = vsub.f32 %v899, %v979
        %v988 = vsub.f32 %v902, %v980
        %v989 = vsub.f32 %v905, %v981
        %v990 = vsub.f32 %v908, %v982
        %v991 = vmul.f32 %v983, 1.442695
        %v992 = vpow.pop %v991
        %v993 = vmul.f32 %v984, 1.442695
        %v994 = vpow.pop %v993
        %v995 = vmul.f32 %v985, 1.442695
        %v996 = vpow.pop %v995
        %v997 = vmul.f32 %v986, 1.442695
        %v998 = vpow.pop %v997
        %v999 = vmul.f32 %v987, 1.442695
        %v1000 = vpow.pop %v999
        %v1001 = vmul.f32 %v988, 1.442695
        %v1002 = vpow.pop %v1001
        %v1003 = vmul.f32 %v989, 1.442695
        %v1004 = vpow.pop %v1003
        %v1005 = vmul.f32 %v990, 1.442695
        %v1006 = vpow.pop %v1005
        %v1007 = vsub.f32 %v952, %v975
        %v1008 = vsub.f32 %v955, %v976
        %v1009 = vsub.f32 %v958, %v977
        %v1010 = vsub.f32 %v961, %v978
        %v1011 = vsub.f32 %v964, %v979
        %v1012 = vsub.f32 %v967, %v980
        %v1013 = vsub.f32 %v970, %v981
        %v1014 = vsub.f32 %v973, %v982
        %v1015 = vmul.f32 %v1007, 1.442695
        %v1016 = vpow.pop %v1015
        %v1017 = vmul.f32 %v1008, 1.442695
        %v1018 = vpow.pop %v1017
        %v1019 = vmul.f32 %v1009, 1.442695
        %v1020 = vpow.pop %v1019
        %v1021 = vmul.f32 %v1010, 1.442695
        %v1022 = vpow.pop %v1021
        %v1023 = vmul.f32 %v1011, 1.442695
        %v1024 = vpow.pop %v1023
        %v1025 = vmul.f32 %v1012, 1.442695
        %v1026 = vpow.pop %v1025
        %v1027 = vmul.f32 %v1013, 1.442695
        %v1028 = vpow.pop %v1027
        %v1029 = vmul.f32 %v1014, 1.442695
        %v1030 = vpow.pop %v1029
        %v1031 = vadd.f32 %v992, %v1016
        %v1032 = vadd.f32 %v994, %v1018
        %v1033 = vadd.f32 %v996, %v1020
        %v1034 = vadd.f32 %v998, %v1022
        %v1035 = vadd.f32 %v1000, %v1024
        %v1036 = vadd.f32 %v1002, %v1026
        %v1037 = vadd.f32 %v1004, %v1028
        %v1038 = vadd.f32 %v1006, %v1030
        %v1039 = vrcp.pop %v1031
        %v1040 = vrcp.pop %v1032
        %v1041 = vrcp.pop %v1033
        %v1042 = vrcp.pop %v1034
        %v1043 = vrcp.pop %v1035
        %v1044 = vrcp.pop %v1036
        %v1045 = vrcp.pop %v1037
        %v1046 = vrcp.pop %v1038
        %v1047 = vmul.f32 %v992, %v1039
        %v1048 = vmul.f32 %v994, %v1040
        %v1049 = vmul.f32 %v996, %v1041
        %v1050 = vmul.f32 %v998, %v1042
        %v1051 = vmul.f32 %v1000, %v1043
        %v1052 = vmul.f32 %v1002, %v1044
        %v1053 = vmul.f32 %v1004, %v1045
        %v1054 = vmul.f32 %v1006, %v1046
        %v1055 = vmul.f32 %v1016, %v1039
        %v1056 = vmul.f32 %v1018, %v1040
        %v1057 = vmul.f32 %v1020, %v1041
        %v1058 = vmul.f32 %v1022, %v1042
        %v1059 = vmul.f32 %v1024, %v1043
        %v1060 = vmul.f32 %v1026, %v1044
        %v1061 = vmul.f32 %v1028, %v1045
        %v1062 = vmul.f32 %v1030, %v1046
        %v1063 = vld [vmem:[#allocation4] sm:$0xff]
        %v1064 = vld [vmem:[#allocation4 + $0x8] sm:$0xff]
        %v1065 = vld [vmem:[#allocation4 + $0x10] sm:$0xff]
        %v1066 = vld [vmem:[#allocation4 + $0x18] sm:$0xff]
        %v1067 = vld [vmem:[#allocation4 + $0x20] sm:$0xff]
        %v1068 = vld [vmem:[#allocation4 + $0x28] sm:$0xff]
        %v1069 = vld [vmem:[#allocation4 + $0x30] sm:$0xff]
        %v1070 = vld [vmem:[#allocation4 + $0x38] sm:$0xff]
        %v1071 = vld [vmem:[#allocation5] sm:$0xff]
        %v1072 = vld [vmem:[#allocation5 + $0x8] sm:$0xff]
        %v1073 = vld [vmem:[#allocation5 + $0x10] sm:$0xff]
        %v1074 = vld [vmem:[#allocation5 + $0x18] sm:$0xff]
        %v1075 = vld [vmem:[#allocation5 + $0x20] sm:$0xff]
        %v1076 = vld [vmem:[#allocation5 + $0x28] sm:$0xff]
        %v1077 = vld [vmem:[#allocation5 + $0x30] sm:$0xff]
        %v1078 = vld [vmem:[#allocation5 + $0x38] sm:$0xff]
        %v1079 = vmul.f32 %v1063, 0.015625
        %v1080 = vmul.f32 %v1064, 0.015625
        %v1081 = vmul.f32 %v1065, 0.015625
        %v1082 = vmul.f32 %v1066, 0.015625
        %v1083 = vmul.f32 %v1067, 0.015625
        %v1084 = vmul.f32 %v1068, 0.015625
        %v1085 = vmul.f32 %v1069, 0.015625
        %v1086 = vmul.f32 %v1070, 0.015625
        %1087 = vmatpush.msra.mxu0 0.0
        %1088 = vmatpush.msra.mxu0 0.0
        %1089 = vmatpush.msra.mxu0 0.0
        %1090 = vmatpush.msra.mxu0 0.0
        %1091 = vmatpush.msra.mxu0 0.0
        %1092 = vmatpush.msra.mxu0 0.0
        %1093 = vmatpush.msra.mxu0 0.0
        %1094 = vmatpush.msra.mxu0 0.0
        %1095 = vmatpush.msra.mxu0 %v1086
        %1096 = vmatpush.msra.mxu0 %v1085
        %1097 = vmatpush.msra.mxu0 %v1084
        %1098 = vmatpush.msra.mxu0 %v1083
        %1099 = vmatpush.msra.mxu0 %v1082
        %1100 = vmatpush.msra.mxu0 %v1081
        %1101 = vmatpush.msra.mxu0 %v1080
        %1102 = vmatpush.msra.mxu0 %v1079
        %1103 = vmatmul.f32.gmra.mxu0 %v789
        %v1104 = vpop.f32.mrf.mxu0
        %v1105 = vadd.f32 0.0, %v1104
        %1106 = vdwg.mxu0
        %v1107 = vmax.f32 %v1105, 0.0
        %v1108 = vmul.f32 %v1071, 0.015625
        %v1109 = vmul.f32 %v1072, 0.015625
        %v1110 = vmul.f32 %v1073, 0.015625
        %v1111 = vmul.f32 %v1074, 0.015625
        %v1112 = vmul.f32 %v1075, 0.015625
        %v1113 = vmul.f32 %v1076, 0.015625
        %v1114 = vmul.f32 %v1077, 0.015625
        %v1115 = vmul.f32 %v1078, 0.015625
        %1116 = vmatpush.msra.mxu0 0.0
        %1117 = vmatpush.msra.mxu0 0.0
        %1118 = vmatpush.msra.mxu0 0.0
        %1119 = vmatpush.msra.mxu0 0.0
        %1120 = vmatpush.msra.mxu0 0.0
        %1121 = vmatpush.msra.mxu0 0.0
        %1122 = vmatpush.msra.mxu0 0.0
        %1123 = vmatpush.msra.mxu0 0.0
        %1124 = vmatpush.msra.mxu0 %v1115
        %1125 = vmatpush.msra.mxu0 %v1114
        %1126 = vmatpush.msra.mxu0 %v1113
        %1127 = vmatpush.msra.mxu0 %v1112
        %1128 = vmatpush.msra.mxu0 %v1111
        %1129 = vmatpush.msra.mxu0 %v1110
        %1130 = vmatpush.msra.mxu0 %v1109
        %1131 = vmatpush.msra.mxu0 %v1108
        %1132 = vmatmul.f32.gmra.mxu0 %v821
        %v1133 = vpop.f32.mrf.mxu0
        %v1134 = vadd.f32 0.0, %v1133
        %1135 = vdwg.mxu0
        %v1136 = vmax.f32 %v1134, 0.0
        %1137 = vmatpush.msra.mxu0 0.0
        %1138 = vmatpush.msra.mxu0 0.0
        %1139 = vmatpush.msra.mxu0 0.0
        %1140 = vmatpush.msra.mxu0 0.0
        %1141 = vmatpush.msra.mxu0 0.0
        %1142 = vmatpush.msra.mxu0 0.0
        %1143 = vmatpush.msra.mxu0 0.0
        %1144 = vmatpush.msra.mxu0 0.0
        %1145 = vmatpush.msra.mxu0 0.0
        %1146 = vmatpush.msra.mxu0 0.0
        %1147 = vmatpush.msra.mxu0 0.0
        %1148 = vmatpush.msra.mxu0 0.0
        %1149 = vmatpush.msra.mxu0 0.0
        %1150 = vmatpush.msra.mxu0 0.0
        %1151 = vmatpush.msra.mxu0 0.0
        %1152 = vmatpush.msra.mxu0 %v1107
        %1153 = vmatmul.f32.gmra.mxu0 %v846
        %v1154 = vpop.f32.mrf.mxu0
        %v1155 = vadd.f32 0.0, %v1154
        %1156 = vmatmul.f32.gmra.mxu0 %v849
        %v1157 = vpop.f32.mrf.mxu0
        %v1158 = vadd.f32 0.0, %v1157
        %1159 = vmatmul.f32.gmra.mxu0 %v852
        %v1160 = vpop.f32.mrf.mxu0
        %v1161 = vadd.f32 0.0, %v1160
        %1162 = vmatmul.f32.gmra.mxu0 %v855
        %v1163 = vpop.f32.mrf.mxu0
        %v1164 = vadd.f32 0.0, %v1163
        %1165 = vmatmul.f32.gmra.mxu0 %v858
        %v1166 = vpop.f32.mrf.mxu0
        %v1167 = vadd.f32 0.0, %v1166
        %1168 = vmatmul.f32.gmra.mxu0 %v861
        %v1169 = vpop.f32.mrf.mxu0
        %v1170 = vadd.f32 0.0, %v1169
        %1171 = vmatmul.f32.gmra.mxu0 %v864
        %v1172 = vpop.f32.mrf.mxu0
        %v1173 = vadd.f32 0.0, %v1172
        %1174 = vmatmul.f32.gmra.mxu0 %v867
        %v1175 = vpop.f32.mrf.mxu0
        %v1176 = vadd.f32 0.0, %v1175
        %1177 = vdwg.mxu0
        %1178 = vmatpush.msra.mxu0 0.0
        %1179 = vmatpush.msra.mxu0 0.0
        %1180 = vmatpush.msra.mxu0 0.0
        %1181 = vmatpush.msra.mxu0 0.0
        %1182 = vmatpush.msra.mxu0 0.0
        %1183 = vmatpush.msra.mxu0 0.0
        %1184 = vmatpush.msra.mxu0 0.0
        %1185 = vmatpush.msra.mxu0 0.0
        %1186 = vmatpush.msra.mxu0 0.0
        %1187 = vmatpush.msra.mxu0 0.0
        %1188 = vmatpush.msra.mxu0 0.0
        %1189 = vmatpush.msra.mxu0 0.0
        %1190 = vmatpush.msra.mxu0 0.0
        %1191 = vmatpush.msra.mxu0 0.0
        %1192 = vmatpush.msra.mxu0 0.0
        %1193 = vmatpush.msra.mxu0 %v1136
        %1194 = vmatmul.f32.gmra.mxu0 %v911
        %v1195 = vpop.f32.mrf.mxu0
        %v1196 = vadd.f32 0.0, %v1195
        %1197 = vmatmul.f32.gmra.mxu0 %v914
        %v1198 = vpop.f32.mrf.mxu0
        %v1199 = vadd.f32 0.0, %v1198
        %1200 = vmatmul.f32.gmra.mxu0 %v917
        %v1201 = vpop.f32.mrf.mxu0
        %v1202 = vadd.f32 0.0, %v1201
        %1203 = vmatmul.f32.gmra.mxu0 %v920
        %v1204 = vpop.f32.mrf.mxu0
        %v1205 = vadd.f32 0.0, %v1204
        %1206 = vmatmul.f32.gmra.mxu0 %v923
        %v1207 = vpop.f32.mrf.mxu0
        %v1208 = vadd.f32 0.0, %v1207
        %1209 = vmatmul.f32.gmra.mxu0 %v926
        %v1210 = vpop.f32.mrf.mxu0
        %v1211 = vadd.f32 0.0, %v1210
        %1212 = vmatmul.f32.gmra.mxu0 %v929
        %v1213 = vpop.f32.mrf.mxu0
        %v1214 = vadd.f32 0.0, %v1213
        %1215 = vmatmul.f32.gmra.mxu0 %v932
        %v1216 = vpop.f32.mrf.mxu0
        %v1217 = vadd.f32 0.0, %v1216
        %1218 = vdwg.mxu0
        %v1219 = vmax.f32 %v1155, %v1196
        %v1220 = vmax.f32 %v1158, %v1199
        %v1221 = vmax.f32 %v1161, %v1202
        %v1222 = vmax.f32 %v1164, %v1205
        %v1223 = vmax.f32 %v1167, %v1208
        %v1224 = vmax.f32 %v1170, %v1211
        %v1225 = vmax.f32 %v1173, %v1214
        %v1226 = vmax.f32 %v1176, %v1217
        %v1227 = vsub.f32 %v1155, %v1219
        %v1228 = vsub.f32 %v1158, %v1220
        %v1229 = vsub.f32 %v1161, %v1221
        %v1230 = vsub.f32 %v1164, %v1222
        %v1231 = vsub.f32 %v1167, %v1223
        %v1232 = vsub.f32 %v1170, %v1224
        %v1233 = vsub.f32 %v1173, %v1225
        %v1234 = vsub.f32 %v1176, %v1226
        %v1235 = vmul.f32 %v1227, 1.442695
        %v1236 = vpow.pop %v1235
        %v1237 = vmul.f32 %v1228, 1.442695
        %v1238 = vpow.pop %v1237
        %v1239 = vmul.f32 %v1229, 1.442695
        %v1240 = vpow.pop %v1239
        %v1241 = vmul.f32 %v1230, 1.442695
        %v1242 = vpow.pop %v1241
        %v1243 = vmul.f32 %v1231, 1.442695
        %v1244 = vpow.pop %v1243
        %v1245 = vmul.f32 %v1232, 1.442695
        %v1246 = vpow.pop %v1245
        %v1247 = vmul.f32 %v1233, 1.442695
        %v1248 = vpow.pop %v1247
        %v1249 = vmul.f32 %v1234, 1.442695
        %v1250 = vpow.pop %v1249
        %v1251 = vsub.f32 %v1196, %v1219
        %v1252 = vsub.f32 %v1199, %v1220
        %v1253 = vsub.f32 %v1202, %v1221
        %v1254 = vsub.f32 %v1205, %v1222
        %v1255 = vsub.f32 %v1208, %v1223
        %v1256 = vsub.f32 %v1211, %v1224
        %v1257 = vsub.f32 %v1214, %v1225
        %v1258 = vsub.f32 %v1217, %v1226
        %v1259 = vmul.f32 %v1251, 1.442695
        %v1260 = vpow.pop %v1259
        %v1261 = vmul.f32 %v1252, 1.442695
        %v1262 = vpow.pop %v1261
        %v1263 = vmul.f32 %v1253, 1.442695
        %v1264 = vpow.pop %v1263
        %v1265 = vmul.f32 %v1254, 1.442695
        %v1266 = vpow.pop %v1265
        %v1267 = vmul.f32 %v1255, 1.442695
        %v1268 = vpow.pop %v1267
        %v1269 = vmul.f32 %v1256, 1.442695
        %v1270 = vpow.pop %v1269
        %v1271 = vmul.f32 %v1257, 1.442695
        %v1272 = vpow.pop %v1271
        %v1273 = vmul.f32 %v1258, 1.442695
        %v1274 = vpow.pop %v1273
        %v1275 = vadd.f32 %v1236, %v1260
        %v1276 = vadd.f32 %v1238, %v1262
        %v1277 = vadd.f32 %v1240, %v1264
        %v1278 = vadd.f32 %v1242, %v1266
        %v1279 = vadd.f32 %v1244, %v1268
        %v1280 = vadd.f32 %v1246, %v1270
        %v1281 = vadd.f32 %v1248, %v1272
        %v1282 = vadd.f32 %v1250, %v1274
        %v1283 = vrcp.pop %v1275
        %v1284 = vrcp.pop %v1276
        %v1285 = vrcp.pop %v1277
        %v1286 = vrcp.pop %v1278
        %v1287 = vrcp.pop %v1279
        %v1288 = vrcp.pop %v1280
        %v1289 = vrcp.pop %v1281
        %v1290 = vrcp.pop %v1282
        %v1291 = vmul.f32 %v1236, %v1283
        %v1292 = vmul.f32 %v1238, %v1284
        %v1293 = vmul.f32 %v1240, %v1285
        %v1294 = vmul.f32 %v1242, %v1286
        %v1295 = vmul.f32 %v1244, %v1287
        %v1296 = vmul.f32 %v1246, %v1288
        %v1297 = vmul.f32 %v1248, %v1289
        %v1298 = vmul.f32 %v1250, %v1290
        %v1299 = vmul.f32 %v1260, %v1283
        %v1300 = vmul.f32 %v1262, %v1284
        %v1301 = vmul.f32 %v1264, %v1285
        %v1302 = vmul.f32 %v1266, %v1286
        %v1303 = vmul.f32 %v1268, %v1287
        %v1304 = vmul.f32 %v1270, %v1288
        %v1305 = vmul.f32 %v1272, %v1289
        %v1306 = vmul.f32 %v1274, %v1290
        %v1307 = vld [vmem:[%s7] sm:$0xff]
        %v1308 = vld [vmem:[%s7 + $0x8] sm:$0xff]
        %v1309 = vld [vmem:[%s7 + $0x10] sm:$0xff]
        %v1310 = vld [vmem:[%s7 + $0x18] sm:$0xff]
        %v1311 = vld [vmem:[%s7 + $0x20] sm:$0xff]
        %v1312 = vld [vmem:[%s7 + $0x28] sm:$0xff]
        %v1313 = vld [vmem:[%s7 + $0x30] sm:$0xff]
        %v1314 = vld [vmem:[%s7 + $0x38] sm:$0xff]
        %1315 = vst.msk [vmem:[%s390] sm:$0xff] %vm613, %v1307
        %1316 = vst.msk [vmem:[%s390 + $0x8] sm:$0xff] %vm613, %v1308
        %1317 = vst.msk [vmem:[%s390 + $0x10] sm:$0xff] %vm613, %v1309
        %1318 = vst.msk [vmem:[%s390 + $0x18] sm:$0xff] %vm613, %v1310
        %1319 = vst.msk [vmem:[%s390 + $0x20] sm:$0xff] %vm613, %v1311
        %1320 = vst.msk [vmem:[%s390 + $0x28] sm:$0xff] %vm613, %v1312
        %1321 = vst.msk [vmem:[%s390 + $0x30] sm:$0xff] %vm613, %v1313
        %1322 = vst.msk [vmem:[%s390 + $0x38] sm:$0xff] %vm613, %v1314
        %1331 = vrot.lane.b32.xlu0 %v1047, 1
        %v1332 = vpop.permute.xlu0 %1331
        %1333 = vrot.lane.b32.xlu0 %v1048, 1
        %v1334 = vpop.permute.xlu0 %1333
        %1335 = vrot.lane.b32.xlu0 %v1049, 1
        %v1336 = vpop.permute.xlu0 %1335
        %1337 = vrot.lane.b32.xlu0 %v1050, 1
        %v1338 = vpop.permute.xlu0 %1337
        %1339 = vrot.lane.b32.xlu0 %v1051, 1
        %v1340 = vpop.permute.xlu0 %1339
        %1341 = vrot.lane.b32.xlu0 %v1052, 1
        %v1342 = vpop.permute.xlu0 %1341
        %1343 = vrot.lane.b32.xlu0 %v1053, 1
        %v1344 = vpop.permute.xlu0 %1343
        %1345 = vrot.lane.b32.xlu0 %v1054, 1
        %v1346 = vpop.permute.xlu0 %1345
        %v1355 = vmul.f32 %v1307, %v1332
        %v1356 = vmul.f32 %v1308, %v1334
        %v1357 = vmul.f32 %v1309, %v1336
        %v1358 = vmul.f32 %v1310, %v1338
        %v1359 = vmul.f32 %v1311, %v1340
        %v1360 = vmul.f32 %v1312, %v1342
        %v1361 = vmul.f32 %v1313, %v1344
        %v1362 = vmul.f32 %v1314, %v1346
        %vm1363 = vcmask 15368
        %1364 = vst.msk [vmem:[%s390] sm:$0xff] %vm1363, %v1355
        %1365 = vst.msk [vmem:[%s390 + $0x8] sm:$0xff] %vm1363, %v1356
        %1366 = vst.msk [vmem:[%s390 + $0x10] sm:$0xff] %vm1363, %v1357
        %1367 = vst.msk [vmem:[%s390 + $0x18] sm:$0xff] %vm1363, %v1358
        %1368 = vst.msk [vmem:[%s390 + $0x20] sm:$0xff] %vm1363, %v1359
        %1369 = vst.msk [vmem:[%s390 + $0x28] sm:$0xff] %vm1363, %v1360
        %1370 = vst.msk [vmem:[%s390 + $0x30] sm:$0xff] %vm1363, %v1361
        %1371 = vst.msk [vmem:[%s390 + $0x38] sm:$0xff] %vm1363, %v1362
        %1380 = vrot.lane.b32.xlu0 %v1055, 1
        %v1381 = vpop.permute.xlu0 %1380
        %1382 = vrot.lane.b32.xlu0 %v1056, 1
        %v1383 = vpop.permute.xlu0 %1382
        %1384 = vrot.lane.b32.xlu0 %v1057, 1
        %v1385 = vpop.permute.xlu0 %1384
        %1386 = vrot.lane.b32.xlu0 %v1058, 1
        %v1387 = vpop.permute.xlu0 %1386
        %1388 = vrot.lane.b32.xlu0 %v1059, 1
        %v1389 = vpop.permute.xlu0 %1388
        %1390 = vrot.lane.b32.xlu0 %v1060, 1
        %v1391 = vpop.permute.xlu0 %1390
        %1392 = vrot.lane.b32.xlu0 %v1061, 1
        %v1393 = vpop.permute.xlu0 %1392
        %1394 = vrot.lane.b32.xlu0 %v1062, 1
        %v1395 = vpop.permute.xlu0 %1394
        %v1404 = vmul.f32 %v1307, %v1381
        %v1405 = vmul.f32 %v1308, %v1383
        %v1406 = vmul.f32 %v1309, %v1385
        %v1407 = vmul.f32 %v1310, %v1387
        %v1408 = vmul.f32 %v1311, %v1389
        %v1409 = vmul.f32 %v1312, %v1391
        %v1410 = vmul.f32 %v1313, %v1393
        %v1411 = vmul.f32 %v1314, %v1395
        %1420 = vrot.lane.b32.xlu0 %v1404, 1
        %v1421 = vpop.permute.xlu0 %1420
        %1422 = vrot.lane.b32.xlu0 %v1405, 1
        %v1423 = vpop.permute.xlu0 %1422
        %1424 = vrot.lane.b32.xlu0 %v1406, 1
        %v1425 = vpop.permute.xlu0 %1424
        %1426 = vrot.lane.b32.xlu0 %v1407, 1
        %v1427 = vpop.permute.xlu0 %1426
        %1428 = vrot.lane.b32.xlu0 %v1408, 1
        %v1429 = vpop.permute.xlu0 %1428
        %1430 = vrot.lane.b32.xlu0 %v1409, 1
        %v1431 = vpop.permute.xlu0 %1430
        %1432 = vrot.lane.b32.xlu0 %v1410, 1
        %v1433 = vpop.permute.xlu0 %1432
        %1434 = vrot.lane.b32.xlu0 %v1411, 1
        %v1435 = vpop.permute.xlu0 %1434
        %vm1444 = vcmask 23568
        %1445 = vst.msk [vmem:[%s390] sm:$0xff] %vm1444, %v1421
        %1446 = vst.msk [vmem:[%s390 + $0x8] sm:$0xff] %vm1444, %v1423
        %1447 = vst.msk [vmem:[%s390 + $0x10] sm:$0xff] %vm1444, %v1425
        %1448 = vst.msk [vmem:[%s390 + $0x18] sm:$0xff] %vm1444, %v1427
        %1449 = vst.msk [vmem:[%s390 + $0x20] sm:$0xff] %vm1444, %v1429
        %1450 = vst.msk [vmem:[%s390 + $0x28] sm:$0xff] %vm1444, %v1431
        %1451 = vst.msk [vmem:[%s390 + $0x30] sm:$0xff] %vm1444, %v1433
        %1452 = vst.msk [vmem:[%s390 + $0x38] sm:$0xff] %vm1444, %v1435
        %1461 = vrot.lane.b32.xlu0 %v1291, 2
        %v1462 = vpop.permute.xlu0 %1461
        %1463 = vrot.lane.b32.xlu0 %v1292, 2
        %v1464 = vpop.permute.xlu0 %1463
        %1465 = vrot.lane.b32.xlu0 %v1293, 2
        %v1466 = vpop.permute.xlu0 %1465
        %1467 = vrot.lane.b32.xlu0 %v1294, 2
        %v1468 = vpop.permute.xlu0 %1467
        %1469 = vrot.lane.b32.xlu0 %v1295, 2
        %v1470 = vpop.permute.xlu0 %1469
        %1471 = vrot.lane.b32.xlu0 %v1296, 2
        %v1472 = vpop.permute.xlu0 %1471
        %1473 = vrot.lane.b32.xlu0 %v1297, 2
        %v1474 = vpop.permute.xlu0 %1473
        %1475 = vrot.lane.b32.xlu0 %v1298, 2
        %v1476 = vpop.permute.xlu0 %1475
        %v1485 = vmul.f32 %v1307, %v1462
        %v1486 = vmul.f32 %v1308, %v1464
        %v1487 = vmul.f32 %v1309, %v1466
        %v1488 = vmul.f32 %v1310, %v1468
        %v1489 = vmul.f32 %v1311, %v1470
        %v1490 = vmul.f32 %v1312, %v1472
        %v1491 = vmul.f32 %v1313, %v1474
        %v1492 = vmul.f32 %v1314, %v1476
        %1501 = vrot.lane.b32.xlu0 %v1485, 1
        %v1502 = vpop.permute.xlu0 %1501
        %1503 = vrot.lane.b32.xlu0 %v1486, 1
        %v1504 = vpop.permute.xlu0 %1503
        %1505 = vrot.lane.b32.xlu0 %v1487, 1
        %v1506 = vpop.permute.xlu0 %1505
        %1507 = vrot.lane.b32.xlu0 %v1488, 1
        %v1508 = vpop.permute.xlu0 %1507
        %1509 = vrot.lane.b32.xlu0 %v1489, 1
        %v1510 = vpop.permute.xlu0 %1509
        %1511 = vrot.lane.b32.xlu0 %v1490, 1
        %v1512 = vpop.permute.xlu0 %1511
        %1513 = vrot.lane.b32.xlu0 %v1491, 1
        %v1514 = vpop.permute.xlu0 %1513
        %1515 = vrot.lane.b32.xlu0 %v1492, 1
        %v1516 = vpop.permute.xlu0 %1515
        %vm1525 = vcmask 31768
        %1526 = vst.msk [vmem:[%s390] sm:$0xff] %vm1525, %v1502
        %1527 = vst.msk [vmem:[%s390 + $0x8] sm:$0xff] %vm1525, %v1504
        %1528 = vst.msk [vmem:[%s390 + $0x10] sm:$0xff] %vm1525, %v1506
        %1529 = vst.msk [vmem:[%s390 + $0x18] sm:$0xff] %vm1525, %v1508
        %1530 = vst.msk [vmem:[%s390 + $0x20] sm:$0xff] %vm1525, %v1510
        %1531 = vst.msk [vmem:[%s390 + $0x28] sm:$0xff] %vm1525, %v1512
        %1532 = vst.msk [vmem:[%s390 + $0x30] sm:$0xff] %vm1525, %v1514
        %1533 = vst.msk [vmem:[%s390 + $0x38] sm:$0xff] %vm1525, %v1516
        %1542 = vrot.lane.b32.xlu0 %v1299, 2
        %v1543 = vpop.permute.xlu0 %1542
        %1544 = vrot.lane.b32.xlu0 %v1300, 2
        %v1545 = vpop.permute.xlu0 %1544
        %1546 = vrot.lane.b32.xlu0 %v1301, 2
        %v1547 = vpop.permute.xlu0 %1546
        %1548 = vrot.lane.b32.xlu0 %v1302, 2
        %v1549 = vpop.permute.xlu0 %1548
        %1550 = vrot.lane.b32.xlu0 %v1303, 2
        %v1551 = vpop.permute.xlu0 %1550
        %1552 = vrot.lane.b32.xlu0 %v1304, 2
        %v1553 = vpop.permute.xlu0 %1552
        %1554 = vrot.lane.b32.xlu0 %v1305, 2
        %v1555 = vpop.permute.xlu0 %1554
        %1556 = vrot.lane.b32.xlu0 %v1306, 2
        %v1557 = vpop.permute.xlu0 %1556
        %v1566 = vmul.f32 %v1307, %v1543
        %v1567 = vmul.f32 %v1308, %v1545
        %v1568 = vmul.f32 %v1309, %v1547
        %v1569 = vmul.f32 %v1310, %v1549
        %v1570 = vmul.f32 %v1311, %v1551
        %v1571 = vmul.f32 %v1312, %v1553
        %v1572 = vmul.f32 %v1313, %v1555
        %v1573 = vmul.f32 %v1314, %v1557
        %1582 = vrot.lane.b32.xlu0 %v1566, 2
        %v1583 = vpop.permute.xlu0 %1582
        %1584 = vrot.lane.b32.xlu0 %v1567, 2
        %v1585 = vpop.permute.xlu0 %1584
        %1586 = vrot.lane.b32.xlu0 %v1568, 2
        %v1587 = vpop.permute.xlu0 %1586
        %1588 = vrot.lane.b32.xlu0 %v1569, 2
        %v1589 = vpop.permute.xlu0 %1588
        %1590 = vrot.lane.b32.xlu0 %v1570, 2
        %v1591 = vpop.permute.xlu0 %1590
        %1592 = vrot.lane.b32.xlu0 %v1571, 2
        %v1593 = vpop.permute.xlu0 %1592
        %1594 = vrot.lane.b32.xlu0 %v1572, 2
        %v1595 = vpop.permute.xlu0 %1594
        %1596 = vrot.lane.b32.xlu0 %v1573, 2
        %v1597 = vpop.permute.xlu0 %1596
        %vm1606 = vcmask 39968
        %1607 = vst.msk [vmem:[%s390] sm:$0xff] %vm1606, %v1583
        %1608 = vst.msk [vmem:[%s390 + $0x8] sm:$0xff] %vm1606, %v1585
        %1609 = vst.msk [vmem:[%s390 + $0x10] sm:$0xff] %vm1606, %v1587
        %1610 = vst.msk [vmem:[%s390 + $0x18] sm:$0xff] %vm1606, %v1589
        %1611 = vst.msk [vmem:[%s390 + $0x20] sm:$0xff] %vm1606, %v1591
        %1612 = vst.msk [vmem:[%s390 + $0x28] sm:$0xff] %vm1606, %v1593
        %1613 = vst.msk [vmem:[%s390 + $0x30] sm:$0xff] %vm1606, %v1595
        %1614 = vst.msk [vmem:[%s390 + $0x38] sm:$0xff] %vm1606, %v1597
      $region60: #{sranet_forward.8} parent=51 // pred_fallthru
        _
      %p1615 = scmp.lt.s32.totalorder %s23, 1
      %s1616 = scalar_select %p1615, %s23, 1
      %s1617 = smul.addr %s1616, 8
      %s1618 = smul.addr %s1617, 8
      %s1619 = scalar_lea.vmem %s8, %s1618
      // Predicated region
      $region61: #{sranet_forward.8} parent=51 // pred_check
        %p1620 = pneg %p238
      $region62: #{sranet_forward.8} parent=51 // pred_check_branch
        %1622 = sbr.rel (%p1620) target = $region64
      $region63: #{sranet_forward.8} parent=51 // pred_region
        _
      $region64: #{sranet_forward.8} parent=51 // pred_fallthru
        _
    $region52: #{sranet_forward.8} parent=5 // pred_fallthru
      _
    %p1623 = scmp.le.s32.totalorder 2, %s14
    // Predicated region
    $region65: #{sranet_forward.8} parent=5 // pred_check
      %p1624 = pneg %p1623
    $region66: #{sranet_forward.8} parent=5 // pred_check_branch
      %1626 = sbr.rel (%p1624) target = $region68
    $region67: #{sranet_forward.8} parent=5 // pred_region
      %s1627 = ssub.s32 %s14, 2
      // Predicated region
      $region69: #{sranet_forward.8} parent=67 // pred_check
        %p1628 = pneg %p244
      $region70: #{sranet_forward.8} parent=67 // pred_check_branch
        %1630 = sbr.rel (%p1628) target = $region72
      $region71: #{sranet_forward.8} parent=67 // pred_region
        %p1631 = scmp.lt.s32.totalorder %s25, 1
        %s1632 = scalar_select %p1631, %s25, 1
        %s1633 = smul.addr %s1632, 8
        %s1634 = smul.addr %s1633, 8
        %s1635 = scalar_lea.vmem %s8, %s1634
      $region72: #{sranet_forward.8} parent=67 // pred_fallthru
        _
    $region68: #{sranet_forward.8} parent=5 // pred_fallthru
      _
  $region6: #{sranet_forward.8} parent=0 // loop_footer
    %s18 = sadd.s32 1, %s14
  $region7: #{sranet_forward.8} parent=0 // loop_footer_branch
    %13 = sbr.rel target = $region3
  $region8: #{sranet_forward.8} parent=0 // loop_exit
    _

</llo_original>
